<compile_context>
chip_gen: v5e
topology: v5e:2x2
jax: 0.10.0
libtpu: 0.0.40
codegen_flags: <defaults>
</compile_context>

<pallas_src>
import functools

import jax
import jax.numpy as jnp
from jax.experimental import pallas as pl
from jax.experimental.pallas import tpu as pltpu

_LANE = 128


def _ceil_to(x, m):
    return ((x + m - 1) // m) * m


# ----------------------------------------------------------------------------
# Pallas kernels
# ----------------------------------------------------------------------------
def _conv_taps_kernel(x_ref, w_ref, y_ref, s_ref, q_ref, *, offsets, ho, wo):
    """Direct conv as a sum of shifted-window matmuls, one image per grid step.

    x_ref: (1, Hx, Wx, Cin)   spatially padded NHWC activation (f32)
    w_ref: (T,  Cin, Cout)    per-tap weight matrices (bf16)
    y_ref: (1, ho*wo, Cout)   conv output (f32, pre-BN)
    s_ref: (1, 1, Cout)       per-image per-channel sum   (fused BN stats)
    q_ref: (1, 1, Cout)       per-image per-channel sumsq (fused BN stats)
    """
    cin = x_ref.shape[-1]
    cout = y_ref.shape[-1]
    acc = jnp.zeros((ho * wo, cout), jnp.float32)
    for t, (oh, ow) in enumerate(offsets):
        patch = x_ref[0, pl.ds(oh, ho), pl.ds(ow, wo), :]
        acc = acc + jnp.dot(
            patch.reshape(ho * wo, cin).astype(jnp.bfloat16),
            w_ref[t],
            preferred_element_type=jnp.float32)
    y_ref[...] = acc.reshape(1, ho * wo, cout)
    s_ref[...] = jnp.sum(acc, axis=0, keepdims=True).reshape(1, 1, cout)
    q_ref[...] = jnp.sum(acc * acc, axis=0, keepdims=True).reshape(1, 1, cout)


def _bn_relu_kernel(x_ref, s_ref, b_ref, o_ref):
    s = s_ref[...].reshape(1, 1, -1)
    b = b_ref[...].reshape(1, 1, -1)
    o_ref[...] = jnp.maximum(x_ref[...] * s + b, 0.0)


def _res_add_relu_kernel(a_ref, sa_ref, ba_ref, r_ref, sr_ref, br_ref, o_ref):
    """relu( (a*sa+ba) + (r*sr+br) ): fused BN(main)+BN(shortcut)+add+ReLU."""
    sa = sa_ref[...].reshape(1, 1, -1)
    ba = ba_ref[...].reshape(1, 1, -1)
    sr = sr_ref[...].reshape(1, 1, -1)
    br = br_ref[...].reshape(1, 1, -1)
    o_ref[...] = jnp.maximum(a_ref[...] * sa + ba + r_ref[...] * sr + br, 0.0)


def _gap_kernel(x_ref, o_ref):
    o_ref[...] = jnp.mean(x_ref[...], axis=1, keepdims=True)


def _linear_kernel(x_ref, w_ref, b_ref, o_ref):
    o_ref[...] = jnp.dot(x_ref[...], w_ref[...],
                         preferred_element_type=jnp.float32) + b_ref[...]


# ----------------------------------------------------------------------------
# Kernel wrappers
# ----------------------------------------------------------------------------
_ELT_PARAMS = pltpu.CompilerParams(dimension_semantics=("parallel",))


def _conv_taps(x, wmat, offsets, ho, wo):
    """x: (N, Hx, Wx, Cin) f32, wmat: (T, Cin, Cout) bf16 ->
       y: (N, ho*wo, Cout) f32, per-image channel sum / sumsq: (N, 1, Cout)."""
    n, hx, wx, cin = x.shape
    t, _, cout = wmat.shape
    kernel = functools.partial(_conv_taps_kernel, offsets=offsets, ho=ho, wo=wo)
    return pl.pallas_call(
        kernel,
        out_shape=(jax.ShapeDtypeStruct((n, ho * wo, cout), jnp.float32),
                   jax.ShapeDtypeStruct((n, 1, cout), jnp.float32),
                   jax.ShapeDtypeStruct((n, 1, cout), jnp.float32)),
        grid=(n,),
        in_specs=[pl.BlockSpec((1, hx, wx, cin), lambda i: (i, 0, 0, 0)),
                  pl.BlockSpec((t, cin, cout), lambda i: (0, 0, 0))],
        out_specs=(pl.BlockSpec((1, ho * wo, cout), lambda i: (i, 0, 0)),
                   pl.BlockSpec((1, 1, cout), lambda i: (i, 0, 0)),
                   pl.BlockSpec((1, 1, cout), lambda i: (i, 0, 0))),
        compiler_params=pltpu.CompilerParams(
            dimension_semantics=("parallel",),
            vmem_limit_bytes=32 * 1024 * 1024),
    )(x, wmat)


def conv3x3(x, wmat, stride):
    """3x3 conv (padding=1, bias=False) on channel-padded NHWC input.
    Returns (y: (N, Ho, Wo, Cout_p) f32, per-image channel sum / sumsq)."""
    n, h, w, c = x.shape
    if stride == 1:
        xp = jnp.pad(x, ((0, 0), (1, 1), (1, 1), (0, 0)))
        offsets = tuple((kh, kw) for kh in range(3) for kw in range(3))
        ho, wo = h, w
        y, s, q = _conv_taps(xp, wmat, offsets, ho, wo)
    else:
        # stride 2: space-to-depth, then a stride-1 conv with 2x2 taps and the
        # correspondingly regrouped (zero-padded) weights.
        xp = jnp.pad(x, ((0, 0), (1, 1 + h % 2), (1, 1 + w % 2), (0, 0)))
        hp, wp = xp.shape[1], xp.shape[2]
        xs = xp.reshape(n, hp // 2, 2, wp // 2, 2, c)
        xs = jnp.transpose(xs, (0, 1, 3, 2, 4, 5)).reshape(
            n, hp // 2, wp // 2, 4 * c)
        ho, wo = hp // 2 - 1, wp // 2 - 1
        offsets = tuple((dh, dw) for dh in range(2) for dw in range(2))
        y, s, q = _conv_taps(xs, wmat, offsets, ho, wo)
    return y.reshape(n, ho, wo, wmat.shape[-1]), s, q


def _bn_relu(x, scale, bias):
    n, h, w, c = x.shape
    out = pl.pallas_call(
        _bn_relu_kernel,
        out_shape=jax.ShapeDtypeStruct((n, h * w, c), jnp.float32),
        grid=(n,),
        in_specs=[pl.BlockSpec((1, h * w, c), lambda i: (i, 0, 0)),
                  pl.BlockSpec((1, c), lambda i: (0, 0)),
                  pl.BlockSpec((1, c), lambda i: (0, 0))],
        out_specs=pl.BlockSpec((1, h * w, c), lambda i: (i, 0, 0)),
        compiler_params=_ELT_PARAMS,
    )(x.reshape(n, h * w, c), scale, bias)
    return out.reshape(n, h, w, c)


def _res_add_relu(a, sa, ba, r, sr, br):
    n, h, w, c = a.shape
    act_spec = pl.BlockSpec((1, h * w, c), lambda i: (i, 0, 0))
    vec_spec = pl.BlockSpec((1, c), lambda i: (0, 0))
    out = pl.pallas_call(
        _res_add_relu_kernel,
        out_shape=jax.ShapeDtypeStruct((n, h * w, c), jnp.float32),
        grid=(n,),
        in_specs=[act_spec, vec_spec, vec_spec, act_spec, vec_spec, vec_spec],
        out_specs=act_spec,
        compiler_params=_ELT_PARAMS,
    )(a.reshape(n, h * w, c), sa, ba, r.reshape(n, h * w, c), sr, br)
    return out.reshape(n, h, w, c)


def _global_avg_pool(x):
    n, h, w, c = x.shape
    out = pl.pallas_call(
        _gap_kernel,
        out_shape=jax.ShapeDtypeStruct((n, 1, c), jnp.float32),
        grid=(n,),
        in_specs=[pl.BlockSpec((1, h * w, c), lambda i: (i, 0, 0))],
        out_specs=pl.BlockSpec((1, 1, c), lambda i: (i, 0, 0)),
        compiler_params=_ELT_PARAMS,
    )(x.reshape(n, h * w, c))
    return out.reshape(n, c)


def _linear(x, wmat, bmat):
    n = x.shape[0]
    nout = wmat.shape[1]
    return pl.pallas_call(
        _linear_kernel,
        out_shape=jax.ShapeDtypeStruct((n, nout), jnp.float32),
    )(x, wmat, bmat)


# ----------------------------------------------------------------------------
# BatchNorm scale/bias from fused conv statistics (tiny (C,) math, JAX glue)
# ----------------------------------------------------------------------------
def _bn_scale_bias(ch_sum, ch_sq, m, gamma, beta, eps=1e-5):
    """Training-mode BN: batch mean / biased variance -> per-channel affine."""
    s = jnp.sum(ch_sum, axis=(0, 1))
    q = jnp.sum(ch_sq, axis=(0, 1))
    mean = s / m
    var = jnp.maximum(q / m - mean * mean, 0.0)  # clamp cancellation noise
    scale = gamma / jnp.sqrt(var + eps)
    bias = beta - mean * scale
    return scale.reshape(1, -1), bias.reshape(1, -1)


# ----------------------------------------------------------------------------
# ResNet blocks / forward
# ----------------------------------------------------------------------------
def basic_block(x, p):
    """Residual BasicBlock with fused conv+stats / BN+ReLU / BN+add+ReLU."""
    stride = p["stride"]
    n = x.shape[0]

    y1, s1, q1 = conv3x3(x, p["conv1_wm"], stride)
    m1 = n * y1.shape[1] * y1.shape[2]
    sc1, b1 = _bn_scale_bias(s1, q1, m1, p["bn1_gamma"], p["bn1_beta"])
    a1 = _bn_relu(y1, sc1, b1)

    y2, s2, q2 = conv3x3(a1, p["conv2_wm"], 1)
    m2 = n * y2.shape[1] * y2.shape[2]
    sc2, b2 = _bn_scale_bias(s2, q2, m2, p["bn2_gamma"], p["bn2_beta"])

    if "sc_wm" in p:  # 1x1 conv + BN shortcut
        xs = x[:, ::stride, ::stride, :]
        hs, ws = xs.shape[1], xs.shape[2]
        ysc, ss, qs = _conv_taps(xs, p["sc_wm"], ((0, 0),), hs, ws)
        scs, bss = _bn_scale_bias(ss, qs, n * hs * ws,
                                  p["sc_bn_gamma"], p["sc_bn_beta"])
        r = ysc.reshape(n, hs, ws, -1)
    else:  # identity shortcut
        c = x.shape[-1]
        r = x
        scs = jnp.ones((1, c), jnp.float32)
        bss = jnp.zeros((1, c), jnp.float32)
    return _res_add_relu(y2, sc2, b2, r, scs, bss)


def resnet_forward(params, x_nchw, rotations=True, index_mixup=None, lam=-1):
    assert lam == -1, "mixup path not implemented"  # TODO(synk): mixup
    x = jnp.transpose(x_nchw, (0, 2, 3, 1)).astype(jnp.float32)  # NCHW -> NHWC
    n, h, w, cin = x.shape
    x = jnp.pad(x, ((0, 0), (0, 0), (0, 0), (0, params["cinp"] - cin)))

    # stem: relu(bn1(conv1(x)))
    y, s, q = conv3x3(x, params["conv1_wm"], 1)
    sc, bs = _bn_scale_bias(s, q, n * y.shape[1] * y.shape[2],
                            params["bn1_gamma"], params["bn1_beta"])
    out = _bn_relu(y, sc, bs)

    # Residual layers.  The nn.ReLU between blocks / F.relu after each layer of
    # the reference are numerical no-ops (block output is already post-ReLU)
    # and are elided.
    for layer in params["layers"]:
        for blk in layer:
            out = basic_block(out, blk)

    pooled = _global_avg_pool(out)                    # (N, C_padded)
    features = pooled[:, :params["feat_dim"]]
    logits_all = _linear(pooled, params["linear_wm"], params["linear_bm"])
    nc = params["num_classes"]
    logits = logits_all[:, :nc]
    if rotations:
        logits_rot = logits_all[:, nc:nc + 4]
        return (logits, logits_rot), features
    return logits, features


# ----------------------------------------------------------------------------
# One-time weight preparation (transpose / pad / bf16 cast done outside forward)
# ----------------------------------------------------------------------------
def _pad_vec(v, cp):
    return jnp.pad(v.astype(jnp.float32), (0, cp - v.shape[0]))


def _prep_w3x3_s1(w, cinp, coutp):
    """(Cout, Cin, 3, 3) -> (9, Cin_p, Cout_p) bf16 tap matrices (tap = kh*3+kw)."""
    cout, cin = w.shape[0], w.shape[1]
    wm = jnp.zeros((3, 3, cinp, coutp), jnp.float32)
    wm = wm.at[:, :, :cin, :cout].set(jnp.transpose(w, (2, 3, 1, 0)))
    return wm.reshape(9, cinp, coutp).astype(jnp.bfloat16)


def _prep_w3x3_s2(w, cinp, coutp):
    """Stride-2 3x3 conv rewritten as a stride-1 2x2-tap conv over the
    space-to-depth input: (Cout, Cin, 3, 3) -> (4, 4*Cin_p, Cout_p) bf16."""
    cout, cin = w.shape[0], w.shape[1]
    wk = jnp.zeros((4, 4, cinp, coutp), jnp.float32)
    wk = wk.at[:3, :3, :cin, :cout].set(jnp.transpose(w, (2, 3, 1, 0)))
    wk = wk.reshape(2, 2, 2, 2, cinp, coutp)       # (dh, ph, dw, pw, cin, cout)
    wk = jnp.transpose(wk, (0, 2, 1, 3, 4, 5))     # (dh, dw, ph, pw, cin, cout)
    return wk.reshape(4, 4 * cinp, coutp).astype(jnp.bfloat16)


def _prep_w1x1(w, cinp, coutp):
    """(Cout, Cin, 1, 1) -> (1, Cin_p, Cout_p) bf16."""
    cout, cin = w.shape[0], w.shape[1]
    wm = jnp.zeros((cinp, coutp), jnp.float32)
    wm = wm.at[:cin, :cout].set(w[:, :, 0, 0].T)
    return wm.reshape(1, cinp, coutp).astype(jnp.bfloat16)


def _prep_linear(w_cls, b_cls, w_rot, b_rot, cinp, rotations):
    """Pack (and lane-pad) the classification + rotation heads into one matmul."""
    nc = w_cls.shape[0]
    n_all = nc + (4 if rotations else 0)
    nout = _ceil_to(n_all, _LANE)
    wm = jnp.zeros((cinp, nout), jnp.float32)
    bm = jnp.zeros((1, nout), jnp.float32)
    wm = wm.at[:w_cls.shape[1], :nc].set(w_cls.T)
    bm = bm.at[0, :nc].set(b_cls)
    if rotations:
        wm = wm.at[:w_rot.shape[1], nc:nc + 4].set(w_rot.T)
        bm = bm.at[0, nc:nc + 4].set(b_rot)
    return wm, bm


# ----------------------------------------------------------------------------
# Deterministic parameter initialization (matches module shapes)
# ----------------------------------------------------------------------------
def init_params(key, feature_maps, num_blocks, input_shape, num_classes,
                rotations=True):
    kiter = iter(jax.random.split(key, 256))

    def conv_w(cout, cin, k):
        fan_in = cin * k * k
        return (jax.random.normal(next(kiter), (cout, cin, k, k), jnp.float32)
                / jnp.sqrt(fan_in))

    cin = input_shape[0]
    cinp = _ceil_to(cin, _LANE)
    fm_p = _ceil_to(feature_maps, _LANE)
    params = {"cinp": cinp, "num_classes": num_classes}

    params["conv1_wm"] = _prep_w3x3_s1(conv_w(feature_maps, cin, 3), cinp, fm_p)
    params["bn1_gamma"] = _pad_vec(jnp.ones((feature_maps,)), fm_p)
    params["bn1_beta"] = _pad_vec(jnp.zeros((feature_maps,)), fm_p)

    in_planes, in_p = feature_maps, fm_p
    layers = []
    for i, nb in enumerate(num_blocks):
        planes = (2 ** i) * feature_maps
        planes_p = _ceil_to(planes, _LANE)
        strides = [1 if i == 0 else 2] + [1] * (nb - 1)
        blocks = []
        for s in strides:
            blk = {"stride": s}
            w1 = conv_w(planes, in_planes, 3)
            blk["conv1_wm"] = (_prep_w3x3_s1(w1, in_p, planes_p) if s == 1
                               else _prep_w3x3_s2(w1, in_p, planes_p))
            blk["bn1_gamma"] = _pad_vec(jnp.ones((planes,)), planes_p)
            blk["bn1_beta"] = _pad_vec(jnp.zeros((planes,)), planes_p)
            blk["conv2_wm"] = _prep_w3x3_s1(conv_w(planes, planes, 3),
                                            planes_p, planes_p)
            blk["bn2_gamma"] = _pad_vec(jnp.ones((planes,)), planes_p)
            blk["bn2_beta"] = _pad_vec(jnp.zeros((planes,)), planes_p)
            if s != 1 or in_planes != planes:
                blk["sc_wm"] = _prep_w1x1(conv_w(planes, in_planes, 1),
                                          in_p, planes_p)
                blk["sc_bn_gamma"] = _pad_vec(jnp.ones((planes,)), planes_p)
                blk["sc_bn_beta"] = _pad_vec(jnp.zeros((planes,)), planes_p)
            blocks.append(blk)
            in_planes, in_p = planes, planes_p
        layers.append(blocks)
    params["layers"] = layers

    feat_dim = (2 ** (len(num_blocks) - 1)) * feature_maps
    feat_p = _ceil_to(feat_dim, _LANE)
    params["feat_dim"] = feat_dim
    w_cls = (jax.random.normal(next(kiter), (num_classes, feat_dim), jnp.float32)
             / jnp.sqrt(feat_dim))
    w_rot = (jax.random.normal(next(kiter), (4, feat_dim), jnp.float32)
             / jnp.sqrt(feat_dim))
    params["linear_wm"], params["linear_bm"] = _prep_linear(
        w_cls, jnp.zeros((num_classes,), jnp.float32),
        w_rot, jnp.zeros((4,), jnp.float32), feat_p, rotations)
    return params


if __name__ == "__main__":
    key = jax.random.PRNGKey(0)
    kp, kx = jax.random.split(key)

    feature_maps = 4
    num_blocks = [1, 1]          # depth 2: planes 4 (stride 1), 8 (stride 2)
    input_shape = (3, 16, 16)
    num_classes = 5
    rotations = True

    params = init_params(kp, feature_maps, num_blocks, input_shape, num_classes,
                         rotations=rotations)
    x = jax.random.normal(kx, (2,) + input_shape, jnp.float32)  # NCHW input

    fwd = jax.jit(lambda inp: resnet_forward(params, inp, rotations=rotations))
    (logits, logits_rot), features = fwd(x)
    jax.block_until_ready((logits, logits_rot, features))

    assert logits.shape == (2, num_classes)
    assert logits_rot.shape == (2, 4)
    assert features.shape == (2, (2 ** (len(num_blocks) - 1)) * feature_maps)
    print("KERNEL_OK")
</pallas_src>

<mosaic_0001>
module attributes {stable_mosaic.version = 11 : i64} {
  func.func @_conv_taps_kernel(%arg0: i32, %arg1: memref<1x18x18x128xf32, #tpu.memory_space<vmem>>, %arg2: memref<9x128x128xbf16, #tpu.memory_space<vmem>>, %arg3: memref<1x256x128xf32, #tpu.memory_space<vmem>>, %arg4: memref<1x1x128xf32, #tpu.memory_space<vmem>>, %arg5: memref<1x1x128xf32, #tpu.memory_space<vmem>>) attributes {dimension_semantics = [#tpu.dimension_semantics<parallel>], iteration_bounds = array<i64: 2>, scalar_prefetch = 0 : i64, scratch_operands = 0 : i64, tpu.core_type = #tpu.core_type<tc>, window_params = [{transform_indices = @transform_0, window_bounds = array<i64: 1, 18, 18, 128>}, {pipeline_mode = #tpu.pipeline_mode<synchronous>, transform_indices = @transform_1, window_bounds = array<i64: 9, 128, 128>}, {transform_indices = @transform_2, window_bounds = array<i64: 1, 256, 128>}, {transform_indices = @transform_3, window_bounds = array<i64: 1, 1, 128>}, {transform_indices = @transform_4, window_bounds = array<i64: 1, 1, 128>}]} {
    %cst = arith.constant 0.000000e+00 : f32
    %0 = vector.broadcast %cst : f32 to vector<256x128xf32>
    %c0 = arith.constant 0 : index
    %c0_0 = arith.constant 0 : index
    %c0_1 = arith.constant 0 : index
    %c0_2 = arith.constant 0 : index
    %1 = vector.load %arg1[%c0, %c0_0, %c0_1, %c0_2] : memref<1x18x18x128xf32, #tpu.memory_space<vmem>>, vector<1x16x16x128xf32>
    %2 = vector.shape_cast %1 : vector<1x16x16x128xf32> to vector<16x16x128xf32>
    %3 = vector.shape_cast %2 : vector<16x16x128xf32> to vector<256x128xf32>
    %4 = arith.truncf %3 : vector<256x128xf32> to vector<256x128xbf16>
    %c0_3 = arith.constant 0 : index
    %c0_4 = arith.constant 0 : index
    %c0_5 = arith.constant 0 : index
    %5 = vector.load %arg2[%c0_3, %c0_4, %c0_5] : memref<9x128x128xbf16, #tpu.memory_space<vmem>>, vector<1x128x128xbf16>
    %6 = vector.shape_cast %5 : vector<1x128x128xbf16> to vector<128x128xbf16>
    %cst_6 = arith.constant dense<0.000000e+00> : vector<256x128xf32>
    %7 = tpu.matmul %4, %6, %cst_6 {dimension_numbers = #tpu.dot_dimension_numbers<[1], [0], [0], [1], [0, 0, 1, 1], [], []>} : vector<256x128xbf16>, vector<128x128xbf16>, vector<256x128xf32> -> vector<256x128xf32>
    %8 = arith.addf %0, %7 : vector<256x128xf32>
    %c0_7 = arith.constant 0 : index
    %c0_8 = arith.constant 0 : index
    %c1 = arith.constant 1 : index
    %c0_9 = arith.constant 0 : index
    %9 = vector.load %arg1[%c0_7, %c0_8, %c1, %c0_9] : memref<1x18x18x128xf32, #tpu.memory_space<vmem>>, vector<1x16x16x128xf32>
    %10 = vector.shape_cast %9 : vector<1x16x16x128xf32> to vector<16x16x128xf32>
    %11 = vector.shape_cast %10 : vector<16x16x128xf32> to vector<256x128xf32>
    %12 = arith.truncf %11 : vector<256x128xf32> to vector<256x128xbf16>
    %c1_10 = arith.constant 1 : index
    %c0_11 = arith.constant 0 : index
    %c0_12 = arith.constant 0 : index
    %13 = vector.load %arg2[%c1_10, %c0_11, %c0_12] : memref<9x128x128xbf16, #tpu.memory_space<vmem>>, vector<1x128x128xbf16>
    %14 = vector.shape_cast %13 : vector<1x128x128xbf16> to vector<128x128xbf16>
    %cst_13 = arith.constant dense<0.000000e+00> : vector<256x128xf32>
    %15 = tpu.matmul %12, %14, %cst_13 {dimension_numbers = #tpu.dot_dimension_numbers<[1], [0], [0], [1], [0, 0, 1, 1], [], []>} : vector<256x128xbf16>, vector<128x128xbf16>, vector<256x128xf32> -> vector<256x128xf32>
    %16 = arith.addf %8, %15 : vector<256x128xf32>
    %c0_14 = arith.constant 0 : index
    %c0_15 = arith.constant 0 : index
    %c2 = arith.constant 2 : index
    %c0_16 = arith.constant 0 : index
    %17 = vector.load %arg1[%c0_14, %c0_15, %c2, %c0_16] : memref<1x18x18x128xf32, #tpu.memory_space<vmem>>, vector<1x16x16x128xf32>
    %18 = vector.shape_cast %17 : vector<1x16x16x128xf32> to vector<16x16x128xf32>
    %19 = vector.shape_cast %18 : vector<16x16x128xf32> to vector<256x128xf32>
    %20 = arith.truncf %19 : vector<256x128xf32> to vector<256x128xbf16>
    %c2_17 = arith.constant 2 : index
    %c0_18 = arith.constant 0 : index
    %c0_19 = arith.constant 0 : index
    %21 = vector.load %arg2[%c2_17, %c0_18, %c0_19] : memref<9x128x128xbf16, #tpu.memory_space<vmem>>, vector<1x128x128xbf16>
    %22 = vector.shape_cast %21 : vector<1x128x128xbf16> to vector<128x128xbf16>
    %cst_20 = arith.constant dense<0.000000e+00> : vector<256x128xf32>
    %23 = tpu.matmul %20, %22, %cst_20 {dimension_numbers = #tpu.dot_dimension_numbers<[1], [0], [0], [1], [0, 0, 1, 1], [], []>} : vector<256x128xbf16>, vector<128x128xbf16>, vector<256x128xf32> -> vector<256x128xf32>
    %24 = arith.addf %16, %23 : vector<256x128xf32>
    %c0_21 = arith.constant 0 : index
    %c1_22 = arith.constant 1 : index
    %c0_23 = arith.constant 0 : index
    %c0_24 = arith.constant 0 : index
    %25 = vector.load %arg1[%c0_21, %c1_22, %c0_23, %c0_24] : memref<1x18x18x128xf32, #tpu.memory_space<vmem>>, vector<1x16x16x128xf32>
    %26 = vector.shape_cast %25 : vector<1x16x16x128xf32> to vector<16x16x128xf32>
    %27 = vector.shape_cast %26 : vector<16x16x128xf32> to vector<256x128xf32>
    %28 = arith.truncf %27 : vector<256x128xf32> to vector<256x128xbf16>
    %c3 = arith.constant 3 : index
    %c0_25 = arith.constant 0 : index
    %c0_26 = arith.constant 0 : index
    %29 = vector.load %arg2[%c3, %c0_25, %c0_26] : memref<9x128x128xbf16, #tpu.memory_space<vmem>>, vector<1x128x128xbf16>
    %30 = vector.shape_cast %29 : vector<1x128x128xbf16> to vector<128x128xbf16>
    %cst_27 = arith.constant dense<0.000000e+00> : vector<256x128xf32>
    %31 = tpu.matmul %28, %30, %cst_27 {dimension_numbers = #tpu.dot_dimension_numbers<[1], [0], [0], [1], [0, 0, 1, 1], [], []>} : vector<256x128xbf16>, vector<128x128xbf16>, vector<256x128xf32> -> vector<256x128xf32>
    %32 = arith.addf %24, %31 : vector<256x128xf32>
    %c0_28 = arith.constant 0 : index
    %c1_29 = arith.constant 1 : index
    %c1_30 = arith.constant 1 : index
    %c0_31 = arith.constant 0 : index
    %33 = vector.load %arg1[%c0_28, %c1_29, %c1_30, %c0_31] : memref<1x18x18x128xf32, #tpu.memory_space<vmem>>, vector<1x16x16x128xf32>
    %34 = vector.shape_cast %33 : vector<1x16x16x128xf32> to vector<16x16x128xf32>
    %35 = vector.shape_cast %34 : vector<16x16x128xf32> to vector<256x128xf32>
    %36 = arith.truncf %35 : vector<256x128xf32> to vector<256x128xbf16>
    %c4 = arith.constant 4 : index
    %c0_32 = arith.constant 0 : index
    %c0_33 = arith.constant 0 : index
    %37 = vector.load %arg2[%c4, %c0_32, %c0_33] : memref<9x128x128xbf16, #tpu.memory_space<vmem>>, vector<1x128x128xbf16>
    %38 = vector.shape_cast %37 : vector<1x128x128xbf16> to vector<128x128xbf16>
    %cst_34 = arith.constant dense<0.000000e+00> : vector<256x128xf32>
    %39 = tpu.matmul %36, %38, %cst_34 {dimension_numbers = #tpu.dot_dimension_numbers<[1], [0], [0], [1], [0, 0, 1, 1], [], []>} : vector<256x128xbf16>, vector<128x128xbf16>, vector<256x128xf32> -> vector<256x128xf32>
    %40 = arith.addf %32, %39 : vector<256x128xf32>
    %c0_35 = arith.constant 0 : index
    %c1_36 = arith.constant 1 : index
    %c2_37 = arith.constant 2 : index
    %c0_38 = arith.constant 0 : index
    %41 = vector.load %arg1[%c0_35, %c1_36, %c2_37, %c0_38] : memref<1x18x18x128xf32, #tpu.memory_space<vmem>>, vector<1x16x16x128xf32>
    %42 = vector.shape_cast %41 : vector<1x16x16x128xf32> to vector<16x16x128xf32>
    %43 = vector.shape_cast %42 : vector<16x16x128xf32> to vector<256x128xf32>
    %44 = arith.truncf %43 : vector<256x128xf32> to vector<256x128xbf16>
    %c5 = arith.constant 5 : index
    %c0_39 = arith.constant 0 : index
    %c0_40 = arith.constant 0 : index
    %45 = vector.load %arg2[%c5, %c0_39, %c0_40] : memref<9x128x128xbf16, #tpu.memory_space<vmem>>, vector<1x128x128xbf16>
    %46 = vector.shape_cast %45 : vector<1x128x128xbf16> to vector<128x128xbf16>
    %cst_41 = arith.constant dense<0.000000e+00> : vector<256x128xf32>
    %47 = tpu.matmul %44, %46, %cst_41 {dimension_numbers = #tpu.dot_dimension_numbers<[1], [0], [0], [1], [0, 0, 1, 1], [], []>} : vector<256x128xbf16>, vector<128x128xbf16>, vector<256x128xf32> -> vector<256x128xf32>
    %48 = arith.addf %40, %47 : vector<256x128xf32>
    %c0_42 = arith.constant 0 : index
    %c2_43 = arith.constant 2 : index
    %c0_44 = arith.constant 0 : index
    %c0_45 = arith.constant 0 : index
    %49 = vector.load %arg1[%c0_42, %c2_43, %c0_44, %c0_45] : memref<1x18x18x128xf32, #tpu.memory_space<vmem>>, vector<1x16x16x128xf32>
    %50 = vector.shape_cast %49 : vector<1x16x16x128xf32> to vector<16x16x128xf32>
    %51 = vector.shape_cast %50 : vector<16x16x128xf32> to vector<256x128xf32>
    %52 = arith.truncf %51 : vector<256x128xf32> to vector<256x128xbf16>
    %c6 = arith.constant 6 : index
    %c0_46 = arith.constant 0 : index
    %c0_47 = arith.constant 0 : index
    %53 = vector.load %arg2[%c6, %c0_46, %c0_47] : memref<9x128x128xbf16, #tpu.memory_space<vmem>>, vector<1x128x128xbf16>
    %54 = vector.shape_cast %53 : vector<1x128x128xbf16> to vector<128x128xbf16>
    %cst_48 = arith.constant dense<0.000000e+00> : vector<256x128xf32>
    %55 = tpu.matmul %52, %54, %cst_48 {dimension_numbers = #tpu.dot_dimension_numbers<[1], [0], [0], [1], [0, 0, 1, 1], [], []>} : vector<256x128xbf16>, vector<128x128xbf16>, vector<256x128xf32> -> vector<256x128xf32>
    %56 = arith.addf %48, %55 : vector<256x128xf32>
    %c0_49 = arith.constant 0 : index
    %c2_50 = arith.constant 2 : index
    %c1_51 = arith.constant 1 : index
    %c0_52 = arith.constant 0 : index
    %57 = vector.load %arg1[%c0_49, %c2_50, %c1_51, %c0_52] : memref<1x18x18x128xf32, #tpu.memory_space<vmem>>, vector<1x16x16x128xf32>
    %58 = vector.shape_cast %57 : vector<1x16x16x128xf32> to vector<16x16x128xf32>
    %59 = vector.shape_cast %58 : vector<16x16x128xf32> to vector<256x128xf32>
    %60 = arith.truncf %59 : vector<256x128xf32> to vector<256x128xbf16>
    %c7 = arith.constant 7 : index
    %c0_53 = arith.constant 0 : index
    %c0_54 = arith.constant 0 : index
    %61 = vector.load %arg2[%c7, %c0_53, %c0_54] : memref<9x128x128xbf16, #tpu.memory_space<vmem>>, vector<1x128x128xbf16>
    %62 = vector.shape_cast %61 : vector<1x128x128xbf16> to vector<128x128xbf16>
    %cst_55 = arith.constant dense<0.000000e+00> : vector<256x128xf32>
    %63 = tpu.matmul %60, %62, %cst_55 {dimension_numbers = #tpu.dot_dimension_numbers<[1], [0], [0], [1], [0, 0, 1, 1], [], []>} : vector<256x128xbf16>, vector<128x128xbf16>, vector<256x128xf32> -> vector<256x128xf32>
    %64 = arith.addf %56, %63 : vector<256x128xf32>
    %c0_56 = arith.constant 0 : index
    %c2_57 = arith.constant 2 : index
    %c2_58 = arith.constant 2 : index
    %c0_59 = arith.constant 0 : index
    %65 = vector.load %arg1[%c0_56, %c2_57, %c2_58, %c0_59] : memref<1x18x18x128xf32, #tpu.memory_space<vmem>>, vector<1x16x16x128xf32>
    %66 = vector.shape_cast %65 : vector<1x16x16x128xf32> to vector<16x16x128xf32>
    %67 = vector.shape_cast %66 : vector<16x16x128xf32> to vector<256x128xf32>
    %68 = arith.truncf %67 : vector<256x128xf32> to vector<256x128xbf16>
    %c8 = arith.constant 8 : index
    %c0_60 = arith.constant 0 : index
    %c0_61 = arith.constant 0 : index
    %69 = vector.load %arg2[%c8, %c0_60, %c0_61] : memref<9x128x128xbf16, #tpu.memory_space<vmem>>, vector<1x128x128xbf16>
    %70 = vector.shape_cast %69 : vector<1x128x128xbf16> to vector<128x128xbf16>
    %cst_62 = arith.constant dense<0.000000e+00> : vector<256x128xf32>
    %71 = tpu.matmul %68, %70, %cst_62 {dimension_numbers = #tpu.dot_dimension_numbers<[1], [0], [0], [1], [0, 0, 1, 1], [], []>} : vector<256x128xbf16>, vector<128x128xbf16>, vector<256x128xf32> -> vector<256x128xf32>
    %72 = arith.addf %64, %71 : vector<256x128xf32>
    %73 = vector.shape_cast %72 : vector<256x128xf32> to vector<1x256x128xf32>
    %c0_63 = arith.constant 0 : index
    %c0_64 = arith.constant 0 : index
    %c0_65 = arith.constant 0 : index
    %74 = vector.load %arg3[%c0_63, %c0_64, %c0_65] : memref<1x256x128xf32, #tpu.memory_space<vmem>>, vector<1x256x128xf32>
    tpu.vector_store %arg3[%c0_63, %c0_64, %c0_65], %73 {strides = array<i32>} : memref<1x256x128xf32, #tpu.memory_space<vmem>>, vector<1x256x128xf32>,
    %cst_66 = arith.constant dense<0.000000e+00> : vector<128xf32>
    %75 = vector.multi_reduction <add>, %72, %cst_66 [0] : vector<256x128xf32> to vector<128xf32>
    %76 = vector.shape_cast %75 : vector<128xf32> to vector<1x128xf32>
    %77 = vector.shape_cast %76 : vector<1x128xf32> to vector<1x1x128xf32>
    %c0_67 = arith.constant 0 : index
    %c0_68 = arith.constant 0 : index
    %c0_69 = arith.constant 0 : index
    %78 = vector.load %arg4[%c0_67, %c0_68, %c0_69] : memref<1x1x128xf32, #tpu.memory_space<vmem>>, vector<1x1x128xf32>
    tpu.vector_store %arg4[%c0_67, %c0_68, %c0_69], %77 {strides = array<i32>} : memref<1x1x128xf32, #tpu.memory_space<vmem>>, vector<1x1x128xf32>,
    %79 = arith.mulf %72, %72 : vector<256x128xf32>
    %cst_70 = arith.constant dense<0.000000e+00> : vector<128xf32>
    %80 = vector.multi_reduction <add>, %79, %cst_70 [0] : vector<256x128xf32> to vector<128xf32>
    %81 = vector.shape_cast %80 : vector<128xf32> to vector<1x128xf32>
    %82 = vector.shape_cast %81 : vector<1x128xf32> to vector<1x1x128xf32>
    %c0_71 = arith.constant 0 : index
    %c0_72 = arith.constant 0 : index
    %c0_73 = arith.constant 0 : index
    %83 = vector.load %arg5[%c0_71, %c0_72, %c0_73] : memref<1x1x128xf32, #tpu.memory_space<vmem>>, vector<1x1x128xf32>
    tpu.vector_store %arg5[%c0_71, %c0_72, %c0_73], %82 {strides = array<i32>} : memref<1x1x128xf32, #tpu.memory_space<vmem>>, vector<1x1x128xf32>,
    return
  }
  func.func @transform_0(%arg0: i32) -> (i32, i32, i32, i32) {
    %c0_i32 = arith.constant 0 : i32
    %c0_i32_0 = arith.constant 0 : i32
    %c0_i32_1 = arith.constant 0 : i32
    %c0_i32_2 = arith.constant 0 : i32
    return %arg0, %c0_i32, %c0_i32_0, %c0_i32_1 : i32, i32, i32, i32
  }
  func.func @transform_1(%arg0: i32) -> (i32, i32, i32) {
    %c0_i32 = arith.constant 0 : i32
    %c0_i32_0 = arith.constant 0 : i32
    %c0_i32_1 = arith.constant 0 : i32
    %c0_i32_2 = arith.constant 0 : i32
    return %c0_i32, %c0_i32_0, %c0_i32_1 : i32, i32, i32
  }
  func.func @transform_2(%arg0: i32) -> (i32, i32, i32) {
    %c0_i32 = arith.constant 0 : i32
    %c0_i32_0 = arith.constant 0 : i32
    %c0_i32_1 = arith.constant 0 : i32
    return %arg0, %c0_i32, %c0_i32_0 : i32, i32, i32
  }
  func.func @transform_3(%arg0: i32) -> (i32, i32, i32) {
    %c0_i32 = arith.constant 0 : i32
    %c0_i32_0 = arith.constant 0 : i32
    %c0_i32_1 = arith.constant 0 : i32
    return %arg0, %c0_i32, %c0_i32_0 : i32, i32, i32
  }
  func.func @transform_4(%arg0: i32) -> (i32, i32, i32) {
    %c0_i32 = arith.constant 0 : i32
    %c0_i32_0 = arith.constant 0 : i32
    %c0_i32_1 = arith.constant 0 : i32
    return %arg0, %c0_i32, %c0_i32_0 : i32, i32, i32
  }
}

module attributes {stable_mosaic.version = 11 : i64} {
  func.func @_bn_relu_kernel(%arg0: i32, %arg1: memref<1x256x128xf32, #tpu.memory_space<vmem>>, %arg2: memref<1x128xf32, #tpu.memory_space<vmem>>, %arg3: memref<1x128xf32, #tpu.memory_space<vmem>>, %arg4: memref<1x256x128xf32, #tpu.memory_space<vmem>>) attributes {dimension_semantics = [#tpu.dimension_semantics<parallel>], iteration_bounds = array<i64: 2>, scalar_prefetch = 0 : i64, scratch_operands = 0 : i64, tpu.core_type = #tpu.core_type<tc>, window_params = [{transform_indices = @transform_0, window_bounds = array<i64: 1, 256, 128>}, {pipeline_mode = #tpu.pipeline_mode<synchronous>, transform_indices = @transform_1, window_bounds = array<i64: 1, 128>}, {pipeline_mode = #tpu.pipeline_mode<synchronous>, transform_indices = @transform_2, window_bounds = array<i64: 1, 128>}, {transform_indices = @transform_3, window_bounds = array<i64: 1, 256, 128>}]} {
    %c0 = arith.constant 0 : index
    %c0_0 = arith.constant 0 : index
    %0 = vector.load %arg2[%c0, %c0_0] : memref<1x128xf32, #tpu.memory_space<vmem>>, vector<1x128xf32>
    %1 = vector.shape_cast %0 : vector<1x128xf32> to vector<1x1x128xf32>
    %c0_1 = arith.constant 0 : index
    %c0_2 = arith.constant 0 : index
    %2 = vector.load %arg3[%c0_1, %c0_2] : memref<1x128xf32, #tpu.memory_space<vmem>>, vector<1x128xf32>
    %3 = vector.shape_cast %2 : vector<1x128xf32> to vector<1x1x128xf32>
    %c0_3 = arith.constant 0 : index
    %c0_4 = arith.constant 0 : index
    %c0_5 = arith.constant 0 : index
    %4 = vector.load %arg1[%c0_3, %c0_4, %c0_5] : memref<1x256x128xf32, #tpu.memory_space<vmem>>, vector<1x256x128xf32>
    %5 = vector.broadcast %1 : vector<1x1x128xf32> to vector<1x256x128xf32>
    %6 = arith.mulf %4, %5 : vector<1x256x128xf32>
    %7 = vector.broadcast %3 : vector<1x1x128xf32> to vector<1x256x128xf32>
    %8 = arith.addf %6, %7 : vector<1x256x128xf32>
    %cst = arith.constant 0.000000e+00 : f32
    %9 = vector.broadcast %cst : f32 to vector<1x256x128xf32>
    %10 = arith.maximumf %8, %9 : vector<1x256x128xf32>
    %c0_6 = arith.constant 0 : index
    %c0_7 = arith.constant 0 : index
    %c0_8 = arith.constant 0 : index
    %11 = vector.load %arg4[%c0_6, %c0_7, %c0_8] : memref<1x256x128xf32, #tpu.memory_space<vmem>>, vector<1x256x128xf32>
    tpu.vector_store %arg4[%c0_6, %c0_7, %c0_8], %10 {strides = array<i32>} : memref<1x256x128xf32, #tpu.memory_space<vmem>>, vector<1x256x128xf32>,
    return
  }
  func.func @transform_0(%arg0: i32) -> (i32, i32, i32) {
    %c0_i32 = arith.constant 0 : i32
    %c0_i32_0 = arith.constant 0 : i32
    %c0_i32_1 = arith.constant 0 : i32
    return %arg0, %c0_i32, %c0_i32_0 : i32, i32, i32
  }
  func.func @transform_1(%arg0: i32) -> (i32, i32) {
    %c0_i32 = arith.constant 0 : i32
    %c0_i32_0 = arith.constant 0 : i32
    %c0_i32_1 = arith.constant 0 : i32
    return %c0_i32, %c0_i32_0 : i32, i32
  }
  func.func @transform_2(%arg0: i32) -> (i32, i32) {
    %c0_i32 = arith.constant 0 : i32
    %c0_i32_0 = arith.constant 0 : i32
    %c0_i32_1 = arith.constant 0 : i32
    return %c0_i32, %c0_i32_0 : i32, i32
  }
  func.func @transform_3(%arg0: i32) -> (i32, i32, i32) {
    %c0_i32 = arith.constant 0 : i32
    %c0_i32_0 = arith.constant 0 : i32
    %c0_i32_1 = arith.constant 0 : i32
    return %arg0, %c0_i32, %c0_i32_0 : i32, i32, i32
  }
}

module attributes {stable_mosaic.version = 11 : i64} {
  func.func @_res_add_relu_kernel(%arg0: i32, %arg1: memref<1x256x128xf32, #tpu.memory_space<vmem>>, %arg2: memref<1x128xf32, #tpu.memory_space<vmem>>, %arg3: memref<1x128xf32, #tpu.memory_space<vmem>>, %arg4: memref<1x256x128xf32, #tpu.memory_space<vmem>>, %arg5: memref<1x128xf32, #tpu.memory_space<vmem>>, %arg6: memref<1x128xf32, #tpu.memory_space<vmem>>, %arg7: memref<1x256x128xf32, #tpu.memory_space<vmem>>) attributes {dimension_semantics = [#tpu.dimension_semantics<parallel>], iteration_bounds = array<i64: 2>, scalar_prefetch = 0 : i64, scratch_operands = 0 : i64, tpu.core_type = #tpu.core_type<tc>, window_params = [{transform_indices = @transform_0, window_bounds = array<i64: 1, 256, 128>}, {pipeline_mode = #tpu.pipeline_mode<synchronous>, transform_indices = @transform_1, window_bounds = array<i64: 1, 128>}, {pipeline_mode = #tpu.pipeline_mode<synchronous>, transform_indices = @transform_2, window_bounds = array<i64: 1, 128>}, {transform_indices = @transform_3, window_bounds = array<i64: 1, 256, 128>}, {pipeline_mode = #tpu.pipeline_mode<synchronous>, transform_indices = @transform_4, window_bounds = array<i64: 1, 128>}, {pipeline_mode = #tpu.pipeline_mode<synchronous>, transform_indices = @transform_5, window_bounds = array<i64: 1, 128>}, {transform_indices = @transform_6, window_bounds = array<i64: 1, 256, 128>}]} {
    %c0 = arith.constant 0 : index
    %c0_0 = arith.constant 0 : index
    %0 = vector.load %arg2[%c0, %c0_0] : memref<1x128xf32, #tpu.memory_space<vmem>>, vector<1x128xf32>
    %1 = vector.shape_cast %0 : vector<1x128xf32> to vector<1x1x128xf32>
    %c0_1 = arith.constant 0 : index
    %c0_2 = arith.constant 0 : index
    %2 = vector.load %arg3[%c0_1, %c0_2] : memref<1x128xf32, #tpu.memory_space<vmem>>, vector<1x128xf32>
    %3 = vector.shape_cast %2 : vector<1x128xf32> to vector<1x1x128xf32>
    %c0_3 = arith.constant 0 : index
    %c0_4 = arith.constant 0 : index
    %4 = vector.load %arg5[%c0_3, %c0_4] : memref<1x128xf32, #tpu.memory_space<vmem>>, vector<1x128xf32>
    %5 = vector.shape_cast %4 : vector<1x128xf32> to vector<1x1x128xf32>
    %c0_5 = arith.constant 0 : index
    %c0_6 = arith.constant 0 : index
    %6 = vector.load %arg6[%c0_5, %c0_6] : memref<1x128xf32, #tpu.memory_space<vmem>>, vector<1x128xf32>
    %7 = vector.shape_cast %6 : vector<1x128xf32> to vector<1x1x128xf32>
    %c0_7 = arith.constant 0 : index
    %c0_8 = arith.constant 0 : index
    %c0_9 = arith.constant 0 : index
    %8 = vector.load %arg1[%c0_7, %c0_8, %c0_9] : memref<1x256x128xf32, #tpu.memory_space<vmem>>, vector<1x256x128xf32>
    %9 = vector.broadcast %1 : vector<1x1x128xf32> to vector<1x256x128xf32>
    %10 = arith.mulf %8, %9 : vector<1x256x128xf32>
    %11 = vector.broadcast %3 : vector<1x1x128xf32> to vector<1x256x128xf32>
    %12 = arith.addf %10, %11 : vector<1x256x128xf32>
    %c0_10 = arith.constant 0 : index
    %c0_11 = arith.constant 0 : index
    %c0_12 = arith.constant 0 : index
    %13 = vector.load %arg4[%c0_10, %c0_11, %c0_12] : memref<1x256x128xf32, #tpu.memory_space<vmem>>, vector<1x256x128xf32>
    %14 = vector.broadcast %5 : vector<1x1x128xf32> to vector<1x256x128xf32>
    %15 = arith.mulf %13, %14 : vector<1x256x128xf32>
    %16 = arith.addf %12, %15 : vector<1x256x128xf32>
    %17 = vector.broadcast %7 : vector<1x1x128xf32> to vector<1x256x128xf32>
    %18 = arith.addf %16, %17 : vector<1x256x128xf32>
    %cst = arith.constant 0.000000e+00 : f32
    %19 = vector.broadcast %cst : f32 to vector<1x256x128xf32>
    %20 = arith.maximumf %18, %19 : vector<1x256x128xf32>
    %c0_13 = arith.constant 0 : index
    %c0_14 = arith.constant 0 : index
    %c0_15 = arith.constant 0 : index
    %21 = vector.load %arg7[%c0_13, %c0_14, %c0_15] : memref<1x256x128xf32, #tpu.memory_space<vmem>>, vector<1x256x128xf32>
    tpu.vector_store %arg7[%c0_13, %c0_14, %c0_15], %20 {strides = array<i32>} : memref<1x256x128xf32, #tpu.memory_space<vmem>>, vector<1x256x128xf32>,
    return
  }
  func.func @transform_0(%arg0: i32) -> (i32, i32, i32) {
    %c0_i32 = arith.constant 0 : i32
    %c0_i32_0 = arith.constant 0 : i32
    %c0_i32_1 = arith.constant 0 : i32
    return %arg0, %c0_i32, %c0_i32_0 : i32, i32, i32
  }
  func.func @transform_1(%arg0: i32) -> (i32, i32) {
    %c0_i32 = arith.constant 0 : i32
    %c0_i32_0 = arith.constant 0 : i32
    %c0_i32_1 = arith.constant 0 : i32
    return %c0_i32, %c0_i32_0 : i32, i32
  }
  func.func @transform_2(%arg0: i32) -> (i32, i32) {
    %c0_i32 = arith.constant 0 : i32
    %c0_i32_0 = arith.constant 0 : i32
    %c0_i32_1 = arith.constant 0 : i32
    return %c0_i32, %c0_i32_0 : i32, i32
  }
  func.func @transform_3(%arg0: i32) -> (i32, i32, i32) {
    %c0_i32 = arith.constant 0 : i32
    %c0_i32_0 = arith.constant 0 : i32
    %c0_i32_1 = arith.constant 0 : i32
    return %arg0, %c0_i32, %c0_i32_0 : i32, i32, i32
  }
  func.func @transform_4(%arg0: i32) -> (i32, i32) {
    %c0_i32 = arith.constant 0 : i32
    %c0_i32_0 = arith.constant 0 : i32
    %c0_i32_1 = arith.constant 0 : i32
    return %c0_i32, %c0_i32_0 : i32, i32
  }
  func.func @transform_5(%arg0: i32) -> (i32, i32) {
    %c0_i32 = arith.constant 0 : i32
    %c0_i32_0 = arith.constant 0 : i32
    %c0_i32_1 = arith.constant 0 : i32
    return %c0_i32, %c0_i32_0 : i32, i32
  }
  func.func @transform_6(%arg0: i32) -> (i32, i32, i32) {
    %c0_i32 = arith.constant 0 : i32
    %c0_i32_0 = arith.constant 0 : i32
    %c0_i32_1 = arith.constant 0 : i32
    return %arg0, %c0_i32, %c0_i32_0 : i32, i32, i32
  }
}

module attributes {stable_mosaic.version = 11 : i64} {
  func.func @_conv_taps_kernel(%arg0: i32, %arg1: memref<1x8x8x128xf32, #tpu.memory_space<vmem>>, %arg2: memref<1x128x128xbf16, #tpu.memory_space<vmem>>, %arg3: memref<1x64x128xf32, #tpu.memory_space<vmem>>, %arg4: memref<1x1x128xf32, #tpu.memory_space<vmem>>, %arg5: memref<1x1x128xf32, #tpu.memory_space<vmem>>) attributes {dimension_semantics = [#tpu.dimension_semantics<parallel>], iteration_bounds = array<i64: 2>, scalar_prefetch = 0 : i64, scratch_operands = 0 : i64, tpu.core_type = #tpu.core_type<tc>, window_params = [{transform_indices = @transform_0, window_bounds = array<i64: 1, 8, 8, 128>}, {pipeline_mode = #tpu.pipeline_mode<synchronous>, transform_indices = @transform_1, window_bounds = array<i64: 1, 128, 128>}, {transform_indices = @transform_2, window_bounds = array<i64: 1, 64, 128>}, {transform_indices = @transform_3, window_bounds = array<i64: 1, 1, 128>}, {transform_indices = @transform_4, window_bounds = array<i64: 1, 1, 128>}]} {
    %cst = arith.constant 0.000000e+00 : f32
    %0 = vector.broadcast %cst : f32 to vector<64x128xf32>
    %c0 = arith.constant 0 : index
    %c0_0 = arith.constant 0 : index
    %c0_1 = arith.constant 0 : index
    %c0_2 = arith.constant 0 : index
    %1 = vector.load %arg1[%c0, %c0_0, %c0_1, %c0_2] : memref<1x8x8x128xf32, #tpu.memory_space<vmem>>, vector<1x8x8x128xf32>
    %2 = vector.shape_cast %1 : vector<1x8x8x128xf32> to vector<8x8x128xf32>
    %3 = vector.shape_cast %2 : vector<8x8x128xf32> to vector<64x128xf32>
    %4 = arith.truncf %3 : vector<64x128xf32> to vector<64x128xbf16>
    %c0_3 = arith.constant 0 : index
    %c0_4 = arith.constant 0 : index
    %c0_5 = arith.constant 0 : index
    %5 = vector.load %arg2[%c0_3, %c0_4, %c0_5] : memref<1x128x128xbf16, #tpu.memory_space<vmem>>, vector<1x128x128xbf16>
    %6 = vector.shape_cast %5 : vector<1x128x128xbf16> to vector<128x128xbf16>
    %cst_6 = arith.constant dense<0.000000e+00> : vector<64x128xf32>
    %7 = tpu.matmul %4, %6, %cst_6 {dimension_numbers = #tpu.dot_dimension_numbers<[1], [0], [0], [1], [0, 0, 1, 1], [], []>} : vector<64x128xbf16>, vector<128x128xbf16>, vector<64x128xf32> -> vector<64x128xf32>
    %8 = arith.addf %0, %7 : vector<64x128xf32>
    %9 = vector.shape_cast %8 : vector<64x128xf32> to vector<1x64x128xf32>
    %c0_7 = arith.constant 0 : index
    %c0_8 = arith.constant 0 : index
    %c0_9 = arith.constant 0 : index
    %10 = vector.load %arg3[%c0_7, %c0_8, %c0_9] : memref<1x64x128xf32, #tpu.memory_space<vmem>>, vector<1x64x128xf32>
    tpu.vector_store %arg3[%c0_7, %c0_8, %c0_9], %9 {strides = array<i32>} : memref<1x64x128xf32, #tpu.memory_space<vmem>>, vector<1x64x128xf32>,
    %cst_10 = arith.constant dense<0.000000e+00> : vector<128xf32>
    %11 = vector.multi_reduction <add>, %8, %cst_10 [0] : vector<64x128xf32> to vector<128xf32>
    %12 = vector.shape_cast %11 : vector<128xf32> to vector<1x128xf32>
    %13 = vector.shape_cast %12 : vector<1x128xf32> to vector<1x1x128xf32>
    %c0_11 = arith.constant 0 : index
    %c0_12 = arith.constant 0 : index
    %c0_13 = arith.constant 0 : index
    %14 = vector.load %arg4[%c0_11, %c0_12, %c0_13] : memref<1x1x128xf32, #tpu.memory_space<vmem>>, vector<1x1x128xf32>
    tpu.vector_store %arg4[%c0_11, %c0_12, %c0_13], %13 {strides = array<i32>} : memref<1x1x128xf32, #tpu.memory_space<vmem>>, vector<1x1x128xf32>,
    %15 = arith.mulf %8, %8 : vector<64x128xf32>
    %cst_14 = arith.constant dense<0.000000e+00> : vector<128xf32>
    %16 = vector.multi_reduction <add>, %15, %cst_14 [0] : vector<64x128xf32> to vector<128xf32>
    %17 = vector.shape_cast %16 : vector<128xf32> to vector<1x128xf32>
    %18 = vector.shape_cast %17 : vector<1x128xf32> to vector<1x1x128xf32>
    %c0_15 = arith.constant 0 : index
    %c0_16 = arith.constant 0 : index
    %c0_17 = arith.constant 0 : index
    %19 = vector.load %arg5[%c0_15, %c0_16, %c0_17] : memref<1x1x128xf32, #tpu.memory_space<vmem>>, vector<1x1x128xf32>
    tpu.vector_store %arg5[%c0_15, %c0_16, %c0_17], %18 {strides = array<i32>} : memref<1x1x128xf32, #tpu.memory_space<vmem>>, vector<1x1x128xf32>,
    return
  }
  func.func @transform_0(%arg0: i32) -> (i32, i32, i32, i32) {
    %c0_i32 = arith.constant 0 : i32
    %c0_i32_0 = arith.constant 0 : i32
    %c0_i32_1 = arith.constant 0 : i32
    %c0_i32_2 = arith.constant 0 : i32
    return %arg0, %c0_i32, %c0_i32_0, %c0_i32_1 : i32, i32, i32, i32
  }
  func.func @transform_1(%arg0: i32) -> (i32, i32, i32) {
    %c0_i32 = arith.constant 0 : i32
    %c0_i32_0 = arith.constant 0 : i32
    %c0_i32_1 = arith.constant 0 : i32
    %c0_i32_2 = arith.constant 0 : i32
    return %c0_i32, %c0_i32_0, %c0_i32_1 : i32, i32, i32
  }
  func.func @transform_2(%arg0: i32) -> (i32, i32, i32) {
    %c0_i32 = arith.constant 0 : i32
    %c0_i32_0 = arith.constant 0 : i32
    %c0_i32_1 = arith.constant 0 : i32
    return %arg0, %c0_i32, %c0_i32_0 : i32, i32, i32
  }
  func.func @transform_3(%arg0: i32) -> (i32, i32, i32) {
    %c0_i32 = arith.constant 0 : i32
    %c0_i32_0 = arith.constant 0 : i32
    %c0_i32_1 = arith.constant 0 : i32
    return %arg0, %c0_i32, %c0_i32_0 : i32, i32, i32
  }
  func.func @transform_4(%arg0: i32) -> (i32, i32, i32) {
    %c0_i32 = arith.constant 0 : i32
    %c0_i32_0 = arith.constant 0 : i32
    %c0_i32_1 = arith.constant 0 : i32
    return %arg0, %c0_i32, %c0_i32_0 : i32, i32, i32
  }
}

module attributes {stable_mosaic.version = 11 : i64} {
  func.func @_conv_taps_kernel(%arg0: i32, %arg1: memref<1x9x9x512xf32, #tpu.memory_space<vmem>>, %arg2: memref<4x512x128xbf16, #tpu.memory_space<vmem>>, %arg3: memref<1x64x128xf32, #tpu.memory_space<vmem>>, %arg4: memref<1x1x128xf32, #tpu.memory_space<vmem>>, %arg5: memref<1x1x128xf32, #tpu.memory_space<vmem>>) attributes {dimension_semantics = [#tpu.dimension_semantics<parallel>], iteration_bounds = array<i64: 2>, scalar_prefetch = 0 : i64, scratch_operands = 0 : i64, tpu.core_type = #tpu.core_type<tc>, window_params = [{transform_indices = @transform_0, window_bounds = array<i64: 1, 9, 9, 512>}, {pipeline_mode = #tpu.pipeline_mode<synchronous>, transform_indices = @transform_1, window_bounds = array<i64: 4, 512, 128>}, {transform_indices = @transform_2, window_bounds = array<i64: 1, 64, 128>}, {transform_indices = @transform_3, window_bounds = array<i64: 1, 1, 128>}, {transform_indices = @transform_4, window_bounds = array<i64: 1, 1, 128>}]} {
    %cst = arith.constant 0.000000e+00 : f32
    %0 = vector.broadcast %cst : f32 to vector<64x128xf32>
    %c0 = arith.constant 0 : index
    %c0_0 = arith.constant 0 : index
    %c0_1 = arith.constant 0 : index
    %c0_2 = arith.constant 0 : index
    %1 = vector.load %arg1[%c0, %c0_0, %c0_1, %c0_2] : memref<1x9x9x512xf32, #tpu.memory_space<vmem>>, vector<1x8x8x512xf32>
    %2 = vector.shape_cast %1 : vector<1x8x8x512xf32> to vector<8x8x512xf32>
    %3 = vector.shape_cast %2 : vector<8x8x512xf32> to vector<64x512xf32>
    %4 = arith.truncf %3 : vector<64x512xf32> to vector<64x512xbf16>
    %c0_3 = arith.constant 0 : index
    %c0_4 = arith.constant 0 : index
    %c0_5 = arith.constant 0 : index
    %5 = vector.load %arg2[%c0_3, %c0_4, %c0_5] : memref<4x512x128xbf16, #tpu.memory_space<vmem>>, vector<1x512x128xbf16>
    %6 = vector.shape_cast %5 : vector<1x512x128xbf16> to vector<512x128xbf16>
    %cst_6 = arith.constant dense<0.000000e+00> : vector<64x128xf32>
    %7 = tpu.matmul %4, %6, %cst_6 {dimension_numbers = #tpu.dot_dimension_numbers<[1], [0], [0], [1], [0, 0, 1, 1], [], []>} : vector<64x512xbf16>, vector<512x128xbf16>, vector<64x128xf32> -> vector<64x128xf32>
    %8 = arith.addf %0, %7 : vector<64x128xf32>
    %c0_7 = arith.constant 0 : index
    %c0_8 = arith.constant 0 : index
    %c1 = arith.constant 1 : index
    %c0_9 = arith.constant 0 : index
    %9 = vector.load %arg1[%c0_7, %c0_8, %c1, %c0_9] : memref<1x9x9x512xf32, #tpu.memory_space<vmem>>, vector<1x8x8x512xf32>
    %10 = vector.shape_cast %9 : vector<1x8x8x512xf32> to vector<8x8x512xf32>
    %11 = vector.shape_cast %10 : vector<8x8x512xf32> to vector<64x512xf32>
    %12 = arith.truncf %11 : vector<64x512xf32> to vector<64x512xbf16>
    %c1_10 = arith.constant 1 : index
    %c0_11 = arith.constant 0 : index
    %c0_12 = arith.constant 0 : index
    %13 = vector.load %arg2[%c1_10, %c0_11, %c0_12] : memref<4x512x128xbf16, #tpu.memory_space<vmem>>, vector<1x512x128xbf16>
    %14 = vector.shape_cast %13 : vector<1x512x128xbf16> to vector<512x128xbf16>
    %cst_13 = arith.constant dense<0.000000e+00> : vector<64x128xf32>
    %15 = tpu.matmul %12, %14, %cst_13 {dimension_numbers = #tpu.dot_dimension_numbers<[1], [0], [0], [1], [0, 0, 1, 1], [], []>} : vector<64x512xbf16>, vector<512x128xbf16>, vector<64x128xf32> -> vector<64x128xf32>
    %16 = arith.addf %8, %15 : vector<64x128xf32>
    %c0_14 = arith.constant 0 : index
    %c1_15 = arith.constant 1 : index
    %c0_16 = arith.constant 0 : index
    %c0_17 = arith.constant 0 : index
    %17 = vector.load %arg1[%c0_14, %c1_15, %c0_16, %c0_17] : memref<1x9x9x512xf32, #tpu.memory_space<vmem>>, vector<1x8x8x512xf32>
    %18 = vector.shape_cast %17 : vector<1x8x8x512xf32> to vector<8x8x512xf32>
    %19 = vector.shape_cast %18 : vector<8x8x512xf32> to vector<64x512xf32>
    %20 = arith.truncf %19 : vector<64x512xf32> to vector<64x512xbf16>
    %c2 = arith.constant 2 : index
    %c0_18 = arith.constant 0 : index
    %c0_19 = arith.constant 0 : index
    %21 = vector.load %arg2[%c2, %c0_18, %c0_19] : memref<4x512x128xbf16, #tpu.memory_space<vmem>>, vector<1x512x128xbf16>
    %22 = vector.shape_cast %21 : vector<1x512x128xbf16> to vector<512x128xbf16>
    %cst_20 = arith.constant dense<0.000000e+00> : vector<64x128xf32>
    %23 = tpu.matmul %20, %22, %cst_20 {dimension_numbers = #tpu.dot_dimension_numbers<[1], [0], [0], [1], [0, 0, 1, 1], [], []>} : vector<64x512xbf16>, vector<512x128xbf16>, vector<64x128xf32> -> vector<64x128xf32>
    %24 = arith.addf %16, %23 : vector<64x128xf32>
    %c0_21 = arith.constant 0 : index
    %c1_22 = arith.constant 1 : index
    %c1_23 = arith.constant 1 : index
    %c0_24 = arith.constant 0 : index
    %25 = vector.load %arg1[%c0_21, %c1_22, %c1_23, %c0_24] : memref<1x9x9x512xf32, #tpu.memory_space<vmem>>, vector<1x8x8x512xf32>
    %26 = vector.shape_cast %25 : vector<1x8x8x512xf32> to vector<8x8x512xf32>
    %27 = vector.shape_cast %26 : vector<8x8x512xf32> to vector<64x512xf32>
    %28 = arith.truncf %27 : vector<64x512xf32> to vector<64x512xbf16>
    %c3 = arith.constant 3 : index
    %c0_25 = arith.constant 0 : index
    %c0_26 = arith.constant 0 : index
    %29 = vector.load %arg2[%c3, %c0_25, %c0_26] : memref<4x512x128xbf16, #tpu.memory_space<vmem>>, vector<1x512x128xbf16>
    %30 = vector.shape_cast %29 : vector<1x512x128xbf16> to vector<512x128xbf16>
    %cst_27 = arith.constant dense<0.000000e+00> : vector<64x128xf32>
    %31 = tpu.matmul %28, %30, %cst_27 {dimension_numbers = #tpu.dot_dimension_numbers<[1], [0], [0], [1], [0, 0, 1, 1], [], []>} : vector<64x512xbf16>, vector<512x128xbf16>, vector<64x128xf32> -> vector<64x128xf32>
    %32 = arith.addf %24, %31 : vector<64x128xf32>
    %33 = vector.shape_cast %32 : vector<64x128xf32> to vector<1x64x128xf32>
    %c0_28 = arith.constant 0 : index
    %c0_29 = arith.constant 0 : index
    %c0_30 = arith.constant 0 : index
    %34 = vector.load %arg3[%c0_28, %c0_29, %c0_30] : memref<1x64x128xf32, #tpu.memory_space<vmem>>, vector<1x64x128xf32>
    tpu.vector_store %arg3[%c0_28, %c0_29, %c0_30], %33 {strides = array<i32>} : memref<1x64x128xf32, #tpu.memory_space<vmem>>, vector<1x64x128xf32>,
    %cst_31 = arith.constant dense<0.000000e+00> : vector<128xf32>
    %35 = vector.multi_reduction <add>, %32, %cst_31 [0] : vector<64x128xf32> to vector<128xf32>
    %36 = vector.shape_cast %35 : vector<128xf32> to vector<1x128xf32>
    %37 = vector.shape_cast %36 : vector<1x128xf32> to vector<1x1x128xf32>
    %c0_32 = arith.constant 0 : index
    %c0_33 = arith.constant 0 : index
    %c0_34 = arith.constant 0 : index
    %38 = vector.load %arg4[%c0_32, %c0_33, %c0_34] : memref<1x1x128xf32, #tpu.memory_space<vmem>>, vector<1x1x128xf32>
    tpu.vector_store %arg4[%c0_32, %c0_33, %c0_34], %37 {strides = array<i32>} : memref<1x1x128xf32, #tpu.memory_space<vmem>>, vector<1x1x128xf32>,
    %39 = arith.mulf %32, %32 : vector<64x128xf32>
    %cst_35 = arith.constant dense<0.000000e+00> : vector<128xf32>
    %40 = vector.multi_reduction <add>, %39, %cst_35 [0] : vector<64x128xf32> to vector<128xf32>
    %41 = vector.shape_cast %40 : vector<128xf32> to vector<1x128xf32>
    %42 = vector.shape_cast %41 : vector<1x128xf32> to vector<1x1x128xf32>
    %c0_36 = arith.constant 0 : index
    %c0_37 = arith.constant 0 : index
    %c0_38 = arith.constant 0 : index
    %43 = vector.load %arg5[%c0_36, %c0_37, %c0_38] : memref<1x1x128xf32, #tpu.memory_space<vmem>>, vector<1x1x128xf32>
    tpu.vector_store %arg5[%c0_36, %c0_37, %c0_38], %42 {strides = array<i32>} : memref<1x1x128xf32, #tpu.memory_space<vmem>>, vector<1x1x128xf32>,
    return
  }
  func.func @transform_0(%arg0: i32) -> (i32, i32, i32, i32) {
    %c0_i32 = arith.constant 0 : i32
    %c0_i32_0 = arith.constant 0 : i32
    %c0_i32_1 = arith.constant 0 : i32
    %c0_i32_2 = arith.constant 0 : i32
    return %arg0, %c0_i32, %c0_i32_0, %c0_i32_1 : i32, i32, i32, i32
  }
  func.func @transform_1(%arg0: i32) -> (i32, i32, i32) {
    %c0_i32 = arith.constant 0 : i32
    %c0_i32_0 = arith.constant 0 : i32
    %c0_i32_1 = arith.constant 0 : i32
    %c0_i32_2 = arith.constant 0 : i32
    return %c0_i32, %c0_i32_0, %c0_i32_1 : i32, i32, i32
  }
  func.func @transform_2(%arg0: i32) -> (i32, i32, i32) {
    %c0_i32 = arith.constant 0 : i32
    %c0_i32_0 = arith.constant 0 : i32
    %c0_i32_1 = arith.constant 0 : i32
    return %arg0, %c0_i32, %c0_i32_0 : i32, i32, i32
  }
  func.func @transform_3(%arg0: i32) -> (i32, i32, i32) {
    %c0_i32 = arith.constant 0 : i32
    %c0_i32_0 = arith.constant 0 : i32
    %c0_i32_1 = arith.constant 0 : i32
    return %arg0, %c0_i32, %c0_i32_0 : i32, i32, i32
  }
  func.func @transform_4(%arg0: i32) -> (i32, i32, i32) {
    %c0_i32 = arith.constant 0 : i32
    %c0_i32_0 = arith.constant 0 : i32
    %c0_i32_1 = arith.constant 0 : i32
    return %arg0, %c0_i32, %c0_i32_0 : i32, i32, i32
  }
}

module attributes {stable_mosaic.version = 11 : i64} {
  func.func @_bn_relu_kernel(%arg0: i32, %arg1: memref<1x64x128xf32, #tpu.memory_space<vmem>>, %arg2: memref<1x128xf32, #tpu.memory_space<vmem>>, %arg3: memref<1x128xf32, #tpu.memory_space<vmem>>, %arg4: memref<1x64x128xf32, #tpu.memory_space<vmem>>) attributes {dimension_semantics = [#tpu.dimension_semantics<parallel>], iteration_bounds = array<i64: 2>, scalar_prefetch = 0 : i64, scratch_operands = 0 : i64, tpu.core_type = #tpu.core_type<tc>, window_params = [{transform_indices = @transform_0, window_bounds = array<i64: 1, 64, 128>}, {pipeline_mode = #tpu.pipeline_mode<synchronous>, transform_indices = @transform_1, window_bounds = array<i64: 1, 128>}, {pipeline_mode = #tpu.pipeline_mode<synchronous>, transform_indices = @transform_2, window_bounds = array<i64: 1, 128>}, {transform_indices = @transform_3, window_bounds = array<i64: 1, 64, 128>}]} {
    %c0 = arith.constant 0 : index
    %c0_0 = arith.constant 0 : index
    %0 = vector.load %arg2[%c0, %c0_0] : memref<1x128xf32, #tpu.memory_space<vmem>>, vector<1x128xf32>
    %1 = vector.shape_cast %0 : vector<1x128xf32> to vector<1x1x128xf32>
    %c0_1 = arith.constant 0 : index
    %c0_2 = arith.constant 0 : index
    %2 = vector.load %arg3[%c0_1, %c0_2] : memref<1x128xf32, #tpu.memory_space<vmem>>, vector<1x128xf32>
    %3 = vector.shape_cast %2 : vector<1x128xf32> to vector<1x1x128xf32>
    %c0_3 = arith.constant 0 : index
    %c0_4 = arith.constant 0 : index
    %c0_5 = arith.constant 0 : index
    %4 = vector.load %arg1[%c0_3, %c0_4, %c0_5] : memref<1x64x128xf32, #tpu.memory_space<vmem>>, vector<1x64x128xf32>
    %5 = vector.broadcast %1 : vector<1x1x128xf32> to vector<1x64x128xf32>
    %6 = arith.mulf %4, %5 : vector<1x64x128xf32>
    %7 = vector.broadcast %3 : vector<1x1x128xf32> to vector<1x64x128xf32>
    %8 = arith.addf %6, %7 : vector<1x64x128xf32>
    %cst = arith.constant 0.000000e+00 : f32
    %9 = vector.broadcast %cst : f32 to vector<1x64x128xf32>
    %10 = arith.maximumf %8, %9 : vector<1x64x128xf32>
    %c0_6 = arith.constant 0 : index
    %c0_7 = arith.constant 0 : index
    %c0_8 = arith.constant 0 : index
    %11 = vector.load %arg4[%c0_6, %c0_7, %c0_8] : memref<1x64x128xf32, #tpu.memory_space<vmem>>, vector<1x64x128xf32>
    tpu.vector_store %arg4[%c0_6, %c0_7, %c0_8], %10 {strides = array<i32>} : memref<1x64x128xf32, #tpu.memory_space<vmem>>, vector<1x64x128xf32>,
    return
  }
  func.func @transform_0(%arg0: i32) -> (i32, i32, i32) {
    %c0_i32 = arith.constant 0 : i32
    %c0_i32_0 = arith.constant 0 : i32
    %c0_i32_1 = arith.constant 0 : i32
    return %arg0, %c0_i32, %c0_i32_0 : i32, i32, i32
  }
  func.func @transform_1(%arg0: i32) -> (i32, i32) {
    %c0_i32 = arith.constant 0 : i32
    %c0_i32_0 = arith.constant 0 : i32
    %c0_i32_1 = arith.constant 0 : i32
    return %c0_i32, %c0_i32_0 : i32, i32
  }
  func.func @transform_2(%arg0: i32) -> (i32, i32) {
    %c0_i32 = arith.constant 0 : i32
    %c0_i32_0 = arith.constant 0 : i32
    %c0_i32_1 = arith.constant 0 : i32
    return %c0_i32, %c0_i32_0 : i32, i32
  }
  func.func @transform_3(%arg0: i32) -> (i32, i32, i32) {
    %c0_i32 = arith.constant 0 : i32
    %c0_i32_0 = arith.constant 0 : i32
    %c0_i32_1 = arith.constant 0 : i32
    return %arg0, %c0_i32, %c0_i32_0 : i32, i32, i32
  }
}

module attributes {stable_mosaic.version = 11 : i64} {
  func.func @_conv_taps_kernel(%arg0: i32, %arg1: memref<1x10x10x128xf32, #tpu.memory_space<vmem>>, %arg2: memref<9x128x128xbf16, #tpu.memory_space<vmem>>, %arg3: memref<1x64x128xf32, #tpu.memory_space<vmem>>, %arg4: memref<1x1x128xf32, #tpu.memory_space<vmem>>, %arg5: memref<1x1x128xf32, #tpu.memory_space<vmem>>) attributes {dimension_semantics = [#tpu.dimension_semantics<parallel>], iteration_bounds = array<i64: 2>, scalar_prefetch = 0 : i64, scratch_operands = 0 : i64, tpu.core_type = #tpu.core_type<tc>, window_params = [{transform_indices = @transform_0, window_bounds = array<i64: 1, 10, 10, 128>}, {pipeline_mode = #tpu.pipeline_mode<synchronous>, transform_indices = @transform_1, window_bounds = array<i64: 9, 128, 128>}, {transform_indices = @transform_2, window_bounds = array<i64: 1, 64, 128>}, {transform_indices = @transform_3, window_bounds = array<i64: 1, 1, 128>}, {transform_indices = @transform_4, window_bounds = array<i64: 1, 1, 128>}]} {
    %cst = arith.constant 0.000000e+00 : f32
    %0 = vector.broadcast %cst : f32 to vector<64x128xf32>
    %c0 = arith.constant 0 : index
    %c0_0 = arith.constant 0 : index
    %c0_1 = arith.constant 0 : index
    %c0_2 = arith.constant 0 : index
    %1 = vector.load %arg1[%c0, %c0_0, %c0_1, %c0_2] : memref<1x10x10x128xf32, #tpu.memory_space<vmem>>, vector<1x8x8x128xf32>
    %2 = vector.shape_cast %1 : vector<1x8x8x128xf32> to vector<8x8x128xf32>
    %3 = vector.shape_cast %2 : vector<8x8x128xf32> to vector<64x128xf32>
    %4 = arith.truncf %3 : vector<64x128xf32> to vector<64x128xbf16>
    %c0_3 = arith.constant 0 : index
    %c0_4 = arith.constant 0 : index
    %c0_5 = arith.constant 0 : index
    %5 = vector.load %arg2[%c0_3, %c0_4, %c0_5] : memref<9x128x128xbf16, #tpu.memory_space<vmem>>, vector<1x128x128xbf16>
    %6 = vector.shape_cast %5 : vector<1x128x128xbf16> to vector<128x128xbf16>
    %cst_6 = arith.constant dense<0.000000e+00> : vector<64x128xf32>
    %7 = tpu.matmul %4, %6, %cst_6 {dimension_numbers = #tpu.dot_dimension_numbers<[1], [0], [0], [1], [0, 0, 1, 1], [], []>} : vector<64x128xbf16>, vector<128x128xbf16>, vector<64x128xf32> -> vector<64x128xf32>
    %8 = arith.addf %0, %7 : vector<64x128xf32>
    %c0_7 = arith.constant 0 : index
    %c0_8 = arith.constant 0 : index
    %c1 = arith.constant 1 : index
    %c0_9 = arith.constant 0 : index
    %9 = vector.load %arg1[%c0_7, %c0_8, %c1, %c0_9] : memref<1x10x10x128xf32, #tpu.memory_space<vmem>>, vector<1x8x8x128xf32>
    %10 = vector.shape_cast %9 : vector<1x8x8x128xf32> to vector<8x8x128xf32>
    %11 = vector.shape_cast %10 : vector<8x8x128xf32> to vector<64x128xf32>
    %12 = arith.truncf %11 : vector<64x128xf32> to vector<64x128xbf16>
    %c1_10 = arith.constant 1 : index
    %c0_11 = arith.constant 0 : index
    %c0_12 = arith.constant 0 : index
    %13 = vector.load %arg2[%c1_10, %c0_11, %c0_12] : memref<9x128x128xbf16, #tpu.memory_space<vmem>>, vector<1x128x128xbf16>
    %14 = vector.shape_cast %13 : vector<1x128x128xbf16> to vector<128x128xbf16>
    %cst_13 = arith.constant dense<0.000000e+00> : vector<64x128xf32>
    %15 = tpu.matmul %12, %14, %cst_13 {dimension_numbers = #tpu.dot_dimension_numbers<[1], [0], [0], [1], [0, 0, 1, 1], [], []>} : vector<64x128xbf16>, vector<128x128xbf16>, vector<64x128xf32> -> vector<64x128xf32>
    %16 = arith.addf %8, %15 : vector<64x128xf32>
    %c0_14 = arith.constant 0 : index
    %c0_15 = arith.constant 0 : index
    %c2 = arith.constant 2 : index
    %c0_16 = arith.constant 0 : index
    %17 = vector.load %arg1[%c0_14, %c0_15, %c2, %c0_16] : memref<1x10x10x128xf32, #tpu.memory_space<vmem>>, vector<1x8x8x128xf32>
    %18 = vector.shape_cast %17 : vector<1x8x8x128xf32> to vector<8x8x128xf32>
    %19 = vector.shape_cast %18 : vector<8x8x128xf32> to vector<64x128xf32>
    %20 = arith.truncf %19 : vector<64x128xf32> to vector<64x128xbf16>
    %c2_17 = arith.constant 2 : index
    %c0_18 = arith.constant 0 : index
    %c0_19 = arith.constant 0 : index
    %21 = vector.load %arg2[%c2_17, %c0_18, %c0_19] : memref<9x128x128xbf16, #tpu.memory_space<vmem>>, vector<1x128x128xbf16>
    %22 = vector.shape_cast %21 : vector<1x128x128xbf16> to vector<128x128xbf16>
    %cst_20 = arith.constant dense<0.000000e+00> : vector<64x128xf32>
    %23 = tpu.matmul %20, %22, %cst_20 {dimension_numbers = #tpu.dot_dimension_numbers<[1], [0], [0], [1], [0, 0, 1, 1], [], []>} : vector<64x128xbf16>, vector<128x128xbf16>, vector<64x128xf32> -> vector<64x128xf32>
    %24 = arith.addf %16, %23 : vector<64x128xf32>
    %c0_21 = arith.constant 0 : index
    %c1_22 = arith.constant 1 : index
    %c0_23 = arith.constant 0 : index
    %c0_24 = arith.constant 0 : index
    %25 = vector.load %arg1[%c0_21, %c1_22, %c0_23, %c0_24] : memref<1x10x10x128xf32, #tpu.memory_space<vmem>>, vector<1x8x8x128xf32>
    %26 = vector.shape_cast %25 : vector<1x8x8x128xf32> to vector<8x8x128xf32>
    %27 = vector.shape_cast %26 : vector<8x8x128xf32> to vector<64x128xf32>
    %28 = arith.truncf %27 : vector<64x128xf32> to vector<64x128xbf16>
    %c3 = arith.constant 3 : index
    %c0_25 = arith.constant 0 : index
    %c0_26 = arith.constant 0 : index
    %29 = vector.load %arg2[%c3, %c0_25, %c0_26] : memref<9x128x128xbf16, #tpu.memory_space<vmem>>, vector<1x128x128xbf16>
    %30 = vector.shape_cast %29 : vector<1x128x128xbf16> to vector<128x128xbf16>
    %cst_27 = arith.constant dense<0.000000e+00> : vector<64x128xf32>
    %31 = tpu.matmul %28, %30, %cst_27 {dimension_numbers = #tpu.dot_dimension_numbers<[1], [0], [0], [1], [0, 0, 1, 1], [], []>} : vector<64x128xbf16>, vector<128x128xbf16>, vector<64x128xf32> -> vector<64x128xf32>
    %32 = arith.addf %24, %31 : vector<64x128xf32>
    %c0_28 = arith.constant 0 : index
    %c1_29 = arith.constant 1 : index
    %c1_30 = arith.constant 1 : index
    %c0_31 = arith.constant 0 : index
    %33 = vector.load %arg1[%c0_28, %c1_29, %c1_30, %c0_31] : memref<1x10x10x128xf32, #tpu.memory_space<vmem>>, vector<1x8x8x128xf32>
    %34 = vector.shape_cast %33 : vector<1x8x8x128xf32> to vector<8x8x128xf32>
    %35 = vector.shape_cast %34 : vector<8x8x128xf32> to vector<64x128xf32>
    %36 = arith.truncf %35 : vector<64x128xf32> to vector<64x128xbf16>
    %c4 = arith.constant 4 : index
    %c0_32 = arith.constant 0 : index
    %c0_33 = arith.constant 0 : index
    %37 = vector.load %arg2[%c4, %c0_32, %c0_33] : memref<9x128x128xbf16, #tpu.memory_space<vmem>>, vector<1x128x128xbf16>
    %38 = vector.shape_cast %37 : vector<1x128x128xbf16> to vector<128x128xbf16>
    %cst_34 = arith.constant dense<0.000000e+00> : vector<64x128xf32>
    %39 = tpu.matmul %36, %38, %cst_34 {dimension_numbers = #tpu.dot_dimension_numbers<[1], [0], [0], [1], [0, 0, 1, 1], [], []>} : vector<64x128xbf16>, vector<128x128xbf16>, vector<64x128xf32> -> vector<64x128xf32>
    %40 = arith.addf %32, %39 : vector<64x128xf32>
    %c0_35 = arith.constant 0 : index
    %c1_36 = arith.constant 1 : index
    %c2_37 = arith.constant 2 : index
    %c0_38 = arith.constant 0 : index
    %41 = vector.load %arg1[%c0_35, %c1_36, %c2_37, %c0_38] : memref<1x10x10x128xf32, #tpu.memory_space<vmem>>, vector<1x8x8x128xf32>
    %42 = vector.shape_cast %41 : vector<1x8x8x128xf32> to vector<8x8x128xf32>
    %43 = vector.shape_cast %42 : vector<8x8x128xf32> to vector<64x128xf32>
    %44 = arith.truncf %43 : vector<64x128xf32> to vector<64x128xbf16>
    %c5 = arith.constant 5 : index
    %c0_39 = arith.constant 0 : index
    %c0_40 = arith.constant 0 : index
    %45 = vector.load %arg2[%c5, %c0_39, %c0_40] : memref<9x128x128xbf16, #tpu.memory_space<vmem>>, vector<1x128x128xbf16>
    %46 = vector.shape_cast %45 : vector<1x128x128xbf16> to vector<128x128xbf16>
    %cst_41 = arith.constant dense<0.000000e+00> : vector<64x128xf32>
    %47 = tpu.matmul %44, %46, %cst_41 {dimension_numbers = #tpu.dot_dimension_numbers<[1], [0], [0], [1], [0, 0, 1, 1], [], []>} : vector<64x128xbf16>, vector<128x128xbf16>, vector<64x128xf32> -> vector<64x128xf32>
    %48 = arith.addf %40, %47 : vector<64x128xf32>
    %c0_42 = arith.constant 0 : index
    %c2_43 = arith.constant 2 : index
    %c0_44 = arith.constant 0 : index
    %c0_45 = arith.constant 0 : index
    %49 = vector.load %arg1[%c0_42, %c2_43, %c0_44, %c0_45] : memref<1x10x10x128xf32, #tpu.memory_space<vmem>>, vector<1x8x8x128xf32>
    %50 = vector.shape_cast %49 : vector<1x8x8x128xf32> to vector<8x8x128xf32>
    %51 = vector.shape_cast %50 : vector<8x8x128xf32> to vector<64x128xf32>
    %52 = arith.truncf %51 : vector<64x128xf32> to vector<64x128xbf16>
    %c6 = arith.constant 6 : index
    %c0_46 = arith.constant 0 : index
    %c0_47 = arith.constant 0 : index
    %53 = vector.load %arg2[%c6, %c0_46, %c0_47] : memref<9x128x128xbf16, #tpu.memory_space<vmem>>, vector<1x128x128xbf16>
    %54 = vector.shape_cast %53 : vector<1x128x128xbf16> to vector<128x128xbf16>
    %cst_48 = arith.constant dense<0.000000e+00> : vector<64x128xf32>
    %55 = tpu.matmul %52, %54, %cst_48 {dimension_numbers = #tpu.dot_dimension_numbers<[1], [0], [0], [1], [0, 0, 1, 1], [], []>} : vector<64x128xbf16>, vector<128x128xbf16>, vector<64x128xf32> -> vector<64x128xf32>
    %56 = arith.addf %48, %55 : vector<64x128xf32>
    %c0_49 = arith.constant 0 : index
    %c2_50 = arith.constant 2 : index
    %c1_51 = arith.constant 1 : index
    %c0_52 = arith.constant 0 : index
    %57 = vector.load %arg1[%c0_49, %c2_50, %c1_51, %c0_52] : memref<1x10x10x128xf32, #tpu.memory_space<vmem>>, vector<1x8x8x128xf32>
    %58 = vector.shape_cast %57 : vector<1x8x8x128xf32> to vector<8x8x128xf32>
    %59 = vector.shape_cast %58 : vector<8x8x128xf32> to vector<64x128xf32>
    %60 = arith.truncf %59 : vector<64x128xf32> to vector<64x128xbf16>
    %c7 = arith.constant 7 : index
    %c0_53 = arith.constant 0 : index
    %c0_54 = arith.constant 0 : index
    %61 = vector.load %arg2[%c7, %c0_53, %c0_54] : memref<9x128x128xbf16, #tpu.memory_space<vmem>>, vector<1x128x128xbf16>
    %62 = vector.shape_cast %61 : vector<1x128x128xbf16> to vector<128x128xbf16>
    %cst_55 = arith.constant dense<0.000000e+00> : vector<64x128xf32>
    %63 = tpu.matmul %60, %62, %cst_55 {dimension_numbers = #tpu.dot_dimension_numbers<[1], [0], [0], [1], [0, 0, 1, 1], [], []>} : vector<64x128xbf16>, vector<128x128xbf16>, vector<64x128xf32> -> vector<64x128xf32>
    %64 = arith.addf %56, %63 : vector<64x128xf32>
    %c0_56 = arith.constant 0 : index
    %c2_57 = arith.constant 2 : index
    %c2_58 = arith.constant 2 : index
    %c0_59 = arith.constant 0 : index
    %65 = vector.load %arg1[%c0_56, %c2_57, %c2_58, %c0_59] : memref<1x10x10x128xf32, #tpu.memory_space<vmem>>, vector<1x8x8x128xf32>
    %66 = vector.shape_cast %65 : vector<1x8x8x128xf32> to vector<8x8x128xf32>
    %67 = vector.shape_cast %66 : vector<8x8x128xf32> to vector<64x128xf32>
    %68 = arith.truncf %67 : vector<64x128xf32> to vector<64x128xbf16>
    %c8 = arith.constant 8 : index
    %c0_60 = arith.constant 0 : index
    %c0_61 = arith.constant 0 : index
    %69 = vector.load %arg2[%c8, %c0_60, %c0_61] : memref<9x128x128xbf16, #tpu.memory_space<vmem>>, vector<1x128x128xbf16>
    %70 = vector.shape_cast %69 : vector<1x128x128xbf16> to vector<128x128xbf16>
    %cst_62 = arith.constant dense<0.000000e+00> : vector<64x128xf32>
    %71 = tpu.matmul %68, %70, %cst_62 {dimension_numbers = #tpu.dot_dimension_numbers<[1], [0], [0], [1], [0, 0, 1, 1], [], []>} : vector<64x128xbf16>, vector<128x128xbf16>, vector<64x128xf32> -> vector<64x128xf32>
    %72 = arith.addf %64, %71 : vector<64x128xf32>
    %73 = vector.shape_cast %72 : vector<64x128xf32> to vector<1x64x128xf32>
    %c0_63 = arith.constant 0 : index
    %c0_64 = arith.constant 0 : index
    %c0_65 = arith.constant 0 : index
    %74 = vector.load %arg3[%c0_63, %c0_64, %c0_65] : memref<1x64x128xf32, #tpu.memory_space<vmem>>, vector<1x64x128xf32>
    tpu.vector_store %arg3[%c0_63, %c0_64, %c0_65], %73 {strides = array<i32>} : memref<1x64x128xf32, #tpu.memory_space<vmem>>, vector<1x64x128xf32>,
    %cst_66 = arith.constant dense<0.000000e+00> : vector<128xf32>
    %75 = vector.multi_reduction <add>, %72, %cst_66 [0] : vector<64x128xf32> to vector<128xf32>
    %76 = vector.shape_cast %75 : vector<128xf32> to vector<1x128xf32>
    %77 = vector.shape_cast %76 : vector<1x128xf32> to vector<1x1x128xf32>
    %c0_67 = arith.constant 0 : index
    %c0_68 = arith.constant 0 : index
    %c0_69 = arith.constant 0 : index
    %78 = vector.load %arg4[%c0_67, %c0_68, %c0_69] : memref<1x1x128xf32, #tpu.memory_space<vmem>>, vector<1x1x128xf32>
    tpu.vector_store %arg4[%c0_67, %c0_68, %c0_69], %77 {strides = array<i32>} : memref<1x1x128xf32, #tpu.memory_space<vmem>>, vector<1x1x128xf32>,
    %79 = arith.mulf %72, %72 : vector<64x128xf32>
    %cst_70 = arith.constant dense<0.000000e+00> : vector<128xf32>
    %80 = vector.multi_reduction <add>, %79, %cst_70 [0] : vector<64x128xf32> to vector<128xf32>
    %81 = vector.shape_cast %80 : vector<128xf32> to vector<1x128xf32>
    %82 = vector.shape_cast %81 : vector<1x128xf32> to vector<1x1x128xf32>
    %c0_71 = arith.constant 0 : index
    %c0_72 = arith.constant 0 : index
    %c0_73 = arith.constant 0 : index
    %83 = vector.load %arg5[%c0_71, %c0_72, %c0_73] : memref<1x1x128xf32, #tpu.memory_space<vmem>>, vector<1x1x128xf32>
    tpu.vector_store %arg5[%c0_71, %c0_72, %c0_73], %82 {strides = array<i32>} : memref<1x1x128xf32, #tpu.memory_space<vmem>>, vector<1x1x128xf32>,
    return
  }
  func.func @transform_0(%arg0: i32) -> (i32, i32, i32, i32) {
    %c0_i32 = arith.constant 0 : i32
    %c0_i32_0 = arith.constant 0 : i32
    %c0_i32_1 = arith.constant 0 : i32
    %c0_i32_2 = arith.constant 0 : i32
    return %arg0, %c0_i32, %c0_i32_0, %c0_i32_1 : i32, i32, i32, i32
  }
  func.func @transform_1(%arg0: i32) -> (i32, i32, i32) {
    %c0_i32 = arith.constant 0 : i32
    %c0_i32_0 = arith.constant 0 : i32
    %c0_i32_1 = arith.constant 0 : i32
    %c0_i32_2 = arith.constant 0 : i32
    return %c0_i32, %c0_i32_0, %c0_i32_1 : i32, i32, i32
  }
  func.func @transform_2(%arg0: i32) -> (i32, i32, i32) {
    %c0_i32 = arith.constant 0 : i32
    %c0_i32_0 = arith.constant 0 : i32
    %c0_i32_1 = arith.constant 0 : i32
    return %arg0, %c0_i32, %c0_i32_0 : i32, i32, i32
  }
  func.func @transform_3(%arg0: i32) -> (i32, i32, i32) {
    %c0_i32 = arith.constant 0 : i32
    %c0_i32_0 = arith.constant 0 : i32
    %c0_i32_1 = arith.constant 0 : i32
    return %arg0, %c0_i32, %c0_i32_0 : i32, i32, i32
  }
  func.func @transform_4(%arg0: i32) -> (i32, i32, i32) {
    %c0_i32 = arith.constant 0 : i32
    %c0_i32_0 = arith.constant 0 : i32
    %c0_i32_1 = arith.constant 0 : i32
    return %arg0, %c0_i32, %c0_i32_0 : i32, i32, i32
  }
}

module attributes {stable_mosaic.version = 11 : i64} {
  func.func @_res_add_relu_kernel(%arg0: i32, %arg1: memref<1x64x128xf32, #tpu.memory_space<vmem>>, %arg2: memref<1x128xf32, #tpu.memory_space<vmem>>, %arg3: memref<1x128xf32, #tpu.memory_space<vmem>>, %arg4: memref<1x64x128xf32, #tpu.memory_space<vmem>>, %arg5: memref<1x128xf32, #tpu.memory_space<vmem>>, %arg6: memref<1x128xf32, #tpu.memory_space<vmem>>, %arg7: memref<1x64x128xf32, #tpu.memory_space<vmem>>) attributes {dimension_semantics = [#tpu.dimension_semantics<parallel>], iteration_bounds = array<i64: 2>, scalar_prefetch = 0 : i64, scratch_operands = 0 : i64, tpu.core_type = #tpu.core_type<tc>, window_params = [{transform_indices = @transform_0, window_bounds = array<i64: 1, 64, 128>}, {pipeline_mode = #tpu.pipeline_mode<synchronous>, transform_indices = @transform_1, window_bounds = array<i64: 1, 128>}, {pipeline_mode = #tpu.pipeline_mode<synchronous>, transform_indices = @transform_2, window_bounds = array<i64: 1, 128>}, {transform_indices = @transform_3, window_bounds = array<i64: 1, 64, 128>}, {pipeline_mode = #tpu.pipeline_mode<synchronous>, transform_indices = @transform_4, window_bounds = array<i64: 1, 128>}, {pipeline_mode = #tpu.pipeline_mode<synchronous>, transform_indices = @transform_5, window_bounds = array<i64: 1, 128>}, {transform_indices = @transform_6, window_bounds = array<i64: 1, 64, 128>}]} {
    %c0 = arith.constant 0 : index
    %c0_0 = arith.constant 0 : index
    %0 = vector.load %arg2[%c0, %c0_0] : memref<1x128xf32, #tpu.memory_space<vmem>>, vector<1x128xf32>
    %1 = vector.shape_cast %0 : vector<1x128xf32> to vector<1x1x128xf32>
    %c0_1 = arith.constant 0 : index
    %c0_2 = arith.constant 0 : index
    %2 = vector.load %arg3[%c0_1, %c0_2] : memref<1x128xf32, #tpu.memory_space<vmem>>, vector<1x128xf32>
    %3 = vector.shape_cast %2 : vector<1x128xf32> to vector<1x1x128xf32>
    %c0_3 = arith.constant 0 : index
    %c0_4 = arith.constant 0 : index
    %4 = vector.load %arg5[%c0_3, %c0_4] : memref<1x128xf32, #tpu.memory_space<vmem>>, vector<1x128xf32>
    %5 = vector.shape_cast %4 : vector<1x128xf32> to vector<1x1x128xf32>
    %c0_5 = arith.constant 0 : index
    %c0_6 = arith.constant 0 : index
    %6 = vector.load %arg6[%c0_5, %c0_6] : memref<1x128xf32, #tpu.memory_space<vmem>>, vector<1x128xf32>
    %7 = vector.shape_cast %6 : vector<1x128xf32> to vector<1x1x128xf32>
    %c0_7 = arith.constant 0 : index
    %c0_8 = arith.constant 0 : index
    %c0_9 = arith.constant 0 : index
    %8 = vector.load %arg1[%c0_7, %c0_8, %c0_9] : memref<1x64x128xf32, #tpu.memory_space<vmem>>, vector<1x64x128xf32>
    %9 = vector.broadcast %1 : vector<1x1x128xf32> to vector<1x64x128xf32>
    %10 = arith.mulf %8, %9 : vector<1x64x128xf32>
    %11 = vector.broadcast %3 : vector<1x1x128xf32> to vector<1x64x128xf32>
    %12 = arith.addf %10, %11 : vector<1x64x128xf32>
    %c0_10 = arith.constant 0 : index
    %c0_11 = arith.constant 0 : index
    %c0_12 = arith.constant 0 : index
    %13 = vector.load %arg4[%c0_10, %c0_11, %c0_12] : memref<1x64x128xf32, #tpu.memory_space<vmem>>, vector<1x64x128xf32>
    %14 = vector.broadcast %5 : vector<1x1x128xf32> to vector<1x64x128xf32>
    %15 = arith.mulf %13, %14 : vector<1x64x128xf32>
    %16 = arith.addf %12, %15 : vector<1x64x128xf32>
    %17 = vector.broadcast %7 : vector<1x1x128xf32> to vector<1x64x128xf32>
    %18 = arith.addf %16, %17 : vector<1x64x128xf32>
    %cst = arith.constant 0.000000e+00 : f32
    %19 = vector.broadcast %cst : f32 to vector<1x64x128xf32>
    %20 = arith.maximumf %18, %19 : vector<1x64x128xf32>
    %c0_13 = arith.constant 0 : index
    %c0_14 = arith.constant 0 : index
    %c0_15 = arith.constant 0 : index
    %21 = vector.load %arg7[%c0_13, %c0_14, %c0_15] : memref<1x64x128xf32, #tpu.memory_space<vmem>>, vector<1x64x128xf32>
    tpu.vector_store %arg7[%c0_13, %c0_14, %c0_15], %20 {strides = array<i32>} : memref<1x64x128xf32, #tpu.memory_space<vmem>>, vector<1x64x128xf32>,
    return
  }
  func.func @transform_0(%arg0: i32) -> (i32, i32, i32) {
    %c0_i32 = arith.constant 0 : i32
    %c0_i32_0 = arith.constant 0 : i32
    %c0_i32_1 = arith.constant 0 : i32
    return %arg0, %c0_i32, %c0_i32_0 : i32, i32, i32
  }
  func.func @transform_1(%arg0: i32) -> (i32, i32) {
    %c0_i32 = arith.constant 0 : i32
    %c0_i32_0 = arith.constant 0 : i32
    %c0_i32_1 = arith.constant 0 : i32
    return %c0_i32, %c0_i32_0 : i32, i32
  }
  func.func @transform_2(%arg0: i32) -> (i32, i32) {
    %c0_i32 = arith.constant 0 : i32
    %c0_i32_0 = arith.constant 0 : i32
    %c0_i32_1 = arith.constant 0 : i32
    return %c0_i32, %c0_i32_0 : i32, i32
  }
  func.func @transform_3(%arg0: i32) -> (i32, i32, i32) {
    %c0_i32 = arith.constant 0 : i32
    %c0_i32_0 = arith.constant 0 : i32
    %c0_i32_1 = arith.constant 0 : i32
    return %arg0, %c0_i32, %c0_i32_0 : i32, i32, i32
  }
  func.func @transform_4(%arg0: i32) -> (i32, i32) {
    %c0_i32 = arith.constant 0 : i32
    %c0_i32_0 = arith.constant 0 : i32
    %c0_i32_1 = arith.constant 0 : i32
    return %c0_i32, %c0_i32_0 : i32, i32
  }
  func.func @transform_5(%arg0: i32) -> (i32, i32) {
    %c0_i32 = arith.constant 0 : i32
    %c0_i32_0 = arith.constant 0 : i32
    %c0_i32_1 = arith.constant 0 : i32
    return %c0_i32, %c0_i32_0 : i32, i32
  }
  func.func @transform_6(%arg0: i32) -> (i32, i32, i32) {
    %c0_i32 = arith.constant 0 : i32
    %c0_i32_0 = arith.constant 0 : i32
    %c0_i32_1 = arith.constant 0 : i32
    return %arg0, %c0_i32, %c0_i32_0 : i32, i32, i32
  }
}

module attributes {stable_mosaic.version = 11 : i64} {
  func.func @_gap_kernel(%arg0: i32, %arg1: memref<1x64x128xf32, #tpu.memory_space<vmem>>, %arg2: memref<1x1x128xf32, #tpu.memory_space<vmem>>) attributes {dimension_semantics = [#tpu.dimension_semantics<parallel>], iteration_bounds = array<i64: 2>, scalar_prefetch = 0 : i64, scratch_operands = 0 : i64, tpu.core_type = #tpu.core_type<tc>, window_params = [{transform_indices = @transform_0, window_bounds = array<i64: 1, 64, 128>}, {transform_indices = @transform_1, window_bounds = array<i64: 1, 1, 128>}]} {
    %c0 = arith.constant 0 : index
    %c0_0 = arith.constant 0 : index
    %c0_1 = arith.constant 0 : index
    %0 = vector.load %arg1[%c0, %c0_0, %c0_1] : memref<1x64x128xf32, #tpu.memory_space<vmem>>, vector<1x64x128xf32>
    %cst = arith.constant dense<0.000000e+00> : vector<1x128xf32>
    %1 = vector.multi_reduction <add>, %0, %cst [1] : vector<1x64x128xf32> to vector<1x128xf32>
    %2 = vector.shape_cast %1 : vector<1x128xf32> to vector<1x1x128xf32>
    %cst_2 = arith.constant 6.400000e+01 : f32
    %3 = vector.broadcast %cst_2 : f32 to vector<1x1x128xf32>
    %4 = arith.divf %2, %3 : vector<1x1x128xf32>
    %c0_3 = arith.constant 0 : index
    %c0_4 = arith.constant 0 : index
    %c0_5 = arith.constant 0 : index
    %5 = vector.load %arg2[%c0_3, %c0_4, %c0_5] : memref<1x1x128xf32, #tpu.memory_space<vmem>>, vector<1x1x128xf32>
    tpu.vector_store %arg2[%c0_3, %c0_4, %c0_5], %4 {strides = array<i32>} : memref<1x1x128xf32, #tpu.memory_space<vmem>>, vector<1x1x128xf32>,
    return
  }
  func.func @transform_0(%arg0: i32) -> (i32, i32, i32) {
    %c0_i32 = arith.constant 0 : i32
    %c0_i32_0 = arith.constant 0 : i32
    %c0_i32_1 = arith.constant 0 : i32
    return %arg0, %c0_i32, %c0_i32_0 : i32, i32, i32
  }
  func.func @transform_1(%arg0: i32) -> (i32, i32, i32) {
    %c0_i32 = arith.constant 0 : i32
    %c0_i32_0 = arith.constant 0 : i32
    %c0_i32_1 = arith.constant 0 : i32
    return %arg0, %c0_i32, %c0_i32_0 : i32, i32, i32
  }
}

module attributes {stable_mosaic.version = 11 : i64} {
  func.func @_linear_kernel(%arg0: memref<2x128xf32, #tpu.memory_space<vmem>>, %arg1: memref<128x128xf32, #tpu.memory_space<vmem>>, %arg2: memref<1x128xf32, #tpu.memory_space<vmem>>, %arg3: memref<2x128xf32, #tpu.memory_space<vmem>>) attributes {dimension_semantics = [], scalar_prefetch = 0 : i64, scratch_operands = 0 : i64, tpu.core_type = #tpu.core_type<tc>} {
    %c0 = arith.constant 0 : index
    %c0_0 = arith.constant 0 : index
    %0 = vector.load %arg0[%c0, %c0_0] : memref<2x128xf32, #tpu.memory_space<vmem>>, vector<2x128xf32>
    %c0_1 = arith.constant 0 : index
    %c0_2 = arith.constant 0 : index
    %1 = vector.load %arg1[%c0_1, %c0_2] : memref<128x128xf32, #tpu.memory_space<vmem>>, vector<128x128xf32>
    %cst = arith.constant dense<0.000000e+00> : vector<2x128xf32>
    %2 = tpu.matmul %0, %1, %cst {dimension_numbers = #tpu.dot_dimension_numbers<[1], [0], [0], [1], [0, 0, 1, 1], [], []>} : vector<2x128xf32>, vector<128x128xf32>, vector<2x128xf32> -> vector<2x128xf32>
    %c0_3 = arith.constant 0 : index
    %c0_4 = arith.constant 0 : index
    %3 = vector.load %arg2[%c0_3, %c0_4] : memref<1x128xf32, #tpu.memory_space<vmem>>, vector<1x128xf32>
    %4 = vector.broadcast %3 : vector<1x128xf32> to vector<2x128xf32>
    %5 = arith.addf %2, %4 : vector<2x128xf32>
    %c0_5 = arith.constant 0 : index
    %c0_6 = arith.constant 0 : index
    %6 = vector.load %arg3[%c0_5, %c0_6] : memref<2x128xf32, #tpu.memory_space<vmem>>, vector<2x128xf32>
    tpu.vector_store %arg3[%c0_5, %c0_6], %5 {strides = array<i32>} : memref<2x128xf32, #tpu.memory_space<vmem>>, vector<2x128xf32>,
    return
  }
}

</mosaic_0001>

<llo_original>
// kernel: _lambda_.14
$region0: #{_lambda_.14}
  #allocation0 [shape = 'u32[]', space=smem, size = 0x4, offset = 0x4, fixed_abs, tag = 'smem constant byte address 0x4 - core index']
  #allocation1 [shape = 'u32[72,128]{1,0:T(1,128)}', space=vmem, size = 0x9000, scoped, tag = 'internal scratch']
  %s0 = inlined_call_operand.vmem [shape: f32[2,256,128], index: 0, kind: input, shape index: {}]
  %s1 = inlined_call_operand.vmem [shape: f32[1,128], index: 1, kind: input, shape index: {}]
  %s2 = inlined_call_operand.vmem [shape: f32[1,128], index: 2, kind: input, shape index: {}]
  %s3 = inlined_call_operand.vmem [shape: f32[2,256,128], index: 3, kind: output, shape index: {}]
  %s4 = sld [smem:[#allocation0]]
  $region45: #{_lambda_.14} parent=0
    _
  %s6 = ssub.s32 1, %s4
  %s7 = scalar_select 0, %s6, %s4
  loop: start=0, step=1, limit=4
  $region2: #{_lambda_.14} parent=0 // loop_pre_header
    _
  $region3: #{_lambda_.14} parent=0 // loop_header
    %s9 = sphi 0, %s13
    %p10 = scmp.ge.s32.totalorder %s9, 4
    %s19 = sphi 0, %s21
    %s22 = sphi 0, %s19
    %s23 = sphi 0, %s22
    %s39 = sphi 0, %s23
    %s43 = sphi 0, %s43
    %s45 = sphi 0, %s43
    %s46 = sphi 0, %s45
    %s60 = sphi 0, %s46
    %s64 = sphi 0, %s64
    %s66 = sphi 0, %s64
    %s67 = sphi 0, %s66
    %s81 = sphi 0, %s67
    %s87 = sphi 0, %s89
    %s90 = sphi 0, %s87
    %s91 = sphi 0, %s90
    %s107 = sphi 0, %s91
  $region4: #{_lambda_.14} parent=0 // loop_header_branch
    %12 = sbr.rel (%p10) target = $region8
  $region5: #{_lambda_.14} parent=0 // loop_body
    %s14 = ssub.s32 %s9, 1
    %s15 = ssub.s32 %s9, 2
    %s16 = sadd.s32 %s9, 1
    %s17 = ssub.s32 %s9, %s16
    %p18 = scmp.eq.s32.totalorder %s17, 0
    %s20 = sadd.s32 %s19, 1
    %s21 = scalar_select %p18, %s19, %s20
    %p24 = pneg %p18
    %p25 = scmp.eq.s32.totalorder %s9, 1
    %p26 = por %p24, %p25
    %p27 = scmp.ne.s32.totalorder %s19, %s22
    %p28 = scmp.eq.s32.totalorder %s9, 0
    %p29 = por %p27, %p28
    %p30 = scmp.ne.s32.totalorder %s19, %s22
    %p31 = scmp.eq.s32.totalorder %s14, 1
    %p32 = por %p30, %p31
    %p33 = scmp.ne.s32.totalorder %s22, %s23
    %p34 = scmp.eq.s32.totalorder %s14, 0
    %p35 = por %p33, %p34
    %p36 = scmp.ne.s32.totalorder %s22, %s23
    %p37 = scmp.eq.s32.totalorder %s15, 1
    %p38 = por %p36, %p37
    %p40 = scmp.ne.s32.totalorder %s23, %s39
    %p41 = scmp.eq.s32.totalorder %s15, 0
    %p42 = por %p40, %p41
    %s44 = sadd.s32 %s43, 1
    %p47 = scmp.eq.s32.totalorder %s9, 1
    %p48 = scmp.ne.s32.totalorder %s43, %s45
    %p49 = scmp.eq.s32.totalorder %s9, 0
    %p50 = por %p48, %p49
    %p51 = scmp.ne.s32.totalorder %s43, %s45
    %p52 = scmp.eq.s32.totalorder %s14, 1
    %p53 = por %p51, %p52
    %p54 = scmp.ne.s32.totalorder %s45, %s46
    %p55 = scmp.eq.s32.totalorder %s14, 0
    %p56 = por %p54, %p55
    %p57 = scmp.ne.s32.totalorder %s45, %s46
    %p58 = scmp.eq.s32.totalorder %s15, 1
    %p59 = por %p57, %p58
    %p61 = scmp.ne.s32.totalorder %s46, %s60
    %p62 = scmp.eq.s32.totalorder %s15, 0
    %p63 = por %p61, %p62
    %s65 = sadd.s32 %s64, 1
    %p68 = scmp.eq.s32.totalorder %s9, 1
    %p69 = scmp.ne.s32.totalorder %s64, %s66
    %p70 = scmp.eq.s32.totalorder %s9, 0
    %p71 = por %p69, %p70
    %p72 = scmp.ne.s32.totalorder %s64, %s66
    %p73 = scmp.eq.s32.totalorder %s14, 1
    %p74 = por %p72, %p73
    %p75 = scmp.ne.s32.totalorder %s66, %s67
    %p76 = scmp.eq.s32.totalorder %s14, 0
    %p77 = por %p75, %p76
    %p78 = scmp.ne.s32.totalorder %s66, %s67
    %p79 = scmp.eq.s32.totalorder %s15, 1
    %p80 = por %p78, %p79
    %p82 = scmp.ne.s32.totalorder %s67, %s81
    %p83 = scmp.eq.s32.totalorder %s15, 0
    %p84 = por %p82, %p83
    %s85 = ssub.s32 %s9, %s16
    %p86 = scmp.eq.s32.totalorder %s85, 0
    %s88 = sadd.s32 %s87, 1
    %s89 = scalar_select %p86, %s87, %s88
    %p92 = pneg %p86
    %p93 = scmp.eq.s32.totalorder %s9, 1
    %p94 = por %p92, %p93
    %p95 = scmp.ne.s32.totalorder %s87, %s90
    %p96 = scmp.eq.s32.totalorder %s9, 0
    %p97 = por %p95, %p96
    %p98 = scmp.ne.s32.totalorder %s87, %s90
    %p99 = scmp.eq.s32.totalorder %s14, 1
    %p100 = por %p98, %p99
    %p101 = scmp.ne.s32.totalorder %s90, %s91
    %p102 = scmp.eq.s32.totalorder %s14, 0
    %p103 = por %p101, %p102
    %p104 = scmp.ne.s32.totalorder %s90, %s91
    %p105 = scmp.eq.s32.totalorder %s15, 1
    %p106 = por %p104, %p105
    %p108 = scmp.ne.s32.totalorder %s91, %s107
    %p109 = scmp.eq.s32.totalorder %s15, 0
    %p110 = por %p108, %p109
    %p111 = scmp.le.s32.totalorder 1, %s9
    %p112 = scmp.lt.s32.totalorder %s9, 3
    %p113 = pnand %p111, %p112
    %p114 = pneg %p113
    // Predicated region
    $region9: #{_lambda_.14} parent=5 // pred_check
      _
    $region10: #{_lambda_.14} parent=5 // pred_check_branch
      %116 = sbr.rel (%p113) target = $region12
    $region11: #{_lambda_.14} parent=5 // pred_region
      %s117 = ssub.s32 %s9, 1
      // Predicated region
      $region13: #{_lambda_.14} parent=11 // pred_check
        %p118 = pneg %p56
      $region14: #{_lambda_.14} parent=11 // pred_check_branch
        %120 = sbr.rel (%p118) target = $region16
      $region15: #{_lambda_.14} parent=11 // pred_region
        _
      $region16: #{_lambda_.14} parent=11 // pred_fallthru
        _
      // Predicated region
      $region17: #{_lambda_.14} parent=11 // pred_check
        %p121 = pneg %p77
      $region18: #{_lambda_.14} parent=11 // pred_check_branch
        %123 = sbr.rel (%p121) target = $region20
      $region19: #{_lambda_.14} parent=11 // pred_region
        _
      $region20: #{_lambda_.14} parent=11 // pred_fallthru
        _
    $region12: #{_lambda_.14} parent=5 // pred_fallthru
      _
    %p124 = scmp.lt.s32.totalorder %s9, 2
    // Predicated region
    $region21: #{_lambda_.14} parent=5 // pred_check
      %p125 = pneg %p124
    $region22: #{_lambda_.14} parent=5 // pred_check_branch
      %127 = sbr.rel (%p125) target = $region24
    $region23: #{_lambda_.14} parent=5 // pred_region
      // Predicated region
      $region25: #{_lambda_.14} parent=23 // pred_check
        %p128 = pneg %p29
      $region26: #{_lambda_.14} parent=23 // pred_check_branch
        %130 = sbr.rel (%p128) target = $region28
      $region27: #{_lambda_.14} parent=23 // pred_region
        %p131 = scmp.lt.s32.totalorder %s9, 1
        %s132 = scalar_select %p131, %s9, 1
        %s133 = smul.addr %s132, 32
        %s134 = smul.addr %s133, 8
        %s135 = scalar_lea.vmem %s0, %s134
      $region28: #{_lambda_.14} parent=23 // pred_fallthru
        _
    $region24: #{_lambda_.14} parent=5 // pred_fallthru
      _
    %p136 = scmp.le.s32.totalorder 1, %s9
    %p137 = scmp.lt.s32.totalorder %s9, 3
    %p138 = pnand %p136, %p137
    %p139 = pneg %p138
    // Predicated region
    $region29: #{_lambda_.14} parent=5 // pred_check
      _
    $region30: #{_lambda_.14} parent=5 // pred_check_branch
      %141 = sbr.rel (%p138) target = $region32
    $region31: #{_lambda_.14} parent=5 // pred_region
      %s142 = ssub.s32 %s9, 1
      %p143 = scmp.lt.s32.totalorder %s14, 1
      %s144 = scalar_select %p143, %s14, 1
      %s145 = smul.addr %s144, 32
      %s146 = smul.addr %s145, 8
      %s147 = scalar_lea.vmem %s0, %s146
      %p148 = pneg %p35
      %p149 = pneg %p32
      %p150 = pneg %p56
      %p151 = pneg %p53
      %p152 = pneg %p77
      %p153 = pneg %p74
      %p154 = pneg %p103
      %p155 = pneg %p100
      %p156 = scmp.lt.s32.totalorder %s14, 1
      %s157 = scalar_select %p156, %s14, 1
      %s158 = smul.addr %s157, 32
      %s159 = smul.addr %s158, 8
      %s160 = scalar_lea.vmem %s3, %s159
      %p161 = scmp.lt.s32.totalorder %s14, 1
      %s162 = scalar_select %p161, %s14, 1
      %s163 = smul.addr %s162, 32
      %s164 = smul.addr %s163, 8
      %s165 = scalar_lea.vmem %s0, %s164
      %p166 = scmp.lt.s32.totalorder %s14, 1
      %s167 = scalar_select %p166, %s14, 1
      %s168 = smul.addr %s167, 32
      %s169 = smul.addr %s168, 8
      %s170 = scalar_lea.vmem %s3, %s169
      %v171 = vld [vmem:[%s1] sm:$0x1]
      %v172 = vld [vmem:[%s2] sm:$0x1]
      %v173 = vld [vmem:[%s165] sm:$0xff]
      %v174 = vld [vmem:[%s165 + $0x8] sm:$0xff]
      %v175 = vld [vmem:[%s165 + $0x10] sm:$0xff]
      %v176 = vld [vmem:[%s165 + $0x18] sm:$0xff]
      %v177 = vld [vmem:[%s165 + $0x20] sm:$0xff]
      %v178 = vld [vmem:[%s165 + $0x28] sm:$0xff]
      %v179 = vld [vmem:[%s165 + $0x30] sm:$0xff]
      %v180 = vld [vmem:[%s165 + $0x38] sm:$0xff]
      %v181 = vld [vmem:[%s165 + $0x40] sm:$0xff]
      %v182 = vld [vmem:[%s165 + $0x48] sm:$0xff]
      %v183 = vld [vmem:[%s165 + $0x50] sm:$0xff]
      %v184 = vld [vmem:[%s165 + $0x58] sm:$0xff]
      %v185 = vld [vmem:[%s165 + $0x60] sm:$0xff]
      %v186 = vld [vmem:[%s165 + $0x68] sm:$0xff]
      %v187 = vld [vmem:[%s165 + $0x70] sm:$0xff]
      %v188 = vld [vmem:[%s165 + $0x78] sm:$0xff]
      %v189 = vld [vmem:[%s165 + $0x80] sm:$0xff]
      %v190 = vld [vmem:[%s165 + $0x88] sm:$0xff]
      %v191 = vld [vmem:[%s165 + $0x90] sm:$0xff]
      %v192 = vld [vmem:[%s165 + $0x98] sm:$0xff]
      %v193 = vld [vmem:[%s165 + $0xa0] sm:$0xff]
      %v194 = vld [vmem:[%s165 + $0xa8] sm:$0xff]
      %v195 = vld [vmem:[%s165 + $0xb0] sm:$0xff]
      %v196 = vld [vmem:[%s165 + $0xb8] sm:$0xff]
      %v197 = vld [vmem:[%s165 + $0xc0] sm:$0xff]
      %v198 = vld [vmem:[%s165 + $0xc8] sm:$0xff]
      %v199 = vld [vmem:[%s165 + $0xd0] sm:$0xff]
      %v200 = vld [vmem:[%s165 + $0xd8] sm:$0xff]
      %v201 = vld [vmem:[%s165 + $0xe0] sm:$0xff]
      %v202 = vld [vmem:[%s165 + $0xe8] sm:$0xff]
      %v203 = vld [vmem:[%s165 + $0xf0] sm:$0xff]
      %v204 = vld [vmem:[%s165 + $0xf8] sm:$0xff]
      %v206 = vperm.slane %v171, 0
      %v208 = vmul.f32 %v173, %v206
      %v209 = vmul.f32 %v174, %v206
      %v210 = vmul.f32 %v175, %v206
      %v211 = vmul.f32 %v176, %v206
      %v212 = vmul.f32 %v177, %v206
      %v213 = vmul.f32 %v178, %v206
      %v214 = vmul.f32 %v179, %v206
      %v215 = vmul.f32 %v180, %v206
      %v216 = vmul.f32 %v181, %v206
      %v217 = vmul.f32 %v182, %v206
      %v218 = vmul.f32 %v183, %v206
      %v219 = vmul.f32 %v184, %v206
      %v220 = vmul.f32 %v185, %v206
      %v221 = vmul.f32 %v186, %v206
      %v222 = vmul.f32 %v187, %v206
      %v223 = vmul.f32 %v188, %v206
      %v224 = vmul.f32 %v189, %v206
      %v225 = vmul.f32 %v190, %v206
      %v226 = vmul.f32 %v191, %v206
      %v227 = vmul.f32 %v192, %v206
      %v228 = vmul.f32 %v193, %v206
      %v229 = vmul.f32 %v194, %v206
      %v230 = vmul.f32 %v195, %v206
      %v231 = vmul.f32 %v196, %v206
      %v232 = vmul.f32 %v197, %v206
      %v233 = vmul.f32 %v198, %v206
      %v234 = vmul.f32 %v199, %v206
      %v235 = vmul.f32 %v200, %v206
      %v236 = vmul.f32 %v201, %v206
      %v237 = vmul.f32 %v202, %v206
      %v238 = vmul.f32 %v203, %v206
      %v239 = vmul.f32 %v204, %v206
      %v241 = vperm.slane %v172, 0
      %v243 = vadd.f32 %v208, %v241
      %v244 = vadd.f32 %v209, %v241
      %v245 = vadd.f32 %v210, %v241
      %v246 = vadd.f32 %v211, %v241
      %v247 = vadd.f32 %v212, %v241
      %v248 = vadd.f32 %v213, %v241
      %v249 = vadd.f32 %v214, %v241
      %v250 = vadd.f32 %v215, %v241
      %v251 = vadd.f32 %v216, %v241
      %v252 = vadd.f32 %v217, %v241
      %v253 = vadd.f32 %v218, %v241
      %v254 = vadd.f32 %v219, %v241
      %v255 = vadd.f32 %v220, %v241
      %v256 = vadd.f32 %v221, %v241
      %v257 = vadd.f32 %v222, %v241
      %v258 = vadd.f32 %v223, %v241
      %v259 = vadd.f32 %v224, %v241
      %v260 = vadd.f32 %v225, %v241
      %v261 = vadd.f32 %v226, %v241
      %v262 = vadd.f32 %v227, %v241
      %v263 = vadd.f32 %v228, %v241
      %v264 = vadd.f32 %v229, %v241
      %v265 = vadd.f32 %v230, %v241
      %v266 = vadd.f32 %v231, %v241
      %v267 = vadd.f32 %v232, %v241
      %v268 = vadd.f32 %v233, %v241
      %v269 = vadd.f32 %v234, %v241
      %v270 = vadd.f32 %v235, %v241
      %v271 = vadd.f32 %v236, %v241
      %v272 = vadd.f32 %v237, %v241
      %v273 = vadd.f32 %v238, %v241
      %v274 = vadd.f32 %v239, %v241
      %v275 = vmax.f32 %v243, 0.0
      %v276 = vmax.f32 %v244, 0.0
      %v277 = vmax.f32 %v245, 0.0
      %v278 = vmax.f32 %v246, 0.0
      %v279 = vmax.f32 %v247, 0.0
      %v280 = vmax.f32 %v248, 0.0
      %v281 = vmax.f32 %v249, 0.0
      %v282 = vmax.f32 %v250, 0.0
      %v283 = vmax.f32 %v251, 0.0
      %v284 = vmax.f32 %v252, 0.0
      %v285 = vmax.f32 %v253, 0.0
      %v286 = vmax.f32 %v254, 0.0
      %v287 = vmax.f32 %v255, 0.0
      %v288 = vmax.f32 %v256, 0.0
      %v289 = vmax.f32 %v257, 0.0
      %v290 = vmax.f32 %v258, 0.0
      %v291 = vmax.f32 %v259, 0.0
      %v292 = vmax.f32 %v260, 0.0
      %v293 = vmax.f32 %v261, 0.0
      %v294 = vmax.f32 %v262, 0.0
      %v295 = vmax.f32 %v263, 0.0
      %v296 = vmax.f32 %v264, 0.0
      %v297 = vmax.f32 %v265, 0.0
      %v298 = vmax.f32 %v266, 0.0
      %v299 = vmax.f32 %v267, 0.0
      %v300 = vmax.f32 %v268, 0.0
      %v301 = vmax.f32 %v269, 0.0
      %v302 = vmax.f32 %v270, 0.0
      %v303 = vmax.f32 %v271, 0.0
      %v304 = vmax.f32 %v272, 0.0
      %v305 = vmax.f32 %v273, 0.0
      %v306 = vmax.f32 %v274, 0.0
      %307 = vst [vmem:[%s170] sm:$0xff] %v275
      %308 = vst [vmem:[%s170 + $0x8] sm:$0xff] %v276
      %309 = vst [vmem:[%s170 + $0x10] sm:$0xff] %v277
      %310 = vst [vmem:[%s170 + $0x18] sm:$0xff] %v278
      %311 = vst [vmem:[%s170 + $0x20] sm:$0xff] %v279
      %312 = vst [vmem:[%s170 + $0x28] sm:$0xff] %v280
      %313 = vst [vmem:[%s170 + $0x30] sm:$0xff] %v281
      %314 = vst [vmem:[%s170 + $0x38] sm:$0xff] %v282
      %315 = vst [vmem:[%s170 + $0x40] sm:$0xff] %v283
      %316 = vst [vmem:[%s170 + $0x48] sm:$0xff] %v284
      %317 = vst [vmem:[%s170 + $0x50] sm:$0xff] %v285
      %318 = vst [vmem:[%s170 + $0x58] sm:$0xff] %v286
      %319 = vst [vmem:[%s170 + $0x60] sm:$0xff] %v287
      %320 = vst [vmem:[%s170 + $0x68] sm:$0xff] %v288
      %321 = vst [vmem:[%s170 + $0x70] sm:$0xff] %v289
      %322 = vst [vmem:[%s170 + $0x78] sm:$0xff] %v290
      %323 = vst [vmem:[%s170 + $0x80] sm:$0xff] %v291
      %324 = vst [vmem:[%s170 + $0x88] sm:$0xff] %v292
      %325 = vst [vmem:[%s170 + $0x90] sm:$0xff] %v293
      %326 = vst [vmem:[%s170 + $0x98] sm:$0xff] %v294
      %327 = vst [vmem:[%s170 + $0xa0] sm:$0xff] %v295
      %328 = vst [vmem:[%s170 + $0xa8] sm:$0xff] %v296
      %329 = vst [vmem:[%s170 + $0xb0] sm:$0xff] %v297
      %330 = vst [vmem:[%s170 + $0xb8] sm:$0xff] %v298
      %331 = vst [vmem:[%s170 + $0xc0] sm:$0xff] %v299
      %332 = vst [vmem:[%s170 + $0xc8] sm:$0xff] %v300
      %333 = vst [vmem:[%s170 + $0xd0] sm:$0xff] %v301
      %334 = vst [vmem:[%s170 + $0xd8] sm:$0xff] %v302
      %335 = vst [vmem:[%s170 + $0xe0] sm:$0xff] %v303
      %336 = vst [vmem:[%s170 + $0xe8] sm:$0xff] %v304
      %337 = vst [vmem:[%s170 + $0xf0] sm:$0xff] %v305
      %338 = vst [vmem:[%s170 + $0xf8] sm:$0xff] %v306
      %p339 = scmp.lt.s32.totalorder %s14, 1
      %s340 = scalar_select %p339, %s14, 1
      %s341 = smul.addr %s340, 32
      %s342 = smul.addr %s341, 8
      %s343 = scalar_lea.vmem %s3, %s342
      // Predicated region
      $region33: #{_lambda_.14} parent=31 // pred_check
        %p344 = pneg %p100
      $region34: #{_lambda_.14} parent=31 // pred_check_branch
        %346 = sbr.rel (%p344) target = $region36
      $region35: #{_lambda_.14} parent=31 // pred_region
        _
      $region36: #{_lambda_.14} parent=31 // pred_fallthru
        _
    $region32: #{_lambda_.14} parent=5 // pred_fallthru
      _
    %p347 = scmp.le.s32.totalorder 2, %s9
    // Predicated region
    $region37: #{_lambda_.14} parent=5 // pred_check
      %p348 = pneg %p347
    $region38: #{_lambda_.14} parent=5 // pred_check_branch
      %350 = sbr.rel (%p348) target = $region40
    $region39: #{_lambda_.14} parent=5 // pred_region
      %s351 = ssub.s32 %s9, 2
      // Predicated region
      $region41: #{_lambda_.14} parent=39 // pred_check
        %p352 = pneg %p106
      $region42: #{_lambda_.14} parent=39 // pred_check_branch
        %354 = sbr.rel (%p352) target = $region44
      $region43: #{_lambda_.14} parent=39 // pred_region
        %p355 = scmp.lt.s32.totalorder %s15, 1
        %s356 = scalar_select %p355, %s15, 1
        %s357 = smul.addr %s356, 32
        %s358 = smul.addr %s357, 8
        %s359 = scalar_lea.vmem %s3, %s358
      $region44: #{_lambda_.14} parent=39 // pred_fallthru
        _
    $region40: #{_lambda_.14} parent=5 // pred_fallthru
      _
  $region6: #{_lambda_.14} parent=0 // loop_footer
    %s13 = sadd.s32 1, %s9
  $region7: #{_lambda_.14} parent=0 // loop_footer_branch
    %8 = sbr.rel target = $region3
  $region8: #{_lambda_.14} parent=0 // loop_exit
    _

// kernel: _lambda_.18
$region0: #{_lambda_.18}
  #allocation0 [shape = 'u32[]', space=smem, size = 0x4, offset = 0x4, fixed_abs, tag = 'smem constant byte address 0x4 - core index']
  #allocation1 [shape = 'u32[72,128]{1,0:T(1,128)}', space=vmem, size = 0x9000, scoped, tag = 'internal scratch']
  %s0 = inlined_call_operand.vmem [shape: f32[2,256,128], index: 0, kind: input, shape index: {}]
  %s1 = inlined_call_operand.vmem [shape: f32[1,128], index: 1, kind: input, shape index: {}]
  %s2 = inlined_call_operand.vmem [shape: f32[1,128], index: 2, kind: input, shape index: {}]
  %s3 = inlined_call_operand.vmem [shape: f32[2,256,128], index: 3, kind: input, shape index: {}]
  %s4 = inlined_call_operand.vmem [shape: f32[1,128], index: 4, kind: input, shape index: {}]
  %s5 = inlined_call_operand.vmem [shape: f32[1,128], index: 5, kind: input, shape index: {}]
  %s6 = inlined_call_operand.vmem [shape: f32[2,256,128], index: 6, kind: output, shape index: {}]
  %s7 = sld [smem:[#allocation0]]
  $region57: #{_lambda_.18} parent=0
    _
  %s9 = ssub.s32 1, %s7
  %s10 = scalar_select 0, %s9, %s7
  loop: start=0, step=1, limit=4
  $region2: #{_lambda_.18} parent=0 // loop_pre_header
    _
  $region3: #{_lambda_.18} parent=0 // loop_header
    %s12 = sphi 0, %s16
    %p13 = scmp.ge.s32.totalorder %s12, 4
    %s22 = sphi 0, %s24
    %s25 = sphi 0, %s22
    %s26 = sphi 0, %s25
    %s42 = sphi 0, %s26
    %s46 = sphi 0, %s46
    %s48 = sphi 0, %s46
    %s49 = sphi 0, %s48
    %s63 = sphi 0, %s49
    %s67 = sphi 0, %s67
    %s69 = sphi 0, %s67
    %s70 = sphi 0, %s69
    %s84 = sphi 0, %s70
    %s90 = sphi 0, %s92
    %s93 = sphi 0, %s90
    %s94 = sphi 0, %s93
    %s110 = sphi 0, %s94
    %s114 = sphi 0, %s114
    %s116 = sphi 0, %s114
    %s117 = sphi 0, %s116
    %s131 = sphi 0, %s117
    %s135 = sphi 0, %s135
    %s137 = sphi 0, %s135
    %s138 = sphi 0, %s137
    %s152 = sphi 0, %s138
    %s158 = sphi 0, %s160
    %s161 = sphi 0, %s158
    %s162 = sphi 0, %s161
    %s178 = sphi 0, %s162
  $region4: #{_lambda_.18} parent=0 // loop_header_branch
    %15 = sbr.rel (%p13) target = $region8
  $region5: #{_lambda_.18} parent=0 // loop_body
    %s17 = ssub.s32 %s12, 1
    %s18 = ssub.s32 %s12, 2
    %s19 = sadd.s32 %s12, 1
    %s20 = ssub.s32 %s12, %s19
    %p21 = scmp.eq.s32.totalorder %s20, 0
    %s23 = sadd.s32 %s22, 1
    %s24 = scalar_select %p21, %s22, %s23
    %p27 = pneg %p21
    %p28 = scmp.eq.s32.totalorder %s12, 1
    %p29 = por %p27, %p28
    %p30 = scmp.ne.s32.totalorder %s22, %s25
    %p31 = scmp.eq.s32.totalorder %s12, 0
    %p32 = por %p30, %p31
    %p33 = scmp.ne.s32.totalorder %s22, %s25
    %p34 = scmp.eq.s32.totalorder %s17, 1
    %p35 = por %p33, %p34
    %p36 = scmp.ne.s32.totalorder %s25, %s26
    %p37 = scmp.eq.s32.totalorder %s17, 0
    %p38 = por %p36, %p37
    %p39 = scmp.ne.s32.totalorder %s25, %s26
    %p40 = scmp.eq.s32.totalorder %s18, 1
    %p41 = por %p39, %p40
    %p43 = scmp.ne.s32.totalorder %s26, %s42
    %p44 = scmp.eq.s32.totalorder %s18, 0
    %p45 = por %p43, %p44
    %s47 = sadd.s32 %s46, 1
    %p50 = scmp.eq.s32.totalorder %s12, 1
    %p51 = scmp.ne.s32.totalorder %s46, %s48
    %p52 = scmp.eq.s32.totalorder %s12, 0
    %p53 = por %p51, %p52
    %p54 = scmp.ne.s32.totalorder %s46, %s48
    %p55 = scmp.eq.s32.totalorder %s17, 1
    %p56 = por %p54, %p55
    %p57 = scmp.ne.s32.totalorder %s48, %s49
    %p58 = scmp.eq.s32.totalorder %s17, 0
    %p59 = por %p57, %p58
    %p60 = scmp.ne.s32.totalorder %s48, %s49
    %p61 = scmp.eq.s32.totalorder %s18, 1
    %p62 = por %p60, %p61
    %p64 = scmp.ne.s32.totalorder %s49, %s63
    %p65 = scmp.eq.s32.totalorder %s18, 0
    %p66 = por %p64, %p65
    %s68 = sadd.s32 %s67, 1
    %p71 = scmp.eq.s32.totalorder %s12, 1
    %p72 = scmp.ne.s32.totalorder %s67, %s69
    %p73 = scmp.eq.s32.totalorder %s12, 0
    %p74 = por %p72, %p73
    %p75 = scmp.ne.s32.totalorder %s67, %s69
    %p76 = scmp.eq.s32.totalorder %s17, 1
    %p77 = por %p75, %p76
    %p78 = scmp.ne.s32.totalorder %s69, %s70
    %p79 = scmp.eq.s32.totalorder %s17, 0
    %p80 = por %p78, %p79
    %p81 = scmp.ne.s32.totalorder %s69, %s70
    %p82 = scmp.eq.s32.totalorder %s18, 1
    %p83 = por %p81, %p82
    %p85 = scmp.ne.s32.totalorder %s70, %s84
    %p86 = scmp.eq.s32.totalorder %s18, 0
    %p87 = por %p85, %p86
    %s88 = ssub.s32 %s12, %s19
    %p89 = scmp.eq.s32.totalorder %s88, 0
    %s91 = sadd.s32 %s90, 1
    %s92 = scalar_select %p89, %s90, %s91
    %p95 = pneg %p89
    %p96 = scmp.eq.s32.totalorder %s12, 1
    %p97 = por %p95, %p96
    %p98 = scmp.ne.s32.totalorder %s90, %s93
    %p99 = scmp.eq.s32.totalorder %s12, 0
    %p100 = por %p98, %p99
    %p101 = scmp.ne.s32.totalorder %s90, %s93
    %p102 = scmp.eq.s32.totalorder %s17, 1
    %p103 = por %p101, %p102
    %p104 = scmp.ne.s32.totalorder %s93, %s94
    %p105 = scmp.eq.s32.totalorder %s17, 0
    %p106 = por %p104, %p105
    %p107 = scmp.ne.s32.totalorder %s93, %s94
    %p108 = scmp.eq.s32.totalorder %s18, 1
    %p109 = por %p107, %p108
    %p111 = scmp.ne.s32.totalorder %s94, %s110
    %p112 = scmp.eq.s32.totalorder %s18, 0
    %p113 = por %p111, %p112
    %s115 = sadd.s32 %s114, 1
    %p118 = scmp.eq.s32.totalorder %s12, 1
    %p119 = scmp.ne.s32.totalorder %s114, %s116
    %p120 = scmp.eq.s32.totalorder %s12, 0
    %p121 = por %p119, %p120
    %p122 = scmp.ne.s32.totalorder %s114, %s116
    %p123 = scmp.eq.s32.totalorder %s17, 1
    %p124 = por %p122, %p123
    %p125 = scmp.ne.s32.totalorder %s116, %s117
    %p126 = scmp.eq.s32.totalorder %s17, 0
    %p127 = por %p125, %p126
    %p128 = scmp.ne.s32.totalorder %s116, %s117
    %p129 = scmp.eq.s32.totalorder %s18, 1
    %p130 = por %p128, %p129
    %p132 = scmp.ne.s32.totalorder %s117, %s131
    %p133 = scmp.eq.s32.totalorder %s18, 0
    %p134 = por %p132, %p133
    %s136 = sadd.s32 %s135, 1
    %p139 = scmp.eq.s32.totalorder %s12, 1
    %p140 = scmp.ne.s32.totalorder %s135, %s137
    %p141 = scmp.eq.s32.totalorder %s12, 0
    %p142 = por %p140, %p141
    %p143 = scmp.ne.s32.totalorder %s135, %s137
    %p144 = scmp.eq.s32.totalorder %s17, 1
    %p145 = por %p143, %p144
    %p146 = scmp.ne.s32.totalorder %s137, %s138
    %p147 = scmp.eq.s32.totalorder %s17, 0
    %p148 = por %p146, %p147
    %p149 = scmp.ne.s32.totalorder %s137, %s138
    %p150 = scmp.eq.s32.totalorder %s18, 1
    %p151 = por %p149, %p150
    %p153 = scmp.ne.s32.totalorder %s138, %s152
    %p154 = scmp.eq.s32.totalorder %s18, 0
    %p155 = por %p153, %p154
    %s156 = ssub.s32 %s12, %s19
    %p157 = scmp.eq.s32.totalorder %s156, 0
    %s159 = sadd.s32 %s158, 1
    %s160 = scalar_select %p157, %s158, %s159
    %p163 = pneg %p157
    %p164 = scmp.eq.s32.totalorder %s12, 1
    %p165 = por %p163, %p164
    %p166 = scmp.ne.s32.totalorder %s158, %s161
    %p167 = scmp.eq.s32.totalorder %s12, 0
    %p168 = por %p166, %p167
    %p169 = scmp.ne.s32.totalorder %s158, %s161
    %p170 = scmp.eq.s32.totalorder %s17, 1
    %p171 = por %p169, %p170
    %p172 = scmp.ne.s32.totalorder %s161, %s162
    %p173 = scmp.eq.s32.totalorder %s17, 0
    %p174 = por %p172, %p173
    %p175 = scmp.ne.s32.totalorder %s161, %s162
    %p176 = scmp.eq.s32.totalorder %s18, 1
    %p177 = por %p175, %p176
    %p179 = scmp.ne.s32.totalorder %s162, %s178
    %p180 = scmp.eq.s32.totalorder %s18, 0
    %p181 = por %p179, %p180
    %p182 = scmp.le.s32.totalorder 1, %s12
    %p183 = scmp.lt.s32.totalorder %s12, 3
    %p184 = pnand %p182, %p183
    %p185 = pneg %p184
    // Predicated region
    $region9: #{_lambda_.18} parent=5 // pred_check
      _
    $region10: #{_lambda_.18} parent=5 // pred_check_branch
      %187 = sbr.rel (%p184) target = $region12
    $region11: #{_lambda_.18} parent=5 // pred_region
      %s188 = ssub.s32 %s12, 1
      // Predicated region
      $region13: #{_lambda_.18} parent=11 // pred_check
        %p189 = pneg %p59
      $region14: #{_lambda_.18} parent=11 // pred_check_branch
        %191 = sbr.rel (%p189) target = $region16
      $region15: #{_lambda_.18} parent=11 // pred_region
        _
      $region16: #{_lambda_.18} parent=11 // pred_fallthru
        _
      // Predicated region
      $region17: #{_lambda_.18} parent=11 // pred_check
        %p192 = pneg %p80
      $region18: #{_lambda_.18} parent=11 // pred_check_branch
        %194 = sbr.rel (%p192) target = $region20
      $region19: #{_lambda_.18} parent=11 // pred_region
        _
      $region20: #{_lambda_.18} parent=11 // pred_fallthru
        _
      // Predicated region
      $region21: #{_lambda_.18} parent=11 // pred_check
        %p195 = pneg %p127
      $region22: #{_lambda_.18} parent=11 // pred_check_branch
        %197 = sbr.rel (%p195) target = $region24
      $region23: #{_lambda_.18} parent=11 // pred_region
        _
      $region24: #{_lambda_.18} parent=11 // pred_fallthru
        _
      // Predicated region
      $region25: #{_lambda_.18} parent=11 // pred_check
        %p198 = pneg %p148
      $region26: #{_lambda_.18} parent=11 // pred_check_branch
        %200 = sbr.rel (%p198) target = $region28
      $region27: #{_lambda_.18} parent=11 // pred_region
        _
      $region28: #{_lambda_.18} parent=11 // pred_fallthru
        _
    $region12: #{_lambda_.18} parent=5 // pred_fallthru
      _
    %p201 = scmp.lt.s32.totalorder %s12, 2
    // Predicated region
    $region29: #{_lambda_.18} parent=5 // pred_check
      %p202 = pneg %p201
    $region30: #{_lambda_.18} parent=5 // pred_check_branch
      %204 = sbr.rel (%p202) target = $region32
    $region31: #{_lambda_.18} parent=5 // pred_region
      // Predicated region
      $region33: #{_lambda_.18} parent=31 // pred_check
        %p205 = pneg %p32
      $region34: #{_lambda_.18} parent=31 // pred_check_branch
        %207 = sbr.rel (%p205) target = $region36
      $region35: #{_lambda_.18} parent=31 // pred_region
        %p208 = scmp.lt.s32.totalorder %s12, 1
        %s209 = scalar_select %p208, %s12, 1
        %s210 = smul.addr %s209, 32
        %s211 = smul.addr %s210, 8
        %s212 = scalar_lea.vmem %s0, %s211
      $region36: #{_lambda_.18} parent=31 // pred_fallthru
        _
      // Predicated region
      $region37: #{_lambda_.18} parent=31 // pred_check
        %p213 = pneg %p100
      $region38: #{_lambda_.18} parent=31 // pred_check_branch
        %215 = sbr.rel (%p213) target = $region40
      $region39: #{_lambda_.18} parent=31 // pred_region
        %p216 = scmp.lt.s32.totalorder %s12, 1
        %s217 = scalar_select %p216, %s12, 1
        %s218 = smul.addr %s217, 32
        %s219 = smul.addr %s218, 8
        %s220 = scalar_lea.vmem %s3, %s219
      $region40: #{_lambda_.18} parent=31 // pred_fallthru
        _
    $region32: #{_lambda_.18} parent=5 // pred_fallthru
      _
    %p221 = scmp.le.s32.totalorder 1, %s12
    %p222 = scmp.lt.s32.totalorder %s12, 3
    %p223 = pnand %p221, %p222
    %p224 = pneg %p223
    // Predicated region
    $region41: #{_lambda_.18} parent=5 // pred_check
      _
    $region42: #{_lambda_.18} parent=5 // pred_check_branch
      %226 = sbr.rel (%p223) target = $region44
    $region43: #{_lambda_.18} parent=5 // pred_region
      %s227 = ssub.s32 %s12, 1
      %p228 = scmp.lt.s32.totalorder %s17, 1
      %s229 = scalar_select %p228, %s17, 1
      %s230 = smul.addr %s229, 32
      %s231 = smul.addr %s230, 8
      %s232 = scalar_lea.vmem %s0, %s231
      %p233 = pneg %p38
      %p234 = pneg %p35
      %p235 = pneg %p59
      %p236 = pneg %p56
      %p237 = pneg %p80
      %p238 = pneg %p77
      %p239 = scmp.lt.s32.totalorder %s17, 1
      %s240 = scalar_select %p239, %s17, 1
      %s241 = smul.addr %s240, 32
      %s242 = smul.addr %s241, 8
      %s243 = scalar_lea.vmem %s3, %s242
      %p244 = pneg %p106
      %p245 = pneg %p103
      %p246 = pneg %p127
      %p247 = pneg %p124
      %p248 = pneg %p148
      %p249 = pneg %p145
      %p250 = pneg %p174
      %p251 = pneg %p171
      %p252 = scmp.lt.s32.totalorder %s17, 1
      %s253 = scalar_select %p252, %s17, 1
      %s254 = smul.addr %s253, 32
      %s255 = smul.addr %s254, 8
      %s256 = scalar_lea.vmem %s6, %s255
      %p257 = scmp.lt.s32.totalorder %s17, 1
      %s258 = scalar_select %p257, %s17, 1
      %s259 = smul.addr %s258, 32
      %s260 = smul.addr %s259, 8
      %s261 = scalar_lea.vmem %s0, %s260
      %p262 = scmp.lt.s32.totalorder %s17, 1
      %s263 = scalar_select %p262, %s17, 1
      %s264 = smul.addr %s263, 32
      %s265 = smul.addr %s264, 8
      %s266 = scalar_lea.vmem %s3, %s265
      %p267 = scmp.lt.s32.totalorder %s17, 1
      %s268 = scalar_select %p267, %s17, 1
      %s269 = smul.addr %s268, 32
      %s270 = smul.addr %s269, 8
      %s271 = scalar_lea.vmem %s6, %s270
      %v272 = vld [vmem:[%s1] sm:$0x1]
      %v273 = vld [vmem:[%s2] sm:$0x1]
      %v274 = vld [vmem:[%s4] sm:$0x1]
      %v275 = vld [vmem:[%s5] sm:$0x1]
      %v276 = vld [vmem:[%s261] sm:$0xff]
      %v277 = vld [vmem:[%s261 + $0x8] sm:$0xff]
      %v278 = vld [vmem:[%s261 + $0x10] sm:$0xff]
      %v279 = vld [vmem:[%s261 + $0x18] sm:$0xff]
      %v280 = vld [vmem:[%s261 + $0x20] sm:$0xff]
      %v281 = vld [vmem:[%s261 + $0x28] sm:$0xff]
      %v282 = vld [vmem:[%s261 + $0x30] sm:$0xff]
      %v283 = vld [vmem:[%s261 + $0x38] sm:$0xff]
      %v284 = vld [vmem:[%s261 + $0x40] sm:$0xff]
      %v285 = vld [vmem:[%s261 + $0x48] sm:$0xff]
      %v286 = vld [vmem:[%s261 + $0x50] sm:$0xff]
      %v287 = vld [vmem:[%s261 + $0x58] sm:$0xff]
      %v288 = vld [vmem:[%s261 + $0x60] sm:$0xff]
      %v289 = vld [vmem:[%s261 + $0x68] sm:$0xff]
      %v290 = vld [vmem:[%s261 + $0x70] sm:$0xff]
      %v291 = vld [vmem:[%s261 + $0x78] sm:$0xff]
      %v292 = vld [vmem:[%s261 + $0x80] sm:$0xff]
      %v293 = vld [vmem:[%s261 + $0x88] sm:$0xff]
      %v294 = vld [vmem:[%s261 + $0x90] sm:$0xff]
      %v295 = vld [vmem:[%s261 + $0x98] sm:$0xff]
      %v296 = vld [vmem:[%s261 + $0xa0] sm:$0xff]
      %v297 = vld [vmem:[%s261 + $0xa8] sm:$0xff]
      %v298 = vld [vmem:[%s261 + $0xb0] sm:$0xff]
      %v299 = vld [vmem:[%s261 + $0xb8] sm:$0xff]
      %v300 = vld [vmem:[%s261 + $0xc0] sm:$0xff]
      %v301 = vld [vmem:[%s261 + $0xc8] sm:$0xff]
      %v302 = vld [vmem:[%s261 + $0xd0] sm:$0xff]
      %v303 = vld [vmem:[%s261 + $0xd8] sm:$0xff]
      %v304 = vld [vmem:[%s261 + $0xe0] sm:$0xff]
      %v305 = vld [vmem:[%s261 + $0xe8] sm:$0xff]
      %v306 = vld [vmem:[%s261 + $0xf0] sm:$0xff]
      %v307 = vld [vmem:[%s261 + $0xf8] sm:$0xff]
      %v309 = vperm.slane %v272, 0
      %v311 = vmul.f32 %v276, %v309
      %v312 = vmul.f32 %v277, %v309
      %v313 = vmul.f32 %v278, %v309
      %v314 = vmul.f32 %v279, %v309
      %v315 = vmul.f32 %v280, %v309
      %v316 = vmul.f32 %v281, %v309
      %v317 = vmul.f32 %v282, %v309
      %v318 = vmul.f32 %v283, %v309
      %v319 = vmul.f32 %v284, %v309
      %v320 = vmul.f32 %v285, %v309
      %v321 = vmul.f32 %v286, %v309
      %v322 = vmul.f32 %v287, %v309
      %v323 = vmul.f32 %v288, %v309
      %v324 = vmul.f32 %v289, %v309
      %v325 = vmul.f32 %v290, %v309
      %v326 = vmul.f32 %v291, %v309
      %v327 = vmul.f32 %v292, %v309
      %v328 = vmul.f32 %v293, %v309
      %v329 = vmul.f32 %v294, %v309
      %v330 = vmul.f32 %v295, %v309
      %v331 = vmul.f32 %v296, %v309
      %v332 = vmul.f32 %v297, %v309
      %v333 = vmul.f32 %v298, %v309
      %v334 = vmul.f32 %v299, %v309
      %v335 = vmul.f32 %v300, %v309
      %v336 = vmul.f32 %v301, %v309
      %v337 = vmul.f32 %v302, %v309
      %v338 = vmul.f32 %v303, %v309
      %v339 = vmul.f32 %v304, %v309
      %v340 = vmul.f32 %v305, %v309
      %v341 = vmul.f32 %v306, %v309
      %v342 = vmul.f32 %v307, %v309
      %v344 = vperm.slane %v273, 0
      %v346 = vadd.f32 %v311, %v344
      %v347 = vadd.f32 %v312, %v344
      %v348 = vadd.f32 %v313, %v344
      %v349 = vadd.f32 %v314, %v344
      %v350 = vadd.f32 %v315, %v344
      %v351 = vadd.f32 %v316, %v344
      %v352 = vadd.f32 %v317, %v344
      %v353 = vadd.f32 %v318, %v344
      %v354 = vadd.f32 %v319, %v344
      %v355 = vadd.f32 %v320, %v344
      %v356 = vadd.f32 %v321, %v344
      %v357 = vadd.f32 %v322, %v344
      %v358 = vadd.f32 %v323, %v344
      %v359 = vadd.f32 %v324, %v344
      %v360 = vadd.f32 %v325, %v344
      %v361 = vadd.f32 %v326, %v344
      %v362 = vadd.f32 %v327, %v344
      %v363 = vadd.f32 %v328, %v344
      %v364 = vadd.f32 %v329, %v344
      %v365 = vadd.f32 %v330, %v344
      %v366 = vadd.f32 %v331, %v344
      %v367 = vadd.f32 %v332, %v344
      %v368 = vadd.f32 %v333, %v344
      %v369 = vadd.f32 %v334, %v344
      %v370 = vadd.f32 %v335, %v344
      %v371 = vadd.f32 %v336, %v344
      %v372 = vadd.f32 %v337, %v344
      %v373 = vadd.f32 %v338, %v344
      %v374 = vadd.f32 %v339, %v344
      %v375 = vadd.f32 %v340, %v344
      %v376 = vadd.f32 %v341, %v344
      %v377 = vadd.f32 %v342, %v344
      %v378 = vld [vmem:[%s266] sm:$0xff]
      %v379 = vld [vmem:[%s266 + $0x8] sm:$0xff]
      %v380 = vld [vmem:[%s266 + $0x10] sm:$0xff]
      %v381 = vld [vmem:[%s266 + $0x18] sm:$0xff]
      %v382 = vld [vmem:[%s266 + $0x20] sm:$0xff]
      %v383 = vld [vmem:[%s266 + $0x28] sm:$0xff]
      %v384 = vld [vmem:[%s266 + $0x30] sm:$0xff]
      %v385 = vld [vmem:[%s266 + $0x38] sm:$0xff]
      %v386 = vld [vmem:[%s266 + $0x40] sm:$0xff]
      %v387 = vld [vmem:[%s266 + $0x48] sm:$0xff]
      %v388 = vld [vmem:[%s266 + $0x50] sm:$0xff]
      %v389 = vld [vmem:[%s266 + $0x58] sm:$0xff]
      %v390 = vld [vmem:[%s266 + $0x60] sm:$0xff]
      %v391 = vld [vmem:[%s266 + $0x68] sm:$0xff]
      %v392 = vld [vmem:[%s266 + $0x70] sm:$0xff]
      %v393 = vld [vmem:[%s266 + $0x78] sm:$0xff]
      %v394 = vld [vmem:[%s266 + $0x80] sm:$0xff]
      %v395 = vld [vmem:[%s266 + $0x88] sm:$0xff]
      %v396 = vld [vmem:[%s266 + $0x90] sm:$0xff]
      %v397 = vld [vmem:[%s266 + $0x98] sm:$0xff]
      %v398 = vld [vmem:[%s266 + $0xa0] sm:$0xff]
      %v399 = vld [vmem:[%s266 + $0xa8] sm:$0xff]
      %v400 = vld [vmem:[%s266 + $0xb0] sm:$0xff]
      %v401 = vld [vmem:[%s266 + $0xb8] sm:$0xff]
      %v402 = vld [vmem:[%s266 + $0xc0] sm:$0xff]
      %v403 = vld [vmem:[%s266 + $0xc8] sm:$0xff]
      %v404 = vld [vmem:[%s266 + $0xd0] sm:$0xff]
      %v405 = vld [vmem:[%s266 + $0xd8] sm:$0xff]
      %v406 = vld [vmem:[%s266 + $0xe0] sm:$0xff]
      %v407 = vld [vmem:[%s266 + $0xe8] sm:$0xff]
      %v408 = vld [vmem:[%s266 + $0xf0] sm:$0xff]
      %v409 = vld [vmem:[%s266 + $0xf8] sm:$0xff]
      %v411 = vperm.slane %v274, 0
      %v413 = vmul.f32 %v378, %v411
      %v414 = vmul.f32 %v379, %v411
      %v415 = vmul.f32 %v380, %v411
      %v416 = vmul.f32 %v381, %v411
      %v417 = vmul.f32 %v382, %v411
      %v418 = vmul.f32 %v383, %v411
      %v419 = vmul.f32 %v384, %v411
      %v420 = vmul.f32 %v385, %v411
      %v421 = vmul.f32 %v386, %v411
      %v422 = vmul.f32 %v387, %v411
      %v423 = vmul.f32 %v388, %v411
      %v424 = vmul.f32 %v389, %v411
      %v425 = vmul.f32 %v390, %v411
      %v426 = vmul.f32 %v391, %v411
      %v427 = vmul.f32 %v392, %v411
      %v428 = vmul.f32 %v393, %v411
      %v429 = vmul.f32 %v394, %v411
      %v430 = vmul.f32 %v395, %v411
      %v431 = vmul.f32 %v396, %v411
      %v432 = vmul.f32 %v397, %v411
      %v433 = vmul.f32 %v398, %v411
      %v434 = vmul.f32 %v399, %v411
      %v435 = vmul.f32 %v400, %v411
      %v436 = vmul.f32 %v401, %v411
      %v437 = vmul.f32 %v402, %v411
      %v438 = vmul.f32 %v403, %v411
      %v439 = vmul.f32 %v404, %v411
      %v440 = vmul.f32 %v405, %v411
      %v441 = vmul.f32 %v406, %v411
      %v442 = vmul.f32 %v407, %v411
      %v443 = vmul.f32 %v408, %v411
      %v444 = vmul.f32 %v409, %v411
      %v445 = vadd.f32 %v346, %v413
      %v446 = vadd.f32 %v347, %v414
      %v447 = vadd.f32 %v348, %v415
      %v448 = vadd.f32 %v349, %v416
      %v449 = vadd.f32 %v350, %v417
      %v450 = vadd.f32 %v351, %v418
      %v451 = vadd.f32 %v352, %v419
      %v452 = vadd.f32 %v353, %v420
      %v453 = vadd.f32 %v354, %v421
      %v454 = vadd.f32 %v355, %v422
      %v455 = vadd.f32 %v356, %v423
      %v456 = vadd.f32 %v357, %v424
      %v457 = vadd.f32 %v358, %v425
      %v458 = vadd.f32 %v359, %v426
      %v459 = vadd.f32 %v360, %v427
      %v460 = vadd.f32 %v361, %v428
      %v461 = vadd.f32 %v362, %v429
      %v462 = vadd.f32 %v363, %v430
      %v463 = vadd.f32 %v364, %v431
      %v464 = vadd.f32 %v365, %v432
      %v465 = vadd.f32 %v366, %v433
      %v466 = vadd.f32 %v367, %v434
      %v467 = vadd.f32 %v368, %v435
      %v468 = vadd.f32 %v369, %v436
      %v469 = vadd.f32 %v370, %v437
      %v470 = vadd.f32 %v371, %v438
      %v471 = vadd.f32 %v372, %v439
      %v472 = vadd.f32 %v373, %v440
      %v473 = vadd.f32 %v374, %v441
      %v474 = vadd.f32 %v375, %v442
      %v475 = vadd.f32 %v376, %v443
      %v476 = vadd.f32 %v377, %v444
      %v478 = vperm.slane %v275, 0
      %v480 = vadd.f32 %v445, %v478
      %v481 = vadd.f32 %v446, %v478
      %v482 = vadd.f32 %v447, %v478
      %v483 = vadd.f32 %v448, %v478
      %v484 = vadd.f32 %v449, %v478
      %v485 = vadd.f32 %v450, %v478
      %v486 = vadd.f32 %v451, %v478
      %v487 = vadd.f32 %v452, %v478
      %v488 = vadd.f32 %v453, %v478
      %v489 = vadd.f32 %v454, %v478
      %v490 = vadd.f32 %v455, %v478
      %v491 = vadd.f32 %v456, %v478
      %v492 = vadd.f32 %v457, %v478
      %v493 = vadd.f32 %v458, %v478
      %v494 = vadd.f32 %v459, %v478
      %v495 = vadd.f32 %v460, %v478
      %v496 = vadd.f32 %v461, %v478
      %v497 = vadd.f32 %v462, %v478
      %v498 = vadd.f32 %v463, %v478
      %v499 = vadd.f32 %v464, %v478
      %v500 = vadd.f32 %v465, %v478
      %v501 = vadd.f32 %v466, %v478
      %v502 = vadd.f32 %v467, %v478
      %v503 = vadd.f32 %v468, %v478
      %v504 = vadd.f32 %v469, %v478
      %v505 = vadd.f32 %v470, %v478
      %v506 = vadd.f32 %v471, %v478
      %v507 = vadd.f32 %v472, %v478
      %v508 = vadd.f32 %v473, %v478
      %v509 = vadd.f32 %v474, %v478
      %v510 = vadd.f32 %v475, %v478
      %v511 = vadd.f32 %v476, %v478
      %v512 = vmax.f32 %v480, 0.0
      %v513 = vmax.f32 %v481, 0.0
      %v514 = vmax.f32 %v482, 0.0
      %v515 = vmax.f32 %v483, 0.0
      %v516 = vmax.f32 %v484, 0.0
      %v517 = vmax.f32 %v485, 0.0
      %v518 = vmax.f32 %v486, 0.0
      %v519 = vmax.f32 %v487, 0.0
      %v520 = vmax.f32 %v488, 0.0
      %v521 = vmax.f32 %v489, 0.0
      %v522 = vmax.f32 %v490, 0.0
      %v523 = vmax.f32 %v491, 0.0
      %v524 = vmax.f32 %v492, 0.0
      %v525 = vmax.f32 %v493, 0.0
      %v526 = vmax.f32 %v494, 0.0
      %v527 = vmax.f32 %v495, 0.0
      %v528 = vmax.f32 %v496, 0.0
      %v529 = vmax.f32 %v497, 0.0
      %v530 = vmax.f32 %v498, 0.0
      %v531 = vmax.f32 %v499, 0.0
      %v532 = vmax.f32 %v500, 0.0
      %v533 = vmax.f32 %v501, 0.0
      %v534 = vmax.f32 %v502, 0.0
      %v535 = vmax.f32 %v503, 0.0
      %v536 = vmax.f32 %v504, 0.0
      %v537 = vmax.f32 %v505, 0.0
      %v538 = vmax.f32 %v506, 0.0
      %v539 = vmax.f32 %v507, 0.0
      %v540 = vmax.f32 %v508, 0.0
      %v541 = vmax.f32 %v509, 0.0
      %v542 = vmax.f32 %v510, 0.0
      %v543 = vmax.f32 %v511, 0.0
      %544 = vst [vmem:[%s271] sm:$0xff] %v512
      %545 = vst [vmem:[%s271 + $0x8] sm:$0xff] %v513
      %546 = vst [vmem:[%s271 + $0x10] sm:$0xff] %v514
      %547 = vst [vmem:[%s271 + $0x18] sm:$0xff] %v515
      %548 = vst [vmem:[%s271 + $0x20] sm:$0xff] %v516
      %549 = vst [vmem:[%s271 + $0x28] sm:$0xff] %v517
      %550 = vst [vmem:[%s271 + $0x30] sm:$0xff] %v518
      %551 = vst [vmem:[%s271 + $0x38] sm:$0xff] %v519
      %552 = vst [vmem:[%s271 + $0x40] sm:$0xff] %v520
      %553 = vst [vmem:[%s271 + $0x48] sm:$0xff] %v521
      %554 = vst [vmem:[%s271 + $0x50] sm:$0xff] %v522
      %555 = vst [vmem:[%s271 + $0x58] sm:$0xff] %v523
      %556 = vst [vmem:[%s271 + $0x60] sm:$0xff] %v524
      %557 = vst [vmem:[%s271 + $0x68] sm:$0xff] %v525
      %558 = vst [vmem:[%s271 + $0x70] sm:$0xff] %v526
      %559 = vst [vmem:[%s271 + $0x78] sm:$0xff] %v527
      %560 = vst [vmem:[%s271 + $0x80] sm:$0xff] %v528
      %561 = vst [vmem:[%s271 + $0x88] sm:$0xff] %v529
      %562 = vst [vmem:[%s271 + $0x90] sm:$0xff] %v530
      %563 = vst [vmem:[%s271 + $0x98] sm:$0xff] %v531
      %564 = vst [vmem:[%s271 + $0xa0] sm:$0xff] %v532
      %565 = vst [vmem:[%s271 + $0xa8] sm:$0xff] %v533
      %566 = vst [vmem:[%s271 + $0xb0] sm:$0xff] %v534
      %567 = vst [vmem:[%s271 + $0xb8] sm:$0xff] %v535
      %568 = vst [vmem:[%s271 + $0xc0] sm:$0xff] %v536
      %569 = vst [vmem:[%s271 + $0xc8] sm:$0xff] %v537
      %570 = vst [vmem:[%s271 + $0xd0] sm:$0xff] %v538
      %571 = vst [vmem:[%s271 + $0xd8] sm:$0xff] %v539
      %572 = vst [vmem:[%s271 + $0xe0] sm:$0xff] %v540
      %573 = vst [vmem:[%s271 + $0xe8] sm:$0xff] %v541
      %574 = vst [vmem:[%s271 + $0xf0] sm:$0xff] %v542
      %575 = vst [vmem:[%s271 + $0xf8] sm:$0xff] %v543
      %p576 = scmp.lt.s32.totalorder %s17, 1
      %s577 = scalar_select %p576, %s17, 1
      %s578 = smul.addr %s577, 32
      %s579 = smul.addr %s578, 8
      %s580 = scalar_lea.vmem %s6, %s579
      // Predicated region
      $region45: #{_lambda_.18} parent=43 // pred_check
        %p581 = pneg %p171
      $region46: #{_lambda_.18} parent=43 // pred_check_branch
        %583 = sbr.rel (%p581) target = $region48
      $region47: #{_lambda_.18} parent=43 // pred_region
        _
      $region48: #{_lambda_.18} parent=43 // pred_fallthru
        _
    $region44: #{_lambda_.18} parent=5 // pred_fallthru
      _
    %p584 = scmp.le.s32.totalorder 2, %s12
    // Predicated region
    $region49: #{_lambda_.18} parent=5 // pred_check
      %p585 = pneg %p584
    $region50: #{_lambda_.18} parent=5 // pred_check_branch
      %587 = sbr.rel (%p585) target = $region52
    $region51: #{_lambda_.18} parent=5 // pred_region
      %s588 = ssub.s32 %s12, 2
      // Predicated region
      $region53: #{_lambda_.18} parent=51 // pred_check
        %p589 = pneg %p177
      $region54: #{_lambda_.18} parent=51 // pred_check_branch
        %591 = sbr.rel (%p589) target = $region56
      $region55: #{_lambda_.18} parent=51 // pred_region
        %p592 = scmp.lt.s32.totalorder %s18, 1
        %s593 = scalar_select %p592, %s18, 1
        %s594 = smul.addr %s593, 32
        %s595 = smul.addr %s594, 8
        %s596 = scalar_lea.vmem %s6, %s595
      $region56: #{_lambda_.18} parent=51 // pred_fallthru
        _
    $region52: #{_lambda_.18} parent=5 // pred_fallthru
      _
  $region6: #{_lambda_.18} parent=0 // loop_footer
    %s16 = sadd.s32 1, %s12
  $region7: #{_lambda_.18} parent=0 // loop_footer_branch
    %11 = sbr.rel target = $region3
  $region8: #{_lambda_.18} parent=0 // loop_exit
    _

// kernel: _lambda_.22
$region0: #{_lambda_.22}
  #allocation0 [shape = 'u32[]', space=smem, size = 0x4, offset = 0x4, fixed_abs, tag = 'smem constant byte address 0x4 - core index']
  #allocation1 [shape = 'u32[72,128]{1,0:T(1,128)}', space=vmem, size = 0x9000, scoped, tag = 'internal scratch']
  %s0 = inlined_call_operand.vmem [shape: f32[2,8,8,128], index: 0, kind: input, shape index: {}]
  %s1 = inlined_call_operand.vmem [shape: bf16[1,128,128], index: 1, kind: input, shape index: {}]
  %s2 = inlined_call_operand.vmem [shape: f32[2,64,128], index: 2, kind: output, shape index: {0}]
  %s3 = inlined_call_operand.vmem [shape: f32[2,1,128], index: 3, kind: output, shape index: {1}]
  %s4 = inlined_call_operand.vmem [shape: f32[2,1,128], index: 4, kind: output, shape index: {2}]
  %5 = xla_tuple %s2, %s3, %s4
  %s6 = sld [smem:[#allocation0]]
  $region57: #{_lambda_.22} parent=0
    _
  %s8 = ssub.s32 1, %s6
  %s9 = scalar_select 0, %s8, %s6
  loop: start=0, step=1, limit=4
  $region2: #{_lambda_.22} parent=0 // loop_pre_header
    _
  $region3: #{_lambda_.22} parent=0 // loop_header
    %s11 = sphi 0, %s15
    %p12 = scmp.ge.s32.totalorder %s11, 4
    %s21 = sphi 0, %s23
    %s24 = sphi 0, %s21
    %s25 = sphi 0, %s24
    %s41 = sphi 0, %s25
    %s45 = sphi 0, %s45
    %s47 = sphi 0, %s45
    %s48 = sphi 0, %s47
    %s62 = sphi 0, %s48
    %s68 = sphi 0, %s70
    %s71 = sphi 0, %s68
    %s72 = sphi 0, %s71
    %s88 = sphi 0, %s72
    %s94 = sphi 0, %s96
    %s97 = sphi 0, %s94
    %s98 = sphi 0, %s97
    %s114 = sphi 0, %s98
    %s120 = sphi 0, %s122
    %s123 = sphi 0, %s120
    %s124 = sphi 0, %s123
    %s140 = sphi 0, %s124
  $region4: #{_lambda_.22} parent=0 // loop_header_branch
    %14 = sbr.rel (%p12) target = $region8
  $region5: #{_lambda_.22} parent=0 // loop_body
    %s16 = ssub.s32 %s11, 1
    %s17 = ssub.s32 %s11, 2
    %s18 = sadd.s32 %s11, 1
    %s19 = ssub.s32 %s11, %s18
    %p20 = scmp.eq.s32.totalorder %s19, 0
    %s22 = sadd.s32 %s21, 1
    %s23 = scalar_select %p20, %s21, %s22
    %p26 = pneg %p20
    %p27 = scmp.eq.s32.totalorder %s11, 1
    %p28 = por %p26, %p27
    %p29 = scmp.ne.s32.totalorder %s21, %s24
    %p30 = scmp.eq.s32.totalorder %s11, 0
    %p31 = por %p29, %p30
    %p32 = scmp.ne.s32.totalorder %s21, %s24
    %p33 = scmp.eq.s32.totalorder %s16, 1
    %p34 = por %p32, %p33
    %p35 = scmp.ne.s32.totalorder %s24, %s25
    %p36 = scmp.eq.s32.totalorder %s16, 0
    %p37 = por %p35, %p36
    %p38 = scmp.ne.s32.totalorder %s24, %s25
    %p39 = scmp.eq.s32.totalorder %s17, 1
    %p40 = por %p38, %p39
    %p42 = scmp.ne.s32.totalorder %s25, %s41
    %p43 = scmp.eq.s32.totalorder %s17, 0
    %p44 = por %p42, %p43
    %s46 = sadd.s32 %s45, 1
    %p49 = scmp.eq.s32.totalorder %s11, 1
    %p50 = scmp.ne.s32.totalorder %s45, %s47
    %p51 = scmp.eq.s32.totalorder %s11, 0
    %p52 = por %p50, %p51
    %p53 = scmp.ne.s32.totalorder %s45, %s47
    %p54 = scmp.eq.s32.totalorder %s16, 1
    %p55 = por %p53, %p54
    %p56 = scmp.ne.s32.totalorder %s47, %s48
    %p57 = scmp.eq.s32.totalorder %s16, 0
    %p58 = por %p56, %p57
    %p59 = scmp.ne.s32.totalorder %s47, %s48
    %p60 = scmp.eq.s32.totalorder %s17, 1
    %p61 = por %p59, %p60
    %p63 = scmp.ne.s32.totalorder %s48, %s62
    %p64 = scmp.eq.s32.totalorder %s17, 0
    %p65 = por %p63, %p64
    %s66 = ssub.s32 %s11, %s18
    %p67 = scmp.eq.s32.totalorder %s66, 0
    %s69 = sadd.s32 %s68, 1
    %s70 = scalar_select %p67, %s68, %s69
    %p73 = pneg %p67
    %p74 = scmp.eq.s32.totalorder %s11, 1
    %p75 = por %p73, %p74
    %p76 = scmp.ne.s32.totalorder %s68, %s71
    %p77 = scmp.eq.s32.totalorder %s11, 0
    %p78 = por %p76, %p77
    %p79 = scmp.ne.s32.totalorder %s68, %s71
    %p80 = scmp.eq.s32.totalorder %s16, 1
    %p81 = por %p79, %p80
    %p82 = scmp.ne.s32.totalorder %s71, %s72
    %p83 = scmp.eq.s32.totalorder %s16, 0
    %p84 = por %p82, %p83
    %p85 = scmp.ne.s32.totalorder %s71, %s72
    %p86 = scmp.eq.s32.totalorder %s17, 1
    %p87 = por %p85, %p86
    %p89 = scmp.ne.s32.totalorder %s72, %s88
    %p90 = scmp.eq.s32.totalorder %s17, 0
    %p91 = por %p89, %p90
    %s92 = ssub.s32 %s11, %s18
    %p93 = scmp.eq.s32.totalorder %s92, 0
    %s95 = sadd.s32 %s94, 1
    %s96 = scalar_select %p93, %s94, %s95
    %p99 = pneg %p93
    %p100 = scmp.eq.s32.totalorder %s11, 1
    %p101 = por %p99, %p100
    %p102 = scmp.ne.s32.totalorder %s94, %s97
    %p103 = scmp.eq.s32.totalorder %s11, 0
    %p104 = por %p102, %p103
    %p105 = scmp.ne.s32.totalorder %s94, %s97
    %p106 = scmp.eq.s32.totalorder %s16, 1
    %p107 = por %p105, %p106
    %p108 = scmp.ne.s32.totalorder %s97, %s98
    %p109 = scmp.eq.s32.totalorder %s16, 0
    %p110 = por %p108, %p109
    %p111 = scmp.ne.s32.totalorder %s97, %s98
    %p112 = scmp.eq.s32.totalorder %s17, 1
    %p113 = por %p111, %p112
    %p115 = scmp.ne.s32.totalorder %s98, %s114
    %p116 = scmp.eq.s32.totalorder %s17, 0
    %p117 = por %p115, %p116
    %s118 = ssub.s32 %s11, %s18
    %p119 = scmp.eq.s32.totalorder %s118, 0
    %s121 = sadd.s32 %s120, 1
    %s122 = scalar_select %p119, %s120, %s121
    %p125 = pneg %p119
    %p126 = scmp.eq.s32.totalorder %s11, 1
    %p127 = por %p125, %p126
    %p128 = scmp.ne.s32.totalorder %s120, %s123
    %p129 = scmp.eq.s32.totalorder %s11, 0
    %p130 = por %p128, %p129
    %p131 = scmp.ne.s32.totalorder %s120, %s123
    %p132 = scmp.eq.s32.totalorder %s16, 1
    %p133 = por %p131, %p132
    %p134 = scmp.ne.s32.totalorder %s123, %s124
    %p135 = scmp.eq.s32.totalorder %s16, 0
    %p136 = por %p134, %p135
    %p137 = scmp.ne.s32.totalorder %s123, %s124
    %p138 = scmp.eq.s32.totalorder %s17, 1
    %p139 = por %p137, %p138
    %p141 = scmp.ne.s32.totalorder %s124, %s140
    %p142 = scmp.eq.s32.totalorder %s17, 0
    %p143 = por %p141, %p142
    %p144 = scmp.le.s32.totalorder 1, %s11
    %p145 = scmp.lt.s32.totalorder %s11, 3
    %p146 = pnand %p144, %p145
    %p147 = pneg %p146
    // Predicated region
    $region9: #{_lambda_.22} parent=5 // pred_check
      _
    $region10: #{_lambda_.22} parent=5 // pred_check_branch
      %149 = sbr.rel (%p146) target = $region12
    $region11: #{_lambda_.22} parent=5 // pred_region
      %s150 = ssub.s32 %s11, 1
      // Predicated region
      $region13: #{_lambda_.22} parent=11 // pred_check
        %p151 = pneg %p58
      $region14: #{_lambda_.22} parent=11 // pred_check_branch
        %153 = sbr.rel (%p151) target = $region16
      $region15: #{_lambda_.22} parent=11 // pred_region
        _
      $region16: #{_lambda_.22} parent=11 // pred_fallthru
        _
    $region12: #{_lambda_.22} parent=5 // pred_fallthru
      _
    %p154 = scmp.lt.s32.totalorder %s11, 2
    // Predicated region
    $region17: #{_lambda_.22} parent=5 // pred_check
      %p155 = pneg %p154
    $region18: #{_lambda_.22} parent=5 // pred_check_branch
      %157 = sbr.rel (%p155) target = $region20
    $region19: #{_lambda_.22} parent=5 // pred_region
      // Predicated region
      $region21: #{_lambda_.22} parent=19 // pred_check
        %p158 = pneg %p31
      $region22: #{_lambda_.22} parent=19 // pred_check_branch
        %160 = sbr.rel (%p158) target = $region24
      $region23: #{_lambda_.22} parent=19 // pred_region
        %p161 = scmp.lt.s32.totalorder %s11, 1
        %s162 = scalar_select %p161, %s11, 1
        %s163 = smul.addr %s162, 8
        %s164 = smul.addr %s163, 8
        %s165 = scalar_lea.vmem %s0, %s164
      $region24: #{_lambda_.22} parent=19 // pred_fallthru
        _
    $region20: #{_lambda_.22} parent=5 // pred_fallthru
      _
    %p166 = scmp.le.s32.totalorder 1, %s11
    %p167 = scmp.lt.s32.totalorder %s11, 3
    %p168 = pnand %p166, %p167
    %p169 = pneg %p168
    // Predicated region
    $region25: #{_lambda_.22} parent=5 // pred_check
      _
    $region26: #{_lambda_.22} parent=5 // pred_check_branch
      %171 = sbr.rel (%p168) target = $region28
    $region27: #{_lambda_.22} parent=5 // pred_region
      %s172 = ssub.s32 %s11, 1
      %p173 = scmp.lt.s32.totalorder %s16, 1
      %s174 = scalar_select %p173, %s16, 1
      %s175 = smul.addr %s174, 8
      %s176 = smul.addr %s175, 8
      %s177 = scalar_lea.vmem %s0, %s176
      %p178 = pneg %p37
      %p179 = pneg %p34
      %p180 = pneg %p58
      %p181 = pneg %p55
      %p182 = pneg %p84
      %p183 = pneg %p81
      %p184 = scmp.lt.s32.totalorder %s16, 1
      %s185 = scalar_select %p184, %s16, 1
      %s186 = smul.addr %s185, 8
      %s187 = smul.addr %s186, 8
      %s188 = scalar_lea.vmem %s2, %s187
      %p189 = pneg %p110
      %p190 = pneg %p107
      %p191 = scmp.lt.s32.totalorder %s16, 1
      %s192 = scalar_select %p191, %s16, 1
      %s193 = scalar_lea.vmem %s3, %s192
      %p194 = pneg %p136
      %p195 = pneg %p133
      %p196 = scmp.lt.s32.totalorder %s16, 1
      %s197 = scalar_select %p196, %s16, 1
      %s198 = scalar_lea.vmem %s4, %s197
      %p199 = scmp.lt.s32.totalorder %s16, 1
      %s200 = scalar_select %p199, %s16, 1
      %s201 = smul.addr %s200, 8
      %s202 = smul.addr %s201, 8
      %s203 = scalar_lea.vmem %s0, %s202
      %p204 = scmp.lt.s32.totalorder %s16, 1
      %s205 = scalar_select %p204, %s16, 1
      %s206 = smul.addr %s205, 8
      %s207 = smul.addr %s206, 8
      %s208 = scalar_lea.vmem %s2, %s207
      %p209 = scmp.lt.s32.totalorder %s16, 1
      %s210 = scalar_select %p209, %s16, 1
      %s211 = scalar_lea.vmem %s3, %s210
      %p212 = scmp.lt.s32.totalorder %s16, 1
      %s213 = scalar_select %p212, %s16, 1
      %s214 = scalar_lea.vmem %s4, %s213
      %v215 = vld [vmem:[%s203] sm:$0xff]
      %v216 = vld [vmem:[%s203 + $0x8] sm:$0xff]
      %v217 = vld [vmem:[%s203 + $0x10] sm:$0xff]
      %v218 = vld [vmem:[%s203 + $0x18] sm:$0xff]
      %v219 = vld [vmem:[%s203 + $0x20] sm:$0xff]
      %v220 = vld [vmem:[%s203 + $0x28] sm:$0xff]
      %v221 = vld [vmem:[%s203 + $0x30] sm:$0xff]
      %v222 = vld [vmem:[%s203 + $0x38] sm:$0xff]
      %v223 = vpack.c.bf16 %v216, %v215
      %v224 = vpack.c.bf16 %v218, %v217
      %v225 = vpack.c.bf16 %v220, %v219
      %v226 = vpack.c.bf16 %v222, %v221
      %v227 = vld [vmem:[%s1] sm:$0xf]
      %v228 = vld [vmem:[%s1 + $0x4] sm:$0xf]
      %v229 = vld [vmem:[%s1 + $0x8] sm:$0xf]
      %v230 = vld [vmem:[%s1 + $0xc] sm:$0xf]
      %v231 = vld [vmem:[%s1 + $0x10] sm:$0xf]
      %v232 = vld [vmem:[%s1 + $0x14] sm:$0xf]
      %v233 = vld [vmem:[%s1 + $0x18] sm:$0xf]
      %v234 = vld [vmem:[%s1 + $0x1c] sm:$0xf]
      %v235 = vld [vmem:[%s1 + $0x20] sm:$0xf]
      %v236 = vld [vmem:[%s1 + $0x24] sm:$0xf]
      %v237 = vld [vmem:[%s1 + $0x28] sm:$0xf]
      %v238 = vld [vmem:[%s1 + $0x2c] sm:$0xf]
      %v239 = vld [vmem:[%s1 + $0x30] sm:$0xf]
      %v240 = vld [vmem:[%s1 + $0x34] sm:$0xf]
      %v241 = vld [vmem:[%s1 + $0x38] sm:$0xf]
      %v242 = vld [vmem:[%s1 + $0x3c] sm:$0xf]
      %v259 = vunpack.c.l.b16 %v227
      %v260 = vunpack.c.l.b16 %v228
      %v261 = vunpack.c.l.b16 %v229
      %v262 = vunpack.c.l.b16 %v230
      %v263 = vunpack.c.l.b16 %v231
      %v264 = vunpack.c.l.b16 %v232
      %v265 = vunpack.c.l.b16 %v233
      %v266 = vunpack.c.l.b16 %v234
      %v267 = vunpack.c.l.b16 %v235
      %v268 = vunpack.c.l.b16 %v236
      %v269 = vunpack.c.l.b16 %v237
      %v270 = vunpack.c.l.b16 %v238
      %v271 = vunpack.c.l.b16 %v239
      %v272 = vunpack.c.l.b16 %v240
      %v273 = vunpack.c.l.b16 %v241
      %v274 = vunpack.c.l.b16 %v242
      %v275 = vpack.c.b16 %v260, %v259
      %v276 = vpack.c.b16 %v262, %v261
      %v277 = vpack.c.b16 %v264, %v263
      %v278 = vpack.c.b16 %v266, %v265
      %v279 = vpack.c.b16 %v268, %v267
      %v280 = vpack.c.b16 %v270, %v269
      %v281 = vpack.c.b16 %v272, %v271
      %v282 = vpack.c.b16 %v274, %v273
      %291 = vmatpush.bf16.msra.mxu0 %v282
      %292 = vmatpush.bf16.msra.mxu0 %v281
      %293 = vmatpush.bf16.msra.mxu0 %v280
      %294 = vmatpush.bf16.msra.mxu0 %v279
      %295 = vmatpush.bf16.msra.mxu0 %v278
      %296 = vmatpush.bf16.msra.mxu0 %v277
      %297 = vmatpush.bf16.msra.mxu0 %v276
      %298 = vmatpush.bf16.msra.mxu0 %v275
      %299 = vmatmul.bf16.gmra.mxu0 %v223
      %v300 = vpop.f32.mrf.mxu0
      %v301 = vadd.f32 0.0, %v300
      %v302 = vpop.f32.mrf.mxu0
      %v303 = vadd.f32 0.0, %v302
      %304 = vmatmul.bf16.gmra.mxu0 %v224
      %v305 = vpop.f32.mrf.mxu0
      %v306 = vadd.f32 0.0, %v305
      %v307 = vpop.f32.mrf.mxu0
      %v308 = vadd.f32 0.0, %v307
      %309 = vmatmul.bf16.gmra.mxu0 %v225
      %v310 = vpop.f32.mrf.mxu0
      %v311 = vadd.f32 0.0, %v310
      %v312 = vpop.f32.mrf.mxu0
      %v313 = vadd.f32 0.0, %v312
      %314 = vmatmul.bf16.gmra.mxu0 %v226
      %v315 = vpop.f32.mrf.mxu0
      %v316 = vadd.f32 0.0, %v315
      %v317 = vpop.f32.mrf.mxu0
      %v318 = vadd.f32 0.0, %v317
      %319 = vdwg.mxu0
      %320 = vst [vmem:[%s208] sm:$0xff] %v301
      %321 = vst [vmem:[%s208 + $0x8] sm:$0xff] %v303
      %322 = vst [vmem:[%s208 + $0x10] sm:$0xff] %v306
      %323 = vst [vmem:[%s208 + $0x18] sm:$0xff] %v308
      %324 = vst [vmem:[%s208 + $0x20] sm:$0xff] %v311
      %325 = vst [vmem:[%s208 + $0x28] sm:$0xff] %v313
      %326 = vst [vmem:[%s208 + $0x30] sm:$0xff] %v316
      %327 = vst [vmem:[%s208 + $0x38] sm:$0xff] %v318
      %v328 = vadd.f32 %v301, %v303
      %v329 = vadd.f32 %v328, %v306
      %v330 = vadd.f32 %v329, %v308
      %v331 = vadd.f32 %v330, %v311
      %v332 = vadd.f32 %v331, %v313
      %v333 = vadd.f32 %v332, %v316
      %v334 = vadd.f32 %v333, %v318
      %v335 = vrot.slane %v334, 4
      %v336 = vadd.f32 %v334, %v335
      %v337 = vrot.slane %v336, 2
      %v338 = vadd.f32 %v336, %v337
      %v339 = vrot.slane %v338, 1
      %v340 = vadd.f32 %v338, %v339
      %341 = vst [vmem:[%s211] sm:$0x1] %v340
      %v342 = vmul.f32 %v301, %v301
      %v343 = vmul.f32 %v303, %v303
      %v344 = vmul.f32 %v306, %v306
      %v345 = vmul.f32 %v308, %v308
      %v346 = vmul.f32 %v311, %v311
      %v347 = vmul.f32 %v313, %v313
      %v348 = vmul.f32 %v316, %v316
      %v349 = vmul.f32 %v318, %v318
      %v350 = vadd.f32 %v342, %v343
      %v351 = vadd.f32 %v350, %v344
      %v352 = vadd.f32 %v351, %v345
      %v353 = vadd.f32 %v352, %v346
      %v354 = vadd.f32 %v353, %v347
      %v355 = vadd.f32 %v354, %v348
      %v356 = vadd.f32 %v355, %v349
      %v357 = vrot.slane %v356, 4
      %v358 = vadd.f32 %v356, %v357
      %v359 = vrot.slane %v358, 2
      %v360 = vadd.f32 %v358, %v359
      %v361 = vrot.slane %v360, 1
      %v362 = vadd.f32 %v360, %v361
      %363 = vst [vmem:[%s214] sm:$0x1] %v362
      %p364 = scmp.lt.s32.totalorder %s16, 1
      %s365 = scalar_select %p364, %s16, 1
      %s366 = smul.addr %s365, 8
      %s367 = smul.addr %s366, 8
      %s368 = scalar_lea.vmem %s2, %s367
      %p369 = scmp.lt.s32.totalorder %s16, 1
      %s370 = scalar_select %p369, %s16, 1
      %s371 = scalar_lea.vmem %s3, %s370
      %p372 = scmp.lt.s32.totalorder %s16, 1
      %s373 = scalar_select %p372, %s16, 1
      %s374 = scalar_lea.vmem %s4, %s373
      // Predicated region
      $region29: #{_lambda_.22} parent=27 // pred_check
        %p375 = pneg %p81
      $region30: #{_lambda_.22} parent=27 // pred_check_branch
        %377 = sbr.rel (%p375) target = $region32
      $region31: #{_lambda_.22} parent=27 // pred_region
        _
      $region32: #{_lambda_.22} parent=27 // pred_fallthru
        _
      // Predicated region
      $region33: #{_lambda_.22} parent=27 // pred_check
        %p378 = pneg %p107
      $region34: #{_lambda_.22} parent=27 // pred_check_branch
        %380 = sbr.rel (%p378) target = $region36
      $region35: #{_lambda_.22} parent=27 // pred_region
        _
      $region36: #{_lambda_.22} parent=27 // pred_fallthru
        _
      // Predicated region
      $region37: #{_lambda_.22} parent=27 // pred_check
        %p381 = pneg %p133
      $region38: #{_lambda_.22} parent=27 // pred_check_branch
        %383 = sbr.rel (%p381) target = $region40
      $region39: #{_lambda_.22} parent=27 // pred_region
        _
      $region40: #{_lambda_.22} parent=27 // pred_fallthru
        _
    $region28: #{_lambda_.22} parent=5 // pred_fallthru
      _
    %p384 = scmp.le.s32.totalorder 2, %s11
    // Predicated region
    $region41: #{_lambda_.22} parent=5 // pred_check
      %p385 = pneg %p384
    $region42: #{_lambda_.22} parent=5 // pred_check_branch
      %387 = sbr.rel (%p385) target = $region44
    $region43: #{_lambda_.22} parent=5 // pred_region
      %s388 = ssub.s32 %s11, 2
      // Predicated region
      $region45: #{_lambda_.22} parent=43 // pred_check
        %p389 = pneg %p87
      $region46: #{_lambda_.22} parent=43 // pred_check_branch
        %391 = sbr.rel (%p389) target = $region48
      $region47: #{_lambda_.22} parent=43 // pred_region
        %p392 = scmp.lt.s32.totalorder %s17, 1
        %s393 = scalar_select %p392, %s17, 1
        %s394 = smul.addr %s393, 8
        %s395 = smul.addr %s394, 8
        %s396 = scalar_lea.vmem %s2, %s395
      $region48: #{_lambda_.22} parent=43 // pred_fallthru
        _
      // Predicated region
      $region49: #{_lambda_.22} parent=43 // pred_check
        %p397 = pneg %p113
      $region50: #{_lambda_.22} parent=43 // pred_check_branch
        %399 = sbr.rel (%p397) target = $region52
      $region51: #{_lambda_.22} parent=43 // pred_region
        %p400 = scmp.lt.s32.totalorder %s17, 1
        %s401 = scalar_select %p400, %s17, 1
        %s402 = scalar_lea.vmem %s3, %s401
      $region52: #{_lambda_.22} parent=43 // pred_fallthru
        _
      // Predicated region
      $region53: #{_lambda_.22} parent=43 // pred_check
        %p403 = pneg %p139
      $region54: #{_lambda_.22} parent=43 // pred_check_branch
        %405 = sbr.rel (%p403) target = $region56
      $region55: #{_lambda_.22} parent=43 // pred_region
        %p406 = scmp.lt.s32.totalorder %s17, 1
        %s407 = scalar_select %p406, %s17, 1
        %s408 = scalar_lea.vmem %s4, %s407
      $region56: #{_lambda_.22} parent=43 // pred_fallthru
        _
    $region44: #{_lambda_.22} parent=5 // pred_fallthru
      _
  $region6: #{_lambda_.22} parent=0 // loop_footer
    %s15 = sadd.s32 1, %s11
  $region7: #{_lambda_.22} parent=0 // loop_footer_branch
    %10 = sbr.rel target = $region3
  $region8: #{_lambda_.22} parent=0 // loop_exit
    _

// kernel: _lambda_.13
$region0: #{_lambda_.13}
  #allocation0 [shape = 'u32[]', space=smem, size = 0x4, offset = 0x4, fixed_abs, tag = 'smem constant byte address 0x4 - core index']
  #allocation1 [shape = 'u32[72,128]{1,0:T(1,128)}', space=vmem, size = 0x9000, scoped, tag = 'internal scratch']
  %s0 = inlined_call_operand.vmem [shape: f32[2,18,18,128], index: 0, kind: input, shape index: {}]
  %s1 = inlined_call_operand.vmem [shape: bf16[9,128,128], index: 1, kind: input, shape index: {}]
  %s2 = inlined_call_operand.vmem [shape: f32[2,256,128], index: 2, kind: output, shape index: {0}]
  %s3 = inlined_call_operand.vmem [shape: f32[2,1,128], index: 3, kind: output, shape index: {1}]
  %s4 = inlined_call_operand.vmem [shape: f32[2,1,128], index: 4, kind: output, shape index: {2}]
  %5 = xla_tuple %s2, %s3, %s4
  %s6 = sld [smem:[#allocation0]]
  $region57: #{_lambda_.13} parent=0
    _
  %s8 = ssub.s32 1, %s6
  %s9 = scalar_select 0, %s8, %s6
  loop: start=0, step=1, limit=4
  $region2: #{_lambda_.13} parent=0 // loop_pre_header
    _
  $region3: #{_lambda_.13} parent=0 // loop_header
    %s11 = sphi 0, %s15
    %p12 = scmp.ge.s32.totalorder %s11, 4
    %s21 = sphi 0, %s23
    %s24 = sphi 0, %s21
    %s25 = sphi 0, %s24
    %s41 = sphi 0, %s25
    %s45 = sphi 0, %s45
    %s47 = sphi 0, %s45
    %s48 = sphi 0, %s47
    %s62 = sphi 0, %s48
    %s68 = sphi 0, %s70
    %s71 = sphi 0, %s68
    %s72 = sphi 0, %s71
    %s88 = sphi 0, %s72
    %s94 = sphi 0, %s96
    %s97 = sphi 0, %s94
    %s98 = sphi 0, %s97
    %s114 = sphi 0, %s98
    %s120 = sphi 0, %s122
    %s123 = sphi 0, %s120
    %s124 = sphi 0, %s123
    %s140 = sphi 0, %s124
  $region4: #{_lambda_.13} parent=0 // loop_header_branch
    %14 = sbr.rel (%p12) target = $region8
  $region5: #{_lambda_.13} parent=0 // loop_body
    %s16 = ssub.s32 %s11, 1
    %s17 = ssub.s32 %s11, 2
    %s18 = sadd.s32 %s11, 1
    %s19 = ssub.s32 %s11, %s18
    %p20 = scmp.eq.s32.totalorder %s19, 0
    %s22 = sadd.s32 %s21, 1
    %s23 = scalar_select %p20, %s21, %s22
    %p26 = pneg %p20
    %p27 = scmp.eq.s32.totalorder %s11, 1
    %p28 = por %p26, %p27
    %p29 = scmp.ne.s32.totalorder %s21, %s24
    %p30 = scmp.eq.s32.totalorder %s11, 0
    %p31 = por %p29, %p30
    %p32 = scmp.ne.s32.totalorder %s21, %s24
    %p33 = scmp.eq.s32.totalorder %s16, 1
    %p34 = por %p32, %p33
    %p35 = scmp.ne.s32.totalorder %s24, %s25
    %p36 = scmp.eq.s32.totalorder %s16, 0
    %p37 = por %p35, %p36
    %p38 = scmp.ne.s32.totalorder %s24, %s25
    %p39 = scmp.eq.s32.totalorder %s17, 1
    %p40 = por %p38, %p39
    %p42 = scmp.ne.s32.totalorder %s25, %s41
    %p43 = scmp.eq.s32.totalorder %s17, 0
    %p44 = por %p42, %p43
    %s46 = sadd.s32 %s45, 1
    %p49 = scmp.eq.s32.totalorder %s11, 1
    %p50 = scmp.ne.s32.totalorder %s45, %s47
    %p51 = scmp.eq.s32.totalorder %s11, 0
    %p52 = por %p50, %p51
    %p53 = scmp.ne.s32.totalorder %s45, %s47
    %p54 = scmp.eq.s32.totalorder %s16, 1
    %p55 = por %p53, %p54
    %p56 = scmp.ne.s32.totalorder %s47, %s48
    %p57 = scmp.eq.s32.totalorder %s16, 0
    %p58 = por %p56, %p57
    %p59 = scmp.ne.s32.totalorder %s47, %s48
    %p60 = scmp.eq.s32.totalorder %s17, 1
    %p61 = por %p59, %p60
    %p63 = scmp.ne.s32.totalorder %s48, %s62
    %p64 = scmp.eq.s32.totalorder %s17, 0
    %p65 = por %p63, %p64
    %s66 = ssub.s32 %s11, %s18
    %p67 = scmp.eq.s32.totalorder %s66, 0
    %s69 = sadd.s32 %s68, 1
    %s70 = scalar_select %p67, %s68, %s69
    %p73 = pneg %p67
    %p74 = scmp.eq.s32.totalorder %s11, 1
    %p75 = por %p73, %p74
    %p76 = scmp.ne.s32.totalorder %s68, %s71
    %p77 = scmp.eq.s32.totalorder %s11, 0
    %p78 = por %p76, %p77
    %p79 = scmp.ne.s32.totalorder %s68, %s71
    %p80 = scmp.eq.s32.totalorder %s16, 1
    %p81 = por %p79, %p80
    %p82 = scmp.ne.s32.totalorder %s71, %s72
    %p83 = scmp.eq.s32.totalorder %s16, 0
    %p84 = por %p82, %p83
    %p85 = scmp.ne.s32.totalorder %s71, %s72
    %p86 = scmp.eq.s32.totalorder %s17, 1
    %p87 = por %p85, %p86
    %p89 = scmp.ne.s32.totalorder %s72, %s88
    %p90 = scmp.eq.s32.totalorder %s17, 0
    %p91 = por %p89, %p90
    %s92 = ssub.s32 %s11, %s18
    %p93 = scmp.eq.s32.totalorder %s92, 0
    %s95 = sadd.s32 %s94, 1
    %s96 = scalar_select %p93, %s94, %s95
    %p99 = pneg %p93
    %p100 = scmp.eq.s32.totalorder %s11, 1
    %p101 = por %p99, %p100
    %p102 = scmp.ne.s32.totalorder %s94, %s97
    %p103 = scmp.eq.s32.totalorder %s11, 0
    %p104 = por %p102, %p103
    %p105 = scmp.ne.s32.totalorder %s94, %s97
    %p106 = scmp.eq.s32.totalorder %s16, 1
    %p107 = por %p105, %p106
    %p108 = scmp.ne.s32.totalorder %s97, %s98
    %p109 = scmp.eq.s32.totalorder %s16, 0
    %p110 = por %p108, %p109
    %p111 = scmp.ne.s32.totalorder %s97, %s98
    %p112 = scmp.eq.s32.totalorder %s17, 1
    %p113 = por %p111, %p112
    %p115 = scmp.ne.s32.totalorder %s98, %s114
    %p116 = scmp.eq.s32.totalorder %s17, 0
    %p117 = por %p115, %p116
    %s118 = ssub.s32 %s11, %s18
    %p119 = scmp.eq.s32.totalorder %s118, 0
    %s121 = sadd.s32 %s120, 1
    %s122 = scalar_select %p119, %s120, %s121
    %p125 = pneg %p119
    %p126 = scmp.eq.s32.totalorder %s11, 1
    %p127 = por %p125, %p126
    %p128 = scmp.ne.s32.totalorder %s120, %s123
    %p129 = scmp.eq.s32.totalorder %s11, 0
    %p130 = por %p128, %p129
    %p131 = scmp.ne.s32.totalorder %s120, %s123
    %p132 = scmp.eq.s32.totalorder %s16, 1
    %p133 = por %p131, %p132
    %p134 = scmp.ne.s32.totalorder %s123, %s124
    %p135 = scmp.eq.s32.totalorder %s16, 0
    %p136 = por %p134, %p135
    %p137 = scmp.ne.s32.totalorder %s123, %s124
    %p138 = scmp.eq.s32.totalorder %s17, 1
    %p139 = por %p137, %p138
    %p141 = scmp.ne.s32.totalorder %s124, %s140
    %p142 = scmp.eq.s32.totalorder %s17, 0
    %p143 = por %p141, %p142
    %p144 = scmp.le.s32.totalorder 1, %s11
    %p145 = scmp.lt.s32.totalorder %s11, 3
    %p146 = pnand %p144, %p145
    %p147 = pneg %p146
    // Predicated region
    $region9: #{_lambda_.13} parent=5 // pred_check
      _
    $region10: #{_lambda_.13} parent=5 // pred_check_branch
      %149 = sbr.rel (%p146) target = $region12
    $region11: #{_lambda_.13} parent=5 // pred_region
      %s150 = ssub.s32 %s11, 1
      // Predicated region
      $region13: #{_lambda_.13} parent=11 // pred_check
        %p151 = pneg %p58
      $region14: #{_lambda_.13} parent=11 // pred_check_branch
        %153 = sbr.rel (%p151) target = $region16
      $region15: #{_lambda_.13} parent=11 // pred_region
        _
      $region16: #{_lambda_.13} parent=11 // pred_fallthru
        _
    $region12: #{_lambda_.13} parent=5 // pred_fallthru
      _
    %p154 = scmp.lt.s32.totalorder %s11, 2
    // Predicated region
    $region17: #{_lambda_.13} parent=5 // pred_check
      %p155 = pneg %p154
    $region18: #{_lambda_.13} parent=5 // pred_check_branch
      %157 = sbr.rel (%p155) target = $region20
    $region19: #{_lambda_.13} parent=5 // pred_region
      // Predicated region
      $region21: #{_lambda_.13} parent=19 // pred_check
        %p158 = pneg %p31
      $region22: #{_lambda_.13} parent=19 // pred_check_branch
        %160 = sbr.rel (%p158) target = $region24
      $region23: #{_lambda_.13} parent=19 // pred_region
        %p161 = scmp.lt.s32.totalorder %s11, 1
        %s162 = scalar_select %p161, %s11, 1
        %s163 = smul.addr %s162, 54
        %s164 = smul.addr %s163, 8
        %s165 = scalar_lea.vmem %s0, %s164
      $region24: #{_lambda_.13} parent=19 // pred_fallthru
        _
    $region20: #{_lambda_.13} parent=5 // pred_fallthru
      _
    %p166 = scmp.le.s32.totalorder 1, %s11
    %p167 = scmp.lt.s32.totalorder %s11, 3
    %p168 = pnand %p166, %p167
    %p169 = pneg %p168
    // Predicated region
    $region25: #{_lambda_.13} parent=5 // pred_check
      _
    $region26: #{_lambda_.13} parent=5 // pred_check_branch
      %171 = sbr.rel (%p168) target = $region28
    $region27: #{_lambda_.13} parent=5 // pred_region
      %s172 = ssub.s32 %s11, 1
      %p173 = scmp.lt.s32.totalorder %s16, 1
      %s174 = scalar_select %p173, %s16, 1
      %s175 = smul.addr %s174, 54
      %s176 = smul.addr %s175, 8
      %s177 = scalar_lea.vmem %s0, %s176
      %p178 = pneg %p37
      %p179 = pneg %p34
      %p180 = pneg %p58
      %p181 = pneg %p55
      %p182 = pneg %p84
      %p183 = pneg %p81
      %p184 = scmp.lt.s32.totalorder %s16, 1
      %s185 = scalar_select %p184, %s16, 1
      %s186 = smul.addr %s185, 32
      %s187 = smul.addr %s186, 8
      %s188 = scalar_lea.vmem %s2, %s187
      %p189 = pneg %p110
      %p190 = pneg %p107
      %p191 = scmp.lt.s32.totalorder %s16, 1
      %s192 = scalar_select %p191, %s16, 1
      %s193 = scalar_lea.vmem %s3, %s192
      %p194 = pneg %p136
      %p195 = pneg %p133
      %p196 = scmp.lt.s32.totalorder %s16, 1
      %s197 = scalar_select %p196, %s16, 1
      %s198 = scalar_lea.vmem %s4, %s197
      %p199 = scmp.lt.s32.totalorder %s16, 1
      %s200 = scalar_select %p199, %s16, 1
      %s201 = smul.addr %s200, 54
      %s202 = smul.addr %s201, 8
      %s203 = scalar_lea.vmem %s0, %s202
      %p204 = scmp.lt.s32.totalorder %s16, 1
      %s205 = scalar_select %p204, %s16, 1
      %s206 = smul.addr %s205, 32
      %s207 = smul.addr %s206, 8
      %s208 = scalar_lea.vmem %s2, %s207
      %p209 = scmp.lt.s32.totalorder %s16, 1
      %s210 = scalar_select %p209, %s16, 1
      %s211 = scalar_lea.vmem %s3, %s210
      %p212 = scmp.lt.s32.totalorder %s16, 1
      %s213 = scalar_select %p212, %s16, 1
      %s214 = scalar_lea.vmem %s4, %s213
      %v215 = vld [vmem:[%s203] sm:$0xff]
      %v216 = vld [vmem:[%s203 + $0x8] sm:$0xff]
      %v217 = vld [vmem:[%s203 + $0x18] sm:$0xff]
      %v218 = vld [vmem:[%s203 + $0x20] sm:$0xff]
      %v219 = vld [vmem:[%s203 + $0x30] sm:$0xff]
      %v220 = vld [vmem:[%s203 + $0x38] sm:$0xff]
      %v221 = vld [vmem:[%s203 + $0x48] sm:$0xff]
      %v222 = vld [vmem:[%s203 + $0x50] sm:$0xff]
      %v223 = vld [vmem:[%s203 + $0x60] sm:$0xff]
      %v224 = vld [vmem:[%s203 + $0x68] sm:$0xff]
      %v225 = vld [vmem:[%s203 + $0x78] sm:$0xff]
      %v226 = vld [vmem:[%s203 + $0x80] sm:$0xff]
      %v227 = vld [vmem:[%s203 + $0x90] sm:$0xff]
      %v228 = vld [vmem:[%s203 + $0x98] sm:$0xff]
      %v229 = vld [vmem:[%s203 + $0xa8] sm:$0xff]
      %v230 = vld [vmem:[%s203 + $0xb0] sm:$0xff]
      %v231 = vld [vmem:[%s203 + $0xc0] sm:$0xff]
      %v232 = vld [vmem:[%s203 + $0xc8] sm:$0xff]
      %v233 = vld [vmem:[%s203 + $0xd8] sm:$0xff]
      %v234 = vld [vmem:[%s203 + $0xe0] sm:$0xff]
      %v235 = vld [vmem:[%s203 + $0xf0] sm:$0xff]
      %v236 = vld [vmem:[%s203 + $0xf8] sm:$0xff]
      %v237 = vld [vmem:[%s203 + $0x108] sm:$0xff]
      %v238 = vld [vmem:[%s203 + $0x110] sm:$0xff]
      %v239 = vld [vmem:[%s203 + $0x120] sm:$0xff]
      %v240 = vld [vmem:[%s203 + $0x128] sm:$0xff]
      %v241 = vld [vmem:[%s203 + $0x138] sm:$0xff]
      %v242 = vld [vmem:[%s203 + $0x140] sm:$0xff]
      %v243 = vld [vmem:[%s203 + $0x150] sm:$0xff]
      %v244 = vld [vmem:[%s203 + $0x158] sm:$0xff]
      %v245 = vld [vmem:[%s203 + $0x168] sm:$0xff]
      %v246 = vld [vmem:[%s203 + $0x170] sm:$0xff]
      %v247 = vpack.c.bf16 %v216, %v215
      %v248 = vpack.c.bf16 %v218, %v217
      %v249 = vpack.c.bf16 %v220, %v219
      %v250 = vpack.c.bf16 %v222, %v221
      %v251 = vpack.c.bf16 %v224, %v223
      %v252 = vpack.c.bf16 %v226, %v225
      %v253 = vpack.c.bf16 %v228, %v227
      %v254 = vpack.c.bf16 %v230, %v229
      %v255 = vpack.c.bf16 %v232, %v231
      %v256 = vpack.c.bf16 %v234, %v233
      %v257 = vpack.c.bf16 %v236, %v235
      %v258 = vpack.c.bf16 %v238, %v237
      %v259 = vpack.c.bf16 %v240, %v239
      %v260 = vpack.c.bf16 %v242, %v241
      %v261 = vpack.c.bf16 %v244, %v243
      %v262 = vpack.c.bf16 %v246, %v245
      %v263 = vld [vmem:[%s1] sm:$0xf]
      %v264 = vld [vmem:[%s1 + $0x4] sm:$0xf]
      %v265 = vld [vmem:[%s1 + $0x8] sm:$0xf]
      %v266 = vld [vmem:[%s1 + $0xc] sm:$0xf]
      %v267 = vld [vmem:[%s1 + $0x10] sm:$0xf]
      %v268 = vld [vmem:[%s1 + $0x14] sm:$0xf]
      %v269 = vld [vmem:[%s1 + $0x18] sm:$0xf]
      %v270 = vld [vmem:[%s1 + $0x1c] sm:$0xf]
      %v271 = vld [vmem:[%s1 + $0x20] sm:$0xf]
      %v272 = vld [vmem:[%s1 + $0x24] sm:$0xf]
      %v273 = vld [vmem:[%s1 + $0x28] sm:$0xf]
      %v274 = vld [vmem:[%s1 + $0x2c] sm:$0xf]
      %v275 = vld [vmem:[%s1 + $0x30] sm:$0xf]
      %v276 = vld [vmem:[%s1 + $0x34] sm:$0xf]
      %v277 = vld [vmem:[%s1 + $0x38] sm:$0xf]
      %v278 = vld [vmem:[%s1 + $0x3c] sm:$0xf]
      %v279 = vld [vmem:[%s203 + $0x1] sm:$0xff]
      %v280 = vld [vmem:[%s203 + $0x9] sm:$0xff]
      %v281 = vld [vmem:[%s203 + $0x19] sm:$0xff]
      %v282 = vld [vmem:[%s203 + $0x21] sm:$0xff]
      %v283 = vld [vmem:[%s203 + $0x31] sm:$0xff]
      %v284 = vld [vmem:[%s203 + $0x39] sm:$0xff]
      %v285 = vld [vmem:[%s203 + $0x49] sm:$0xff]
      %v286 = vld [vmem:[%s203 + $0x51] sm:$0xff]
      %v287 = vld [vmem:[%s203 + $0x61] sm:$0xff]
      %v288 = vld [vmem:[%s203 + $0x69] sm:$0xff]
      %v289 = vld [vmem:[%s203 + $0x79] sm:$0xff]
      %v290 = vld [vmem:[%s203 + $0x81] sm:$0xff]
      %v291 = vld [vmem:[%s203 + $0x91] sm:$0xff]
      %v292 = vld [vmem:[%s203 + $0x99] sm:$0xff]
      %v293 = vld [vmem:[%s203 + $0xa9] sm:$0xff]
      %v294 = vld [vmem:[%s203 + $0xb1] sm:$0xff]
      %v295 = vld [vmem:[%s203 + $0xc1] sm:$0xff]
      %v296 = vld [vmem:[%s203 + $0xc9] sm:$0xff]
      %v297 = vld [vmem:[%s203 + $0xd9] sm:$0xff]
      %v298 = vld [vmem:[%s203 + $0xe1] sm:$0xff]
      %v299 = vld [vmem:[%s203 + $0xf1] sm:$0xff]
      %v300 = vld [vmem:[%s203 + $0xf9] sm:$0xff]
      %v301 = vld [vmem:[%s203 + $0x109] sm:$0xff]
      %v302 = vld [vmem:[%s203 + $0x111] sm:$0xff]
      %v303 = vld [vmem:[%s203 + $0x121] sm:$0xff]
      %v304 = vld [vmem:[%s203 + $0x129] sm:$0xff]
      %v305 = vld [vmem:[%s203 + $0x139] sm:$0xff]
      %v306 = vld [vmem:[%s203 + $0x141] sm:$0xff]
      %v307 = vld [vmem:[%s203 + $0x151] sm:$0xff]
      %v308 = vld [vmem:[%s203 + $0x159] sm:$0xff]
      %v309 = vld [vmem:[%s203 + $0x169] sm:$0xff]
      %v310 = vld [vmem:[%s203 + $0x171] sm:$0xff]
      %v311 = vpack.c.bf16 %v280, %v279
      %v312 = vpack.c.bf16 %v282, %v281
      %v313 = vpack.c.bf16 %v284, %v283
      %v314 = vpack.c.bf16 %v286, %v285
      %v315 = vpack.c.bf16 %v288, %v287
      %v316 = vpack.c.bf16 %v290, %v289
      %v317 = vpack.c.bf16 %v292, %v291
      %v318 = vpack.c.bf16 %v294, %v293
      %v319 = vpack.c.bf16 %v296, %v295
      %v320 = vpack.c.bf16 %v298, %v297
      %v321 = vpack.c.bf16 %v300, %v299
      %v322 = vpack.c.bf16 %v302, %v301
      %v323 = vpack.c.bf16 %v304, %v303
      %v324 = vpack.c.bf16 %v306, %v305
      %v325 = vpack.c.bf16 %v308, %v307
      %v326 = vpack.c.bf16 %v310, %v309
      %s327 = scalar_lea.vmem %s1, 64
      %v328 = vld [vmem:[%s327] sm:$0xf]
      %v329 = vld [vmem:[%s327 + $0x4] sm:$0xf]
      %v330 = vld [vmem:[%s327 + $0x8] sm:$0xf]
      %v331 = vld [vmem:[%s327 + $0xc] sm:$0xf]
      %v332 = vld [vmem:[%s327 + $0x10] sm:$0xf]
      %v333 = vld [vmem:[%s327 + $0x14] sm:$0xf]
      %v334 = vld [vmem:[%s327 + $0x18] sm:$0xf]
      %v335 = vld [vmem:[%s327 + $0x1c] sm:$0xf]
      %v336 = vld [vmem:[%s327 + $0x20] sm:$0xf]
      %v337 = vld [vmem:[%s327 + $0x24] sm:$0xf]
      %v338 = vld [vmem:[%s327 + $0x28] sm:$0xf]
      %v339 = vld [vmem:[%s327 + $0x2c] sm:$0xf]
      %v340 = vld [vmem:[%s327 + $0x30] sm:$0xf]
      %v341 = vld [vmem:[%s327 + $0x34] sm:$0xf]
      %v342 = vld [vmem:[%s327 + $0x38] sm:$0xf]
      %v343 = vld [vmem:[%s327 + $0x3c] sm:$0xf]
      %v360 = vunpack.c.l.b16 %v328
      %v361 = vunpack.c.l.b16 %v329
      %v362 = vunpack.c.l.b16 %v330
      %v363 = vunpack.c.l.b16 %v331
      %v364 = vunpack.c.l.b16 %v332
      %v365 = vunpack.c.l.b16 %v333
      %v366 = vunpack.c.l.b16 %v334
      %v367 = vunpack.c.l.b16 %v335
      %v368 = vunpack.c.l.b16 %v336
      %v369 = vunpack.c.l.b16 %v337
      %v370 = vunpack.c.l.b16 %v338
      %v371 = vunpack.c.l.b16 %v339
      %v372 = vunpack.c.l.b16 %v340
      %v373 = vunpack.c.l.b16 %v341
      %v374 = vunpack.c.l.b16 %v342
      %v375 = vunpack.c.l.b16 %v343
      %v376 = vpack.c.b16 %v361, %v360
      %v377 = vpack.c.b16 %v363, %v362
      %v378 = vpack.c.b16 %v365, %v364
      %v379 = vpack.c.b16 %v367, %v366
      %v380 = vpack.c.b16 %v369, %v368
      %v381 = vpack.c.b16 %v371, %v370
      %v382 = vpack.c.b16 %v373, %v372
      %v383 = vpack.c.b16 %v375, %v374
      %392 = vmatpush.bf16.msra.mxu0 %v383
      %393 = vmatpush.bf16.msra.mxu0 %v382
      %394 = vmatpush.bf16.msra.mxu0 %v381
      %395 = vmatpush.bf16.msra.mxu0 %v380
      %396 = vmatpush.bf16.msra.mxu0 %v379
      %397 = vmatpush.bf16.msra.mxu0 %v378
      %398 = vmatpush.bf16.msra.mxu0 %v377
      %399 = vmatpush.bf16.msra.mxu0 %v376
      %400 = vmatmul.bf16.gmra.mxu0 %v311
      %v401 = vpop.f32.mrf.mxu0
      %v402 = vadd.f32 0.0, %v401
      %v403 = vpop.f32.mrf.mxu0
      %v404 = vadd.f32 0.0, %v403
      %405 = vmatmul.bf16.gmra.mxu0 %v312
      %v406 = vpop.f32.mrf.mxu0
      %v407 = vadd.f32 0.0, %v406
      %v408 = vpop.f32.mrf.mxu0
      %v409 = vadd.f32 0.0, %v408
      %410 = vmatmul.bf16.gmra.mxu0 %v313
      %v411 = vpop.f32.mrf.mxu0
      %v412 = vadd.f32 0.0, %v411
      %v413 = vpop.f32.mrf.mxu0
      %v414 = vadd.f32 0.0, %v413
      %415 = vmatmul.bf16.gmra.mxu0 %v314
      %v416 = vpop.f32.mrf.mxu0
      %v417 = vadd.f32 0.0, %v416
      %v418 = vpop.f32.mrf.mxu0
      %v419 = vadd.f32 0.0, %v418
      %420 = vmatmul.bf16.gmra.mxu0 %v315
      %v421 = vpop.f32.mrf.mxu0
      %v422 = vadd.f32 0.0, %v421
      %v423 = vpop.f32.mrf.mxu0
      %v424 = vadd.f32 0.0, %v423
      %425 = vmatmul.bf16.gmra.mxu0 %v316
      %v426 = vpop.f32.mrf.mxu0
      %v427 = vadd.f32 0.0, %v426
      %v428 = vpop.f32.mrf.mxu0
      %v429 = vadd.f32 0.0, %v428
      %430 = vmatmul.bf16.gmra.mxu0 %v317
      %v431 = vpop.f32.mrf.mxu0
      %v432 = vadd.f32 0.0, %v431
      %v433 = vpop.f32.mrf.mxu0
      %v434 = vadd.f32 0.0, %v433
      %435 = vmatmul.bf16.gmra.mxu0 %v318
      %v436 = vpop.f32.mrf.mxu0
      %v437 = vadd.f32 0.0, %v436
      %v438 = vpop.f32.mrf.mxu0
      %v439 = vadd.f32 0.0, %v438
      %440 = vmatmul.bf16.gmra.mxu0 %v319
      %v441 = vpop.f32.mrf.mxu0
      %v442 = vadd.f32 0.0, %v441
      %v443 = vpop.f32.mrf.mxu0
      %v444 = vadd.f32 0.0, %v443
      %445 = vmatmul.bf16.gmra.mxu0 %v320
      %v446 = vpop.f32.mrf.mxu0
      %v447 = vadd.f32 0.0, %v446
      %v448 = vpop.f32.mrf.mxu0
      %v449 = vadd.f32 0.0, %v448
      %450 = vmatmul.bf16.gmra.mxu0 %v321
      %v451 = vpop.f32.mrf.mxu0
      %v452 = vadd.f32 0.0, %v451
      %v453 = vpop.f32.mrf.mxu0
      %v454 = vadd.f32 0.0, %v453
      %455 = vmatmul.bf16.gmra.mxu0 %v322
      %v456 = vpop.f32.mrf.mxu0
      %v457 = vadd.f32 0.0, %v456
      %v458 = vpop.f32.mrf.mxu0
      %v459 = vadd.f32 0.0, %v458
      %460 = vmatmul.bf16.gmra.mxu0 %v323
      %v461 = vpop.f32.mrf.mxu0
      %v462 = vadd.f32 0.0, %v461
      %v463 = vpop.f32.mrf.mxu0
      %v464 = vadd.f32 0.0, %v463
      %465 = vmatmul.bf16.gmra.mxu0 %v324
      %v466 = vpop.f32.mrf.mxu0
      %v467 = vadd.f32 0.0, %v466
      %v468 = vpop.f32.mrf.mxu0
      %v469 = vadd.f32 0.0, %v468
      %470 = vmatmul.bf16.gmra.mxu0 %v325
      %v471 = vpop.f32.mrf.mxu0
      %v472 = vadd.f32 0.0, %v471
      %v473 = vpop.f32.mrf.mxu0
      %v474 = vadd.f32 0.0, %v473
      %475 = vmatmul.bf16.gmra.mxu0 %v326
      %v476 = vpop.f32.mrf.mxu0
      %v477 = vadd.f32 0.0, %v476
      %v478 = vpop.f32.mrf.mxu0
      %v479 = vadd.f32 0.0, %v478
      %480 = vdwg.mxu0
      %v497 = vunpack.c.l.b16 %v263
      %v498 = vunpack.c.l.b16 %v264
      %v499 = vunpack.c.l.b16 %v265
      %v500 = vunpack.c.l.b16 %v266
      %v501 = vunpack.c.l.b16 %v267
      %v502 = vunpack.c.l.b16 %v268
      %v503 = vunpack.c.l.b16 %v269
      %v504 = vunpack.c.l.b16 %v270
      %v505 = vunpack.c.l.b16 %v271
      %v506 = vunpack.c.l.b16 %v272
      %v507 = vunpack.c.l.b16 %v273
      %v508 = vunpack.c.l.b16 %v274
      %v509 = vunpack.c.l.b16 %v275
      %v510 = vunpack.c.l.b16 %v276
      %v511 = vunpack.c.l.b16 %v277
      %v512 = vunpack.c.l.b16 %v278
      %v513 = vpack.c.b16 %v498, %v497
      %v514 = vpack.c.b16 %v500, %v499
      %v515 = vpack.c.b16 %v502, %v501
      %v516 = vpack.c.b16 %v504, %v503
      %v517 = vpack.c.b16 %v506, %v505
      %v518 = vpack.c.b16 %v508, %v507
      %v519 = vpack.c.b16 %v510, %v509
      %v520 = vpack.c.b16 %v512, %v511
      %529 = vmatpush.bf16.msra.mxu0 %v520
      %530 = vmatpush.bf16.msra.mxu0 %v519
      %531 = vmatpush.bf16.msra.mxu0 %v518
      %532 = vmatpush.bf16.msra.mxu0 %v517
      %533 = vmatpush.bf16.msra.mxu0 %v516
      %534 = vmatpush.bf16.msra.mxu0 %v515
      %535 = vmatpush.bf16.msra.mxu0 %v514
      %536 = vmatpush.bf16.msra.mxu0 %v513
      %537 = vmatmul.bf16.gmra.mxu0 %v247
      %v538 = vpop.f32.mrf.mxu0
      %v539 = vadd.f32 %v402, %v538
      %v540 = vpop.f32.mrf.mxu0
      %v541 = vadd.f32 %v404, %v540
      %542 = vmatmul.bf16.gmra.mxu0 %v248
      %v543 = vpop.f32.mrf.mxu0
      %v544 = vadd.f32 %v407, %v543
      %v545 = vpop.f32.mrf.mxu0
      %v546 = vadd.f32 %v409, %v545
      %547 = vmatmul.bf16.gmra.mxu0 %v249
      %v548 = vpop.f32.mrf.mxu0
      %v549 = vadd.f32 %v412, %v548
      %v550 = vpop.f32.mrf.mxu0
      %v551 = vadd.f32 %v414, %v550
      %552 = vmatmul.bf16.gmra.mxu0 %v250
      %v553 = vpop.f32.mrf.mxu0
      %v554 = vadd.f32 %v417, %v553
      %v555 = vpop.f32.mrf.mxu0
      %v556 = vadd.f32 %v419, %v555
      %557 = vmatmul.bf16.gmra.mxu0 %v251
      %v558 = vpop.f32.mrf.mxu0
      %v559 = vadd.f32 %v422, %v558
      %v560 = vpop.f32.mrf.mxu0
      %v561 = vadd.f32 %v424, %v560
      %562 = vmatmul.bf16.gmra.mxu0 %v252
      %v563 = vpop.f32.mrf.mxu0
      %v564 = vadd.f32 %v427, %v563
      %v565 = vpop.f32.mrf.mxu0
      %v566 = vadd.f32 %v429, %v565
      %567 = vmatmul.bf16.gmra.mxu0 %v253
      %v568 = vpop.f32.mrf.mxu0
      %v569 = vadd.f32 %v432, %v568
      %v570 = vpop.f32.mrf.mxu0
      %v571 = vadd.f32 %v434, %v570
      %572 = vmatmul.bf16.gmra.mxu0 %v254
      %v573 = vpop.f32.mrf.mxu0
      %v574 = vadd.f32 %v437, %v573
      %v575 = vpop.f32.mrf.mxu0
      %v576 = vadd.f32 %v439, %v575
      %577 = vmatmul.bf16.gmra.mxu0 %v255
      %v578 = vpop.f32.mrf.mxu0
      %v579 = vadd.f32 %v442, %v578
      %v580 = vpop.f32.mrf.mxu0
      %v581 = vadd.f32 %v444, %v580
      %582 = vmatmul.bf16.gmra.mxu0 %v256
      %v583 = vpop.f32.mrf.mxu0
      %v584 = vadd.f32 %v447, %v583
      %v585 = vpop.f32.mrf.mxu0
      %v586 = vadd.f32 %v449, %v585
      %587 = vmatmul.bf16.gmra.mxu0 %v257
      %v588 = vpop.f32.mrf.mxu0
      %v589 = vadd.f32 %v452, %v588
      %v590 = vpop.f32.mrf.mxu0
      %v591 = vadd.f32 %v454, %v590
      %592 = vmatmul.bf16.gmra.mxu0 %v258
      %v593 = vpop.f32.mrf.mxu0
      %v594 = vadd.f32 %v457, %v593
      %v595 = vpop.f32.mrf.mxu0
      %v596 = vadd.f32 %v459, %v595
      %597 = vmatmul.bf16.gmra.mxu0 %v259
      %v598 = vpop.f32.mrf.mxu0
      %v599 = vadd.f32 %v462, %v598
      %v600 = vpop.f32.mrf.mxu0
      %v601 = vadd.f32 %v464, %v600
      %602 = vmatmul.bf16.gmra.mxu0 %v260
      %v603 = vpop.f32.mrf.mxu0
      %v604 = vadd.f32 %v467, %v603
      %v605 = vpop.f32.mrf.mxu0
      %v606 = vadd.f32 %v469, %v605
      %607 = vmatmul.bf16.gmra.mxu0 %v261
      %v608 = vpop.f32.mrf.mxu0
      %v609 = vadd.f32 %v472, %v608
      %v610 = vpop.f32.mrf.mxu0
      %v611 = vadd.f32 %v474, %v610
      %612 = vmatmul.bf16.gmra.mxu0 %v262
      %v613 = vpop.f32.mrf.mxu0
      %v614 = vadd.f32 %v477, %v613
      %v615 = vpop.f32.mrf.mxu0
      %v616 = vadd.f32 %v479, %v615
      %617 = vdwg.mxu0
      %v618 = vld [vmem:[%s203 + $0x2] sm:$0xff]
      %v619 = vld [vmem:[%s203 + $0xa] sm:$0xff]
      %v620 = vld [vmem:[%s203 + $0x1a] sm:$0xff]
      %v621 = vld [vmem:[%s203 + $0x22] sm:$0xff]
      %v622 = vld [vmem:[%s203 + $0x32] sm:$0xff]
      %v623 = vld [vmem:[%s203 + $0x3a] sm:$0xff]
      %v624 = vld [vmem:[%s203 + $0x4a] sm:$0xff]
      %v625 = vld [vmem:[%s203 + $0x52] sm:$0xff]
      %v626 = vld [vmem:[%s203 + $0x62] sm:$0xff]
      %v627 = vld [vmem:[%s203 + $0x6a] sm:$0xff]
      %v628 = vld [vmem:[%s203 + $0x7a] sm:$0xff]
      %v629 = vld [vmem:[%s203 + $0x82] sm:$0xff]
      %v630 = vld [vmem:[%s203 + $0x92] sm:$0xff]
      %v631 = vld [vmem:[%s203 + $0x9a] sm:$0xff]
      %v632 = vld [vmem:[%s203 + $0xaa] sm:$0xff]
      %v633 = vld [vmem:[%s203 + $0xb2] sm:$0xff]
      %v634 = vld [vmem:[%s203 + $0xc2] sm:$0xff]
      %v635 = vld [vmem:[%s203 + $0xca] sm:$0xff]
      %v636 = vld [vmem:[%s203 + $0xda] sm:$0xff]
      %v637 = vld [vmem:[%s203 + $0xe2] sm:$0xff]
      %v638 = vld [vmem:[%s203 + $0xf2] sm:$0xff]
      %v639 = vld [vmem:[%s203 + $0xfa] sm:$0xff]
      %v640 = vld [vmem:[%s203 + $0x10a] sm:$0xff]
      %v641 = vld [vmem:[%s203 + $0x112] sm:$0xff]
      %v642 = vld [vmem:[%s203 + $0x122] sm:$0xff]
      %v643 = vld [vmem:[%s203 + $0x12a] sm:$0xff]
      %v644 = vld [vmem:[%s203 + $0x13a] sm:$0xff]
      %v645 = vld [vmem:[%s203 + $0x142] sm:$0xff]
      %v646 = vld [vmem:[%s203 + $0x152] sm:$0xff]
      %v647 = vld [vmem:[%s203 + $0x15a] sm:$0xff]
      %v648 = vld [vmem:[%s203 + $0x16a] sm:$0xff]
      %v649 = vld [vmem:[%s203 + $0x172] sm:$0xff]
      %v650 = vpack.c.bf16 %v619, %v618
      %v651 = vpack.c.bf16 %v621, %v620
      %v652 = vpack.c.bf16 %v623, %v622
      %v653 = vpack.c.bf16 %v625, %v624
      %v654 = vpack.c.bf16 %v627, %v626
      %v655 = vpack.c.bf16 %v629, %v628
      %v656 = vpack.c.bf16 %v631, %v630
      %v657 = vpack.c.bf16 %v633, %v632
      %v658 = vpack.c.bf16 %v635, %v634
      %v659 = vpack.c.bf16 %v637, %v636
      %v660 = vpack.c.bf16 %v639, %v638
      %v661 = vpack.c.bf16 %v641, %v640
      %v662 = vpack.c.bf16 %v643, %v642
      %v663 = vpack.c.bf16 %v645, %v644
      %v664 = vpack.c.bf16 %v647, %v646
      %v665 = vpack.c.bf16 %v649, %v648
      %s666 = scalar_lea.vmem %s1, 128
      %v667 = vld [vmem:[%s666] sm:$0xf]
      %v668 = vld [vmem:[%s666 + $0x4] sm:$0xf]
      %v669 = vld [vmem:[%s666 + $0x8] sm:$0xf]
      %v670 = vld [vmem:[%s666 + $0xc] sm:$0xf]
      %v671 = vld [vmem:[%s666 + $0x10] sm:$0xf]
      %v672 = vld [vmem:[%s666 + $0x14] sm:$0xf]
      %v673 = vld [vmem:[%s666 + $0x18] sm:$0xf]
      %v674 = vld [vmem:[%s666 + $0x1c] sm:$0xf]
      %v675 = vld [vmem:[%s666 + $0x20] sm:$0xf]
      %v676 = vld [vmem:[%s666 + $0x24] sm:$0xf]
      %v677 = vld [vmem:[%s666 + $0x28] sm:$0xf]
      %v678 = vld [vmem:[%s666 + $0x2c] sm:$0xf]
      %v679 = vld [vmem:[%s666 + $0x30] sm:$0xf]
      %v680 = vld [vmem:[%s666 + $0x34] sm:$0xf]
      %v681 = vld [vmem:[%s666 + $0x38] sm:$0xf]
      %v682 = vld [vmem:[%s666 + $0x3c] sm:$0xf]
      %v699 = vunpack.c.l.b16 %v667
      %v700 = vunpack.c.l.b16 %v668
      %v701 = vunpack.c.l.b16 %v669
      %v702 = vunpack.c.l.b16 %v670
      %v703 = vunpack.c.l.b16 %v671
      %v704 = vunpack.c.l.b16 %v672
      %v705 = vunpack.c.l.b16 %v673
      %v706 = vunpack.c.l.b16 %v674
      %v707 = vunpack.c.l.b16 %v675
      %v708 = vunpack.c.l.b16 %v676
      %v709 = vunpack.c.l.b16 %v677
      %v710 = vunpack.c.l.b16 %v678
      %v711 = vunpack.c.l.b16 %v679
      %v712 = vunpack.c.l.b16 %v680
      %v713 = vunpack.c.l.b16 %v681
      %v714 = vunpack.c.l.b16 %v682
      %v715 = vpack.c.b16 %v700, %v699
      %v716 = vpack.c.b16 %v702, %v701
      %v717 = vpack.c.b16 %v704, %v703
      %v718 = vpack.c.b16 %v706, %v705
      %v719 = vpack.c.b16 %v708, %v707
      %v720 = vpack.c.b16 %v710, %v709
      %v721 = vpack.c.b16 %v712, %v711
      %v722 = vpack.c.b16 %v714, %v713
      %731 = vmatpush.bf16.msra.mxu0 %v722
      %732 = vmatpush.bf16.msra.mxu0 %v721
      %733 = vmatpush.bf16.msra.mxu0 %v720
      %734 = vmatpush.bf16.msra.mxu0 %v719
      %735 = vmatpush.bf16.msra.mxu0 %v718
      %736 = vmatpush.bf16.msra.mxu0 %v717
      %737 = vmatpush.bf16.msra.mxu0 %v716
      %738 = vmatpush.bf16.msra.mxu0 %v715
      %739 = vmatmul.bf16.gmra.mxu0 %v650
      %v740 = vpop.f32.mrf.mxu0
      %v741 = vadd.f32 0.0, %v740
      %v742 = vpop.f32.mrf.mxu0
      %v743 = vadd.f32 0.0, %v742
      %744 = vmatmul.bf16.gmra.mxu0 %v651
      %v745 = vpop.f32.mrf.mxu0
      %v746 = vadd.f32 0.0, %v745
      %v747 = vpop.f32.mrf.mxu0
      %v748 = vadd.f32 0.0, %v747
      %749 = vmatmul.bf16.gmra.mxu0 %v652
      %v750 = vpop.f32.mrf.mxu0
      %v751 = vadd.f32 0.0, %v750
      %v752 = vpop.f32.mrf.mxu0
      %v753 = vadd.f32 0.0, %v752
      %754 = vmatmul.bf16.gmra.mxu0 %v653
      %v755 = vpop.f32.mrf.mxu0
      %v756 = vadd.f32 0.0, %v755
      %v757 = vpop.f32.mrf.mxu0
      %v758 = vadd.f32 0.0, %v757
      %759 = vmatmul.bf16.gmra.mxu0 %v654
      %v760 = vpop.f32.mrf.mxu0
      %v761 = vadd.f32 0.0, %v760
      %v762 = vpop.f32.mrf.mxu0
      %v763 = vadd.f32 0.0, %v762
      %764 = vmatmul.bf16.gmra.mxu0 %v655
      %v765 = vpop.f32.mrf.mxu0
      %v766 = vadd.f32 0.0, %v765
      %v767 = vpop.f32.mrf.mxu0
      %v768 = vadd.f32 0.0, %v767
      %769 = vmatmul.bf16.gmra.mxu0 %v656
      %v770 = vpop.f32.mrf.mxu0
      %v771 = vadd.f32 0.0, %v770
      %v772 = vpop.f32.mrf.mxu0
      %v773 = vadd.f32 0.0, %v772
      %774 = vmatmul.bf16.gmra.mxu0 %v657
      %v775 = vpop.f32.mrf.mxu0
      %v776 = vadd.f32 0.0, %v775
      %v777 = vpop.f32.mrf.mxu0
      %v778 = vadd.f32 0.0, %v777
      %779 = vmatmul.bf16.gmra.mxu0 %v658
      %v780 = vpop.f32.mrf.mxu0
      %v781 = vadd.f32 0.0, %v780
      %v782 = vpop.f32.mrf.mxu0
      %v783 = vadd.f32 0.0, %v782
      %784 = vmatmul.bf16.gmra.mxu0 %v659
      %v785 = vpop.f32.mrf.mxu0
      %v786 = vadd.f32 0.0, %v785
      %v787 = vpop.f32.mrf.mxu0
      %v788 = vadd.f32 0.0, %v787
      %789 = vmatmul.bf16.gmra.mxu0 %v660
      %v790 = vpop.f32.mrf.mxu0
      %v791 = vadd.f32 0.0, %v790
      %v792 = vpop.f32.mrf.mxu0
      %v793 = vadd.f32 0.0, %v792
      %794 = vmatmul.bf16.gmra.mxu0 %v661
      %v795 = vpop.f32.mrf.mxu0
      %v796 = vadd.f32 0.0, %v795
      %v797 = vpop.f32.mrf.mxu0
      %v798 = vadd.f32 0.0, %v797
      %799 = vmatmul.bf16.gmra.mxu0 %v662
      %v800 = vpop.f32.mrf.mxu0
      %v801 = vadd.f32 0.0, %v800
      %v802 = vpop.f32.mrf.mxu0
      %v803 = vadd.f32 0.0, %v802
      %804 = vmatmul.bf16.gmra.mxu0 %v663
      %v805 = vpop.f32.mrf.mxu0
      %v806 = vadd.f32 0.0, %v805
      %v807 = vpop.f32.mrf.mxu0
      %v808 = vadd.f32 0.0, %v807
      %809 = vmatmul.bf16.gmra.mxu0 %v664
      %v810 = vpop.f32.mrf.mxu0
      %v811 = vadd.f32 0.0, %v810
      %v812 = vpop.f32.mrf.mxu0
      %v813 = vadd.f32 0.0, %v812
      %814 = vmatmul.bf16.gmra.mxu0 %v665
      %v815 = vpop.f32.mrf.mxu0
      %v816 = vadd.f32 0.0, %v815
      %v817 = vpop.f32.mrf.mxu0
      %v818 = vadd.f32 0.0, %v817
      %819 = vdwg.mxu0
      %v820 = vadd.f32 %v539, %v741
      %v821 = vadd.f32 %v541, %v743
      %v822 = vadd.f32 %v544, %v746
      %v823 = vadd.f32 %v546, %v748
      %v824 = vadd.f32 %v549, %v751
      %v825 = vadd.f32 %v551, %v753
      %v826 = vadd.f32 %v554, %v756
      %v827 = vadd.f32 %v556, %v758
      %v828 = vadd.f32 %v559, %v761
      %v829 = vadd.f32 %v561, %v763
      %v830 = vadd.f32 %v564, %v766
      %v831 = vadd.f32 %v566, %v768
      %v832 = vadd.f32 %v569, %v771
      %v833 = vadd.f32 %v571, %v773
      %v834 = vadd.f32 %v574, %v776
      %v835 = vadd.f32 %v576, %v778
      %v836 = vadd.f32 %v579, %v781
      %v837 = vadd.f32 %v581, %v783
      %v838 = vadd.f32 %v584, %v786
      %v839 = vadd.f32 %v586, %v788
      %v840 = vadd.f32 %v589, %v791
      %v841 = vadd.f32 %v591, %v793
      %v842 = vadd.f32 %v594, %v796
      %v843 = vadd.f32 %v596, %v798
      %v844 = vadd.f32 %v599, %v801
      %v845 = vadd.f32 %v601, %v803
      %v846 = vadd.f32 %v604, %v806
      %v847 = vadd.f32 %v606, %v808
      %v848 = vadd.f32 %v609, %v811
      %v849 = vadd.f32 %v611, %v813
      %v850 = vadd.f32 %v614, %v816
      %v851 = vadd.f32 %v616, %v818
      %s852 = scalar_lea.vmem %s203, 24
      %v853 = vld [vmem:[%s852] sm:$0xff]
      %v854 = vld [vmem:[%s852 + $0x8] sm:$0xff]
      %v855 = vld [vmem:[%s852 + $0x18] sm:$0xff]
      %v856 = vld [vmem:[%s852 + $0x20] sm:$0xff]
      %v857 = vld [vmem:[%s852 + $0x30] sm:$0xff]
      %v858 = vld [vmem:[%s852 + $0x38] sm:$0xff]
      %v859 = vld [vmem:[%s852 + $0x48] sm:$0xff]
      %v860 = vld [vmem:[%s852 + $0x50] sm:$0xff]
      %v861 = vld [vmem:[%s852 + $0x60] sm:$0xff]
      %v862 = vld [vmem:[%s852 + $0x68] sm:$0xff]
      %v863 = vld [vmem:[%s852 + $0x78] sm:$0xff]
      %v864 = vld [vmem:[%s852 + $0x80] sm:$0xff]
      %v865 = vld [vmem:[%s852 + $0x90] sm:$0xff]
      %v866 = vld [vmem:[%s852 + $0x98] sm:$0xff]
      %v867 = vld [vmem:[%s852 + $0xa8] sm:$0xff]
      %v868 = vld [vmem:[%s852 + $0xb0] sm:$0xff]
      %v869 = vld [vmem:[%s852 + $0xc0] sm:$0xff]
      %v870 = vld [vmem:[%s852 + $0xc8] sm:$0xff]
      %v871 = vld [vmem:[%s852 + $0xd8] sm:$0xff]
      %v872 = vld [vmem:[%s852 + $0xe0] sm:$0xff]
      %v873 = vld [vmem:[%s852 + $0xf0] sm:$0xff]
      %v874 = vld [vmem:[%s852 + $0xf8] sm:$0xff]
      %v875 = vld [vmem:[%s852 + $0x108] sm:$0xff]
      %v876 = vld [vmem:[%s852 + $0x110] sm:$0xff]
      %v877 = vld [vmem:[%s852 + $0x120] sm:$0xff]
      %v878 = vld [vmem:[%s852 + $0x128] sm:$0xff]
      %v879 = vld [vmem:[%s852 + $0x138] sm:$0xff]
      %v880 = vld [vmem:[%s852 + $0x140] sm:$0xff]
      %v881 = vld [vmem:[%s852 + $0x150] sm:$0xff]
      %v882 = vld [vmem:[%s852 + $0x158] sm:$0xff]
      %v883 = vld [vmem:[%s852 + $0x168] sm:$0xff]
      %v884 = vld [vmem:[%s852 + $0x170] sm:$0xff]
      %v885 = vpack.c.bf16 %v854, %v853
      %v886 = vpack.c.bf16 %v856, %v855
      %v887 = vpack.c.bf16 %v858, %v857
      %v888 = vpack.c.bf16 %v860, %v859
      %v889 = vpack.c.bf16 %v862, %v861
      %v890 = vpack.c.bf16 %v864, %v863
      %v891 = vpack.c.bf16 %v866, %v865
      %v892 = vpack.c.bf16 %v868, %v867
      %v893 = vpack.c.bf16 %v870, %v869
      %v894 = vpack.c.bf16 %v872, %v871
      %v895 = vpack.c.bf16 %v874, %v873
      %v896 = vpack.c.bf16 %v876, %v875
      %v897 = vpack.c.bf16 %v878, %v877
      %v898 = vpack.c.bf16 %v880, %v879
      %v899 = vpack.c.bf16 %v882, %v881
      %v900 = vpack.c.bf16 %v884, %v883
      %s901 = scalar_lea.vmem %s1, 192
      %v902 = vld [vmem:[%s901] sm:$0xf]
      %v903 = vld [vmem:[%s901 + $0x4] sm:$0xf]
      %v904 = vld [vmem:[%s901 + $0x8] sm:$0xf]
      %v905 = vld [vmem:[%s901 + $0xc] sm:$0xf]
      %v906 = vld [vmem:[%s901 + $0x10] sm:$0xf]
      %v907 = vld [vmem:[%s901 + $0x14] sm:$0xf]
      %v908 = vld [vmem:[%s901 + $0x18] sm:$0xf]
      %v909 = vld [vmem:[%s901 + $0x1c] sm:$0xf]
      %v910 = vld [vmem:[%s901 + $0x20] sm:$0xf]
      %v911 = vld [vmem:[%s901 + $0x24] sm:$0xf]
      %v912 = vld [vmem:[%s901 + $0x28] sm:$0xf]
      %v913 = vld [vmem:[%s901 + $0x2c] sm:$0xf]
      %v914 = vld [vmem:[%s901 + $0x30] sm:$0xf]
      %v915 = vld [vmem:[%s901 + $0x34] sm:$0xf]
      %v916 = vld [vmem:[%s901 + $0x38] sm:$0xf]
      %v917 = vld [vmem:[%s901 + $0x3c] sm:$0xf]
      %v934 = vunpack.c.l.b16 %v902
      %v935 = vunpack.c.l.b16 %v903
      %v936 = vunpack.c.l.b16 %v904
      %v937 = vunpack.c.l.b16 %v905
      %v938 = vunpack.c.l.b16 %v906
      %v939 = vunpack.c.l.b16 %v907
      %v940 = vunpack.c.l.b16 %v908
      %v941 = vunpack.c.l.b16 %v909
      %v942 = vunpack.c.l.b16 %v910
      %v943 = vunpack.c.l.b16 %v911
      %v944 = vunpack.c.l.b16 %v912
      %v945 = vunpack.c.l.b16 %v913
      %v946 = vunpack.c.l.b16 %v914
      %v947 = vunpack.c.l.b16 %v915
      %v948 = vunpack.c.l.b16 %v916
      %v949 = vunpack.c.l.b16 %v917
      %v950 = vpack.c.b16 %v935, %v934
      %v951 = vpack.c.b16 %v937, %v936
      %v952 = vpack.c.b16 %v939, %v938
      %v953 = vpack.c.b16 %v941, %v940
      %v954 = vpack.c.b16 %v943, %v942
      %v955 = vpack.c.b16 %v945, %v944
      %v956 = vpack.c.b16 %v947, %v946
      %v957 = vpack.c.b16 %v949, %v948
      %966 = vmatpush.bf16.msra.mxu0 %v957
      %967 = vmatpush.bf16.msra.mxu0 %v956
      %968 = vmatpush.bf16.msra.mxu0 %v955
      %969 = vmatpush.bf16.msra.mxu0 %v954
      %970 = vmatpush.bf16.msra.mxu0 %v953
      %971 = vmatpush.bf16.msra.mxu0 %v952
      %972 = vmatpush.bf16.msra.mxu0 %v951
      %973 = vmatpush.bf16.msra.mxu0 %v950
      %974 = vmatmul.bf16.gmra.mxu0 %v885
      %v975 = vpop.f32.mrf.mxu0
      %v976 = vadd.f32 0.0, %v975
      %v977 = vpop.f32.mrf.mxu0
      %v978 = vadd.f32 0.0, %v977
      %979 = vmatmul.bf16.gmra.mxu0 %v886
      %v980 = vpop.f32.mrf.mxu0
      %v981 = vadd.f32 0.0, %v980
      %v982 = vpop.f32.mrf.mxu0
      %v983 = vadd.f32 0.0, %v982
      %984 = vmatmul.bf16.gmra.mxu0 %v887
      %v985 = vpop.f32.mrf.mxu0
      %v986 = vadd.f32 0.0, %v985
      %v987 = vpop.f32.mrf.mxu0
      %v988 = vadd.f32 0.0, %v987
      %989 = vmatmul.bf16.gmra.mxu0 %v888
      %v990 = vpop.f32.mrf.mxu0
      %v991 = vadd.f32 0.0, %v990
      %v992 = vpop.f32.mrf.mxu0
      %v993 = vadd.f32 0.0, %v992
      %994 = vmatmul.bf16.gmra.mxu0 %v889
      %v995 = vpop.f32.mrf.mxu0
      %v996 = vadd.f32 0.0, %v995
      %v997 = vpop.f32.mrf.mxu0
      %v998 = vadd.f32 0.0, %v997
      %999 = vmatmul.bf16.gmra.mxu0 %v890
      %v1000 = vpop.f32.mrf.mxu0
      %v1001 = vadd.f32 0.0, %v1000
      %v1002 = vpop.f32.mrf.mxu0
      %v1003 = vadd.f32 0.0, %v1002
      %1004 = vmatmul.bf16.gmra.mxu0 %v891
      %v1005 = vpop.f32.mrf.mxu0
      %v1006 = vadd.f32 0.0, %v1005
      %v1007 = vpop.f32.mrf.mxu0
      %v1008 = vadd.f32 0.0, %v1007
      %1009 = vmatmul.bf16.gmra.mxu0 %v892
      %v1010 = vpop.f32.mrf.mxu0
      %v1011 = vadd.f32 0.0, %v1010
      %v1012 = vpop.f32.mrf.mxu0
      %v1013 = vadd.f32 0.0, %v1012
      %1014 = vmatmul.bf16.gmra.mxu0 %v893
      %v1015 = vpop.f32.mrf.mxu0
      %v1016 = vadd.f32 0.0, %v1015
      %v1017 = vpop.f32.mrf.mxu0
      %v1018 = vadd.f32 0.0, %v1017
      %1019 = vmatmul.bf16.gmra.mxu0 %v894
      %v1020 = vpop.f32.mrf.mxu0
      %v1021 = vadd.f32 0.0, %v1020
      %v1022 = vpop.f32.mrf.mxu0
      %v1023 = vadd.f32 0.0, %v1022
      %1024 = vmatmul.bf16.gmra.mxu0 %v895
      %v1025 = vpop.f32.mrf.mxu0
      %v1026 = vadd.f32 0.0, %v1025
      %v1027 = vpop.f32.mrf.mxu0
      %v1028 = vadd.f32 0.0, %v1027
      %1029 = vmatmul.bf16.gmra.mxu0 %v896
      %v1030 = vpop.f32.mrf.mxu0
      %v1031 = vadd.f32 0.0, %v1030
      %v1032 = vpop.f32.mrf.mxu0
      %v1033 = vadd.f32 0.0, %v1032
      %1034 = vmatmul.bf16.gmra.mxu0 %v897
      %v1035 = vpop.f32.mrf.mxu0
      %v1036 = vadd.f32 0.0, %v1035
      %v1037 = vpop.f32.mrf.mxu0
      %v1038 = vadd.f32 0.0, %v1037
      %1039 = vmatmul.bf16.gmra.mxu0 %v898
      %v1040 = vpop.f32.mrf.mxu0
      %v1041 = vadd.f32 0.0, %v1040
      %v1042 = vpop.f32.mrf.mxu0
      %v1043 = vadd.f32 0.0, %v1042
      %1044 = vmatmul.bf16.gmra.mxu0 %v899
      %v1045 = vpop.f32.mrf.mxu0
      %v1046 = vadd.f32 0.0, %v1045
      %v1047 = vpop.f32.mrf.mxu0
      %v1048 = vadd.f32 0.0, %v1047
      %1049 = vmatmul.bf16.gmra.mxu0 %v900
      %v1050 = vpop.f32.mrf.mxu0
      %v1051 = vadd.f32 0.0, %v1050
      %v1052 = vpop.f32.mrf.mxu0
      %v1053 = vadd.f32 0.0, %v1052
      %1054 = vdwg.mxu0
      %v1055 = vadd.f32 %v820, %v976
      %v1056 = vadd.f32 %v821, %v978
      %v1057 = vadd.f32 %v822, %v981
      %v1058 = vadd.f32 %v823, %v983
      %v1059 = vadd.f32 %v824, %v986
      %v1060 = vadd.f32 %v825, %v988
      %v1061 = vadd.f32 %v826, %v991
      %v1062 = vadd.f32 %v827, %v993
      %v1063 = vadd.f32 %v828, %v996
      %v1064 = vadd.f32 %v829, %v998
      %v1065 = vadd.f32 %v830, %v1001
      %v1066 = vadd.f32 %v831, %v1003
      %v1067 = vadd.f32 %v832, %v1006
      %v1068 = vadd.f32 %v833, %v1008
      %v1069 = vadd.f32 %v834, %v1011
      %v1070 = vadd.f32 %v835, %v1013
      %v1071 = vadd.f32 %v836, %v1016
      %v1072 = vadd.f32 %v837, %v1018
      %v1073 = vadd.f32 %v838, %v1021
      %v1074 = vadd.f32 %v839, %v1023
      %v1075 = vadd.f32 %v840, %v1026
      %v1076 = vadd.f32 %v841, %v1028
      %v1077 = vadd.f32 %v842, %v1031
      %v1078 = vadd.f32 %v843, %v1033
      %v1079 = vadd.f32 %v844, %v1036
      %v1080 = vadd.f32 %v845, %v1038
      %v1081 = vadd.f32 %v846, %v1041
      %v1082 = vadd.f32 %v847, %v1043
      %v1083 = vadd.f32 %v848, %v1046
      %v1084 = vadd.f32 %v849, %v1048
      %v1085 = vadd.f32 %v850, %v1051
      %v1086 = vadd.f32 %v851, %v1053
      %v1087 = vld [vmem:[%s852 + $0x1] sm:$0xff]
      %v1088 = vld [vmem:[%s852 + $0x9] sm:$0xff]
      %v1089 = vld [vmem:[%s852 + $0x19] sm:$0xff]
      %v1090 = vld [vmem:[%s852 + $0x21] sm:$0xff]
      %v1091 = vld [vmem:[%s852 + $0x31] sm:$0xff]
      %v1092 = vld [vmem:[%s852 + $0x39] sm:$0xff]
      %v1093 = vld [vmem:[%s852 + $0x49] sm:$0xff]
      %v1094 = vld [vmem:[%s852 + $0x51] sm:$0xff]
      %v1095 = vld [vmem:[%s852 + $0x61] sm:$0xff]
      %v1096 = vld [vmem:[%s852 + $0x69] sm:$0xff]
      %v1097 = vld [vmem:[%s852 + $0x79] sm:$0xff]
      %v1098 = vld [vmem:[%s852 + $0x81] sm:$0xff]
      %v1099 = vld [vmem:[%s852 + $0x91] sm:$0xff]
      %v1100 = vld [vmem:[%s852 + $0x99] sm:$0xff]
      %v1101 = vld [vmem:[%s852 + $0xa9] sm:$0xff]
      %v1102 = vld [vmem:[%s852 + $0xb1] sm:$0xff]
      %v1103 = vld [vmem:[%s852 + $0xc1] sm:$0xff]
      %v1104 = vld [vmem:[%s852 + $0xc9] sm:$0xff]
      %v1105 = vld [vmem:[%s852 + $0xd9] sm:$0xff]
      %v1106 = vld [vmem:[%s852 + $0xe1] sm:$0xff]
      %v1107 = vld [vmem:[%s852 + $0xf1] sm:$0xff]
      %v1108 = vld [vmem:[%s852 + $0xf9] sm:$0xff]
      %v1109 = vld [vmem:[%s852 + $0x109] sm:$0xff]
      %v1110 = vld [vmem:[%s852 + $0x111] sm:$0xff]
      %v1111 = vld [vmem:[%s852 + $0x121] sm:$0xff]
      %v1112 = vld [vmem:[%s852 + $0x129] sm:$0xff]
      %v1113 = vld [vmem:[%s852 + $0x139] sm:$0xff]
      %v1114 = vld [vmem:[%s852 + $0x141] sm:$0xff]
      %v1115 = vld [vmem:[%s852 + $0x151] sm:$0xff]
      %v1116 = vld [vmem:[%s852 + $0x159] sm:$0xff]
      %v1117 = vld [vmem:[%s852 + $0x169] sm:$0xff]
      %v1118 = vld [vmem:[%s852 + $0x171] sm:$0xff]
      %v1119 = vpack.c.bf16 %v1088, %v1087
      %v1120 = vpack.c.bf16 %v1090, %v1089
      %v1121 = vpack.c.bf16 %v1092, %v1091
      %v1122 = vpack.c.bf16 %v1094, %v1093
      %v1123 = vpack.c.bf16 %v1096, %v1095
      %v1124 = vpack.c.bf16 %v1098, %v1097
      %v1125 = vpack.c.bf16 %v1100, %v1099
      %v1126 = vpack.c.bf16 %v1102, %v1101
      %v1127 = vpack.c.bf16 %v1104, %v1103
      %v1128 = vpack.c.bf16 %v1106, %v1105
      %v1129 = vpack.c.bf16 %v1108, %v1107
      %v1130 = vpack.c.bf16 %v1110, %v1109
      %v1131 = vpack.c.bf16 %v1112, %v1111
      %v1132 = vpack.c.bf16 %v1114, %v1113
      %v1133 = vpack.c.bf16 %v1116, %v1115
      %v1134 = vpack.c.bf16 %v1118, %v1117
      %s1135 = scalar_lea.vmem %s1, 256
      %v1136 = vld [vmem:[%s1135] sm:$0xf]
      %v1137 = vld [vmem:[%s1135 + $0x4] sm:$0xf]
      %v1138 = vld [vmem:[%s1135 + $0x8] sm:$0xf]
      %v1139 = vld [vmem:[%s1135 + $0xc] sm:$0xf]
      %v1140 = vld [vmem:[%s1135 + $0x10] sm:$0xf]
      %v1141 = vld [vmem:[%s1135 + $0x14] sm:$0xf]
      %v1142 = vld [vmem:[%s1135 + $0x18] sm:$0xf]
      %v1143 = vld [vmem:[%s1135 + $0x1c] sm:$0xf]
      %v1144 = vld [vmem:[%s1135 + $0x20] sm:$0xf]
      %v1145 = vld [vmem:[%s1135 + $0x24] sm:$0xf]
      %v1146 = vld [vmem:[%s1135 + $0x28] sm:$0xf]
      %v1147 = vld [vmem:[%s1135 + $0x2c] sm:$0xf]
      %v1148 = vld [vmem:[%s1135 + $0x30] sm:$0xf]
      %v1149 = vld [vmem:[%s1135 + $0x34] sm:$0xf]
      %v1150 = vld [vmem:[%s1135 + $0x38] sm:$0xf]
      %v1151 = vld [vmem:[%s1135 + $0x3c] sm:$0xf]
      %v1168 = vunpack.c.l.b16 %v1136
      %v1169 = vunpack.c.l.b16 %v1137
      %v1170 = vunpack.c.l.b16 %v1138
      %v1171 = vunpack.c.l.b16 %v1139
      %v1172 = vunpack.c.l.b16 %v1140
      %v1173 = vunpack.c.l.b16 %v1141
      %v1174 = vunpack.c.l.b16 %v1142
      %v1175 = vunpack.c.l.b16 %v1143
      %v1176 = vunpack.c.l.b16 %v1144
      %v1177 = vunpack.c.l.b16 %v1145
      %v1178 = vunpack.c.l.b16 %v1146
      %v1179 = vunpack.c.l.b16 %v1147
      %v1180 = vunpack.c.l.b16 %v1148
      %v1181 = vunpack.c.l.b16 %v1149
      %v1182 = vunpack.c.l.b16 %v1150
      %v1183 = vunpack.c.l.b16 %v1151
      %v1184 = vpack.c.b16 %v1169, %v1168
      %v1185 = vpack.c.b16 %v1171, %v1170
      %v1186 = vpack.c.b16 %v1173, %v1172
      %v1187 = vpack.c.b16 %v1175, %v1174
      %v1188 = vpack.c.b16 %v1177, %v1176
      %v1189 = vpack.c.b16 %v1179, %v1178
      %v1190 = vpack.c.b16 %v1181, %v1180
      %v1191 = vpack.c.b16 %v1183, %v1182
      %1200 = vmatpush.bf16.msra.mxu0 %v1191
      %1201 = vmatpush.bf16.msra.mxu0 %v1190
      %1202 = vmatpush.bf16.msra.mxu0 %v1189
      %1203 = vmatpush.bf16.msra.mxu0 %v1188
      %1204 = vmatpush.bf16.msra.mxu0 %v1187
      %1205 = vmatpush.bf16.msra.mxu0 %v1186
      %1206 = vmatpush.bf16.msra.mxu0 %v1185
      %1207 = vmatpush.bf16.msra.mxu0 %v1184
      %1208 = vmatmul.bf16.gmra.mxu0 %v1119
      %v1209 = vpop.f32.mrf.mxu0
      %v1210 = vadd.f32 0.0, %v1209
      %v1211 = vpop.f32.mrf.mxu0
      %v1212 = vadd.f32 0.0, %v1211
      %1213 = vmatmul.bf16.gmra.mxu0 %v1120
      %v1214 = vpop.f32.mrf.mxu0
      %v1215 = vadd.f32 0.0, %v1214
      %v1216 = vpop.f32.mrf.mxu0
      %v1217 = vadd.f32 0.0, %v1216
      %1218 = vmatmul.bf16.gmra.mxu0 %v1121
      %v1219 = vpop.f32.mrf.mxu0
      %v1220 = vadd.f32 0.0, %v1219
      %v1221 = vpop.f32.mrf.mxu0
      %v1222 = vadd.f32 0.0, %v1221
      %1223 = vmatmul.bf16.gmra.mxu0 %v1122
      %v1224 = vpop.f32.mrf.mxu0
      %v1225 = vadd.f32 0.0, %v1224
      %v1226 = vpop.f32.mrf.mxu0
      %v1227 = vadd.f32 0.0, %v1226
      %1228 = vmatmul.bf16.gmra.mxu0 %v1123
      %v1229 = vpop.f32.mrf.mxu0
      %v1230 = vadd.f32 0.0, %v1229
      %v1231 = vpop.f32.mrf.mxu0
      %v1232 = vadd.f32 0.0, %v1231
      %1233 = vmatmul.bf16.gmra.mxu0 %v1124
      %v1234 = vpop.f32.mrf.mxu0
      %v1235 = vadd.f32 0.0, %v1234
      %v1236 = vpop.f32.mrf.mxu0
      %v1237 = vadd.f32 0.0, %v1236
      %1238 = vmatmul.bf16.gmra.mxu0 %v1125
      %v1239 = vpop.f32.mrf.mxu0
      %v1240 = vadd.f32 0.0, %v1239
      %v1241 = vpop.f32.mrf.mxu0
      %v1242 = vadd.f32 0.0, %v1241
      %1243 = vmatmul.bf16.gmra.mxu0 %v1126
      %v1244 = vpop.f32.mrf.mxu0
      %v1245 = vadd.f32 0.0, %v1244
      %v1246 = vpop.f32.mrf.mxu0
      %v1247 = vadd.f32 0.0, %v1246
      %1248 = vmatmul.bf16.gmra.mxu0 %v1127
      %v1249 = vpop.f32.mrf.mxu0
      %v1250 = vadd.f32 0.0, %v1249
      %v1251 = vpop.f32.mrf.mxu0
      %v1252 = vadd.f32 0.0, %v1251
      %1253 = vmatmul.bf16.gmra.mxu0 %v1128
      %v1254 = vpop.f32.mrf.mxu0
      %v1255 = vadd.f32 0.0, %v1254
      %v1256 = vpop.f32.mrf.mxu0
      %v1257 = vadd.f32 0.0, %v1256
      %1258 = vmatmul.bf16.gmra.mxu0 %v1129
      %v1259 = vpop.f32.mrf.mxu0
      %v1260 = vadd.f32 0.0, %v1259
      %v1261 = vpop.f32.mrf.mxu0
      %v1262 = vadd.f32 0.0, %v1261
      %1263 = vmatmul.bf16.gmra.mxu0 %v1130
      %v1264 = vpop.f32.mrf.mxu0
      %v1265 = vadd.f32 0.0, %v1264
      %v1266 = vpop.f32.mrf.mxu0
      %v1267 = vadd.f32 0.0, %v1266
      %1268 = vmatmul.bf16.gmra.mxu0 %v1131
      %v1269 = vpop.f32.mrf.mxu0
      %v1270 = vadd.f32 0.0, %v1269
      %v1271 = vpop.f32.mrf.mxu0
      %v1272 = vadd.f32 0.0, %v1271
      %1273 = vmatmul.bf16.gmra.mxu0 %v1132
      %v1274 = vpop.f32.mrf.mxu0
      %v1275 = vadd.f32 0.0, %v1274
      %v1276 = vpop.f32.mrf.mxu0
      %v1277 = vadd.f32 0.0, %v1276
      %1278 = vmatmul.bf16.gmra.mxu0 %v1133
      %v1279 = vpop.f32.mrf.mxu0
      %v1280 = vadd.f32 0.0, %v1279
      %v1281 = vpop.f32.mrf.mxu0
      %v1282 = vadd.f32 0.0, %v1281
      %1283 = vmatmul.bf16.gmra.mxu0 %v1134
      %v1284 = vpop.f32.mrf.mxu0
      %v1285 = vadd.f32 0.0, %v1284
      %v1286 = vpop.f32.mrf.mxu0
      %v1287 = vadd.f32 0.0, %v1286
      %1288 = vdwg.mxu0
      %v1289 = vadd.f32 %v1055, %v1210
      %v1290 = vadd.f32 %v1056, %v1212
      %v1291 = vadd.f32 %v1057, %v1215
      %v1292 = vadd.f32 %v1058, %v1217
      %v1293 = vadd.f32 %v1059, %v1220
      %v1294 = vadd.f32 %v1060, %v1222
      %v1295 = vadd.f32 %v1061, %v1225
      %v1296 = vadd.f32 %v1062, %v1227
      %v1297 = vadd.f32 %v1063, %v1230
      %v1298 = vadd.f32 %v1064, %v1232
      %v1299 = vadd.f32 %v1065, %v1235
      %v1300 = vadd.f32 %v1066, %v1237
      %v1301 = vadd.f32 %v1067, %v1240
      %v1302 = vadd.f32 %v1068, %v1242
      %v1303 = vadd.f32 %v1069, %v1245
      %v1304 = vadd.f32 %v1070, %v1247
      %v1305 = vadd.f32 %v1071, %v1250
      %v1306 = vadd.f32 %v1072, %v1252
      %v1307 = vadd.f32 %v1073, %v1255
      %v1308 = vadd.f32 %v1074, %v1257
      %v1309 = vadd.f32 %v1075, %v1260
      %v1310 = vadd.f32 %v1076, %v1262
      %v1311 = vadd.f32 %v1077, %v1265
      %v1312 = vadd.f32 %v1078, %v1267
      %v1313 = vadd.f32 %v1079, %v1270
      %v1314 = vadd.f32 %v1080, %v1272
      %v1315 = vadd.f32 %v1081, %v1275
      %v1316 = vadd.f32 %v1082, %v1277
      %v1317 = vadd.f32 %v1083, %v1280
      %v1318 = vadd.f32 %v1084, %v1282
      %v1319 = vadd.f32 %v1085, %v1285
      %v1320 = vadd.f32 %v1086, %v1287
      %v1321 = vld [vmem:[%s852 + $0x2] sm:$0xff]
      %v1322 = vld [vmem:[%s852 + $0xa] sm:$0xff]
      %v1323 = vld [vmem:[%s852 + $0x1a] sm:$0xff]
      %v1324 = vld [vmem:[%s852 + $0x22] sm:$0xff]
      %v1325 = vld [vmem:[%s852 + $0x32] sm:$0xff]
      %v1326 = vld [vmem:[%s852 + $0x3a] sm:$0xff]
      %v1327 = vld [vmem:[%s852 + $0x4a] sm:$0xff]
      %v1328 = vld [vmem:[%s852 + $0x52] sm:$0xff]
      %v1329 = vld [vmem:[%s852 + $0x62] sm:$0xff]
      %v1330 = vld [vmem:[%s852 + $0x6a] sm:$0xff]
      %v1331 = vld [vmem:[%s852 + $0x7a] sm:$0xff]
      %v1332 = vld [vmem:[%s852 + $0x82] sm:$0xff]
      %v1333 = vld [vmem:[%s852 + $0x92] sm:$0xff]
      %v1334 = vld [vmem:[%s852 + $0x9a] sm:$0xff]
      %v1335 = vld [vmem:[%s852 + $0xaa] sm:$0xff]
      %v1336 = vld [vmem:[%s852 + $0xb2] sm:$0xff]
      %v1337 = vld [vmem:[%s852 + $0xc2] sm:$0xff]
      %v1338 = vld [vmem:[%s852 + $0xca] sm:$0xff]
      %v1339 = vld [vmem:[%s852 + $0xda] sm:$0xff]
      %v1340 = vld [vmem:[%s852 + $0xe2] sm:$0xff]
      %v1341 = vld [vmem:[%s852 + $0xf2] sm:$0xff]
      %v1342 = vld [vmem:[%s852 + $0xfa] sm:$0xff]
      %v1343 = vld [vmem:[%s852 + $0x10a] sm:$0xff]
      %v1344 = vld [vmem:[%s852 + $0x112] sm:$0xff]
      %v1345 = vld [vmem:[%s852 + $0x122] sm:$0xff]
      %v1346 = vld [vmem:[%s852 + $0x12a] sm:$0xff]
      %v1347 = vld [vmem:[%s852 + $0x13a] sm:$0xff]
      %v1348 = vld [vmem:[%s852 + $0x142] sm:$0xff]
      %v1349 = vld [vmem:[%s852 + $0x152] sm:$0xff]
      %v1350 = vld [vmem:[%s852 + $0x15a] sm:$0xff]
      %v1351 = vld [vmem:[%s852 + $0x16a] sm:$0xff]
      %v1352 = vld [vmem:[%s852 + $0x172] sm:$0xff]
      %v1353 = vpack.c.bf16 %v1322, %v1321
      %v1354 = vpack.c.bf16 %v1324, %v1323
      %v1355 = vpack.c.bf16 %v1326, %v1325
      %v1356 = vpack.c.bf16 %v1328, %v1327
      %v1357 = vpack.c.bf16 %v1330, %v1329
      %v1358 = vpack.c.bf16 %v1332, %v1331
      %v1359 = vpack.c.bf16 %v1334, %v1333
      %v1360 = vpack.c.bf16 %v1336, %v1335
      %v1361 = vpack.c.bf16 %v1338, %v1337
      %v1362 = vpack.c.bf16 %v1340, %v1339
      %v1363 = vpack.c.bf16 %v1342, %v1341
      %v1364 = vpack.c.bf16 %v1344, %v1343
      %v1365 = vpack.c.bf16 %v1346, %v1345
      %v1366 = vpack.c.bf16 %v1348, %v1347
      %v1367 = vpack.c.bf16 %v1350, %v1349
      %v1368 = vpack.c.bf16 %v1352, %v1351
      %s1369 = scalar_lea.vmem %s1, 320
      %v1370 = vld [vmem:[%s1369] sm:$0xf]
      %v1371 = vld [vmem:[%s1369 + $0x4] sm:$0xf]
      %v1372 = vld [vmem:[%s1369 + $0x8] sm:$0xf]
      %v1373 = vld [vmem:[%s1369 + $0xc] sm:$0xf]
      %v1374 = vld [vmem:[%s1369 + $0x10] sm:$0xf]
      %v1375 = vld [vmem:[%s1369 + $0x14] sm:$0xf]
      %v1376 = vld [vmem:[%s1369 + $0x18] sm:$0xf]
      %v1377 = vld [vmem:[%s1369 + $0x1c] sm:$0xf]
      %v1378 = vld [vmem:[%s1369 + $0x20] sm:$0xf]
      %v1379 = vld [vmem:[%s1369 + $0x24] sm:$0xf]
      %v1380 = vld [vmem:[%s1369 + $0x28] sm:$0xf]
      %v1381 = vld [vmem:[%s1369 + $0x2c] sm:$0xf]
      %v1382 = vld [vmem:[%s1369 + $0x30] sm:$0xf]
      %v1383 = vld [vmem:[%s1369 + $0x34] sm:$0xf]
      %v1384 = vld [vmem:[%s1369 + $0x38] sm:$0xf]
      %v1385 = vld [vmem:[%s1369 + $0x3c] sm:$0xf]
      %v1402 = vunpack.c.l.b16 %v1370
      %v1403 = vunpack.c.l.b16 %v1371
      %v1404 = vunpack.c.l.b16 %v1372
      %v1405 = vunpack.c.l.b16 %v1373
      %v1406 = vunpack.c.l.b16 %v1374
      %v1407 = vunpack.c.l.b16 %v1375
      %v1408 = vunpack.c.l.b16 %v1376
      %v1409 = vunpack.c.l.b16 %v1377
      %v1410 = vunpack.c.l.b16 %v1378
      %v1411 = vunpack.c.l.b16 %v1379
      %v1412 = vunpack.c.l.b16 %v1380
      %v1413 = vunpack.c.l.b16 %v1381
      %v1414 = vunpack.c.l.b16 %v1382
      %v1415 = vunpack.c.l.b16 %v1383
      %v1416 = vunpack.c.l.b16 %v1384
      %v1417 = vunpack.c.l.b16 %v1385
      %v1418 = vpack.c.b16 %v1403, %v1402
      %v1419 = vpack.c.b16 %v1405, %v1404
      %v1420 = vpack.c.b16 %v1407, %v1406
      %v1421 = vpack.c.b16 %v1409, %v1408
      %v1422 = vpack.c.b16 %v1411, %v1410
      %v1423 = vpack.c.b16 %v1413, %v1412
      %v1424 = vpack.c.b16 %v1415, %v1414
      %v1425 = vpack.c.b16 %v1417, %v1416
      %1434 = vmatpush.bf16.msra.mxu0 %v1425
      %1435 = vmatpush.bf16.msra.mxu0 %v1424
      %1436 = vmatpush.bf16.msra.mxu0 %v1423
      %1437 = vmatpush.bf16.msra.mxu0 %v1422
      %1438 = vmatpush.bf16.msra.mxu0 %v1421
      %1439 = vmatpush.bf16.msra.mxu0 %v1420
      %1440 = vmatpush.bf16.msra.mxu0 %v1419
      %1441 = vmatpush.bf16.msra.mxu0 %v1418
      %1442 = vmatmul.bf16.gmra.mxu0 %v1353
      %v1443 = vpop.f32.mrf.mxu0
      %v1444 = vadd.f32 0.0, %v1443
      %v1445 = vpop.f32.mrf.mxu0
      %v1446 = vadd.f32 0.0, %v1445
      %1447 = vmatmul.bf16.gmra.mxu0 %v1354
      %v1448 = vpop.f32.mrf.mxu0
      %v1449 = vadd.f32 0.0, %v1448
      %v1450 = vpop.f32.mrf.mxu0
      %v1451 = vadd.f32 0.0, %v1450
      %1452 = vmatmul.bf16.gmra.mxu0 %v1355
      %v1453 = vpop.f32.mrf.mxu0
      %v1454 = vadd.f32 0.0, %v1453
      %v1455 = vpop.f32.mrf.mxu0
      %v1456 = vadd.f32 0.0, %v1455
      %1457 = vmatmul.bf16.gmra.mxu0 %v1356
      %v1458 = vpop.f32.mrf.mxu0
      %v1459 = vadd.f32 0.0, %v1458
      %v1460 = vpop.f32.mrf.mxu0
      %v1461 = vadd.f32 0.0, %v1460
      %1462 = vmatmul.bf16.gmra.mxu0 %v1357
      %v1463 = vpop.f32.mrf.mxu0
      %v1464 = vadd.f32 0.0, %v1463
      %v1465 = vpop.f32.mrf.mxu0
      %v1466 = vadd.f32 0.0, %v1465
      %1467 = vmatmul.bf16.gmra.mxu0 %v1358
      %v1468 = vpop.f32.mrf.mxu0
      %v1469 = vadd.f32 0.0, %v1468
      %v1470 = vpop.f32.mrf.mxu0
      %v1471 = vadd.f32 0.0, %v1470
      %1472 = vmatmul.bf16.gmra.mxu0 %v1359
      %v1473 = vpop.f32.mrf.mxu0
      %v1474 = vadd.f32 0.0, %v1473
      %v1475 = vpop.f32.mrf.mxu0
      %v1476 = vadd.f32 0.0, %v1475
      %1477 = vmatmul.bf16.gmra.mxu0 %v1360
      %v1478 = vpop.f32.mrf.mxu0
      %v1479 = vadd.f32 0.0, %v1478
      %v1480 = vpop.f32.mrf.mxu0
      %v1481 = vadd.f32 0.0, %v1480
      %1482 = vmatmul.bf16.gmra.mxu0 %v1361
      %v1483 = vpop.f32.mrf.mxu0
      %v1484 = vadd.f32 0.0, %v1483
      %v1485 = vpop.f32.mrf.mxu0
      %v1486 = vadd.f32 0.0, %v1485
      %1487 = vmatmul.bf16.gmra.mxu0 %v1362
      %v1488 = vpop.f32.mrf.mxu0
      %v1489 = vadd.f32 0.0, %v1488
      %v1490 = vpop.f32.mrf.mxu0
      %v1491 = vadd.f32 0.0, %v1490
      %1492 = vmatmul.bf16.gmra.mxu0 %v1363
      %v1493 = vpop.f32.mrf.mxu0
      %v1494 = vadd.f32 0.0, %v1493
      %v1495 = vpop.f32.mrf.mxu0
      %v1496 = vadd.f32 0.0, %v1495
      %1497 = vmatmul.bf16.gmra.mxu0 %v1364
      %v1498 = vpop.f32.mrf.mxu0
      %v1499 = vadd.f32 0.0, %v1498
      %v1500 = vpop.f32.mrf.mxu0
      %v1501 = vadd.f32 0.0, %v1500
      %1502 = vmatmul.bf16.gmra.mxu0 %v1365
      %v1503 = vpop.f32.mrf.mxu0
      %v1504 = vadd.f32 0.0, %v1503
      %v1505 = vpop.f32.mrf.mxu0
      %v1506 = vadd.f32 0.0, %v1505
      %1507 = vmatmul.bf16.gmra.mxu0 %v1366
      %v1508 = vpop.f32.mrf.mxu0
      %v1509 = vadd.f32 0.0, %v1508
      %v1510 = vpop.f32.mrf.mxu0
      %v1511 = vadd.f32 0.0, %v1510
      %1512 = vmatmul.bf16.gmra.mxu0 %v1367
      %v1513 = vpop.f32.mrf.mxu0
      %v1514 = vadd.f32 0.0, %v1513
      %v1515 = vpop.f32.mrf.mxu0
      %v1516 = vadd.f32 0.0, %v1515
      %1517 = vmatmul.bf16.gmra.mxu0 %v1368
      %v1518 = vpop.f32.mrf.mxu0
      %v1519 = vadd.f32 0.0, %v1518
      %v1520 = vpop.f32.mrf.mxu0
      %v1521 = vadd.f32 0.0, %v1520
      %1522 = vdwg.mxu0
      %v1523 = vadd.f32 %v1289, %v1444
      %v1524 = vadd.f32 %v1290, %v1446
      %v1525 = vadd.f32 %v1291, %v1449
      %v1526 = vadd.f32 %v1292, %v1451
      %v1527 = vadd.f32 %v1293, %v1454
      %v1528 = vadd.f32 %v1294, %v1456
      %v1529 = vadd.f32 %v1295, %v1459
      %v1530 = vadd.f32 %v1296, %v1461
      %v1531 = vadd.f32 %v1297, %v1464
      %v1532 = vadd.f32 %v1298, %v1466
      %v1533 = vadd.f32 %v1299, %v1469
      %v1534 = vadd.f32 %v1300, %v1471
      %v1535 = vadd.f32 %v1301, %v1474
      %v1536 = vadd.f32 %v1302, %v1476
      %v1537 = vadd.f32 %v1303, %v1479
      %v1538 = vadd.f32 %v1304, %v1481
      %v1539 = vadd.f32 %v1305, %v1484
      %v1540 = vadd.f32 %v1306, %v1486
      %v1541 = vadd.f32 %v1307, %v1489
      %v1542 = vadd.f32 %v1308, %v1491
      %v1543 = vadd.f32 %v1309, %v1494
      %v1544 = vadd.f32 %v1310, %v1496
      %v1545 = vadd.f32 %v1311, %v1499
      %v1546 = vadd.f32 %v1312, %v1501
      %v1547 = vadd.f32 %v1313, %v1504
      %v1548 = vadd.f32 %v1314, %v1506
      %v1549 = vadd.f32 %v1315, %v1509
      %v1550 = vadd.f32 %v1316, %v1511
      %v1551 = vadd.f32 %v1317, %v1514
      %v1552 = vadd.f32 %v1318, %v1516
      %v1553 = vadd.f32 %v1319, %v1519
      %v1554 = vadd.f32 %v1320, %v1521
      %s1555 = scalar_lea.vmem %s203, 48
      %v1556 = vld [vmem:[%s1555] sm:$0xff]
      %v1557 = vld [vmem:[%s1555 + $0x8] sm:$0xff]
      %v1558 = vld [vmem:[%s1555 + $0x18] sm:$0xff]
      %v1559 = vld [vmem:[%s1555 + $0x20] sm:$0xff]
      %v1560 = vld [vmem:[%s1555 + $0x30] sm:$0xff]
      %v1561 = vld [vmem:[%s1555 + $0x38] sm:$0xff]
      %v1562 = vld [vmem:[%s1555 + $0x48] sm:$0xff]
      %v1563 = vld [vmem:[%s1555 + $0x50] sm:$0xff]
      %v1564 = vld [vmem:[%s1555 + $0x60] sm:$0xff]
      %v1565 = vld [vmem:[%s1555 + $0x68] sm:$0xff]
      %v1566 = vld [vmem:[%s1555 + $0x78] sm:$0xff]
      %v1567 = vld [vmem:[%s1555 + $0x80] sm:$0xff]
      %v1568 = vld [vmem:[%s1555 + $0x90] sm:$0xff]
      %v1569 = vld [vmem:[%s1555 + $0x98] sm:$0xff]
      %v1570 = vld [vmem:[%s1555 + $0xa8] sm:$0xff]
      %v1571 = vld [vmem:[%s1555 + $0xb0] sm:$0xff]
      %v1572 = vld [vmem:[%s1555 + $0xc0] sm:$0xff]
      %v1573 = vld [vmem:[%s1555 + $0xc8] sm:$0xff]
      %v1574 = vld [vmem:[%s1555 + $0xd8] sm:$0xff]
      %v1575 = vld [vmem:[%s1555 + $0xe0] sm:$0xff]
      %v1576 = vld [vmem:[%s1555 + $0xf0] sm:$0xff]
      %v1577 = vld [vmem:[%s1555 + $0xf8] sm:$0xff]
      %v1578 = vld [vmem:[%s1555 + $0x108] sm:$0xff]
      %v1579 = vld [vmem:[%s1555 + $0x110] sm:$0xff]
      %v1580 = vld [vmem:[%s1555 + $0x120] sm:$0xff]
      %v1581 = vld [vmem:[%s1555 + $0x128] sm:$0xff]
      %v1582 = vld [vmem:[%s1555 + $0x138] sm:$0xff]
      %v1583 = vld [vmem:[%s1555 + $0x140] sm:$0xff]
      %v1584 = vld [vmem:[%s1555 + $0x150] sm:$0xff]
      %v1585 = vld [vmem:[%s1555 + $0x158] sm:$0xff]
      %v1586 = vld [vmem:[%s1555 + $0x168] sm:$0xff]
      %v1587 = vld [vmem:[%s1555 + $0x170] sm:$0xff]
      %v1588 = vpack.c.bf16 %v1557, %v1556
      %v1589 = vpack.c.bf16 %v1559, %v1558
      %v1590 = vpack.c.bf16 %v1561, %v1560
      %v1591 = vpack.c.bf16 %v1563, %v1562
      %v1592 = vpack.c.bf16 %v1565, %v1564
      %v1593 = vpack.c.bf16 %v1567, %v1566
      %v1594 = vpack.c.bf16 %v1569, %v1568
      %v1595 = vpack.c.bf16 %v1571, %v1570
      %v1596 = vpack.c.bf16 %v1573, %v1572
      %v1597 = vpack.c.bf16 %v1575, %v1574
      %v1598 = vpack.c.bf16 %v1577, %v1576
      %v1599 = vpack.c.bf16 %v1579, %v1578
      %v1600 = vpack.c.bf16 %v1581, %v1580
      %v1601 = vpack.c.bf16 %v1583, %v1582
      %v1602 = vpack.c.bf16 %v1585, %v1584
      %v1603 = vpack.c.bf16 %v1587, %v1586
      %s1604 = scalar_lea.vmem %s1, 384
      %v1605 = vld [vmem:[%s1604] sm:$0xf]
      %v1606 = vld [vmem:[%s1604 + $0x4] sm:$0xf]
      %v1607 = vld [vmem:[%s1604 + $0x8] sm:$0xf]
      %v1608 = vld [vmem:[%s1604 + $0xc] sm:$0xf]
      %v1609 = vld [vmem:[%s1604 + $0x10] sm:$0xf]
      %v1610 = vld [vmem:[%s1604 + $0x14] sm:$0xf]
      %v1611 = vld [vmem:[%s1604 + $0x18] sm:$0xf]
      %v1612 = vld [vmem:[%s1604 + $0x1c] sm:$0xf]
      %v1613 = vld [vmem:[%s1604 + $0x20] sm:$0xf]
      %v1614 = vld [vmem:[%s1604 + $0x24] sm:$0xf]
      %v1615 = vld [vmem:[%s1604 + $0x28] sm:$0xf]
      %v1616 = vld [vmem:[%s1604 + $0x2c] sm:$0xf]
      %v1617 = vld [vmem:[%s1604 + $0x30] sm:$0xf]
      %v1618 = vld [vmem:[%s1604 + $0x34] sm:$0xf]
      %v1619 = vld [vmem:[%s1604 + $0x38] sm:$0xf]
      %v1620 = vld [vmem:[%s1604 + $0x3c] sm:$0xf]
      %v1637 = vunpack.c.l.b16 %v1605
      %v1638 = vunpack.c.l.b16 %v1606
      %v1639 = vunpack.c.l.b16 %v1607
      %v1640 = vunpack.c.l.b16 %v1608
      %v1641 = vunpack.c.l.b16 %v1609
      %v1642 = vunpack.c.l.b16 %v1610
      %v1643 = vunpack.c.l.b16 %v1611
      %v1644 = vunpack.c.l.b16 %v1612
      %v1645 = vunpack.c.l.b16 %v1613
      %v1646 = vunpack.c.l.b16 %v1614
      %v1647 = vunpack.c.l.b16 %v1615
      %v1648 = vunpack.c.l.b16 %v1616
      %v1649 = vunpack.c.l.b16 %v1617
      %v1650 = vunpack.c.l.b16 %v1618
      %v1651 = vunpack.c.l.b16 %v1619
      %v1652 = vunpack.c.l.b16 %v1620
      %v1653 = vpack.c.b16 %v1638, %v1637
      %v1654 = vpack.c.b16 %v1640, %v1639
      %v1655 = vpack.c.b16 %v1642, %v1641
      %v1656 = vpack.c.b16 %v1644, %v1643
      %v1657 = vpack.c.b16 %v1646, %v1645
      %v1658 = vpack.c.b16 %v1648, %v1647
      %v1659 = vpack.c.b16 %v1650, %v1649
      %v1660 = vpack.c.b16 %v1652, %v1651
      %1669 = vmatpush.bf16.msra.mxu0 %v1660
      %1670 = vmatpush.bf16.msra.mxu0 %v1659
      %1671 = vmatpush.bf16.msra.mxu0 %v1658
      %1672 = vmatpush.bf16.msra.mxu0 %v1657
      %1673 = vmatpush.bf16.msra.mxu0 %v1656
      %1674 = vmatpush.bf16.msra.mxu0 %v1655
      %1675 = vmatpush.bf16.msra.mxu0 %v1654
      %1676 = vmatpush.bf16.msra.mxu0 %v1653
      %1677 = vmatmul.bf16.gmra.mxu0 %v1588
      %v1678 = vpop.f32.mrf.mxu0
      %v1679 = vadd.f32 0.0, %v1678
      %v1680 = vpop.f32.mrf.mxu0
      %v1681 = vadd.f32 0.0, %v1680
      %1682 = vmatmul.bf16.gmra.mxu0 %v1589
      %v1683 = vpop.f32.mrf.mxu0
      %v1684 = vadd.f32 0.0, %v1683
      %v1685 = vpop.f32.mrf.mxu0
      %v1686 = vadd.f32 0.0, %v1685
      %1687 = vmatmul.bf16.gmra.mxu0 %v1590
      %v1688 = vpop.f32.mrf.mxu0
      %v1689 = vadd.f32 0.0, %v1688
      %v1690 = vpop.f32.mrf.mxu0
      %v1691 = vadd.f32 0.0, %v1690
      %1692 = vmatmul.bf16.gmra.mxu0 %v1591
      %v1693 = vpop.f32.mrf.mxu0
      %v1694 = vadd.f32 0.0, %v1693
      %v1695 = vpop.f32.mrf.mxu0
      %v1696 = vadd.f32 0.0, %v1695
      %1697 = vmatmul.bf16.gmra.mxu0 %v1592
      %v1698 = vpop.f32.mrf.mxu0
      %v1699 = vadd.f32 0.0, %v1698
      %v1700 = vpop.f32.mrf.mxu0
      %v1701 = vadd.f32 0.0, %v1700
      %1702 = vmatmul.bf16.gmra.mxu0 %v1593
      %v1703 = vpop.f32.mrf.mxu0
      %v1704 = vadd.f32 0.0, %v1703
      %v1705 = vpop.f32.mrf.mxu0
      %v1706 = vadd.f32 0.0, %v1705
      %1707 = vmatmul.bf16.gmra.mxu0 %v1594
      %v1708 = vpop.f32.mrf.mxu0
      %v1709 = vadd.f32 0.0, %v1708
      %v1710 = vpop.f32.mrf.mxu0
      %v1711 = vadd.f32 0.0, %v1710
      %1712 = vmatmul.bf16.gmra.mxu0 %v1595
      %v1713 = vpop.f32.mrf.mxu0
      %v1714 = vadd.f32 0.0, %v1713
      %v1715 = vpop.f32.mrf.mxu0
      %v1716 = vadd.f32 0.0, %v1715
      %1717 = vmatmul.bf16.gmra.mxu0 %v1596
      %v1718 = vpop.f32.mrf.mxu0
      %v1719 = vadd.f32 0.0, %v1718
      %v1720 = vpop.f32.mrf.mxu0
      %v1721 = vadd.f32 0.0, %v1720
      %1722 = vmatmul.bf16.gmra.mxu0 %v1597
      %v1723 = vpop.f32.mrf.mxu0
      %v1724 = vadd.f32 0.0, %v1723
      %v1725 = vpop.f32.mrf.mxu0
      %v1726 = vadd.f32 0.0, %v1725
      %1727 = vmatmul.bf16.gmra.mxu0 %v1598
      %v1728 = vpop.f32.mrf.mxu0
      %v1729 = vadd.f32 0.0, %v1728
      %v1730 = vpop.f32.mrf.mxu0
      %v1731 = vadd.f32 0.0, %v1730
      %1732 = vmatmul.bf16.gmra.mxu0 %v1599
      %v1733 = vpop.f32.mrf.mxu0
      %v1734 = vadd.f32 0.0, %v1733
      %v1735 = vpop.f32.mrf.mxu0
      %v1736 = vadd.f32 0.0, %v1735
      %1737 = vmatmul.bf16.gmra.mxu0 %v1600
      %v1738 = vpop.f32.mrf.mxu0
      %v1739 = vadd.f32 0.0, %v1738
      %v1740 = vpop.f32.mrf.mxu0
      %v1741 = vadd.f32 0.0, %v1740
      %1742 = vmatmul.bf16.gmra.mxu0 %v1601
      %v1743 = vpop.f32.mrf.mxu0
      %v1744 = vadd.f32 0.0, %v1743
      %v1745 = vpop.f32.mrf.mxu0
      %v1746 = vadd.f32 0.0, %v1745
      %1747 = vmatmul.bf16.gmra.mxu0 %v1602
      %v1748 = vpop.f32.mrf.mxu0
      %v1749 = vadd.f32 0.0, %v1748
      %v1750 = vpop.f32.mrf.mxu0
      %v1751 = vadd.f32 0.0, %v1750
      %1752 = vmatmul.bf16.gmra.mxu0 %v1603
      %v1753 = vpop.f32.mrf.mxu0
      %v1754 = vadd.f32 0.0, %v1753
      %v1755 = vpop.f32.mrf.mxu0
      %v1756 = vadd.f32 0.0, %v1755
      %1757 = vdwg.mxu0
      %v1758 = vadd.f32 %v1523, %v1679
      %v1759 = vadd.f32 %v1524, %v1681
      %v1760 = vadd.f32 %v1525, %v1684
      %v1761 = vadd.f32 %v1526, %v1686
      %v1762 = vadd.f32 %v1527, %v1689
      %v1763 = vadd.f32 %v1528, %v1691
      %v1764 = vadd.f32 %v1529, %v1694
      %v1765 = vadd.f32 %v1530, %v1696
      %v1766 = vadd.f32 %v1531, %v1699
      %v1767 = vadd.f32 %v1532, %v1701
      %v1768 = vadd.f32 %v1533, %v1704
      %v1769 = vadd.f32 %v1534, %v1706
      %v1770 = vadd.f32 %v1535, %v1709
      %v1771 = vadd.f32 %v1536, %v1711
      %v1772 = vadd.f32 %v1537, %v1714
      %v1773 = vadd.f32 %v1538, %v1716
      %v1774 = vadd.f32 %v1539, %v1719
      %v1775 = vadd.f32 %v1540, %v1721
      %v1776 = vadd.f32 %v1541, %v1724
      %v1777 = vadd.f32 %v1542, %v1726
      %v1778 = vadd.f32 %v1543, %v1729
      %v1779 = vadd.f32 %v1544, %v1731
      %v1780 = vadd.f32 %v1545, %v1734
      %v1781 = vadd.f32 %v1546, %v1736
      %v1782 = vadd.f32 %v1547, %v1739
      %v1783 = vadd.f32 %v1548, %v1741
      %v1784 = vadd.f32 %v1549, %v1744
      %v1785 = vadd.f32 %v1550, %v1746
      %v1786 = vadd.f32 %v1551, %v1749
      %v1787 = vadd.f32 %v1552, %v1751
      %v1788 = vadd.f32 %v1553, %v1754
      %v1789 = vadd.f32 %v1554, %v1756
      %v1790 = vld [vmem:[%s1555 + $0x1] sm:$0xff]
      %v1791 = vld [vmem:[%s1555 + $0x9] sm:$0xff]
      %v1792 = vld [vmem:[%s1555 + $0x19] sm:$0xff]
      %v1793 = vld [vmem:[%s1555 + $0x21] sm:$0xff]
      %v1794 = vld [vmem:[%s1555 + $0x31] sm:$0xff]
      %v1795 = vld [vmem:[%s1555 + $0x39] sm:$0xff]
      %v1796 = vld [vmem:[%s1555 + $0x49] sm:$0xff]
      %v1797 = vld [vmem:[%s1555 + $0x51] sm:$0xff]
      %v1798 = vld [vmem:[%s1555 + $0x61] sm:$0xff]
      %v1799 = vld [vmem:[%s1555 + $0x69] sm:$0xff]
      %v1800 = vld [vmem:[%s1555 + $0x79] sm:$0xff]
      %v1801 = vld [vmem:[%s1555 + $0x81] sm:$0xff]
      %v1802 = vld [vmem:[%s1555 + $0x91] sm:$0xff]
      %v1803 = vld [vmem:[%s1555 + $0x99] sm:$0xff]
      %v1804 = vld [vmem:[%s1555 + $0xa9] sm:$0xff]
      %v1805 = vld [vmem:[%s1555 + $0xb1] sm:$0xff]
      %v1806 = vld [vmem:[%s1555 + $0xc1] sm:$0xff]
      %v1807 = vld [vmem:[%s1555 + $0xc9] sm:$0xff]
      %v1808 = vld [vmem:[%s1555 + $0xd9] sm:$0xff]
      %v1809 = vld [vmem:[%s1555 + $0xe1] sm:$0xff]
      %v1810 = vld [vmem:[%s1555 + $0xf1] sm:$0xff]
      %v1811 = vld [vmem:[%s1555 + $0xf9] sm:$0xff]
      %v1812 = vld [vmem:[%s1555 + $0x109] sm:$0xff]
      %v1813 = vld [vmem:[%s1555 + $0x111] sm:$0xff]
      %v1814 = vld [vmem:[%s1555 + $0x121] sm:$0xff]
      %v1815 = vld [vmem:[%s1555 + $0x129] sm:$0xff]
      %v1816 = vld [vmem:[%s1555 + $0x139] sm:$0xff]
      %v1817 = vld [vmem:[%s1555 + $0x141] sm:$0xff]
      %v1818 = vld [vmem:[%s1555 + $0x151] sm:$0xff]
      %v1819 = vld [vmem:[%s1555 + $0x159] sm:$0xff]
      %v1820 = vld [vmem:[%s1555 + $0x169] sm:$0xff]
      %v1821 = vld [vmem:[%s1555 + $0x171] sm:$0xff]
      %v1822 = vpack.c.bf16 %v1791, %v1790
      %v1823 = vpack.c.bf16 %v1793, %v1792
      %v1824 = vpack.c.bf16 %v1795, %v1794
      %v1825 = vpack.c.bf16 %v1797, %v1796
      %v1826 = vpack.c.bf16 %v1799, %v1798
      %v1827 = vpack.c.bf16 %v1801, %v1800
      %v1828 = vpack.c.bf16 %v1803, %v1802
      %v1829 = vpack.c.bf16 %v1805, %v1804
      %v1830 = vpack.c.bf16 %v1807, %v1806
      %v1831 = vpack.c.bf16 %v1809, %v1808
      %v1832 = vpack.c.bf16 %v1811, %v1810
      %v1833 = vpack.c.bf16 %v1813, %v1812
      %v1834 = vpack.c.bf16 %v1815, %v1814
      %v1835 = vpack.c.bf16 %v1817, %v1816
      %v1836 = vpack.c.bf16 %v1819, %v1818
      %v1837 = vpack.c.bf16 %v1821, %v1820
      %s1838 = scalar_lea.vmem %s1, 448
      %v1839 = vld [vmem:[%s1838] sm:$0xf]
      %v1840 = vld [vmem:[%s1838 + $0x4] sm:$0xf]
      %v1841 = vld [vmem:[%s1838 + $0x8] sm:$0xf]
      %v1842 = vld [vmem:[%s1838 + $0xc] sm:$0xf]
      %v1843 = vld [vmem:[%s1838 + $0x10] sm:$0xf]
      %v1844 = vld [vmem:[%s1838 + $0x14] sm:$0xf]
      %v1845 = vld [vmem:[%s1838 + $0x18] sm:$0xf]
      %v1846 = vld [vmem:[%s1838 + $0x1c] sm:$0xf]
      %v1847 = vld [vmem:[%s1838 + $0x20] sm:$0xf]
      %v1848 = vld [vmem:[%s1838 + $0x24] sm:$0xf]
      %v1849 = vld [vmem:[%s1838 + $0x28] sm:$0xf]
      %v1850 = vld [vmem:[%s1838 + $0x2c] sm:$0xf]
      %v1851 = vld [vmem:[%s1838 + $0x30] sm:$0xf]
      %v1852 = vld [vmem:[%s1838 + $0x34] sm:$0xf]
      %v1853 = vld [vmem:[%s1838 + $0x38] sm:$0xf]
      %v1854 = vld [vmem:[%s1838 + $0x3c] sm:$0xf]
      %v1871 = vunpack.c.l.b16 %v1839
      %v1872 = vunpack.c.l.b16 %v1840
      %v1873 = vunpack.c.l.b16 %v1841
      %v1874 = vunpack.c.l.b16 %v1842
      %v1875 = vunpack.c.l.b16 %v1843
      %v1876 = vunpack.c.l.b16 %v1844
      %v1877 = vunpack.c.l.b16 %v1845
      %v1878 = vunpack.c.l.b16 %v1846
      %v1879 = vunpack.c.l.b16 %v1847
      %v1880 = vunpack.c.l.b16 %v1848
      %v1881 = vunpack.c.l.b16 %v1849
      %v1882 = vunpack.c.l.b16 %v1850
      %v1883 = vunpack.c.l.b16 %v1851
      %v1884 = vunpack.c.l.b16 %v1852
      %v1885 = vunpack.c.l.b16 %v1853
      %v1886 = vunpack.c.l.b16 %v1854
      %v1887 = vpack.c.b16 %v1872, %v1871
      %v1888 = vpack.c.b16 %v1874, %v1873
      %v1889 = vpack.c.b16 %v1876, %v1875
      %v1890 = vpack.c.b16 %v1878, %v1877
      %v1891 = vpack.c.b16 %v1880, %v1879
      %v1892 = vpack.c.b16 %v1882, %v1881
      %v1893 = vpack.c.b16 %v1884, %v1883
      %v1894 = vpack.c.b16 %v1886, %v1885
      %1903 = vmatpush.bf16.msra.mxu0 %v1894
      %1904 = vmatpush.bf16.msra.mxu0 %v1893
      %1905 = vmatpush.bf16.msra.mxu0 %v1892
      %1906 = vmatpush.bf16.msra.mxu0 %v1891
      %1907 = vmatpush.bf16.msra.mxu0 %v1890
      %1908 = vmatpush.bf16.msra.mxu0 %v1889
      %1909 = vmatpush.bf16.msra.mxu0 %v1888
      %1910 = vmatpush.bf16.msra.mxu0 %v1887
      %1911 = vmatmul.bf16.gmra.mxu0 %v1822
      %v1912 = vpop.f32.mrf.mxu0
      %v1913 = vadd.f32 0.0, %v1912
      %v1914 = vpop.f32.mrf.mxu0
      %v1915 = vadd.f32 0.0, %v1914
      %1916 = vmatmul.bf16.gmra.mxu0 %v1823
      %v1917 = vpop.f32.mrf.mxu0
      %v1918 = vadd.f32 0.0, %v1917
      %v1919 = vpop.f32.mrf.mxu0
      %v1920 = vadd.f32 0.0, %v1919
      %1921 = vmatmul.bf16.gmra.mxu0 %v1824
      %v1922 = vpop.f32.mrf.mxu0
      %v1923 = vadd.f32 0.0, %v1922
      %v1924 = vpop.f32.mrf.mxu0
      %v1925 = vadd.f32 0.0, %v1924
      %1926 = vmatmul.bf16.gmra.mxu0 %v1825
      %v1927 = vpop.f32.mrf.mxu0
      %v1928 = vadd.f32 0.0, %v1927
      %v1929 = vpop.f32.mrf.mxu0
      %v1930 = vadd.f32 0.0, %v1929
      %1931 = vmatmul.bf16.gmra.mxu0 %v1826
      %v1932 = vpop.f32.mrf.mxu0
      %v1933 = vadd.f32 0.0, %v1932
      %v1934 = vpop.f32.mrf.mxu0
      %v1935 = vadd.f32 0.0, %v1934
      %1936 = vmatmul.bf16.gmra.mxu0 %v1827
      %v1937 = vpop.f32.mrf.mxu0
      %v1938 = vadd.f32 0.0, %v1937
      %v1939 = vpop.f32.mrf.mxu0
      %v1940 = vadd.f32 0.0, %v1939
      %1941 = vmatmul.bf16.gmra.mxu0 %v1828
      %v1942 = vpop.f32.mrf.mxu0
      %v1943 = vadd.f32 0.0, %v1942
      %v1944 = vpop.f32.mrf.mxu0
      %v1945 = vadd.f32 0.0, %v1944
      %1946 = vmatmul.bf16.gmra.mxu0 %v1829
      %v1947 = vpop.f32.mrf.mxu0
      %v1948 = vadd.f32 0.0, %v1947
      %v1949 = vpop.f32.mrf.mxu0
      %v1950 = vadd.f32 0.0, %v1949
      %1951 = vmatmul.bf16.gmra.mxu0 %v1830
      %v1952 = vpop.f32.mrf.mxu0
      %v1953 = vadd.f32 0.0, %v1952
      %v1954 = vpop.f32.mrf.mxu0
      %v1955 = vadd.f32 0.0, %v1954
      %1956 = vmatmul.bf16.gmra.mxu0 %v1831
      %v1957 = vpop.f32.mrf.mxu0
      %v1958 = vadd.f32 0.0, %v1957
      %v1959 = vpop.f32.mrf.mxu0
      %v1960 = vadd.f32 0.0, %v1959
      %1961 = vmatmul.bf16.gmra.mxu0 %v1832
      %v1962 = vpop.f32.mrf.mxu0
      %v1963 = vadd.f32 0.0, %v1962
      %v1964 = vpop.f32.mrf.mxu0
      %v1965 = vadd.f32 0.0, %v1964
      %1966 = vmatmul.bf16.gmra.mxu0 %v1833
      %v1967 = vpop.f32.mrf.mxu0
      %v1968 = vadd.f32 0.0, %v1967
      %v1969 = vpop.f32.mrf.mxu0
      %v1970 = vadd.f32 0.0, %v1969
      %1971 = vmatmul.bf16.gmra.mxu0 %v1834
      %v1972 = vpop.f32.mrf.mxu0
      %v1973 = vadd.f32 0.0, %v1972
      %v1974 = vpop.f32.mrf.mxu0
      %v1975 = vadd.f32 0.0, %v1974
      %1976 = vmatmul.bf16.gmra.mxu0 %v1835
      %v1977 = vpop.f32.mrf.mxu0
      %v1978 = vadd.f32 0.0, %v1977
      %v1979 = vpop.f32.mrf.mxu0
      %v1980 = vadd.f32 0.0, %v1979
      %1981 = vmatmul.bf16.gmra.mxu0 %v1836
      %v1982 = vpop.f32.mrf.mxu0
      %v1983 = vadd.f32 0.0, %v1982
      %v1984 = vpop.f32.mrf.mxu0
      %v1985 = vadd.f32 0.0, %v1984
      %1986 = vmatmul.bf16.gmra.mxu0 %v1837
      %v1987 = vpop.f32.mrf.mxu0
      %v1988 = vadd.f32 0.0, %v1987
      %v1989 = vpop.f32.mrf.mxu0
      %v1990 = vadd.f32 0.0, %v1989
      %1991 = vdwg.mxu0
      %v1992 = vadd.f32 %v1758, %v1913
      %v1993 = vadd.f32 %v1759, %v1915
      %v1994 = vadd.f32 %v1760, %v1918
      %v1995 = vadd.f32 %v1761, %v1920
      %v1996 = vadd.f32 %v1762, %v1923
      %v1997 = vadd.f32 %v1763, %v1925
      %v1998 = vadd.f32 %v1764, %v1928
      %v1999 = vadd.f32 %v1765, %v1930
      %v2000 = vadd.f32 %v1766, %v1933
      %v2001 = vadd.f32 %v1767, %v1935
      %v2002 = vadd.f32 %v1768, %v1938
      %v2003 = vadd.f32 %v1769, %v1940
      %v2004 = vadd.f32 %v1770, %v1943
      %v2005 = vadd.f32 %v1771, %v1945
      %v2006 = vadd.f32 %v1772, %v1948
      %v2007 = vadd.f32 %v1773, %v1950
      %v2008 = vadd.f32 %v1774, %v1953
      %v2009 = vadd.f32 %v1775, %v1955
      %v2010 = vadd.f32 %v1776, %v1958
      %v2011 = vadd.f32 %v1777, %v1960
      %v2012 = vadd.f32 %v1778, %v1963
      %v2013 = vadd.f32 %v1779, %v1965
      %v2014 = vadd.f32 %v1780, %v1968
      %v2015 = vadd.f32 %v1781, %v1970
      %v2016 = vadd.f32 %v1782, %v1973
      %v2017 = vadd.f32 %v1783, %v1975
      %v2018 = vadd.f32 %v1784, %v1978
      %v2019 = vadd.f32 %v1785, %v1980
      %v2020 = vadd.f32 %v1786, %v1983
      %v2021 = vadd.f32 %v1787, %v1985
      %v2022 = vadd.f32 %v1788, %v1988
      %v2023 = vadd.f32 %v1789, %v1990
      %v2024 = vld [vmem:[%s1555 + $0x2] sm:$0xff]
      %v2025 = vld [vmem:[%s1555 + $0xa] sm:$0xff]
      %v2026 = vld [vmem:[%s1555 + $0x1a] sm:$0xff]
      %v2027 = vld [vmem:[%s1555 + $0x22] sm:$0xff]
      %v2028 = vld [vmem:[%s1555 + $0x32] sm:$0xff]
      %v2029 = vld [vmem:[%s1555 + $0x3a] sm:$0xff]
      %v2030 = vld [vmem:[%s1555 + $0x4a] sm:$0xff]
      %v2031 = vld [vmem:[%s1555 + $0x52] sm:$0xff]
      %v2032 = vld [vmem:[%s1555 + $0x62] sm:$0xff]
      %v2033 = vld [vmem:[%s1555 + $0x6a] sm:$0xff]
      %v2034 = vld [vmem:[%s1555 + $0x7a] sm:$0xff]
      %v2035 = vld [vmem:[%s1555 + $0x82] sm:$0xff]
      %v2036 = vld [vmem:[%s1555 + $0x92] sm:$0xff]
      %v2037 = vld [vmem:[%s1555 + $0x9a] sm:$0xff]
      %v2038 = vld [vmem:[%s1555 + $0xaa] sm:$0xff]
      %v2039 = vld [vmem:[%s1555 + $0xb2] sm:$0xff]
      %v2040 = vld [vmem:[%s1555 + $0xc2] sm:$0xff]
      %v2041 = vld [vmem:[%s1555 + $0xca] sm:$0xff]
      %v2042 = vld [vmem:[%s1555 + $0xda] sm:$0xff]
      %v2043 = vld [vmem:[%s1555 + $0xe2] sm:$0xff]
      %v2044 = vld [vmem:[%s1555 + $0xf2] sm:$0xff]
      %v2045 = vld [vmem:[%s1555 + $0xfa] sm:$0xff]
      %v2046 = vld [vmem:[%s1555 + $0x10a] sm:$0xff]
      %v2047 = vld [vmem:[%s1555 + $0x112] sm:$0xff]
      %v2048 = vld [vmem:[%s1555 + $0x122] sm:$0xff]
      %v2049 = vld [vmem:[%s1555 + $0x12a] sm:$0xff]
      %v2050 = vld [vmem:[%s1555 + $0x13a] sm:$0xff]
      %v2051 = vld [vmem:[%s1555 + $0x142] sm:$0xff]
      %v2052 = vld [vmem:[%s1555 + $0x152] sm:$0xff]
      %v2053 = vld [vmem:[%s1555 + $0x15a] sm:$0xff]
      %v2054 = vld [vmem:[%s1555 + $0x16a] sm:$0xff]
      %v2055 = vld [vmem:[%s1555 + $0x172] sm:$0xff]
      %v2056 = vpack.c.bf16 %v2025, %v2024
      %v2057 = vpack.c.bf16 %v2027, %v2026
      %v2058 = vpack.c.bf16 %v2029, %v2028
      %v2059 = vpack.c.bf16 %v2031, %v2030
      %v2060 = vpack.c.bf16 %v2033, %v2032
      %v2061 = vpack.c.bf16 %v2035, %v2034
      %v2062 = vpack.c.bf16 %v2037, %v2036
      %v2063 = vpack.c.bf16 %v2039, %v2038
      %v2064 = vpack.c.bf16 %v2041, %v2040
      %v2065 = vpack.c.bf16 %v2043, %v2042
      %v2066 = vpack.c.bf16 %v2045, %v2044
      %v2067 = vpack.c.bf16 %v2047, %v2046
      %v2068 = vpack.c.bf16 %v2049, %v2048
      %v2069 = vpack.c.bf16 %v2051, %v2050
      %v2070 = vpack.c.bf16 %v2053, %v2052
      %v2071 = vpack.c.bf16 %v2055, %v2054
      %s2072 = scalar_lea.vmem %s1, 512
      %v2073 = vld [vmem:[%s2072] sm:$0xf]
      %v2074 = vld [vmem:[%s2072 + $0x4] sm:$0xf]
      %v2075 = vld [vmem:[%s2072 + $0x8] sm:$0xf]
      %v2076 = vld [vmem:[%s2072 + $0xc] sm:$0xf]
      %v2077 = vld [vmem:[%s2072 + $0x10] sm:$0xf]
      %v2078 = vld [vmem:[%s2072 + $0x14] sm:$0xf]
      %v2079 = vld [vmem:[%s2072 + $0x18] sm:$0xf]
      %v2080 = vld [vmem:[%s2072 + $0x1c] sm:$0xf]
      %v2081 = vld [vmem:[%s2072 + $0x20] sm:$0xf]
      %v2082 = vld [vmem:[%s2072 + $0x24] sm:$0xf]
      %v2083 = vld [vmem:[%s2072 + $0x28] sm:$0xf]
      %v2084 = vld [vmem:[%s2072 + $0x2c] sm:$0xf]
      %v2085 = vld [vmem:[%s2072 + $0x30] sm:$0xf]
      %v2086 = vld [vmem:[%s2072 + $0x34] sm:$0xf]
      %v2087 = vld [vmem:[%s2072 + $0x38] sm:$0xf]
      %v2088 = vld [vmem:[%s2072 + $0x3c] sm:$0xf]
      %v2105 = vunpack.c.l.b16 %v2073
      %v2106 = vunpack.c.l.b16 %v2074
      %v2107 = vunpack.c.l.b16 %v2075
      %v2108 = vunpack.c.l.b16 %v2076
      %v2109 = vunpack.c.l.b16 %v2077
      %v2110 = vunpack.c.l.b16 %v2078
      %v2111 = vunpack.c.l.b16 %v2079
      %v2112 = vunpack.c.l.b16 %v2080
      %v2113 = vunpack.c.l.b16 %v2081
      %v2114 = vunpack.c.l.b16 %v2082
      %v2115 = vunpack.c.l.b16 %v2083
      %v2116 = vunpack.c.l.b16 %v2084
      %v2117 = vunpack.c.l.b16 %v2085
      %v2118 = vunpack.c.l.b16 %v2086
      %v2119 = vunpack.c.l.b16 %v2087
      %v2120 = vunpack.c.l.b16 %v2088
      %v2121 = vpack.c.b16 %v2106, %v2105
      %v2122 = vpack.c.b16 %v2108, %v2107
      %v2123 = vpack.c.b16 %v2110, %v2109
      %v2124 = vpack.c.b16 %v2112, %v2111
      %v2125 = vpack.c.b16 %v2114, %v2113
      %v2126 = vpack.c.b16 %v2116, %v2115
      %v2127 = vpack.c.b16 %v2118, %v2117
      %v2128 = vpack.c.b16 %v2120, %v2119
      %2137 = vmatpush.bf16.msra.mxu0 %v2128
      %2138 = vmatpush.bf16.msra.mxu0 %v2127
      %2139 = vmatpush.bf16.msra.mxu0 %v2126
      %2140 = vmatpush.bf16.msra.mxu0 %v2125
      %2141 = vmatpush.bf16.msra.mxu0 %v2124
      %2142 = vmatpush.bf16.msra.mxu0 %v2123
      %2143 = vmatpush.bf16.msra.mxu0 %v2122
      %2144 = vmatpush.bf16.msra.mxu0 %v2121
      %2145 = vmatmul.bf16.gmra.mxu0 %v2056
      %v2146 = vpop.f32.mrf.mxu0
      %v2147 = vadd.f32 0.0, %v2146
      %v2148 = vpop.f32.mrf.mxu0
      %v2149 = vadd.f32 0.0, %v2148
      %2150 = vmatmul.bf16.gmra.mxu0 %v2057
      %v2151 = vpop.f32.mrf.mxu0
      %v2152 = vadd.f32 0.0, %v2151
      %v2153 = vpop.f32.mrf.mxu0
      %v2154 = vadd.f32 0.0, %v2153
      %2155 = vmatmul.bf16.gmra.mxu0 %v2058
      %v2156 = vpop.f32.mrf.mxu0
      %v2157 = vadd.f32 0.0, %v2156
      %v2158 = vpop.f32.mrf.mxu0
      %v2159 = vadd.f32 0.0, %v2158
      %2160 = vmatmul.bf16.gmra.mxu0 %v2059
      %v2161 = vpop.f32.mrf.mxu0
      %v2162 = vadd.f32 0.0, %v2161
      %v2163 = vpop.f32.mrf.mxu0
      %v2164 = vadd.f32 0.0, %v2163
      %2165 = vmatmul.bf16.gmra.mxu0 %v2060
      %v2166 = vpop.f32.mrf.mxu0
      %v2167 = vadd.f32 0.0, %v2166
      %v2168 = vpop.f32.mrf.mxu0
      %v2169 = vadd.f32 0.0, %v2168
      %2170 = vmatmul.bf16.gmra.mxu0 %v2061
      %v2171 = vpop.f32.mrf.mxu0
      %v2172 = vadd.f32 0.0, %v2171
      %v2173 = vpop.f32.mrf.mxu0
      %v2174 = vadd.f32 0.0, %v2173
      %2175 = vmatmul.bf16.gmra.mxu0 %v2062
      %v2176 = vpop.f32.mrf.mxu0
      %v2177 = vadd.f32 0.0, %v2176
      %v2178 = vpop.f32.mrf.mxu0
      %v2179 = vadd.f32 0.0, %v2178
      %2180 = vmatmul.bf16.gmra.mxu0 %v2063
      %v2181 = vpop.f32.mrf.mxu0
      %v2182 = vadd.f32 0.0, %v2181
      %v2183 = vpop.f32.mrf.mxu0
      %v2184 = vadd.f32 0.0, %v2183
      %2185 = vmatmul.bf16.gmra.mxu0 %v2064
      %v2186 = vpop.f32.mrf.mxu0
      %v2187 = vadd.f32 0.0, %v2186
      %v2188 = vpop.f32.mrf.mxu0
      %v2189 = vadd.f32 0.0, %v2188
      %2190 = vmatmul.bf16.gmra.mxu0 %v2065
      %v2191 = vpop.f32.mrf.mxu0
      %v2192 = vadd.f32 0.0, %v2191
      %v2193 = vpop.f32.mrf.mxu0
      %v2194 = vadd.f32 0.0, %v2193
      %2195 = vmatmul.bf16.gmra.mxu0 %v2066
      %v2196 = vpop.f32.mrf.mxu0
      %v2197 = vadd.f32 0.0, %v2196
      %v2198 = vpop.f32.mrf.mxu0
      %v2199 = vadd.f32 0.0, %v2198
      %2200 = vmatmul.bf16.gmra.mxu0 %v2067
      %v2201 = vpop.f32.mrf.mxu0
      %v2202 = vadd.f32 0.0, %v2201
      %v2203 = vpop.f32.mrf.mxu0
      %v2204 = vadd.f32 0.0, %v2203
      %2205 = vmatmul.bf16.gmra.mxu0 %v2068
      %v2206 = vpop.f32.mrf.mxu0
      %v2207 = vadd.f32 0.0, %v2206
      %v2208 = vpop.f32.mrf.mxu0
      %v2209 = vadd.f32 0.0, %v2208
      %2210 = vmatmul.bf16.gmra.mxu0 %v2069
      %v2211 = vpop.f32.mrf.mxu0
      %v2212 = vadd.f32 0.0, %v2211
      %v2213 = vpop.f32.mrf.mxu0
      %v2214 = vadd.f32 0.0, %v2213
      %2215 = vmatmul.bf16.gmra.mxu0 %v2070
      %v2216 = vpop.f32.mrf.mxu0
      %v2217 = vadd.f32 0.0, %v2216
      %v2218 = vpop.f32.mrf.mxu0
      %v2219 = vadd.f32 0.0, %v2218
      %2220 = vmatmul.bf16.gmra.mxu0 %v2071
      %v2221 = vpop.f32.mrf.mxu0
      %v2222 = vadd.f32 0.0, %v2221
      %v2223 = vpop.f32.mrf.mxu0
      %v2224 = vadd.f32 0.0, %v2223
      %2225 = vdwg.mxu0
      %v2226 = vadd.f32 %v1992, %v2147
      %v2227 = vadd.f32 %v1993, %v2149
      %v2228 = vadd.f32 %v1994, %v2152
      %v2229 = vadd.f32 %v1995, %v2154
      %v2230 = vadd.f32 %v1996, %v2157
      %v2231 = vadd.f32 %v1997, %v2159
      %v2232 = vadd.f32 %v1998, %v2162
      %v2233 = vadd.f32 %v1999, %v2164
      %v2234 = vadd.f32 %v2000, %v2167
      %v2235 = vadd.f32 %v2001, %v2169
      %v2236 = vadd.f32 %v2002, %v2172
      %v2237 = vadd.f32 %v2003, %v2174
      %v2238 = vadd.f32 %v2004, %v2177
      %v2239 = vadd.f32 %v2005, %v2179
      %v2240 = vadd.f32 %v2006, %v2182
      %v2241 = vadd.f32 %v2007, %v2184
      %v2242 = vadd.f32 %v2008, %v2187
      %v2243 = vadd.f32 %v2009, %v2189
      %v2244 = vadd.f32 %v2010, %v2192
      %v2245 = vadd.f32 %v2011, %v2194
      %v2246 = vadd.f32 %v2012, %v2197
      %v2247 = vadd.f32 %v2013, %v2199
      %v2248 = vadd.f32 %v2014, %v2202
      %v2249 = vadd.f32 %v2015, %v2204
      %v2250 = vadd.f32 %v2016, %v2207
      %v2251 = vadd.f32 %v2017, %v2209
      %v2252 = vadd.f32 %v2018, %v2212
      %v2253 = vadd.f32 %v2019, %v2214
      %v2254 = vadd.f32 %v2020, %v2217
      %v2255 = vadd.f32 %v2021, %v2219
      %v2256 = vadd.f32 %v2022, %v2222
      %v2257 = vadd.f32 %v2023, %v2224
      %2258 = vst [vmem:[%s208] sm:$0xff] %v2226
      %2259 = vst [vmem:[%s208 + $0x8] sm:$0xff] %v2227
      %2260 = vst [vmem:[%s208 + $0x10] sm:$0xff] %v2228
      %2261 = vst [vmem:[%s208 + $0x18] sm:$0xff] %v2229
      %2262 = vst [vmem:[%s208 + $0x20] sm:$0xff] %v2230
      %2263 = vst [vmem:[%s208 + $0x28] sm:$0xff] %v2231
      %2264 = vst [vmem:[%s208 + $0x30] sm:$0xff] %v2232
      %2265 = vst [vmem:[%s208 + $0x38] sm:$0xff] %v2233
      %2266 = vst [vmem:[%s208 + $0x40] sm:$0xff] %v2234
      %2267 = vst [vmem:[%s208 + $0x48] sm:$0xff] %v2235
      %2268 = vst [vmem:[%s208 + $0x50] sm:$0xff] %v2236
      %2269 = vst [vmem:[%s208 + $0x58] sm:$0xff] %v2237
      %2270 = vst [vmem:[%s208 + $0x60] sm:$0xff] %v2238
      %2271 = vst [vmem:[%s208 + $0x68] sm:$0xff] %v2239
      %2272 = vst [vmem:[%s208 + $0x70] sm:$0xff] %v2240
      %2273 = vst [vmem:[%s208 + $0x78] sm:$0xff] %v2241
      %2274 = vst [vmem:[%s208 + $0x80] sm:$0xff] %v2242
      %2275 = vst [vmem:[%s208 + $0x88] sm:$0xff] %v2243
      %2276 = vst [vmem:[%s208 + $0x90] sm:$0xff] %v2244
      %2277 = vst [vmem:[%s208 + $0x98] sm:$0xff] %v2245
      %2278 = vst [vmem:[%s208 + $0xa0] sm:$0xff] %v2246
      %2279 = vst [vmem:[%s208 + $0xa8] sm:$0xff] %v2247
      %2280 = vst [vmem:[%s208 + $0xb0] sm:$0xff] %v2248
      %2281 = vst [vmem:[%s208 + $0xb8] sm:$0xff] %v2249
      %2282 = vst [vmem:[%s208 + $0xc0] sm:$0xff] %v2250
      %2283 = vst [vmem:[%s208 + $0xc8] sm:$0xff] %v2251
      %2284 = vst [vmem:[%s208 + $0xd0] sm:$0xff] %v2252
      %2285 = vst [vmem:[%s208 + $0xd8] sm:$0xff] %v2253
      %2286 = vst [vmem:[%s208 + $0xe0] sm:$0xff] %v2254
      %2287 = vst [vmem:[%s208 + $0xe8] sm:$0xff] %v2255
      %2288 = vst [vmem:[%s208 + $0xf0] sm:$0xff] %v2256
      %2289 = vst [vmem:[%s208 + $0xf8] sm:$0xff] %v2257
      %v2290 = vadd.f32 %v2226, %v2227
      %v2291 = vadd.f32 %v2290, %v2228
      %v2292 = vadd.f32 %v2291, %v2229
      %v2293 = vadd.f32 %v2292, %v2230
      %v2294 = vadd.f32 %v2293, %v2231
      %v2295 = vadd.f32 %v2294, %v2232
      %v2296 = vadd.f32 %v2295, %v2233
      %v2297 = vadd.f32 %v2296, %v2234
      %v2298 = vadd.f32 %v2297, %v2235
      %v2299 = vadd.f32 %v2298, %v2236
      %v2300 = vadd.f32 %v2299, %v2237
      %v2301 = vadd.f32 %v2300, %v2238
      %v2302 = vadd.f32 %v2301, %v2239
      %v2303 = vadd.f32 %v2302, %v2240
      %v2304 = vadd.f32 %v2303, %v2241
      %v2305 = vadd.f32 %v2304, %v2242
      %v2306 = vadd.f32 %v2305, %v2243
      %v2307 = vadd.f32 %v2306, %v2244
      %v2308 = vadd.f32 %v2307, %v2245
      %v2309 = vadd.f32 %v2308, %v2246
      %v2310 = vadd.f32 %v2309, %v2247
      %v2311 = vadd.f32 %v2310, %v2248
      %v2312 = vadd.f32 %v2311, %v2249
      %v2313 = vadd.f32 %v2312, %v2250
      %v2314 = vadd.f32 %v2313, %v2251
      %v2315 = vadd.f32 %v2314, %v2252
      %v2316 = vadd.f32 %v2315, %v2253
      %v2317 = vadd.f32 %v2316, %v2254
      %v2318 = vadd.f32 %v2317, %v2255
      %v2319 = vadd.f32 %v2318, %v2256
      %v2320 = vadd.f32 %v2319, %v2257
      %v2321 = vrot.slane %v2320, 4
      %v2322 = vadd.f32 %v2320, %v2321
      %v2323 = vrot.slane %v2322, 2
      %v2324 = vadd.f32 %v2322, %v2323
      %v2325 = vrot.slane %v2324, 1
      %v2326 = vadd.f32 %v2324, %v2325
      %2327 = vst [vmem:[%s211] sm:$0x1] %v2326
      %v2328 = vmul.f32 %v2226, %v2226
      %v2329 = vmul.f32 %v2227, %v2227
      %v2330 = vmul.f32 %v2228, %v2228
      %v2331 = vmul.f32 %v2229, %v2229
      %v2332 = vmul.f32 %v2230, %v2230
      %v2333 = vmul.f32 %v2231, %v2231
      %v2334 = vmul.f32 %v2232, %v2232
      %v2335 = vmul.f32 %v2233, %v2233
      %v2336 = vmul.f32 %v2234, %v2234
      %v2337 = vmul.f32 %v2235, %v2235
      %v2338 = vmul.f32 %v2236, %v2236
      %v2339 = vmul.f32 %v2237, %v2237
      %v2340 = vmul.f32 %v2238, %v2238
      %v2341 = vmul.f32 %v2239, %v2239
      %v2342 = vmul.f32 %v2240, %v2240
      %v2343 = vmul.f32 %v2241, %v2241
      %v2344 = vmul.f32 %v2242, %v2242
      %v2345 = vmul.f32 %v2243, %v2243
      %v2346 = vmul.f32 %v2244, %v2244
      %v2347 = vmul.f32 %v2245, %v2245
      %v2348 = vmul.f32 %v2246, %v2246
      %v2349 = vmul.f32 %v2247, %v2247
      %v2350 = vmul.f32 %v2248, %v2248
      %v2351 = vmul.f32 %v2249, %v2249
      %v2352 = vmul.f32 %v2250, %v2250
      %v2353 = vmul.f32 %v2251, %v2251
      %v2354 = vmul.f32 %v2252, %v2252
      %v2355 = vmul.f32 %v2253, %v2253
      %v2356 = vmul.f32 %v2254, %v2254
      %v2357 = vmul.f32 %v2255, %v2255
      %v2358 = vmul.f32 %v2256, %v2256
      %v2359 = vmul.f32 %v2257, %v2257
      %v2360 = vadd.f32 %v2328, %v2329
      %v2361 = vadd.f32 %v2360, %v2330
      %v2362 = vadd.f32 %v2361, %v2331
      %v2363 = vadd.f32 %v2362, %v2332
      %v2364 = vadd.f32 %v2363, %v2333
      %v2365 = vadd.f32 %v2364, %v2334
      %v2366 = vadd.f32 %v2365, %v2335
      %v2367 = vadd.f32 %v2366, %v2336
      %v2368 = vadd.f32 %v2367, %v2337
      %v2369 = vadd.f32 %v2368, %v2338
      %v2370 = vadd.f32 %v2369, %v2339
      %v2371 = vadd.f32 %v2370, %v2340
      %v2372 = vadd.f32 %v2371, %v2341
      %v2373 = vadd.f32 %v2372, %v2342
      %v2374 = vadd.f32 %v2373, %v2343
      %v2375 = vadd.f32 %v2374, %v2344
      %v2376 = vadd.f32 %v2375, %v2345
      %v2377 = vadd.f32 %v2376, %v2346
      %v2378 = vadd.f32 %v2377, %v2347
      %v2379 = vadd.f32 %v2378, %v2348
      %v2380 = vadd.f32 %v2379, %v2349
      %v2381 = vadd.f32 %v2380, %v2350
      %v2382 = vadd.f32 %v2381, %v2351
      %v2383 = vadd.f32 %v2382, %v2352
      %v2384 = vadd.f32 %v2383, %v2353
      %v2385 = vadd.f32 %v2384, %v2354
      %v2386 = vadd.f32 %v2385, %v2355
      %v2387 = vadd.f32 %v2386, %v2356
      %v2388 = vadd.f32 %v2387, %v2357
      %v2389 = vadd.f32 %v2388, %v2358
      %v2390 = vadd.f32 %v2389, %v2359
      %v2391 = vrot.slane %v2390, 4
      %v2392 = vadd.f32 %v2390, %v2391
      %v2393 = vrot.slane %v2392, 2
      %v2394 = vadd.f32 %v2392, %v2393
      %v2395 = vrot.slane %v2394, 1
      %v2396 = vadd.f32 %v2394, %v2395
      %2397 = vst [vmem:[%s214] sm:$0x1] %v2396
      %p2398 = scmp.lt.s32.totalorder %s16, 1
      %s2399 = scalar_select %p2398, %s16, 1
      %s2400 = smul.addr %s2399, 32
      %s2401 = smul.addr %s2400, 8
      %s2402 = scalar_lea.vmem %s2, %s2401
      %p2403 = scmp.lt.s32.totalorder %s16, 1
      %s2404 = scalar_select %p2403, %s16, 1
      %s2405 = scalar_lea.vmem %s3, %s2404
      %p2406 = scmp.lt.s32.totalorder %s16, 1
      %s2407 = scalar_select %p2406, %s16, 1
      %s2408 = scalar_lea.vmem %s4, %s2407
      // Predicated region
      $region29: #{_lambda_.13} parent=27 // pred_check
        %p2409 = pneg %p81
      $region30: #{_lambda_.13} parent=27 // pred_check_branch
        %2411 = sbr.rel (%p2409) target = $region32
      $region31: #{_lambda_.13} parent=27 // pred_region
        _
      $region32: #{_lambda_.13} parent=27 // pred_fallthru
        _
      // Predicated region
      $region33: #{_lambda_.13} parent=27 // pred_check
        %p2412 = pneg %p107
      $region34: #{_lambda_.13} parent=27 // pred_check_branch
        %2414 = sbr.rel (%p2412) target = $region36
      $region35: #{_lambda_.13} parent=27 // pred_region
        _
      $region36: #{_lambda_.13} parent=27 // pred_fallthru
        _
      // Predicated region
      $region37: #{_lambda_.13} parent=27 // pred_check
        %p2415 = pneg %p133
      $region38: #{_lambda_.13} parent=27 // pred_check_branch
        %2417 = sbr.rel (%p2415) target = $region40
      $region39: #{_lambda_.13} parent=27 // pred_region
        _
      $region40: #{_lambda_.13} parent=27 // pred_fallthru
        _
    $region28: #{_lambda_.13} parent=5 // pred_fallthru
      _
    %p2418 = scmp.le.s32.totalorder 2, %s11
    // Predicated region
    $region41: #{_lambda_.13} parent=5 // pred_check
      %p2419 = pneg %p2418
    $region42: #{_lambda_.13} parent=5 // pred_check_branch
      %2421 = sbr.rel (%p2419) target = $region44
    $region43: #{_lambda_.13} parent=5 // pred_region
      %s2422 = ssub.s32 %s11, 2
      // Predicated region
      $region45: #{_lambda_.13} parent=43 // pred_check
        %p2423 = pneg %p87
      $region46: #{_lambda_.13} parent=43 // pred_check_branch
        %2425 = sbr.rel (%p2423) target = $region48
      $region47: #{_lambda_.13} parent=43 // pred_region
        %p2426 = scmp.lt.s32.totalorder %s17, 1
        %s2427 = scalar_select %p2426, %s17, 1
        %s2428 = smul.addr %s2427, 32
        %s2429 = smul.addr %s2428, 8
        %s2430 = scalar_lea.vmem %s2, %s2429
      $region48: #{_lambda_.13} parent=43 // pred_fallthru
        _
      // Predicated region
      $region49: #{_lambda_.13} parent=43 // pred_check
        %p2431 = pneg %p113
      $region50: #{_lambda_.13} parent=43 // pred_check_branch
        %2433 = sbr.rel (%p2431) target = $region52
      $region51: #{_lambda_.13} parent=43 // pred_region
        %p2434 = scmp.lt.s32.totalorder %s17, 1
        %s2435 = scalar_select %p2434, %s17, 1
        %s2436 = scalar_lea.vmem %s3, %s2435
      $region52: #{_lambda_.13} parent=43 // pred_fallthru
        _
      // Predicated region
      $region53: #{_lambda_.13} parent=43 // pred_check
        %p2437 = pneg %p139
      $region54: #{_lambda_.13} parent=43 // pred_check_branch
        %2439 = sbr.rel (%p2437) target = $region56
      $region55: #{_lambda_.13} parent=43 // pred_region
        %p2440 = scmp.lt.s32.totalorder %s17, 1
        %s2441 = scalar_select %p2440, %s17, 1
        %s2442 = scalar_lea.vmem %s4, %s2441
      $region56: #{_lambda_.13} parent=43 // pred_fallthru
        _
    $region44: #{_lambda_.13} parent=5 // pred_fallthru
      _
  $region6: #{_lambda_.13} parent=0 // loop_footer
    %s15 = sadd.s32 1, %s11
  $region7: #{_lambda_.13} parent=0 // loop_footer_branch
    %10 = sbr.rel target = $region3
  $region8: #{_lambda_.13} parent=0 // loop_exit
    _

// kernel: _lambda_.20
$region0: #{_lambda_.20}
  #allocation0 [shape = 'u32[]', space=smem, size = 0x4, offset = 0x4, fixed_abs, tag = 'smem constant byte address 0x4 - core index']
  #allocation1 [shape = 'u32[72,128]{1,0:T(1,128)}', space=vmem, size = 0x9000, scoped, tag = 'internal scratch']
  %s0 = inlined_call_operand.vmem [shape: f32[2,64,128], index: 0, kind: input, shape index: {}]
  %s1 = inlined_call_operand.vmem [shape: f32[1,128], index: 1, kind: input, shape index: {}]
  %s2 = inlined_call_operand.vmem [shape: f32[1,128], index: 2, kind: input, shape index: {}]
  %s3 = inlined_call_operand.vmem [shape: f32[2,64,128], index: 3, kind: output, shape index: {}]
  %s4 = sld [smem:[#allocation0]]
  $region45: #{_lambda_.20} parent=0
    _
  %s6 = ssub.s32 1, %s4
  %s7 = scalar_select 0, %s6, %s4
  loop: start=0, step=1, limit=4
  $region2: #{_lambda_.20} parent=0 // loop_pre_header
    _
  $region3: #{_lambda_.20} parent=0 // loop_header
    %s9 = sphi 0, %s13
    %p10 = scmp.ge.s32.totalorder %s9, 4
    %s19 = sphi 0, %s21
    %s22 = sphi 0, %s19
    %s23 = sphi 0, %s22
    %s39 = sphi 0, %s23
    %s43 = sphi 0, %s43
    %s45 = sphi 0, %s43
    %s46 = sphi 0, %s45
    %s60 = sphi 0, %s46
    %s64 = sphi 0, %s64
    %s66 = sphi 0, %s64
    %s67 = sphi 0, %s66
    %s81 = sphi 0, %s67
    %s87 = sphi 0, %s89
    %s90 = sphi 0, %s87
    %s91 = sphi 0, %s90
    %s107 = sphi 0, %s91
  $region4: #{_lambda_.20} parent=0 // loop_header_branch
    %12 = sbr.rel (%p10) target = $region8
  $region5: #{_lambda_.20} parent=0 // loop_body
    %s14 = ssub.s32 %s9, 1
    %s15 = ssub.s32 %s9, 2
    %s16 = sadd.s32 %s9, 1
    %s17 = ssub.s32 %s9, %s16
    %p18 = scmp.eq.s32.totalorder %s17, 0
    %s20 = sadd.s32 %s19, 1
    %s21 = scalar_select %p18, %s19, %s20
    %p24 = pneg %p18
    %p25 = scmp.eq.s32.totalorder %s9, 1
    %p26 = por %p24, %p25
    %p27 = scmp.ne.s32.totalorder %s19, %s22
    %p28 = scmp.eq.s32.totalorder %s9, 0
    %p29 = por %p27, %p28
    %p30 = scmp.ne.s32.totalorder %s19, %s22
    %p31 = scmp.eq.s32.totalorder %s14, 1
    %p32 = por %p30, %p31
    %p33 = scmp.ne.s32.totalorder %s22, %s23
    %p34 = scmp.eq.s32.totalorder %s14, 0
    %p35 = por %p33, %p34
    %p36 = scmp.ne.s32.totalorder %s22, %s23
    %p37 = scmp.eq.s32.totalorder %s15, 1
    %p38 = por %p36, %p37
    %p40 = scmp.ne.s32.totalorder %s23, %s39
    %p41 = scmp.eq.s32.totalorder %s15, 0
    %p42 = por %p40, %p41
    %s44 = sadd.s32 %s43, 1
    %p47 = scmp.eq.s32.totalorder %s9, 1
    %p48 = scmp.ne.s32.totalorder %s43, %s45
    %p49 = scmp.eq.s32.totalorder %s9, 0
    %p50 = por %p48, %p49
    %p51 = scmp.ne.s32.totalorder %s43, %s45
    %p52 = scmp.eq.s32.totalorder %s14, 1
    %p53 = por %p51, %p52
    %p54 = scmp.ne.s32.totalorder %s45, %s46
    %p55 = scmp.eq.s32.totalorder %s14, 0
    %p56 = por %p54, %p55
    %p57 = scmp.ne.s32.totalorder %s45, %s46
    %p58 = scmp.eq.s32.totalorder %s15, 1
    %p59 = por %p57, %p58
    %p61 = scmp.ne.s32.totalorder %s46, %s60
    %p62 = scmp.eq.s32.totalorder %s15, 0
    %p63 = por %p61, %p62
    %s65 = sadd.s32 %s64, 1
    %p68 = scmp.eq.s32.totalorder %s9, 1
    %p69 = scmp.ne.s32.totalorder %s64, %s66
    %p70 = scmp.eq.s32.totalorder %s9, 0
    %p71 = por %p69, %p70
    %p72 = scmp.ne.s32.totalorder %s64, %s66
    %p73 = scmp.eq.s32.totalorder %s14, 1
    %p74 = por %p72, %p73
    %p75 = scmp.ne.s32.totalorder %s66, %s67
    %p76 = scmp.eq.s32.totalorder %s14, 0
    %p77 = por %p75, %p76
    %p78 = scmp.ne.s32.totalorder %s66, %s67
    %p79 = scmp.eq.s32.totalorder %s15, 1
    %p80 = por %p78, %p79
    %p82 = scmp.ne.s32.totalorder %s67, %s81
    %p83 = scmp.eq.s32.totalorder %s15, 0
    %p84 = por %p82, %p83
    %s85 = ssub.s32 %s9, %s16
    %p86 = scmp.eq.s32.totalorder %s85, 0
    %s88 = sadd.s32 %s87, 1
    %s89 = scalar_select %p86, %s87, %s88
    %p92 = pneg %p86
    %p93 = scmp.eq.s32.totalorder %s9, 1
    %p94 = por %p92, %p93
    %p95 = scmp.ne.s32.totalorder %s87, %s90
    %p96 = scmp.eq.s32.totalorder %s9, 0
    %p97 = por %p95, %p96
    %p98 = scmp.ne.s32.totalorder %s87, %s90
    %p99 = scmp.eq.s32.totalorder %s14, 1
    %p100 = por %p98, %p99
    %p101 = scmp.ne.s32.totalorder %s90, %s91
    %p102 = scmp.eq.s32.totalorder %s14, 0
    %p103 = por %p101, %p102
    %p104 = scmp.ne.s32.totalorder %s90, %s91
    %p105 = scmp.eq.s32.totalorder %s15, 1
    %p106 = por %p104, %p105
    %p108 = scmp.ne.s32.totalorder %s91, %s107
    %p109 = scmp.eq.s32.totalorder %s15, 0
    %p110 = por %p108, %p109
    %p111 = scmp.le.s32.totalorder 1, %s9
    %p112 = scmp.lt.s32.totalorder %s9, 3
    %p113 = pnand %p111, %p112
    %p114 = pneg %p113
    // Predicated region
    $region9: #{_lambda_.20} parent=5 // pred_check
      _
    $region10: #{_lambda_.20} parent=5 // pred_check_branch
      %116 = sbr.rel (%p113) target = $region12
    $region11: #{_lambda_.20} parent=5 // pred_region
      %s117 = ssub.s32 %s9, 1
      // Predicated region
      $region13: #{_lambda_.20} parent=11 // pred_check
        %p118 = pneg %p56
      $region14: #{_lambda_.20} parent=11 // pred_check_branch
        %120 = sbr.rel (%p118) target = $region16
      $region15: #{_lambda_.20} parent=11 // pred_region
        _
      $region16: #{_lambda_.20} parent=11 // pred_fallthru
        _
      // Predicated region
      $region17: #{_lambda_.20} parent=11 // pred_check
        %p121 = pneg %p77
      $region18: #{_lambda_.20} parent=11 // pred_check_branch
        %123 = sbr.rel (%p121) target = $region20
      $region19: #{_lambda_.20} parent=11 // pred_region
        _
      $region20: #{_lambda_.20} parent=11 // pred_fallthru
        _
    $region12: #{_lambda_.20} parent=5 // pred_fallthru
      _
    %p124 = scmp.lt.s32.totalorder %s9, 2
    // Predicated region
    $region21: #{_lambda_.20} parent=5 // pred_check
      %p125 = pneg %p124
    $region22: #{_lambda_.20} parent=5 // pred_check_branch
      %127 = sbr.rel (%p125) target = $region24
    $region23: #{_lambda_.20} parent=5 // pred_region
      // Predicated region
      $region25: #{_lambda_.20} parent=23 // pred_check
        %p128 = pneg %p29
      $region26: #{_lambda_.20} parent=23 // pred_check_branch
        %130 = sbr.rel (%p128) target = $region28
      $region27: #{_lambda_.20} parent=23 // pred_region
        %p131 = scmp.lt.s32.totalorder %s9, 1
        %s132 = scalar_select %p131, %s9, 1
        %s133 = smul.addr %s132, 8
        %s134 = smul.addr %s133, 8
        %s135 = scalar_lea.vmem %s0, %s134
      $region28: #{_lambda_.20} parent=23 // pred_fallthru
        _
    $region24: #{_lambda_.20} parent=5 // pred_fallthru
      _
    %p136 = scmp.le.s32.totalorder 1, %s9
    %p137 = scmp.lt.s32.totalorder %s9, 3
    %p138 = pnand %p136, %p137
    %p139 = pneg %p138
    // Predicated region
    $region29: #{_lambda_.20} parent=5 // pred_check
      _
    $region30: #{_lambda_.20} parent=5 // pred_check_branch
      %141 = sbr.rel (%p138) target = $region32
    $region31: #{_lambda_.20} parent=5 // pred_region
      %s142 = ssub.s32 %s9, 1
      %p143 = scmp.lt.s32.totalorder %s14, 1
      %s144 = scalar_select %p143, %s14, 1
      %s145 = smul.addr %s144, 8
      %s146 = smul.addr %s145, 8
      %s147 = scalar_lea.vmem %s0, %s146
      %p148 = pneg %p35
      %p149 = pneg %p32
      %p150 = pneg %p56
      %p151 = pneg %p53
      %p152 = pneg %p77
      %p153 = pneg %p74
      %p154 = pneg %p103
      %p155 = pneg %p100
      %p156 = scmp.lt.s32.totalorder %s14, 1
      %s157 = scalar_select %p156, %s14, 1
      %s158 = smul.addr %s157, 8
      %s159 = smul.addr %s158, 8
      %s160 = scalar_lea.vmem %s3, %s159
      %p161 = scmp.lt.s32.totalorder %s14, 1
      %s162 = scalar_select %p161, %s14, 1
      %s163 = smul.addr %s162, 8
      %s164 = smul.addr %s163, 8
      %s165 = scalar_lea.vmem %s0, %s164
      %p166 = scmp.lt.s32.totalorder %s14, 1
      %s167 = scalar_select %p166, %s14, 1
      %s168 = smul.addr %s167, 8
      %s169 = smul.addr %s168, 8
      %s170 = scalar_lea.vmem %s3, %s169
      %v171 = vld [vmem:[%s1] sm:$0x1]
      %v172 = vld [vmem:[%s2] sm:$0x1]
      %v173 = vld [vmem:[%s165] sm:$0xff]
      %v174 = vld [vmem:[%s165 + $0x8] sm:$0xff]
      %v175 = vld [vmem:[%s165 + $0x10] sm:$0xff]
      %v176 = vld [vmem:[%s165 + $0x18] sm:$0xff]
      %v177 = vld [vmem:[%s165 + $0x20] sm:$0xff]
      %v178 = vld [vmem:[%s165 + $0x28] sm:$0xff]
      %v179 = vld [vmem:[%s165 + $0x30] sm:$0xff]
      %v180 = vld [vmem:[%s165 + $0x38] sm:$0xff]
      %v182 = vperm.slane %v171, 0
      %v184 = vmul.f32 %v173, %v182
      %v185 = vmul.f32 %v174, %v182
      %v186 = vmul.f32 %v175, %v182
      %v187 = vmul.f32 %v176, %v182
      %v188 = vmul.f32 %v177, %v182
      %v189 = vmul.f32 %v178, %v182
      %v190 = vmul.f32 %v179, %v182
      %v191 = vmul.f32 %v180, %v182
      %v193 = vperm.slane %v172, 0
      %v195 = vadd.f32 %v184, %v193
      %v196 = vadd.f32 %v185, %v193
      %v197 = vadd.f32 %v186, %v193
      %v198 = vadd.f32 %v187, %v193
      %v199 = vadd.f32 %v188, %v193
      %v200 = vadd.f32 %v189, %v193
      %v201 = vadd.f32 %v190, %v193
      %v202 = vadd.f32 %v191, %v193
      %v203 = vmax.f32 %v195, 0.0
      %v204 = vmax.f32 %v196, 0.0
      %v205 = vmax.f32 %v197, 0.0
      %v206 = vmax.f32 %v198, 0.0
      %v207 = vmax.f32 %v199, 0.0
      %v208 = vmax.f32 %v200, 0.0
      %v209 = vmax.f32 %v201, 0.0
      %v210 = vmax.f32 %v202, 0.0
      %211 = vst [vmem:[%s170] sm:$0xff] %v203
      %212 = vst [vmem:[%s170 + $0x8] sm:$0xff] %v204
      %213 = vst [vmem:[%s170 + $0x10] sm:$0xff] %v205
      %214 = vst [vmem:[%s170 + $0x18] sm:$0xff] %v206
      %215 = vst [vmem:[%s170 + $0x20] sm:$0xff] %v207
      %216 = vst [vmem:[%s170 + $0x28] sm:$0xff] %v208
      %217 = vst [vmem:[%s170 + $0x30] sm:$0xff] %v209
      %218 = vst [vmem:[%s170 + $0x38] sm:$0xff] %v210
      %p219 = scmp.lt.s32.totalorder %s14, 1
      %s220 = scalar_select %p219, %s14, 1
      %s221 = smul.addr %s220, 8
      %s222 = smul.addr %s221, 8
      %s223 = scalar_lea.vmem %s3, %s222
      // Predicated region
      $region33: #{_lambda_.20} parent=31 // pred_check
        %p224 = pneg %p100
      $region34: #{_lambda_.20} parent=31 // pred_check_branch
        %226 = sbr.rel (%p224) target = $region36
      $region35: #{_lambda_.20} parent=31 // pred_region
        _
      $region36: #{_lambda_.20} parent=31 // pred_fallthru
        _
    $region32: #{_lambda_.20} parent=5 // pred_fallthru
      _
    %p227 = scmp.le.s32.totalorder 2, %s9
    // Predicated region
    $region37: #{_lambda_.20} parent=5 // pred_check
      %p228 = pneg %p227
    $region38: #{_lambda_.20} parent=5 // pred_check_branch
      %230 = sbr.rel (%p228) target = $region40
    $region39: #{_lambda_.20} parent=5 // pred_region
      %s231 = ssub.s32 %s9, 2
      // Predicated region
      $region41: #{_lambda_.20} parent=39 // pred_check
        %p232 = pneg %p106
      $region42: #{_lambda_.20} parent=39 // pred_check_branch
        %234 = sbr.rel (%p232) target = $region44
      $region43: #{_lambda_.20} parent=39 // pred_region
        %p235 = scmp.lt.s32.totalorder %s15, 1
        %s236 = scalar_select %p235, %s15, 1
        %s237 = smul.addr %s236, 8
        %s238 = smul.addr %s237, 8
        %s239 = scalar_lea.vmem %s3, %s238
      $region44: #{_lambda_.20} parent=39 // pred_fallthru
        _
    $region40: #{_lambda_.20} parent=5 // pred_fallthru
      _
  $region6: #{_lambda_.20} parent=0 // loop_footer
    %s13 = sadd.s32 1, %s9
  $region7: #{_lambda_.20} parent=0 // loop_footer_branch
    %8 = sbr.rel target = $region3
  $region8: #{_lambda_.20} parent=0 // loop_exit
    _

// kernel: _lambda_.24
$region0: #{_lambda_.24}
  #allocation0 [shape = 'u32[]', space=smem, size = 0x4, offset = 0x4, fixed_abs, tag = 'smem constant byte address 0x4 - core index']
  #allocation1 [shape = 'u32[72,128]{1,0:T(1,128)}', space=vmem, size = 0x9000, scoped, tag = 'internal scratch']
  %s0 = inlined_call_operand.vmem [shape: f32[2,64,128], index: 0, kind: input, shape index: {}]
  %s1 = inlined_call_operand.vmem [shape: f32[2,1,128], index: 1, kind: output, shape index: {}]
  %s2 = sld [smem:[#allocation0]]
  $region37: #{_lambda_.24} parent=0
    _
  %s4 = ssub.s32 1, %s2
  %s5 = scalar_select 0, %s4, %s2
  loop: start=0, step=1, limit=4
  $region2: #{_lambda_.24} parent=0 // loop_pre_header
    _
  $region3: #{_lambda_.24} parent=0 // loop_header
    %s7 = sphi 0, %s11
    %p8 = scmp.ge.s32.totalorder %s7, 4
    %s17 = sphi 0, %s19
    %s20 = sphi 0, %s17
    %s21 = sphi 0, %s20
    %s37 = sphi 0, %s21
    %s43 = sphi 0, %s45
    %s46 = sphi 0, %s43
    %s47 = sphi 0, %s46
    %s63 = sphi 0, %s47
  $region4: #{_lambda_.24} parent=0 // loop_header_branch
    %10 = sbr.rel (%p8) target = $region8
  $region5: #{_lambda_.24} parent=0 // loop_body
    %s12 = ssub.s32 %s7, 1
    %s13 = ssub.s32 %s7, 2
    %s14 = sadd.s32 %s7, 1
    %s15 = ssub.s32 %s7, %s14
    %p16 = scmp.eq.s32.totalorder %s15, 0
    %s18 = sadd.s32 %s17, 1
    %s19 = scalar_select %p16, %s17, %s18
    %p22 = pneg %p16
    %p23 = scmp.eq.s32.totalorder %s7, 1
    %p24 = por %p22, %p23
    %p25 = scmp.ne.s32.totalorder %s17, %s20
    %p26 = scmp.eq.s32.totalorder %s7, 0
    %p27 = por %p25, %p26
    %p28 = scmp.ne.s32.totalorder %s17, %s20
    %p29 = scmp.eq.s32.totalorder %s12, 1
    %p30 = por %p28, %p29
    %p31 = scmp.ne.s32.totalorder %s20, %s21
    %p32 = scmp.eq.s32.totalorder %s12, 0
    %p33 = por %p31, %p32
    %p34 = scmp.ne.s32.totalorder %s20, %s21
    %p35 = scmp.eq.s32.totalorder %s13, 1
    %p36 = por %p34, %p35
    %p38 = scmp.ne.s32.totalorder %s21, %s37
    %p39 = scmp.eq.s32.totalorder %s13, 0
    %p40 = por %p38, %p39
    %s41 = ssub.s32 %s7, %s14
    %p42 = scmp.eq.s32.totalorder %s41, 0
    %s44 = sadd.s32 %s43, 1
    %s45 = scalar_select %p42, %s43, %s44
    %p48 = pneg %p42
    %p49 = scmp.eq.s32.totalorder %s7, 1
    %p50 = por %p48, %p49
    %p51 = scmp.ne.s32.totalorder %s43, %s46
    %p52 = scmp.eq.s32.totalorder %s7, 0
    %p53 = por %p51, %p52
    %p54 = scmp.ne.s32.totalorder %s43, %s46
    %p55 = scmp.eq.s32.totalorder %s12, 1
    %p56 = por %p54, %p55
    %p57 = scmp.ne.s32.totalorder %s46, %s47
    %p58 = scmp.eq.s32.totalorder %s12, 0
    %p59 = por %p57, %p58
    %p60 = scmp.ne.s32.totalorder %s46, %s47
    %p61 = scmp.eq.s32.totalorder %s13, 1
    %p62 = por %p60, %p61
    %p64 = scmp.ne.s32.totalorder %s47, %s63
    %p65 = scmp.eq.s32.totalorder %s13, 0
    %p66 = por %p64, %p65
    %p67 = scmp.le.s32.totalorder 1, %s7
    %p68 = scmp.lt.s32.totalorder %s7, 3
    %p69 = pnand %p67, %p68
    %p70 = pneg %p69
    // Predicated region
    $region9: #{_lambda_.24} parent=5 // pred_check
      _
    $region10: #{_lambda_.24} parent=5 // pred_check_branch
      %72 = sbr.rel (%p69) target = $region12
    $region11: #{_lambda_.24} parent=5 // pred_region
      %s73 = ssub.s32 %s7, 1
    $region12: #{_lambda_.24} parent=5 // pred_fallthru
      _
    %p74 = scmp.lt.s32.totalorder %s7, 2
    // Predicated region
    $region13: #{_lambda_.24} parent=5 // pred_check
      %p75 = pneg %p74
    $region14: #{_lambda_.24} parent=5 // pred_check_branch
      %77 = sbr.rel (%p75) target = $region16
    $region15: #{_lambda_.24} parent=5 // pred_region
      // Predicated region
      $region17: #{_lambda_.24} parent=15 // pred_check
        %p78 = pneg %p27
      $region18: #{_lambda_.24} parent=15 // pred_check_branch
        %80 = sbr.rel (%p78) target = $region20
      $region19: #{_lambda_.24} parent=15 // pred_region
        %p81 = scmp.lt.s32.totalorder %s7, 1
        %s82 = scalar_select %p81, %s7, 1
        %s83 = smul.addr %s82, 8
        %s84 = smul.addr %s83, 8
        %s85 = scalar_lea.vmem %s0, %s84
      $region20: #{_lambda_.24} parent=15 // pred_fallthru
        _
    $region16: #{_lambda_.24} parent=5 // pred_fallthru
      _
    %p86 = scmp.le.s32.totalorder 1, %s7
    %p87 = scmp.lt.s32.totalorder %s7, 3
    %p88 = pnand %p86, %p87
    %p89 = pneg %p88
    // Predicated region
    $region21: #{_lambda_.24} parent=5 // pred_check
      _
    $region22: #{_lambda_.24} parent=5 // pred_check_branch
      %91 = sbr.rel (%p88) target = $region24
    $region23: #{_lambda_.24} parent=5 // pred_region
      %s92 = ssub.s32 %s7, 1
      %p93 = scmp.lt.s32.totalorder %s12, 1
      %s94 = scalar_select %p93, %s12, 1
      %s95 = smul.addr %s94, 8
      %s96 = smul.addr %s95, 8
      %s97 = scalar_lea.vmem %s0, %s96
      %p98 = pneg %p33
      %p99 = pneg %p30
      %p100 = pneg %p59
      %p101 = pneg %p56
      %p102 = scmp.lt.s32.totalorder %s12, 1
      %s103 = scalar_select %p102, %s12, 1
      %s104 = scalar_lea.vmem %s1, %s103
      %p105 = scmp.lt.s32.totalorder %s12, 1
      %s106 = scalar_select %p105, %s12, 1
      %s107 = smul.addr %s106, 8
      %s108 = smul.addr %s107, 8
      %s109 = scalar_lea.vmem %s0, %s108
      %p110 = scmp.lt.s32.totalorder %s12, 1
      %s111 = scalar_select %p110, %s12, 1
      %s112 = scalar_lea.vmem %s1, %s111
      %v113 = vld [vmem:[%s109] sm:$0xff]
      %v114 = vld [vmem:[%s109 + $0x8] sm:$0xff]
      %v115 = vld [vmem:[%s109 + $0x10] sm:$0xff]
      %v116 = vld [vmem:[%s109 + $0x18] sm:$0xff]
      %v117 = vld [vmem:[%s109 + $0x20] sm:$0xff]
      %v118 = vld [vmem:[%s109 + $0x28] sm:$0xff]
      %v119 = vld [vmem:[%s109 + $0x30] sm:$0xff]
      %v120 = vld [vmem:[%s109 + $0x38] sm:$0xff]
      %v121 = vadd.f32 %v113, %v114
      %v122 = vadd.f32 %v121, %v115
      %v123 = vadd.f32 %v122, %v116
      %v124 = vadd.f32 %v123, %v117
      %v125 = vadd.f32 %v124, %v118
      %v126 = vadd.f32 %v125, %v119
      %v127 = vadd.f32 %v126, %v120
      %v128 = vrot.slane %v127, 4
      %v129 = vadd.f32 %v127, %v128
      %v130 = vrot.slane %v129, 2
      %v131 = vadd.f32 %v129, %v130
      %v132 = vrot.slane %v131, 1
      %v133 = vadd.f32 %v131, %v132
      %v134 = vrcp.pop 64.0
      %v135 = vmul.f32 64.0, %v134
      %v136 = vsub.f32 1.0, %v135
      %v137 = vmul.f32 %v134, %v136
      %v138 = vadd.f32 %v134, %v137
      %vm139 = vweird.f32 %v134
      %v140 = vsel %vm139, %v134, %v138
      %v141 = vmul.f32 %v133, %v140
      %142 = vst [vmem:[%s112] sm:$0x1] %v141
      %p143 = scmp.lt.s32.totalorder %s12, 1
      %s144 = scalar_select %p143, %s12, 1
      %s145 = scalar_lea.vmem %s1, %s144
      // Predicated region
      $region25: #{_lambda_.24} parent=23 // pred_check
        %p146 = pneg %p56
      $region26: #{_lambda_.24} parent=23 // pred_check_branch
        %148 = sbr.rel (%p146) target = $region28
      $region27: #{_lambda_.24} parent=23 // pred_region
        _
      $region28: #{_lambda_.24} parent=23 // pred_fallthru
        _
    $region24: #{_lambda_.24} parent=5 // pred_fallthru
      _
    %p149 = scmp.le.s32.totalorder 2, %s7
    // Predicated region
    $region29: #{_lambda_.24} parent=5 // pred_check
      %p150 = pneg %p149
    $region30: #{_lambda_.24} parent=5 // pred_check_branch
      %152 = sbr.rel (%p150) target = $region32
    $region31: #{_lambda_.24} parent=5 // pred_region
      %s153 = ssub.s32 %s7, 2
      // Predicated region
      $region33: #{_lambda_.24} parent=31 // pred_check
        %p154 = pneg %p62
      $region34: #{_lambda_.24} parent=31 // pred_check_branch
        %156 = sbr.rel (%p154) target = $region36
      $region35: #{_lambda_.24} parent=31 // pred_region
        %p157 = scmp.lt.s32.totalorder %s13, 1
        %s158 = scalar_select %p157, %s13, 1
        %s159 = scalar_lea.vmem %s1, %s158
      $region36: #{_lambda_.24} parent=31 // pred_fallthru
        _
    $region32: #{_lambda_.24} parent=5 // pred_fallthru
      _
  $region6: #{_lambda_.24} parent=0 // loop_footer
    %s11 = sadd.s32 1, %s7
  $region7: #{_lambda_.24} parent=0 // loop_footer_branch
    %6 = sbr.rel target = $region3
  $region8: #{_lambda_.24} parent=0 // loop_exit
    _

// kernel: _lambda_.23
$region0: #{_lambda_.23}
  #allocation0 [shape = 'u32[]', space=smem, size = 0x4, offset = 0x4, fixed_abs, tag = 'smem constant byte address 0x4 - core index']
  #allocation1 [shape = 'u32[72,128]{1,0:T(1,128)}', space=vmem, size = 0x9000, scoped, tag = 'internal scratch']
  %s0 = inlined_call_operand.vmem [shape: f32[2,64,128], index: 0, kind: input, shape index: {}]
  %s1 = inlined_call_operand.vmem [shape: f32[1,128], index: 1, kind: input, shape index: {}]
  %s2 = inlined_call_operand.vmem [shape: f32[1,128], index: 2, kind: input, shape index: {}]
  %s3 = inlined_call_operand.vmem [shape: f32[2,64,128], index: 3, kind: input, shape index: {}]
  %s4 = inlined_call_operand.vmem [shape: f32[1,128], index: 4, kind: input, shape index: {}]
  %s5 = inlined_call_operand.vmem [shape: f32[1,128], index: 5, kind: input, shape index: {}]
  %s6 = inlined_call_operand.vmem [shape: f32[2,64,128], index: 6, kind: output, shape index: {}]
  %s7 = sld [smem:[#allocation0]]
  $region57: #{_lambda_.23} parent=0
    _
  %s9 = ssub.s32 1, %s7
  %s10 = scalar_select 0, %s9, %s7
  loop: start=0, step=1, limit=4
  $region2: #{_lambda_.23} parent=0 // loop_pre_header
    _
  $region3: #{_lambda_.23} parent=0 // loop_header
    %s12 = sphi 0, %s16
    %p13 = scmp.ge.s32.totalorder %s12, 4
    %s22 = sphi 0, %s24
    %s25 = sphi 0, %s22
    %s26 = sphi 0, %s25
    %s42 = sphi 0, %s26
    %s46 = sphi 0, %s46
    %s48 = sphi 0, %s46
    %s49 = sphi 0, %s48
    %s63 = sphi 0, %s49
    %s67 = sphi 0, %s67
    %s69 = sphi 0, %s67
    %s70 = sphi 0, %s69
    %s84 = sphi 0, %s70
    %s90 = sphi 0, %s92
    %s93 = sphi 0, %s90
    %s94 = sphi 0, %s93
    %s110 = sphi 0, %s94
    %s114 = sphi 0, %s114
    %s116 = sphi 0, %s114
    %s117 = sphi 0, %s116
    %s131 = sphi 0, %s117
    %s135 = sphi 0, %s135
    %s137 = sphi 0, %s135
    %s138 = sphi 0, %s137
    %s152 = sphi 0, %s138
    %s158 = sphi 0, %s160
    %s161 = sphi 0, %s158
    %s162 = sphi 0, %s161
    %s178 = sphi 0, %s162
  $region4: #{_lambda_.23} parent=0 // loop_header_branch
    %15 = sbr.rel (%p13) target = $region8
  $region5: #{_lambda_.23} parent=0 // loop_body
    %s17 = ssub.s32 %s12, 1
    %s18 = ssub.s32 %s12, 2
    %s19 = sadd.s32 %s12, 1
    %s20 = ssub.s32 %s12, %s19
    %p21 = scmp.eq.s32.totalorder %s20, 0
    %s23 = sadd.s32 %s22, 1
    %s24 = scalar_select %p21, %s22, %s23
    %p27 = pneg %p21
    %p28 = scmp.eq.s32.totalorder %s12, 1
    %p29 = por %p27, %p28
    %p30 = scmp.ne.s32.totalorder %s22, %s25
    %p31 = scmp.eq.s32.totalorder %s12, 0
    %p32 = por %p30, %p31
    %p33 = scmp.ne.s32.totalorder %s22, %s25
    %p34 = scmp.eq.s32.totalorder %s17, 1
    %p35 = por %p33, %p34
    %p36 = scmp.ne.s32.totalorder %s25, %s26
    %p37 = scmp.eq.s32.totalorder %s17, 0
    %p38 = por %p36, %p37
    %p39 = scmp.ne.s32.totalorder %s25, %s26
    %p40 = scmp.eq.s32.totalorder %s18, 1
    %p41 = por %p39, %p40
    %p43 = scmp.ne.s32.totalorder %s26, %s42
    %p44 = scmp.eq.s32.totalorder %s18, 0
    %p45 = por %p43, %p44
    %s47 = sadd.s32 %s46, 1
    %p50 = scmp.eq.s32.totalorder %s12, 1
    %p51 = scmp.ne.s32.totalorder %s46, %s48
    %p52 = scmp.eq.s32.totalorder %s12, 0
    %p53 = por %p51, %p52
    %p54 = scmp.ne.s32.totalorder %s46, %s48
    %p55 = scmp.eq.s32.totalorder %s17, 1
    %p56 = por %p54, %p55
    %p57 = scmp.ne.s32.totalorder %s48, %s49
    %p58 = scmp.eq.s32.totalorder %s17, 0
    %p59 = por %p57, %p58
    %p60 = scmp.ne.s32.totalorder %s48, %s49
    %p61 = scmp.eq.s32.totalorder %s18, 1
    %p62 = por %p60, %p61
    %p64 = scmp.ne.s32.totalorder %s49, %s63
    %p65 = scmp.eq.s32.totalorder %s18, 0
    %p66 = por %p64, %p65
    %s68 = sadd.s32 %s67, 1
    %p71 = scmp.eq.s32.totalorder %s12, 1
    %p72 = scmp.ne.s32.totalorder %s67, %s69
    %p73 = scmp.eq.s32.totalorder %s12, 0
    %p74 = por %p72, %p73
    %p75 = scmp.ne.s32.totalorder %s67, %s69
    %p76 = scmp.eq.s32.totalorder %s17, 1
    %p77 = por %p75, %p76
    %p78 = scmp.ne.s32.totalorder %s69, %s70
    %p79 = scmp.eq.s32.totalorder %s17, 0
    %p80 = por %p78, %p79
    %p81 = scmp.ne.s32.totalorder %s69, %s70
    %p82 = scmp.eq.s32.totalorder %s18, 1
    %p83 = por %p81, %p82
    %p85 = scmp.ne.s32.totalorder %s70, %s84
    %p86 = scmp.eq.s32.totalorder %s18, 0
    %p87 = por %p85, %p86
    %s88 = ssub.s32 %s12, %s19
    %p89 = scmp.eq.s32.totalorder %s88, 0
    %s91 = sadd.s32 %s90, 1
    %s92 = scalar_select %p89, %s90, %s91
    %p95 = pneg %p89
    %p96 = scmp.eq.s32.totalorder %s12, 1
    %p97 = por %p95, %p96
    %p98 = scmp.ne.s32.totalorder %s90, %s93
    %p99 = scmp.eq.s32.totalorder %s12, 0
    %p100 = por %p98, %p99
    %p101 = scmp.ne.s32.totalorder %s90, %s93
    %p102 = scmp.eq.s32.totalorder %s17, 1
    %p103 = por %p101, %p102
    %p104 = scmp.ne.s32.totalorder %s93, %s94
    %p105 = scmp.eq.s32.totalorder %s17, 0
    %p106 = por %p104, %p105
    %p107 = scmp.ne.s32.totalorder %s93, %s94
    %p108 = scmp.eq.s32.totalorder %s18, 1
    %p109 = por %p107, %p108
    %p111 = scmp.ne.s32.totalorder %s94, %s110
    %p112 = scmp.eq.s32.totalorder %s18, 0
    %p113 = por %p111, %p112
    %s115 = sadd.s32 %s114, 1
    %p118 = scmp.eq.s32.totalorder %s12, 1
    %p119 = scmp.ne.s32.totalorder %s114, %s116
    %p120 = scmp.eq.s32.totalorder %s12, 0
    %p121 = por %p119, %p120
    %p122 = scmp.ne.s32.totalorder %s114, %s116
    %p123 = scmp.eq.s32.totalorder %s17, 1
    %p124 = por %p122, %p123
    %p125 = scmp.ne.s32.totalorder %s116, %s117
    %p126 = scmp.eq.s32.totalorder %s17, 0
    %p127 = por %p125, %p126
    %p128 = scmp.ne.s32.totalorder %s116, %s117
    %p129 = scmp.eq.s32.totalorder %s18, 1
    %p130 = por %p128, %p129
    %p132 = scmp.ne.s32.totalorder %s117, %s131
    %p133 = scmp.eq.s32.totalorder %s18, 0
    %p134 = por %p132, %p133
    %s136 = sadd.s32 %s135, 1
    %p139 = scmp.eq.s32.totalorder %s12, 1
    %p140 = scmp.ne.s32.totalorder %s135, %s137
    %p141 = scmp.eq.s32.totalorder %s12, 0
    %p142 = por %p140, %p141
    %p143 = scmp.ne.s32.totalorder %s135, %s137
    %p144 = scmp.eq.s32.totalorder %s17, 1
    %p145 = por %p143, %p144
    %p146 = scmp.ne.s32.totalorder %s137, %s138
    %p147 = scmp.eq.s32.totalorder %s17, 0
    %p148 = por %p146, %p147
    %p149 = scmp.ne.s32.totalorder %s137, %s138
    %p150 = scmp.eq.s32.totalorder %s18, 1
    %p151 = por %p149, %p150
    %p153 = scmp.ne.s32.totalorder %s138, %s152
    %p154 = scmp.eq.s32.totalorder %s18, 0
    %p155 = por %p153, %p154
    %s156 = ssub.s32 %s12, %s19
    %p157 = scmp.eq.s32.totalorder %s156, 0
    %s159 = sadd.s32 %s158, 1
    %s160 = scalar_select %p157, %s158, %s159
    %p163 = pneg %p157
    %p164 = scmp.eq.s32.totalorder %s12, 1
    %p165 = por %p163, %p164
    %p166 = scmp.ne.s32.totalorder %s158, %s161
    %p167 = scmp.eq.s32.totalorder %s12, 0
    %p168 = por %p166, %p167
    %p169 = scmp.ne.s32.totalorder %s158, %s161
    %p170 = scmp.eq.s32.totalorder %s17, 1
    %p171 = por %p169, %p170
    %p172 = scmp.ne.s32.totalorder %s161, %s162
    %p173 = scmp.eq.s32.totalorder %s17, 0
    %p174 = por %p172, %p173
    %p175 = scmp.ne.s32.totalorder %s161, %s162
    %p176 = scmp.eq.s32.totalorder %s18, 1
    %p177 = por %p175, %p176
    %p179 = scmp.ne.s32.totalorder %s162, %s178
    %p180 = scmp.eq.s32.totalorder %s18, 0
    %p181 = por %p179, %p180
    %p182 = scmp.le.s32.totalorder 1, %s12
    %p183 = scmp.lt.s32.totalorder %s12, 3
    %p184 = pnand %p182, %p183
    %p185 = pneg %p184
    // Predicated region
    $region9: #{_lambda_.23} parent=5 // pred_check
      _
    $region10: #{_lambda_.23} parent=5 // pred_check_branch
      %187 = sbr.rel (%p184) target = $region12
    $region11: #{_lambda_.23} parent=5 // pred_region
      %s188 = ssub.s32 %s12, 1
      // Predicated region
      $region13: #{_lambda_.23} parent=11 // pred_check
        %p189 = pneg %p59
      $region14: #{_lambda_.23} parent=11 // pred_check_branch
        %191 = sbr.rel (%p189) target = $region16
      $region15: #{_lambda_.23} parent=11 // pred_region
        _
      $region16: #{_lambda_.23} parent=11 // pred_fallthru
        _
      // Predicated region
      $region17: #{_lambda_.23} parent=11 // pred_check
        %p192 = pneg %p80
      $region18: #{_lambda_.23} parent=11 // pred_check_branch
        %194 = sbr.rel (%p192) target = $region20
      $region19: #{_lambda_.23} parent=11 // pred_region
        _
      $region20: #{_lambda_.23} parent=11 // pred_fallthru
        _
      // Predicated region
      $region21: #{_lambda_.23} parent=11 // pred_check
        %p195 = pneg %p127
      $region22: #{_lambda_.23} parent=11 // pred_check_branch
        %197 = sbr.rel (%p195) target = $region24
      $region23: #{_lambda_.23} parent=11 // pred_region
        _
      $region24: #{_lambda_.23} parent=11 // pred_fallthru
        _
      // Predicated region
      $region25: #{_lambda_.23} parent=11 // pred_check
        %p198 = pneg %p148
      $region26: #{_lambda_.23} parent=11 // pred_check_branch
        %200 = sbr.rel (%p198) target = $region28
      $region27: #{_lambda_.23} parent=11 // pred_region
        _
      $region28: #{_lambda_.23} parent=11 // pred_fallthru
        _
    $region12: #{_lambda_.23} parent=5 // pred_fallthru
      _
    %p201 = scmp.lt.s32.totalorder %s12, 2
    // Predicated region
    $region29: #{_lambda_.23} parent=5 // pred_check
      %p202 = pneg %p201
    $region30: #{_lambda_.23} parent=5 // pred_check_branch
      %204 = sbr.rel (%p202) target = $region32
    $region31: #{_lambda_.23} parent=5 // pred_region
      // Predicated region
      $region33: #{_lambda_.23} parent=31 // pred_check
        %p205 = pneg %p32
      $region34: #{_lambda_.23} parent=31 // pred_check_branch
        %207 = sbr.rel (%p205) target = $region36
      $region35: #{_lambda_.23} parent=31 // pred_region
        %p208 = scmp.lt.s32.totalorder %s12, 1
        %s209 = scalar_select %p208, %s12, 1
        %s210 = smul.addr %s209, 8
        %s211 = smul.addr %s210, 8
        %s212 = scalar_lea.vmem %s0, %s211
      $region36: #{_lambda_.23} parent=31 // pred_fallthru
        _
      // Predicated region
      $region37: #{_lambda_.23} parent=31 // pred_check
        %p213 = pneg %p100
      $region38: #{_lambda_.23} parent=31 // pred_check_branch
        %215 = sbr.rel (%p213) target = $region40
      $region39: #{_lambda_.23} parent=31 // pred_region
        %p216 = scmp.lt.s32.totalorder %s12, 1
        %s217 = scalar_select %p216, %s12, 1
        %s218 = smul.addr %s217, 8
        %s219 = smul.addr %s218, 8
        %s220 = scalar_lea.vmem %s3, %s219
      $region40: #{_lambda_.23} parent=31 // pred_fallthru
        _
    $region32: #{_lambda_.23} parent=5 // pred_fallthru
      _
    %p221 = scmp.le.s32.totalorder 1, %s12
    %p222 = scmp.lt.s32.totalorder %s12, 3
    %p223 = pnand %p221, %p222
    %p224 = pneg %p223
    // Predicated region
    $region41: #{_lambda_.23} parent=5 // pred_check
      _
    $region42: #{_lambda_.23} parent=5 // pred_check_branch
      %226 = sbr.rel (%p223) target = $region44
    $region43: #{_lambda_.23} parent=5 // pred_region
      %s227 = ssub.s32 %s12, 1
      %p228 = scmp.lt.s32.totalorder %s17, 1
      %s229 = scalar_select %p228, %s17, 1
      %s230 = smul.addr %s229, 8
      %s231 = smul.addr %s230, 8
      %s232 = scalar_lea.vmem %s0, %s231
      %p233 = pneg %p38
      %p234 = pneg %p35
      %p235 = pneg %p59
      %p236 = pneg %p56
      %p237 = pneg %p80
      %p238 = pneg %p77
      %p239 = scmp.lt.s32.totalorder %s17, 1
      %s240 = scalar_select %p239, %s17, 1
      %s241 = smul.addr %s240, 8
      %s242 = smul.addr %s241, 8
      %s243 = scalar_lea.vmem %s3, %s242
      %p244 = pneg %p106
      %p245 = pneg %p103
      %p246 = pneg %p127
      %p247 = pneg %p124
      %p248 = pneg %p148
      %p249 = pneg %p145
      %p250 = pneg %p174
      %p251 = pneg %p171
      %p252 = scmp.lt.s32.totalorder %s17, 1
      %s253 = scalar_select %p252, %s17, 1
      %s254 = smul.addr %s253, 8
      %s255 = smul.addr %s254, 8
      %s256 = scalar_lea.vmem %s6, %s255
      %p257 = scmp.lt.s32.totalorder %s17, 1
      %s258 = scalar_select %p257, %s17, 1
      %s259 = smul.addr %s258, 8
      %s260 = smul.addr %s259, 8
      %s261 = scalar_lea.vmem %s0, %s260
      %p262 = scmp.lt.s32.totalorder %s17, 1
      %s263 = scalar_select %p262, %s17, 1
      %s264 = smul.addr %s263, 8
      %s265 = smul.addr %s264, 8
      %s266 = scalar_lea.vmem %s3, %s265
      %p267 = scmp.lt.s32.totalorder %s17, 1
      %s268 = scalar_select %p267, %s17, 1
      %s269 = smul.addr %s268, 8
      %s270 = smul.addr %s269, 8
      %s271 = scalar_lea.vmem %s6, %s270
      %v272 = vld [vmem:[%s1] sm:$0x1]
      %v273 = vld [vmem:[%s2] sm:$0x1]
      %v274 = vld [vmem:[%s4] sm:$0x1]
      %v275 = vld [vmem:[%s5] sm:$0x1]
      %v276 = vld [vmem:[%s261] sm:$0xff]
      %v277 = vld [vmem:[%s261 + $0x8] sm:$0xff]
      %v278 = vld [vmem:[%s261 + $0x10] sm:$0xff]
      %v279 = vld [vmem:[%s261 + $0x18] sm:$0xff]
      %v280 = vld [vmem:[%s261 + $0x20] sm:$0xff]
      %v281 = vld [vmem:[%s261 + $0x28] sm:$0xff]
      %v282 = vld [vmem:[%s261 + $0x30] sm:$0xff]
      %v283 = vld [vmem:[%s261 + $0x38] sm:$0xff]
      %v285 = vperm.slane %v272, 0
      %v287 = vmul.f32 %v276, %v285
      %v288 = vmul.f32 %v277, %v285
      %v289 = vmul.f32 %v278, %v285
      %v290 = vmul.f32 %v279, %v285
      %v291 = vmul.f32 %v280, %v285
      %v292 = vmul.f32 %v281, %v285
      %v293 = vmul.f32 %v282, %v285
      %v294 = vmul.f32 %v283, %v285
      %v296 = vperm.slane %v273, 0
      %v298 = vadd.f32 %v287, %v296
      %v299 = vadd.f32 %v288, %v296
      %v300 = vadd.f32 %v289, %v296
      %v301 = vadd.f32 %v290, %v296
      %v302 = vadd.f32 %v291, %v296
      %v303 = vadd.f32 %v292, %v296
      %v304 = vadd.f32 %v293, %v296
      %v305 = vadd.f32 %v294, %v296
      %v306 = vld [vmem:[%s266] sm:$0xff]
      %v307 = vld [vmem:[%s266 + $0x8] sm:$0xff]
      %v308 = vld [vmem:[%s266 + $0x10] sm:$0xff]
      %v309 = vld [vmem:[%s266 + $0x18] sm:$0xff]
      %v310 = vld [vmem:[%s266 + $0x20] sm:$0xff]
      %v311 = vld [vmem:[%s266 + $0x28] sm:$0xff]
      %v312 = vld [vmem:[%s266 + $0x30] sm:$0xff]
      %v313 = vld [vmem:[%s266 + $0x38] sm:$0xff]
      %v315 = vperm.slane %v274, 0
      %v317 = vmul.f32 %v306, %v315
      %v318 = vmul.f32 %v307, %v315
      %v319 = vmul.f32 %v308, %v315
      %v320 = vmul.f32 %v309, %v315
      %v321 = vmul.f32 %v310, %v315
      %v322 = vmul.f32 %v311, %v315
      %v323 = vmul.f32 %v312, %v315
      %v324 = vmul.f32 %v313, %v315
      %v325 = vadd.f32 %v298, %v317
      %v326 = vadd.f32 %v299, %v318
      %v327 = vadd.f32 %v300, %v319
      %v328 = vadd.f32 %v301, %v320
      %v329 = vadd.f32 %v302, %v321
      %v330 = vadd.f32 %v303, %v322
      %v331 = vadd.f32 %v304, %v323
      %v332 = vadd.f32 %v305, %v324
      %v334 = vperm.slane %v275, 0
      %v336 = vadd.f32 %v325, %v334
      %v337 = vadd.f32 %v326, %v334
      %v338 = vadd.f32 %v327, %v334
      %v339 = vadd.f32 %v328, %v334
      %v340 = vadd.f32 %v329, %v334
      %v341 = vadd.f32 %v330, %v334
      %v342 = vadd.f32 %v331, %v334
      %v343 = vadd.f32 %v332, %v334
      %v344 = vmax.f32 %v336, 0.0
      %v345 = vmax.f32 %v337, 0.0
      %v346 = vmax.f32 %v338, 0.0
      %v347 = vmax.f32 %v339, 0.0
      %v348 = vmax.f32 %v340, 0.0
      %v349 = vmax.f32 %v341, 0.0
      %v350 = vmax.f32 %v342, 0.0
      %v351 = vmax.f32 %v343, 0.0
      %352 = vst [vmem:[%s271] sm:$0xff] %v344
      %353 = vst [vmem:[%s271 + $0x8] sm:$0xff] %v345
      %354 = vst [vmem:[%s271 + $0x10] sm:$0xff] %v346
      %355 = vst [vmem:[%s271 + $0x18] sm:$0xff] %v347
      %356 = vst [vmem:[%s271 + $0x20] sm:$0xff] %v348
      %357 = vst [vmem:[%s271 + $0x28] sm:$0xff] %v349
      %358 = vst [vmem:[%s271 + $0x30] sm:$0xff] %v350
      %359 = vst [vmem:[%s271 + $0x38] sm:$0xff] %v351
      %p360 = scmp.lt.s32.totalorder %s17, 1
      %s361 = scalar_select %p360, %s17, 1
      %s362 = smul.addr %s361, 8
      %s363 = smul.addr %s362, 8
      %s364 = scalar_lea.vmem %s6, %s363
      // Predicated region
      $region45: #{_lambda_.23} parent=43 // pred_check
        %p365 = pneg %p171
      $region46: #{_lambda_.23} parent=43 // pred_check_branch
        %367 = sbr.rel (%p365) target = $region48
      $region47: #{_lambda_.23} parent=43 // pred_region
        _
      $region48: #{_lambda_.23} parent=43 // pred_fallthru
        _
    $region44: #{_lambda_.23} parent=5 // pred_fallthru
      _
    %p368 = scmp.le.s32.totalorder 2, %s12
    // Predicated region
    $region49: #{_lambda_.23} parent=5 // pred_check
      %p369 = pneg %p368
    $region50: #{_lambda_.23} parent=5 // pred_check_branch
      %371 = sbr.rel (%p369) target = $region52
    $region51: #{_lambda_.23} parent=5 // pred_region
      %s372 = ssub.s32 %s12, 2
      // Predicated region
      $region53: #{_lambda_.23} parent=51 // pred_check
        %p373 = pneg %p177
      $region54: #{_lambda_.23} parent=51 // pred_check_branch
        %375 = sbr.rel (%p373) target = $region56
      $region55: #{_lambda_.23} parent=51 // pred_region
        %p376 = scmp.lt.s32.totalorder %s18, 1
        %s377 = scalar_select %p376, %s18, 1
        %s378 = smul.addr %s377, 8
        %s379 = smul.addr %s378, 8
        %s380 = scalar_lea.vmem %s6, %s379
      $region56: #{_lambda_.23} parent=51 // pred_fallthru
        _
    $region52: #{_lambda_.23} parent=5 // pred_fallthru
      _
  $region6: #{_lambda_.23} parent=0 // loop_footer
    %s16 = sadd.s32 1, %s12
  $region7: #{_lambda_.23} parent=0 // loop_footer_branch
    %11 = sbr.rel target = $region3
  $region8: #{_lambda_.23} parent=0 // loop_exit
    _

// kernel: _lambda_.21
$region0: #{_lambda_.21}
  #allocation0 [shape = 'u32[]', space=smem, size = 0x4, offset = 0x4, fixed_abs, tag = 'smem constant byte address 0x4 - core index']
  #allocation1 [shape = 'u32[72,128]{1,0:T(1,128)}', space=vmem, size = 0x9000, scoped, tag = 'internal scratch']
  %s0 = inlined_call_operand.vmem [shape: f32[2,10,10,128], index: 0, kind: input, shape index: {}]
  %s1 = inlined_call_operand.vmem [shape: bf16[9,128,128], index: 1, kind: input, shape index: {}]
  %s2 = inlined_call_operand.vmem [shape: f32[2,64,128], index: 2, kind: output, shape index: {0}]
  %s3 = inlined_call_operand.vmem [shape: f32[2,1,128], index: 3, kind: output, shape index: {1}]
  %s4 = inlined_call_operand.vmem [shape: f32[2,1,128], index: 4, kind: output, shape index: {2}]
  %5 = xla_tuple %s2, %s3, %s4
  %s6 = sld [smem:[#allocation0]]
  $region57: #{_lambda_.21} parent=0
    _
  %s8 = ssub.s32 1, %s6
  %s9 = scalar_select 0, %s8, %s6
  loop: start=0, step=1, limit=4
  $region2: #{_lambda_.21} parent=0 // loop_pre_header
    _
  $region3: #{_lambda_.21} parent=0 // loop_header
    %s11 = sphi 0, %s15
    %p12 = scmp.ge.s32.totalorder %s11, 4
    %s21 = sphi 0, %s23
    %s24 = sphi 0, %s21
    %s25 = sphi 0, %s24
    %s41 = sphi 0, %s25
    %s45 = sphi 0, %s45
    %s47 = sphi 0, %s45
    %s48 = sphi 0, %s47
    %s62 = sphi 0, %s48
    %s68 = sphi 0, %s70
    %s71 = sphi 0, %s68
    %s72 = sphi 0, %s71
    %s88 = sphi 0, %s72
    %s94 = sphi 0, %s96
    %s97 = sphi 0, %s94
    %s98 = sphi 0, %s97
    %s114 = sphi 0, %s98
    %s120 = sphi 0, %s122
    %s123 = sphi 0, %s120
    %s124 = sphi 0, %s123
    %s140 = sphi 0, %s124
  $region4: #{_lambda_.21} parent=0 // loop_header_branch
    %14 = sbr.rel (%p12) target = $region8
  $region5: #{_lambda_.21} parent=0 // loop_body
    %s16 = ssub.s32 %s11, 1
    %s17 = ssub.s32 %s11, 2
    %s18 = sadd.s32 %s11, 1
    %s19 = ssub.s32 %s11, %s18
    %p20 = scmp.eq.s32.totalorder %s19, 0
    %s22 = sadd.s32 %s21, 1
    %s23 = scalar_select %p20, %s21, %s22
    %p26 = pneg %p20
    %p27 = scmp.eq.s32.totalorder %s11, 1
    %p28 = por %p26, %p27
    %p29 = scmp.ne.s32.totalorder %s21, %s24
    %p30 = scmp.eq.s32.totalorder %s11, 0
    %p31 = por %p29, %p30
    %p32 = scmp.ne.s32.totalorder %s21, %s24
    %p33 = scmp.eq.s32.totalorder %s16, 1
    %p34 = por %p32, %p33
    %p35 = scmp.ne.s32.totalorder %s24, %s25
    %p36 = scmp.eq.s32.totalorder %s16, 0
    %p37 = por %p35, %p36
    %p38 = scmp.ne.s32.totalorder %s24, %s25
    %p39 = scmp.eq.s32.totalorder %s17, 1
    %p40 = por %p38, %p39
    %p42 = scmp.ne.s32.totalorder %s25, %s41
    %p43 = scmp.eq.s32.totalorder %s17, 0
    %p44 = por %p42, %p43
    %s46 = sadd.s32 %s45, 1
    %p49 = scmp.eq.s32.totalorder %s11, 1
    %p50 = scmp.ne.s32.totalorder %s45, %s47
    %p51 = scmp.eq.s32.totalorder %s11, 0
    %p52 = por %p50, %p51
    %p53 = scmp.ne.s32.totalorder %s45, %s47
    %p54 = scmp.eq.s32.totalorder %s16, 1
    %p55 = por %p53, %p54
    %p56 = scmp.ne.s32.totalorder %s47, %s48
    %p57 = scmp.eq.s32.totalorder %s16, 0
    %p58 = por %p56, %p57
    %p59 = scmp.ne.s32.totalorder %s47, %s48
    %p60 = scmp.eq.s32.totalorder %s17, 1
    %p61 = por %p59, %p60
    %p63 = scmp.ne.s32.totalorder %s48, %s62
    %p64 = scmp.eq.s32.totalorder %s17, 0
    %p65 = por %p63, %p64
    %s66 = ssub.s32 %s11, %s18
    %p67 = scmp.eq.s32.totalorder %s66, 0
    %s69 = sadd.s32 %s68, 1
    %s70 = scalar_select %p67, %s68, %s69
    %p73 = pneg %p67
    %p74 = scmp.eq.s32.totalorder %s11, 1
    %p75 = por %p73, %p74
    %p76 = scmp.ne.s32.totalorder %s68, %s71
    %p77 = scmp.eq.s32.totalorder %s11, 0
    %p78 = por %p76, %p77
    %p79 = scmp.ne.s32.totalorder %s68, %s71
    %p80 = scmp.eq.s32.totalorder %s16, 1
    %p81 = por %p79, %p80
    %p82 = scmp.ne.s32.totalorder %s71, %s72
    %p83 = scmp.eq.s32.totalorder %s16, 0
    %p84 = por %p82, %p83
    %p85 = scmp.ne.s32.totalorder %s71, %s72
    %p86 = scmp.eq.s32.totalorder %s17, 1
    %p87 = por %p85, %p86
    %p89 = scmp.ne.s32.totalorder %s72, %s88
    %p90 = scmp.eq.s32.totalorder %s17, 0
    %p91 = por %p89, %p90
    %s92 = ssub.s32 %s11, %s18
    %p93 = scmp.eq.s32.totalorder %s92, 0
    %s95 = sadd.s32 %s94, 1
    %s96 = scalar_select %p93, %s94, %s95
    %p99 = pneg %p93
    %p100 = scmp.eq.s32.totalorder %s11, 1
    %p101 = por %p99, %p100
    %p102 = scmp.ne.s32.totalorder %s94, %s97
    %p103 = scmp.eq.s32.totalorder %s11, 0
    %p104 = por %p102, %p103
    %p105 = scmp.ne.s32.totalorder %s94, %s97
    %p106 = scmp.eq.s32.totalorder %s16, 1
    %p107 = por %p105, %p106
    %p108 = scmp.ne.s32.totalorder %s97, %s98
    %p109 = scmp.eq.s32.totalorder %s16, 0
    %p110 = por %p108, %p109
    %p111 = scmp.ne.s32.totalorder %s97, %s98
    %p112 = scmp.eq.s32.totalorder %s17, 1
    %p113 = por %p111, %p112
    %p115 = scmp.ne.s32.totalorder %s98, %s114
    %p116 = scmp.eq.s32.totalorder %s17, 0
    %p117 = por %p115, %p116
    %s118 = ssub.s32 %s11, %s18
    %p119 = scmp.eq.s32.totalorder %s118, 0
    %s121 = sadd.s32 %s120, 1
    %s122 = scalar_select %p119, %s120, %s121
    %p125 = pneg %p119
    %p126 = scmp.eq.s32.totalorder %s11, 1
    %p127 = por %p125, %p126
    %p128 = scmp.ne.s32.totalorder %s120, %s123
    %p129 = scmp.eq.s32.totalorder %s11, 0
    %p130 = por %p128, %p129
    %p131 = scmp.ne.s32.totalorder %s120, %s123
    %p132 = scmp.eq.s32.totalorder %s16, 1
    %p133 = por %p131, %p132
    %p134 = scmp.ne.s32.totalorder %s123, %s124
    %p135 = scmp.eq.s32.totalorder %s16, 0
    %p136 = por %p134, %p135
    %p137 = scmp.ne.s32.totalorder %s123, %s124
    %p138 = scmp.eq.s32.totalorder %s17, 1
    %p139 = por %p137, %p138
    %p141 = scmp.ne.s32.totalorder %s124, %s140
    %p142 = scmp.eq.s32.totalorder %s17, 0
    %p143 = por %p141, %p142
    %p144 = scmp.le.s32.totalorder 1, %s11
    %p145 = scmp.lt.s32.totalorder %s11, 3
    %p146 = pnand %p144, %p145
    %p147 = pneg %p146
    // Predicated region
    $region9: #{_lambda_.21} parent=5 // pred_check
      _
    $region10: #{_lambda_.21} parent=5 // pred_check_branch
      %149 = sbr.rel (%p146) target = $region12
    $region11: #{_lambda_.21} parent=5 // pred_region
      %s150 = ssub.s32 %s11, 1
      // Predicated region
      $region13: #{_lambda_.21} parent=11 // pred_check
        %p151 = pneg %p58
      $region14: #{_lambda_.21} parent=11 // pred_check_branch
        %153 = sbr.rel (%p151) target = $region16
      $region15: #{_lambda_.21} parent=11 // pred_region
        _
      $region16: #{_lambda_.21} parent=11 // pred_fallthru
        _
    $region12: #{_lambda_.21} parent=5 // pred_fallthru
      _
    %p154 = scmp.lt.s32.totalorder %s11, 2
    // Predicated region
    $region17: #{_lambda_.21} parent=5 // pred_check
      %p155 = pneg %p154
    $region18: #{_lambda_.21} parent=5 // pred_check_branch
      %157 = sbr.rel (%p155) target = $region20
    $region19: #{_lambda_.21} parent=5 // pred_region
      // Predicated region
      $region21: #{_lambda_.21} parent=19 // pred_check
        %p158 = pneg %p31
      $region22: #{_lambda_.21} parent=19 // pred_check_branch
        %160 = sbr.rel (%p158) target = $region24
      $region23: #{_lambda_.21} parent=19 // pred_region
        %p161 = scmp.lt.s32.totalorder %s11, 1
        %s162 = scalar_select %p161, %s11, 1
        %s163 = smul.addr %s162, 20
        %s164 = smul.addr %s163, 8
        %s165 = scalar_lea.vmem %s0, %s164
      $region24: #{_lambda_.21} parent=19 // pred_fallthru
        _
    $region20: #{_lambda_.21} parent=5 // pred_fallthru
      _
    %p166 = scmp.le.s32.totalorder 1, %s11
    %p167 = scmp.lt.s32.totalorder %s11, 3
    %p168 = pnand %p166, %p167
    %p169 = pneg %p168
    // Predicated region
    $region25: #{_lambda_.21} parent=5 // pred_check
      _
    $region26: #{_lambda_.21} parent=5 // pred_check_branch
      %171 = sbr.rel (%p168) target = $region28
    $region27: #{_lambda_.21} parent=5 // pred_region
      %s172 = ssub.s32 %s11, 1
      %p173 = scmp.lt.s32.totalorder %s16, 1
      %s174 = scalar_select %p173, %s16, 1
      %s175 = smul.addr %s174, 20
      %s176 = smul.addr %s175, 8
      %s177 = scalar_lea.vmem %s0, %s176
      %p178 = pneg %p37
      %p179 = pneg %p34
      %p180 = pneg %p58
      %p181 = pneg %p55
      %p182 = pneg %p84
      %p183 = pneg %p81
      %p184 = scmp.lt.s32.totalorder %s16, 1
      %s185 = scalar_select %p184, %s16, 1
      %s186 = smul.addr %s185, 8
      %s187 = smul.addr %s186, 8
      %s188 = scalar_lea.vmem %s2, %s187
      %p189 = pneg %p110
      %p190 = pneg %p107
      %p191 = scmp.lt.s32.totalorder %s16, 1
      %s192 = scalar_select %p191, %s16, 1
      %s193 = scalar_lea.vmem %s3, %s192
      %p194 = pneg %p136
      %p195 = pneg %p133
      %p196 = scmp.lt.s32.totalorder %s16, 1
      %s197 = scalar_select %p196, %s16, 1
      %s198 = scalar_lea.vmem %s4, %s197
      %p199 = scmp.lt.s32.totalorder %s16, 1
      %s200 = scalar_select %p199, %s16, 1
      %s201 = smul.addr %s200, 20
      %s202 = smul.addr %s201, 8
      %s203 = scalar_lea.vmem %s0, %s202
      %p204 = scmp.lt.s32.totalorder %s16, 1
      %s205 = scalar_select %p204, %s16, 1
      %s206 = smul.addr %s205, 8
      %s207 = smul.addr %s206, 8
      %s208 = scalar_lea.vmem %s2, %s207
      %p209 = scmp.lt.s32.totalorder %s16, 1
      %s210 = scalar_select %p209, %s16, 1
      %s211 = scalar_lea.vmem %s3, %s210
      %p212 = scmp.lt.s32.totalorder %s16, 1
      %s213 = scalar_select %p212, %s16, 1
      %s214 = scalar_lea.vmem %s4, %s213
      %v215 = vld [vmem:[%s203] sm:$0xff]
      %v216 = vld [vmem:[%s203 + $0x10] sm:$0xff]
      %v217 = vld [vmem:[%s203 + $0x20] sm:$0xff]
      %v218 = vld [vmem:[%s203 + $0x30] sm:$0xff]
      %v219 = vld [vmem:[%s203 + $0x40] sm:$0xff]
      %v220 = vld [vmem:[%s203 + $0x50] sm:$0xff]
      %v221 = vld [vmem:[%s203 + $0x60] sm:$0xff]
      %v222 = vld [vmem:[%s203 + $0x70] sm:$0xff]
      %v223 = vpack.c.bf16 %v216, %v215
      %v224 = vpack.c.bf16 %v218, %v217
      %v225 = vpack.c.bf16 %v220, %v219
      %v226 = vpack.c.bf16 %v222, %v221
      %v227 = vld [vmem:[%s1] sm:$0xf]
      %v228 = vld [vmem:[%s1 + $0x4] sm:$0xf]
      %v229 = vld [vmem:[%s1 + $0x8] sm:$0xf]
      %v230 = vld [vmem:[%s1 + $0xc] sm:$0xf]
      %v231 = vld [vmem:[%s1 + $0x10] sm:$0xf]
      %v232 = vld [vmem:[%s1 + $0x14] sm:$0xf]
      %v233 = vld [vmem:[%s1 + $0x18] sm:$0xf]
      %v234 = vld [vmem:[%s1 + $0x1c] sm:$0xf]
      %v235 = vld [vmem:[%s1 + $0x20] sm:$0xf]
      %v236 = vld [vmem:[%s1 + $0x24] sm:$0xf]
      %v237 = vld [vmem:[%s1 + $0x28] sm:$0xf]
      %v238 = vld [vmem:[%s1 + $0x2c] sm:$0xf]
      %v239 = vld [vmem:[%s1 + $0x30] sm:$0xf]
      %v240 = vld [vmem:[%s1 + $0x34] sm:$0xf]
      %v241 = vld [vmem:[%s1 + $0x38] sm:$0xf]
      %v242 = vld [vmem:[%s1 + $0x3c] sm:$0xf]
      %v243 = vld [vmem:[%s203 + $0x1] sm:$0xff]
      %v244 = vld [vmem:[%s203 + $0x11] sm:$0xff]
      %v245 = vld [vmem:[%s203 + $0x21] sm:$0xff]
      %v246 = vld [vmem:[%s203 + $0x31] sm:$0xff]
      %v247 = vld [vmem:[%s203 + $0x41] sm:$0xff]
      %v248 = vld [vmem:[%s203 + $0x51] sm:$0xff]
      %v249 = vld [vmem:[%s203 + $0x61] sm:$0xff]
      %v250 = vld [vmem:[%s203 + $0x71] sm:$0xff]
      %v251 = vpack.c.bf16 %v244, %v243
      %v252 = vpack.c.bf16 %v246, %v245
      %v253 = vpack.c.bf16 %v248, %v247
      %v254 = vpack.c.bf16 %v250, %v249
      %s255 = scalar_lea.vmem %s1, 64
      %v256 = vld [vmem:[%s255] sm:$0xf]
      %v257 = vld [vmem:[%s255 + $0x4] sm:$0xf]
      %v258 = vld [vmem:[%s255 + $0x8] sm:$0xf]
      %v259 = vld [vmem:[%s255 + $0xc] sm:$0xf]
      %v260 = vld [vmem:[%s255 + $0x10] sm:$0xf]
      %v261 = vld [vmem:[%s255 + $0x14] sm:$0xf]
      %v262 = vld [vmem:[%s255 + $0x18] sm:$0xf]
      %v263 = vld [vmem:[%s255 + $0x1c] sm:$0xf]
      %v264 = vld [vmem:[%s255 + $0x20] sm:$0xf]
      %v265 = vld [vmem:[%s255 + $0x24] sm:$0xf]
      %v266 = vld [vmem:[%s255 + $0x28] sm:$0xf]
      %v267 = vld [vmem:[%s255 + $0x2c] sm:$0xf]
      %v268 = vld [vmem:[%s255 + $0x30] sm:$0xf]
      %v269 = vld [vmem:[%s255 + $0x34] sm:$0xf]
      %v270 = vld [vmem:[%s255 + $0x38] sm:$0xf]
      %v271 = vld [vmem:[%s255 + $0x3c] sm:$0xf]
      %v288 = vunpack.c.l.b16 %v256
      %v289 = vunpack.c.l.b16 %v257
      %v290 = vunpack.c.l.b16 %v258
      %v291 = vunpack.c.l.b16 %v259
      %v292 = vunpack.c.l.b16 %v260
      %v293 = vunpack.c.l.b16 %v261
      %v294 = vunpack.c.l.b16 %v262
      %v295 = vunpack.c.l.b16 %v263
      %v296 = vunpack.c.l.b16 %v264
      %v297 = vunpack.c.l.b16 %v265
      %v298 = vunpack.c.l.b16 %v266
      %v299 = vunpack.c.l.b16 %v267
      %v300 = vunpack.c.l.b16 %v268
      %v301 = vunpack.c.l.b16 %v269
      %v302 = vunpack.c.l.b16 %v270
      %v303 = vunpack.c.l.b16 %v271
      %v304 = vpack.c.b16 %v289, %v288
      %v305 = vpack.c.b16 %v291, %v290
      %v306 = vpack.c.b16 %v293, %v292
      %v307 = vpack.c.b16 %v295, %v294
      %v308 = vpack.c.b16 %v297, %v296
      %v309 = vpack.c.b16 %v299, %v298
      %v310 = vpack.c.b16 %v301, %v300
      %v311 = vpack.c.b16 %v303, %v302
      %320 = vmatpush.bf16.msra.mxu0 %v311
      %321 = vmatpush.bf16.msra.mxu0 %v310
      %322 = vmatpush.bf16.msra.mxu0 %v309
      %323 = vmatpush.bf16.msra.mxu0 %v308
      %324 = vmatpush.bf16.msra.mxu0 %v307
      %325 = vmatpush.bf16.msra.mxu0 %v306
      %326 = vmatpush.bf16.msra.mxu0 %v305
      %327 = vmatpush.bf16.msra.mxu0 %v304
      %328 = vmatmul.bf16.gmra.mxu0 %v251
      %v329 = vpop.f32.mrf.mxu0
      %v330 = vadd.f32 0.0, %v329
      %v331 = vpop.f32.mrf.mxu0
      %v332 = vadd.f32 0.0, %v331
      %333 = vmatmul.bf16.gmra.mxu0 %v252
      %v334 = vpop.f32.mrf.mxu0
      %v335 = vadd.f32 0.0, %v334
      %v336 = vpop.f32.mrf.mxu0
      %v337 = vadd.f32 0.0, %v336
      %338 = vmatmul.bf16.gmra.mxu0 %v253
      %v339 = vpop.f32.mrf.mxu0
      %v340 = vadd.f32 0.0, %v339
      %v341 = vpop.f32.mrf.mxu0
      %v342 = vadd.f32 0.0, %v341
      %343 = vmatmul.bf16.gmra.mxu0 %v254
      %v344 = vpop.f32.mrf.mxu0
      %v345 = vadd.f32 0.0, %v344
      %v346 = vpop.f32.mrf.mxu0
      %v347 = vadd.f32 0.0, %v346
      %348 = vdwg.mxu0
      %v365 = vunpack.c.l.b16 %v227
      %v366 = vunpack.c.l.b16 %v228
      %v367 = vunpack.c.l.b16 %v229
      %v368 = vunpack.c.l.b16 %v230
      %v369 = vunpack.c.l.b16 %v231
      %v370 = vunpack.c.l.b16 %v232
      %v371 = vunpack.c.l.b16 %v233
      %v372 = vunpack.c.l.b16 %v234
      %v373 = vunpack.c.l.b16 %v235
      %v374 = vunpack.c.l.b16 %v236
      %v375 = vunpack.c.l.b16 %v237
      %v376 = vunpack.c.l.b16 %v238
      %v377 = vunpack.c.l.b16 %v239
      %v378 = vunpack.c.l.b16 %v240
      %v379 = vunpack.c.l.b16 %v241
      %v380 = vunpack.c.l.b16 %v242
      %v381 = vpack.c.b16 %v366, %v365
      %v382 = vpack.c.b16 %v368, %v367
      %v383 = vpack.c.b16 %v370, %v369
      %v384 = vpack.c.b16 %v372, %v371
      %v385 = vpack.c.b16 %v374, %v373
      %v386 = vpack.c.b16 %v376, %v375
      %v387 = vpack.c.b16 %v378, %v377
      %v388 = vpack.c.b16 %v380, %v379
      %397 = vmatpush.bf16.msra.mxu0 %v388
      %398 = vmatpush.bf16.msra.mxu0 %v387
      %399 = vmatpush.bf16.msra.mxu0 %v386
      %400 = vmatpush.bf16.msra.mxu0 %v385
      %401 = vmatpush.bf16.msra.mxu0 %v384
      %402 = vmatpush.bf16.msra.mxu0 %v383
      %403 = vmatpush.bf16.msra.mxu0 %v382
      %404 = vmatpush.bf16.msra.mxu0 %v381
      %405 = vmatmul.bf16.gmra.mxu0 %v223
      %v406 = vpop.f32.mrf.mxu0
      %v407 = vadd.f32 %v330, %v406
      %v408 = vpop.f32.mrf.mxu0
      %v409 = vadd.f32 %v332, %v408
      %410 = vmatmul.bf16.gmra.mxu0 %v224
      %v411 = vpop.f32.mrf.mxu0
      %v412 = vadd.f32 %v335, %v411
      %v413 = vpop.f32.mrf.mxu0
      %v414 = vadd.f32 %v337, %v413
      %415 = vmatmul.bf16.gmra.mxu0 %v225
      %v416 = vpop.f32.mrf.mxu0
      %v417 = vadd.f32 %v340, %v416
      %v418 = vpop.f32.mrf.mxu0
      %v419 = vadd.f32 %v342, %v418
      %420 = vmatmul.bf16.gmra.mxu0 %v226
      %v421 = vpop.f32.mrf.mxu0
      %v422 = vadd.f32 %v345, %v421
      %v423 = vpop.f32.mrf.mxu0
      %v424 = vadd.f32 %v347, %v423
      %425 = vdwg.mxu0
      %v426 = vld [vmem:[%s203 + $0x2] sm:$0xff]
      %v427 = vld [vmem:[%s203 + $0x12] sm:$0xff]
      %v428 = vld [vmem:[%s203 + $0x22] sm:$0xff]
      %v429 = vld [vmem:[%s203 + $0x32] sm:$0xff]
      %v430 = vld [vmem:[%s203 + $0x42] sm:$0xff]
      %v431 = vld [vmem:[%s203 + $0x52] sm:$0xff]
      %v432 = vld [vmem:[%s203 + $0x62] sm:$0xff]
      %v433 = vld [vmem:[%s203 + $0x72] sm:$0xff]
      %v434 = vpack.c.bf16 %v427, %v426
      %v435 = vpack.c.bf16 %v429, %v428
      %v436 = vpack.c.bf16 %v431, %v430
      %v437 = vpack.c.bf16 %v433, %v432
      %s438 = scalar_lea.vmem %s1, 128
      %v439 = vld [vmem:[%s438] sm:$0xf]
      %v440 = vld [vmem:[%s438 + $0x4] sm:$0xf]
      %v441 = vld [vmem:[%s438 + $0x8] sm:$0xf]
      %v442 = vld [vmem:[%s438 + $0xc] sm:$0xf]
      %v443 = vld [vmem:[%s438 + $0x10] sm:$0xf]
      %v444 = vld [vmem:[%s438 + $0x14] sm:$0xf]
      %v445 = vld [vmem:[%s438 + $0x18] sm:$0xf]
      %v446 = vld [vmem:[%s438 + $0x1c] sm:$0xf]
      %v447 = vld [vmem:[%s438 + $0x20] sm:$0xf]
      %v448 = vld [vmem:[%s438 + $0x24] sm:$0xf]
      %v449 = vld [vmem:[%s438 + $0x28] sm:$0xf]
      %v450 = vld [vmem:[%s438 + $0x2c] sm:$0xf]
      %v451 = vld [vmem:[%s438 + $0x30] sm:$0xf]
      %v452 = vld [vmem:[%s438 + $0x34] sm:$0xf]
      %v453 = vld [vmem:[%s438 + $0x38] sm:$0xf]
      %v454 = vld [vmem:[%s438 + $0x3c] sm:$0xf]
      %v471 = vunpack.c.l.b16 %v439
      %v472 = vunpack.c.l.b16 %v440
      %v473 = vunpack.c.l.b16 %v441
      %v474 = vunpack.c.l.b16 %v442
      %v475 = vunpack.c.l.b16 %v443
      %v476 = vunpack.c.l.b16 %v444
      %v477 = vunpack.c.l.b16 %v445
      %v478 = vunpack.c.l.b16 %v446
      %v479 = vunpack.c.l.b16 %v447
      %v480 = vunpack.c.l.b16 %v448
      %v481 = vunpack.c.l.b16 %v449
      %v482 = vunpack.c.l.b16 %v450
      %v483 = vunpack.c.l.b16 %v451
      %v484 = vunpack.c.l.b16 %v452
      %v485 = vunpack.c.l.b16 %v453
      %v486 = vunpack.c.l.b16 %v454
      %v487 = vpack.c.b16 %v472, %v471
      %v488 = vpack.c.b16 %v474, %v473
      %v489 = vpack.c.b16 %v476, %v475
      %v490 = vpack.c.b16 %v478, %v477
      %v491 = vpack.c.b16 %v480, %v479
      %v492 = vpack.c.b16 %v482, %v481
      %v493 = vpack.c.b16 %v484, %v483
      %v494 = vpack.c.b16 %v486, %v485
      %503 = vmatpush.bf16.msra.mxu0 %v494
      %504 = vmatpush.bf16.msra.mxu0 %v493
      %505 = vmatpush.bf16.msra.mxu0 %v492
      %506 = vmatpush.bf16.msra.mxu0 %v491
      %507 = vmatpush.bf16.msra.mxu0 %v490
      %508 = vmatpush.bf16.msra.mxu0 %v489
      %509 = vmatpush.bf16.msra.mxu0 %v488
      %510 = vmatpush.bf16.msra.mxu0 %v487
      %511 = vmatmul.bf16.gmra.mxu0 %v434
      %v512 = vpop.f32.mrf.mxu0
      %v513 = vadd.f32 0.0, %v512
      %v514 = vpop.f32.mrf.mxu0
      %v515 = vadd.f32 0.0, %v514
      %516 = vmatmul.bf16.gmra.mxu0 %v435
      %v517 = vpop.f32.mrf.mxu0
      %v518 = vadd.f32 0.0, %v517
      %v519 = vpop.f32.mrf.mxu0
      %v520 = vadd.f32 0.0, %v519
      %521 = vmatmul.bf16.gmra.mxu0 %v436
      %v522 = vpop.f32.mrf.mxu0
      %v523 = vadd.f32 0.0, %v522
      %v524 = vpop.f32.mrf.mxu0
      %v525 = vadd.f32 0.0, %v524
      %526 = vmatmul.bf16.gmra.mxu0 %v437
      %v527 = vpop.f32.mrf.mxu0
      %v528 = vadd.f32 0.0, %v527
      %v529 = vpop.f32.mrf.mxu0
      %v530 = vadd.f32 0.0, %v529
      %531 = vdwg.mxu0
      %v532 = vadd.f32 %v407, %v513
      %v533 = vadd.f32 %v409, %v515
      %v534 = vadd.f32 %v412, %v518
      %v535 = vadd.f32 %v414, %v520
      %v536 = vadd.f32 %v417, %v523
      %v537 = vadd.f32 %v419, %v525
      %v538 = vadd.f32 %v422, %v528
      %v539 = vadd.f32 %v424, %v530
      %s540 = scalar_lea.vmem %s203, 16
      %v541 = vld [vmem:[%s540] sm:$0xff]
      %v542 = vld [vmem:[%s540 + $0x10] sm:$0xff]
      %v543 = vld [vmem:[%s540 + $0x20] sm:$0xff]
      %v544 = vld [vmem:[%s540 + $0x30] sm:$0xff]
      %v545 = vld [vmem:[%s540 + $0x40] sm:$0xff]
      %v546 = vld [vmem:[%s540 + $0x50] sm:$0xff]
      %v547 = vld [vmem:[%s540 + $0x60] sm:$0xff]
      %v548 = vld [vmem:[%s540 + $0x70] sm:$0xff]
      %v549 = vpack.c.bf16 %v542, %v541
      %v550 = vpack.c.bf16 %v544, %v543
      %v551 = vpack.c.bf16 %v546, %v545
      %v552 = vpack.c.bf16 %v548, %v547
      %s553 = scalar_lea.vmem %s1, 192
      %v554 = vld [vmem:[%s553] sm:$0xf]
      %v555 = vld [vmem:[%s553 + $0x4] sm:$0xf]
      %v556 = vld [vmem:[%s553 + $0x8] sm:$0xf]
      %v557 = vld [vmem:[%s553 + $0xc] sm:$0xf]
      %v558 = vld [vmem:[%s553 + $0x10] sm:$0xf]
      %v559 = vld [vmem:[%s553 + $0x14] sm:$0xf]
      %v560 = vld [vmem:[%s553 + $0x18] sm:$0xf]
      %v561 = vld [vmem:[%s553 + $0x1c] sm:$0xf]
      %v562 = vld [vmem:[%s553 + $0x20] sm:$0xf]
      %v563 = vld [vmem:[%s553 + $0x24] sm:$0xf]
      %v564 = vld [vmem:[%s553 + $0x28] sm:$0xf]
      %v565 = vld [vmem:[%s553 + $0x2c] sm:$0xf]
      %v566 = vld [vmem:[%s553 + $0x30] sm:$0xf]
      %v567 = vld [vmem:[%s553 + $0x34] sm:$0xf]
      %v568 = vld [vmem:[%s553 + $0x38] sm:$0xf]
      %v569 = vld [vmem:[%s553 + $0x3c] sm:$0xf]
      %v586 = vunpack.c.l.b16 %v554
      %v587 = vunpack.c.l.b16 %v555
      %v588 = vunpack.c.l.b16 %v556
      %v589 = vunpack.c.l.b16 %v557
      %v590 = vunpack.c.l.b16 %v558
      %v591 = vunpack.c.l.b16 %v559
      %v592 = vunpack.c.l.b16 %v560
      %v593 = vunpack.c.l.b16 %v561
      %v594 = vunpack.c.l.b16 %v562
      %v595 = vunpack.c.l.b16 %v563
      %v596 = vunpack.c.l.b16 %v564
      %v597 = vunpack.c.l.b16 %v565
      %v598 = vunpack.c.l.b16 %v566
      %v599 = vunpack.c.l.b16 %v567
      %v600 = vunpack.c.l.b16 %v568
      %v601 = vunpack.c.l.b16 %v569
      %v602 = vpack.c.b16 %v587, %v586
      %v603 = vpack.c.b16 %v589, %v588
      %v604 = vpack.c.b16 %v591, %v590
      %v605 = vpack.c.b16 %v593, %v592
      %v606 = vpack.c.b16 %v595, %v594
      %v607 = vpack.c.b16 %v597, %v596
      %v608 = vpack.c.b16 %v599, %v598
      %v609 = vpack.c.b16 %v601, %v600
      %618 = vmatpush.bf16.msra.mxu0 %v609
      %619 = vmatpush.bf16.msra.mxu0 %v608
      %620 = vmatpush.bf16.msra.mxu0 %v607
      %621 = vmatpush.bf16.msra.mxu0 %v606
      %622 = vmatpush.bf16.msra.mxu0 %v605
      %623 = vmatpush.bf16.msra.mxu0 %v604
      %624 = vmatpush.bf16.msra.mxu0 %v603
      %625 = vmatpush.bf16.msra.mxu0 %v602
      %626 = vmatmul.bf16.gmra.mxu0 %v549
      %v627 = vpop.f32.mrf.mxu0
      %v628 = vadd.f32 0.0, %v627
      %v629 = vpop.f32.mrf.mxu0
      %v630 = vadd.f32 0.0, %v629
      %631 = vmatmul.bf16.gmra.mxu0 %v550
      %v632 = vpop.f32.mrf.mxu0
      %v633 = vadd.f32 0.0, %v632
      %v634 = vpop.f32.mrf.mxu0
      %v635 = vadd.f32 0.0, %v634
      %636 = vmatmul.bf16.gmra.mxu0 %v551
      %v637 = vpop.f32.mrf.mxu0
      %v638 = vadd.f32 0.0, %v637
      %v639 = vpop.f32.mrf.mxu0
      %v640 = vadd.f32 0.0, %v639
      %641 = vmatmul.bf16.gmra.mxu0 %v552
      %v642 = vpop.f32.mrf.mxu0
      %v643 = vadd.f32 0.0, %v642
      %v644 = vpop.f32.mrf.mxu0
      %v645 = vadd.f32 0.0, %v644
      %646 = vdwg.mxu0
      %v647 = vadd.f32 %v532, %v628
      %v648 = vadd.f32 %v533, %v630
      %v649 = vadd.f32 %v534, %v633
      %v650 = vadd.f32 %v535, %v635
      %v651 = vadd.f32 %v536, %v638
      %v652 = vadd.f32 %v537, %v640
      %v653 = vadd.f32 %v538, %v643
      %v654 = vadd.f32 %v539, %v645
      %v655 = vld [vmem:[%s540 + $0x1] sm:$0xff]
      %v656 = vld [vmem:[%s540 + $0x11] sm:$0xff]
      %v657 = vld [vmem:[%s540 + $0x21] sm:$0xff]
      %v658 = vld [vmem:[%s540 + $0x31] sm:$0xff]
      %v659 = vld [vmem:[%s540 + $0x41] sm:$0xff]
      %v660 = vld [vmem:[%s540 + $0x51] sm:$0xff]
      %v661 = vld [vmem:[%s540 + $0x61] sm:$0xff]
      %v662 = vld [vmem:[%s540 + $0x71] sm:$0xff]
      %v663 = vpack.c.bf16 %v656, %v655
      %v664 = vpack.c.bf16 %v658, %v657
      %v665 = vpack.c.bf16 %v660, %v659
      %v666 = vpack.c.bf16 %v662, %v661
      %s667 = scalar_lea.vmem %s1, 256
      %v668 = vld [vmem:[%s667] sm:$0xf]
      %v669 = vld [vmem:[%s667 + $0x4] sm:$0xf]
      %v670 = vld [vmem:[%s667 + $0x8] sm:$0xf]
      %v671 = vld [vmem:[%s667 + $0xc] sm:$0xf]
      %v672 = vld [vmem:[%s667 + $0x10] sm:$0xf]
      %v673 = vld [vmem:[%s667 + $0x14] sm:$0xf]
      %v674 = vld [vmem:[%s667 + $0x18] sm:$0xf]
      %v675 = vld [vmem:[%s667 + $0x1c] sm:$0xf]
      %v676 = vld [vmem:[%s667 + $0x20] sm:$0xf]
      %v677 = vld [vmem:[%s667 + $0x24] sm:$0xf]
      %v678 = vld [vmem:[%s667 + $0x28] sm:$0xf]
      %v679 = vld [vmem:[%s667 + $0x2c] sm:$0xf]
      %v680 = vld [vmem:[%s667 + $0x30] sm:$0xf]
      %v681 = vld [vmem:[%s667 + $0x34] sm:$0xf]
      %v682 = vld [vmem:[%s667 + $0x38] sm:$0xf]
      %v683 = vld [vmem:[%s667 + $0x3c] sm:$0xf]
      %v700 = vunpack.c.l.b16 %v668
      %v701 = vunpack.c.l.b16 %v669
      %v702 = vunpack.c.l.b16 %v670
      %v703 = vunpack.c.l.b16 %v671
      %v704 = vunpack.c.l.b16 %v672
      %v705 = vunpack.c.l.b16 %v673
      %v706 = vunpack.c.l.b16 %v674
      %v707 = vunpack.c.l.b16 %v675
      %v708 = vunpack.c.l.b16 %v676
      %v709 = vunpack.c.l.b16 %v677
      %v710 = vunpack.c.l.b16 %v678
      %v711 = vunpack.c.l.b16 %v679
      %v712 = vunpack.c.l.b16 %v680
      %v713 = vunpack.c.l.b16 %v681
      %v714 = vunpack.c.l.b16 %v682
      %v715 = vunpack.c.l.b16 %v683
      %v716 = vpack.c.b16 %v701, %v700
      %v717 = vpack.c.b16 %v703, %v702
      %v718 = vpack.c.b16 %v705, %v704
      %v719 = vpack.c.b16 %v707, %v706
      %v720 = vpack.c.b16 %v709, %v708
      %v721 = vpack.c.b16 %v711, %v710
      %v722 = vpack.c.b16 %v713, %v712
      %v723 = vpack.c.b16 %v715, %v714
      %732 = vmatpush.bf16.msra.mxu0 %v723
      %733 = vmatpush.bf16.msra.mxu0 %v722
      %734 = vmatpush.bf16.msra.mxu0 %v721
      %735 = vmatpush.bf16.msra.mxu0 %v720
      %736 = vmatpush.bf16.msra.mxu0 %v719
      %737 = vmatpush.bf16.msra.mxu0 %v718
      %738 = vmatpush.bf16.msra.mxu0 %v717
      %739 = vmatpush.bf16.msra.mxu0 %v716
      %740 = vmatmul.bf16.gmra.mxu0 %v663
      %v741 = vpop.f32.mrf.mxu0
      %v742 = vadd.f32 0.0, %v741
      %v743 = vpop.f32.mrf.mxu0
      %v744 = vadd.f32 0.0, %v743
      %745 = vmatmul.bf16.gmra.mxu0 %v664
      %v746 = vpop.f32.mrf.mxu0
      %v747 = vadd.f32 0.0, %v746
      %v748 = vpop.f32.mrf.mxu0
      %v749 = vadd.f32 0.0, %v748
      %750 = vmatmul.bf16.gmra.mxu0 %v665
      %v751 = vpop.f32.mrf.mxu0
      %v752 = vadd.f32 0.0, %v751
      %v753 = vpop.f32.mrf.mxu0
      %v754 = vadd.f32 0.0, %v753
      %755 = vmatmul.bf16.gmra.mxu0 %v666
      %v756 = vpop.f32.mrf.mxu0
      %v757 = vadd.f32 0.0, %v756
      %v758 = vpop.f32.mrf.mxu0
      %v759 = vadd.f32 0.0, %v758
      %760 = vdwg.mxu0
      %v761 = vadd.f32 %v647, %v742
      %v762 = vadd.f32 %v648, %v744
      %v763 = vadd.f32 %v649, %v747
      %v764 = vadd.f32 %v650, %v749
      %v765 = vadd.f32 %v651, %v752
      %v766 = vadd.f32 %v652, %v754
      %v767 = vadd.f32 %v653, %v757
      %v768 = vadd.f32 %v654, %v759
      %v769 = vld [vmem:[%s540 + $0x2] sm:$0xff]
      %v770 = vld [vmem:[%s540 + $0x12] sm:$0xff]
      %v771 = vld [vmem:[%s540 + $0x22] sm:$0xff]
      %v772 = vld [vmem:[%s540 + $0x32] sm:$0xff]
      %v773 = vld [vmem:[%s540 + $0x42] sm:$0xff]
      %v774 = vld [vmem:[%s540 + $0x52] sm:$0xff]
      %v775 = vld [vmem:[%s540 + $0x62] sm:$0xff]
      %v776 = vld [vmem:[%s540 + $0x72] sm:$0xff]
      %v777 = vpack.c.bf16 %v770, %v769
      %v778 = vpack.c.bf16 %v772, %v771
      %v779 = vpack.c.bf16 %v774, %v773
      %v780 = vpack.c.bf16 %v776, %v775
      %s781 = scalar_lea.vmem %s1, 320
      %v782 = vld [vmem:[%s781] sm:$0xf]
      %v783 = vld [vmem:[%s781 + $0x4] sm:$0xf]
      %v784 = vld [vmem:[%s781 + $0x8] sm:$0xf]
      %v785 = vld [vmem:[%s781 + $0xc] sm:$0xf]
      %v786 = vld [vmem:[%s781 + $0x10] sm:$0xf]
      %v787 = vld [vmem:[%s781 + $0x14] sm:$0xf]
      %v788 = vld [vmem:[%s781 + $0x18] sm:$0xf]
      %v789 = vld [vmem:[%s781 + $0x1c] sm:$0xf]
      %v790 = vld [vmem:[%s781 + $0x20] sm:$0xf]
      %v791 = vld [vmem:[%s781 + $0x24] sm:$0xf]
      %v792 = vld [vmem:[%s781 + $0x28] sm:$0xf]
      %v793 = vld [vmem:[%s781 + $0x2c] sm:$0xf]
      %v794 = vld [vmem:[%s781 + $0x30] sm:$0xf]
      %v795 = vld [vmem:[%s781 + $0x34] sm:$0xf]
      %v796 = vld [vmem:[%s781 + $0x38] sm:$0xf]
      %v797 = vld [vmem:[%s781 + $0x3c] sm:$0xf]
      %v814 = vunpack.c.l.b16 %v782
      %v815 = vunpack.c.l.b16 %v783
      %v816 = vunpack.c.l.b16 %v784
      %v817 = vunpack.c.l.b16 %v785
      %v818 = vunpack.c.l.b16 %v786
      %v819 = vunpack.c.l.b16 %v787
      %v820 = vunpack.c.l.b16 %v788
      %v821 = vunpack.c.l.b16 %v789
      %v822 = vunpack.c.l.b16 %v790
      %v823 = vunpack.c.l.b16 %v791
      %v824 = vunpack.c.l.b16 %v792
      %v825 = vunpack.c.l.b16 %v793
      %v826 = vunpack.c.l.b16 %v794
      %v827 = vunpack.c.l.b16 %v795
      %v828 = vunpack.c.l.b16 %v796
      %v829 = vunpack.c.l.b16 %v797
      %v830 = vpack.c.b16 %v815, %v814
      %v831 = vpack.c.b16 %v817, %v816
      %v832 = vpack.c.b16 %v819, %v818
      %v833 = vpack.c.b16 %v821, %v820
      %v834 = vpack.c.b16 %v823, %v822
      %v835 = vpack.c.b16 %v825, %v824
      %v836 = vpack.c.b16 %v827, %v826
      %v837 = vpack.c.b16 %v829, %v828
      %846 = vmatpush.bf16.msra.mxu0 %v837
      %847 = vmatpush.bf16.msra.mxu0 %v836
      %848 = vmatpush.bf16.msra.mxu0 %v835
      %849 = vmatpush.bf16.msra.mxu0 %v834
      %850 = vmatpush.bf16.msra.mxu0 %v833
      %851 = vmatpush.bf16.msra.mxu0 %v832
      %852 = vmatpush.bf16.msra.mxu0 %v831
      %853 = vmatpush.bf16.msra.mxu0 %v830
      %854 = vmatmul.bf16.gmra.mxu0 %v777
      %v855 = vpop.f32.mrf.mxu0
      %v856 = vadd.f32 0.0, %v855
      %v857 = vpop.f32.mrf.mxu0
      %v858 = vadd.f32 0.0, %v857
      %859 = vmatmul.bf16.gmra.mxu0 %v778
      %v860 = vpop.f32.mrf.mxu0
      %v861 = vadd.f32 0.0, %v860
      %v862 = vpop.f32.mrf.mxu0
      %v863 = vadd.f32 0.0, %v862
      %864 = vmatmul.bf16.gmra.mxu0 %v779
      %v865 = vpop.f32.mrf.mxu0
      %v866 = vadd.f32 0.0, %v865
      %v867 = vpop.f32.mrf.mxu0
      %v868 = vadd.f32 0.0, %v867
      %869 = vmatmul.bf16.gmra.mxu0 %v780
      %v870 = vpop.f32.mrf.mxu0
      %v871 = vadd.f32 0.0, %v870
      %v872 = vpop.f32.mrf.mxu0
      %v873 = vadd.f32 0.0, %v872
      %874 = vdwg.mxu0
      %v875 = vadd.f32 %v761, %v856
      %v876 = vadd.f32 %v762, %v858
      %v877 = vadd.f32 %v763, %v861
      %v878 = vadd.f32 %v764, %v863
      %v879 = vadd.f32 %v765, %v866
      %v880 = vadd.f32 %v766, %v868
      %v881 = vadd.f32 %v767, %v871
      %v882 = vadd.f32 %v768, %v873
      %s883 = scalar_lea.vmem %s203, 32
      %v884 = vld [vmem:[%s883] sm:$0xff]
      %v885 = vld [vmem:[%s883 + $0x10] sm:$0xff]
      %v886 = vld [vmem:[%s883 + $0x20] sm:$0xff]
      %v887 = vld [vmem:[%s883 + $0x30] sm:$0xff]
      %v888 = vld [vmem:[%s883 + $0x40] sm:$0xff]
      %v889 = vld [vmem:[%s883 + $0x50] sm:$0xff]
      %v890 = vld [vmem:[%s883 + $0x60] sm:$0xff]
      %v891 = vld [vmem:[%s883 + $0x70] sm:$0xff]
      %v892 = vpack.c.bf16 %v885, %v884
      %v893 = vpack.c.bf16 %v887, %v886
      %v894 = vpack.c.bf16 %v889, %v888
      %v895 = vpack.c.bf16 %v891, %v890
      %s896 = scalar_lea.vmem %s1, 384
      %v897 = vld [vmem:[%s896] sm:$0xf]
      %v898 = vld [vmem:[%s896 + $0x4] sm:$0xf]
      %v899 = vld [vmem:[%s896 + $0x8] sm:$0xf]
      %v900 = vld [vmem:[%s896 + $0xc] sm:$0xf]
      %v901 = vld [vmem:[%s896 + $0x10] sm:$0xf]
      %v902 = vld [vmem:[%s896 + $0x14] sm:$0xf]
      %v903 = vld [vmem:[%s896 + $0x18] sm:$0xf]
      %v904 = vld [vmem:[%s896 + $0x1c] sm:$0xf]
      %v905 = vld [vmem:[%s896 + $0x20] sm:$0xf]
      %v906 = vld [vmem:[%s896 + $0x24] sm:$0xf]
      %v907 = vld [vmem:[%s896 + $0x28] sm:$0xf]
      %v908 = vld [vmem:[%s896 + $0x2c] sm:$0xf]
      %v909 = vld [vmem:[%s896 + $0x30] sm:$0xf]
      %v910 = vld [vmem:[%s896 + $0x34] sm:$0xf]
      %v911 = vld [vmem:[%s896 + $0x38] sm:$0xf]
      %v912 = vld [vmem:[%s896 + $0x3c] sm:$0xf]
      %v929 = vunpack.c.l.b16 %v897
      %v930 = vunpack.c.l.b16 %v898
      %v931 = vunpack.c.l.b16 %v899
      %v932 = vunpack.c.l.b16 %v900
      %v933 = vunpack.c.l.b16 %v901
      %v934 = vunpack.c.l.b16 %v902
      %v935 = vunpack.c.l.b16 %v903
      %v936 = vunpack.c.l.b16 %v904
      %v937 = vunpack.c.l.b16 %v905
      %v938 = vunpack.c.l.b16 %v906
      %v939 = vunpack.c.l.b16 %v907
      %v940 = vunpack.c.l.b16 %v908
      %v941 = vunpack.c.l.b16 %v909
      %v942 = vunpack.c.l.b16 %v910
      %v943 = vunpack.c.l.b16 %v911
      %v944 = vunpack.c.l.b16 %v912
      %v945 = vpack.c.b16 %v930, %v929
      %v946 = vpack.c.b16 %v932, %v931
      %v947 = vpack.c.b16 %v934, %v933
      %v948 = vpack.c.b16 %v936, %v935
      %v949 = vpack.c.b16 %v938, %v937
      %v950 = vpack.c.b16 %v940, %v939
      %v951 = vpack.c.b16 %v942, %v941
      %v952 = vpack.c.b16 %v944, %v943
      %961 = vmatpush.bf16.msra.mxu0 %v952
      %962 = vmatpush.bf16.msra.mxu0 %v951
      %963 = vmatpush.bf16.msra.mxu0 %v950
      %964 = vmatpush.bf16.msra.mxu0 %v949
      %965 = vmatpush.bf16.msra.mxu0 %v948
      %966 = vmatpush.bf16.msra.mxu0 %v947
      %967 = vmatpush.bf16.msra.mxu0 %v946
      %968 = vmatpush.bf16.msra.mxu0 %v945
      %969 = vmatmul.bf16.gmra.mxu0 %v892
      %v970 = vpop.f32.mrf.mxu0
      %v971 = vadd.f32 0.0, %v970
      %v972 = vpop.f32.mrf.mxu0
      %v973 = vadd.f32 0.0, %v972
      %974 = vmatmul.bf16.gmra.mxu0 %v893
      %v975 = vpop.f32.mrf.mxu0
      %v976 = vadd.f32 0.0, %v975
      %v977 = vpop.f32.mrf.mxu0
      %v978 = vadd.f32 0.0, %v977
      %979 = vmatmul.bf16.gmra.mxu0 %v894
      %v980 = vpop.f32.mrf.mxu0
      %v981 = vadd.f32 0.0, %v980
      %v982 = vpop.f32.mrf.mxu0
      %v983 = vadd.f32 0.0, %v982
      %984 = vmatmul.bf16.gmra.mxu0 %v895
      %v985 = vpop.f32.mrf.mxu0
      %v986 = vadd.f32 0.0, %v985
      %v987 = vpop.f32.mrf.mxu0
      %v988 = vadd.f32 0.0, %v987
      %989 = vdwg.mxu0
      %v990 = vadd.f32 %v875, %v971
      %v991 = vadd.f32 %v876, %v973
      %v992 = vadd.f32 %v877, %v976
      %v993 = vadd.f32 %v878, %v978
      %v994 = vadd.f32 %v879, %v981
      %v995 = vadd.f32 %v880, %v983
      %v996 = vadd.f32 %v881, %v986
      %v997 = vadd.f32 %v882, %v988
      %v998 = vld [vmem:[%s883 + $0x1] sm:$0xff]
      %v999 = vld [vmem:[%s883 + $0x11] sm:$0xff]
      %v1000 = vld [vmem:[%s883 + $0x21] sm:$0xff]
      %v1001 = vld [vmem:[%s883 + $0x31] sm:$0xff]
      %v1002 = vld [vmem:[%s883 + $0x41] sm:$0xff]
      %v1003 = vld [vmem:[%s883 + $0x51] sm:$0xff]
      %v1004 = vld [vmem:[%s883 + $0x61] sm:$0xff]
      %v1005 = vld [vmem:[%s883 + $0x71] sm:$0xff]
      %v1006 = vpack.c.bf16 %v999, %v998
      %v1007 = vpack.c.bf16 %v1001, %v1000
      %v1008 = vpack.c.bf16 %v1003, %v1002
      %v1009 = vpack.c.bf16 %v1005, %v1004
      %s1010 = scalar_lea.vmem %s1, 448
      %v1011 = vld [vmem:[%s1010] sm:$0xf]
      %v1012 = vld [vmem:[%s1010 + $0x4] sm:$0xf]
      %v1013 = vld [vmem:[%s1010 + $0x8] sm:$0xf]
      %v1014 = vld [vmem:[%s1010 + $0xc] sm:$0xf]
      %v1015 = vld [vmem:[%s1010 + $0x10] sm:$0xf]
      %v1016 = vld [vmem:[%s1010 + $0x14] sm:$0xf]
      %v1017 = vld [vmem:[%s1010 + $0x18] sm:$0xf]
      %v1018 = vld [vmem:[%s1010 + $0x1c] sm:$0xf]
      %v1019 = vld [vmem:[%s1010 + $0x20] sm:$0xf]
      %v1020 = vld [vmem:[%s1010 + $0x24] sm:$0xf]
      %v1021 = vld [vmem:[%s1010 + $0x28] sm:$0xf]
      %v1022 = vld [vmem:[%s1010 + $0x2c] sm:$0xf]
      %v1023 = vld [vmem:[%s1010 + $0x30] sm:$0xf]
      %v1024 = vld [vmem:[%s1010 + $0x34] sm:$0xf]
      %v1025 = vld [vmem:[%s1010 + $0x38] sm:$0xf]
      %v1026 = vld [vmem:[%s1010 + $0x3c] sm:$0xf]
      %v1043 = vunpack.c.l.b16 %v1011
      %v1044 = vunpack.c.l.b16 %v1012
      %v1045 = vunpack.c.l.b16 %v1013
      %v1046 = vunpack.c.l.b16 %v1014
      %v1047 = vunpack.c.l.b16 %v1015
      %v1048 = vunpack.c.l.b16 %v1016
      %v1049 = vunpack.c.l.b16 %v1017
      %v1050 = vunpack.c.l.b16 %v1018
      %v1051 = vunpack.c.l.b16 %v1019
      %v1052 = vunpack.c.l.b16 %v1020
      %v1053 = vunpack.c.l.b16 %v1021
      %v1054 = vunpack.c.l.b16 %v1022
      %v1055 = vunpack.c.l.b16 %v1023
      %v1056 = vunpack.c.l.b16 %v1024
      %v1057 = vunpack.c.l.b16 %v1025
      %v1058 = vunpack.c.l.b16 %v1026
      %v1059 = vpack.c.b16 %v1044, %v1043
      %v1060 = vpack.c.b16 %v1046, %v1045
      %v1061 = vpack.c.b16 %v1048, %v1047
      %v1062 = vpack.c.b16 %v1050, %v1049
      %v1063 = vpack.c.b16 %v1052, %v1051
      %v1064 = vpack.c.b16 %v1054, %v1053
      %v1065 = vpack.c.b16 %v1056, %v1055
      %v1066 = vpack.c.b16 %v1058, %v1057
      %1075 = vmatpush.bf16.msra.mxu0 %v1066
      %1076 = vmatpush.bf16.msra.mxu0 %v1065
      %1077 = vmatpush.bf16.msra.mxu0 %v1064
      %1078 = vmatpush.bf16.msra.mxu0 %v1063
      %1079 = vmatpush.bf16.msra.mxu0 %v1062
      %1080 = vmatpush.bf16.msra.mxu0 %v1061
      %1081 = vmatpush.bf16.msra.mxu0 %v1060
      %1082 = vmatpush.bf16.msra.mxu0 %v1059
      %1083 = vmatmul.bf16.gmra.mxu0 %v1006
      %v1084 = vpop.f32.mrf.mxu0
      %v1085 = vadd.f32 0.0, %v1084
      %v1086 = vpop.f32.mrf.mxu0
      %v1087 = vadd.f32 0.0, %v1086
      %1088 = vmatmul.bf16.gmra.mxu0 %v1007
      %v1089 = vpop.f32.mrf.mxu0
      %v1090 = vadd.f32 0.0, %v1089
      %v1091 = vpop.f32.mrf.mxu0
      %v1092 = vadd.f32 0.0, %v1091
      %1093 = vmatmul.bf16.gmra.mxu0 %v1008
      %v1094 = vpop.f32.mrf.mxu0
      %v1095 = vadd.f32 0.0, %v1094
      %v1096 = vpop.f32.mrf.mxu0
      %v1097 = vadd.f32 0.0, %v1096
      %1098 = vmatmul.bf16.gmra.mxu0 %v1009
      %v1099 = vpop.f32.mrf.mxu0
      %v1100 = vadd.f32 0.0, %v1099
      %v1101 = vpop.f32.mrf.mxu0
      %v1102 = vadd.f32 0.0, %v1101
      %1103 = vdwg.mxu0
      %v1104 = vadd.f32 %v990, %v1085
      %v1105 = vadd.f32 %v991, %v1087
      %v1106 = vadd.f32 %v992, %v1090
      %v1107 = vadd.f32 %v993, %v1092
      %v1108 = vadd.f32 %v994, %v1095
      %v1109 = vadd.f32 %v995, %v1097
      %v1110 = vadd.f32 %v996, %v1100
      %v1111 = vadd.f32 %v997, %v1102
      %v1112 = vld [vmem:[%s883 + $0x2] sm:$0xff]
      %v1113 = vld [vmem:[%s883 + $0x12] sm:$0xff]
      %v1114 = vld [vmem:[%s883 + $0x22] sm:$0xff]
      %v1115 = vld [vmem:[%s883 + $0x32] sm:$0xff]
      %v1116 = vld [vmem:[%s883 + $0x42] sm:$0xff]
      %v1117 = vld [vmem:[%s883 + $0x52] sm:$0xff]
      %v1118 = vld [vmem:[%s883 + $0x62] sm:$0xff]
      %v1119 = vld [vmem:[%s883 + $0x72] sm:$0xff]
      %v1120 = vpack.c.bf16 %v1113, %v1112
      %v1121 = vpack.c.bf16 %v1115, %v1114
      %v1122 = vpack.c.bf16 %v1117, %v1116
      %v1123 = vpack.c.bf16 %v1119, %v1118
      %s1124 = scalar_lea.vmem %s1, 512
      %v1125 = vld [vmem:[%s1124] sm:$0xf]
      %v1126 = vld [vmem:[%s1124 + $0x4] sm:$0xf]
      %v1127 = vld [vmem:[%s1124 + $0x8] sm:$0xf]
      %v1128 = vld [vmem:[%s1124 + $0xc] sm:$0xf]
      %v1129 = vld [vmem:[%s1124 + $0x10] sm:$0xf]
      %v1130 = vld [vmem:[%s1124 + $0x14] sm:$0xf]
      %v1131 = vld [vmem:[%s1124 + $0x18] sm:$0xf]
      %v1132 = vld [vmem:[%s1124 + $0x1c] sm:$0xf]
      %v1133 = vld [vmem:[%s1124 + $0x20] sm:$0xf]
      %v1134 = vld [vmem:[%s1124 + $0x24] sm:$0xf]
      %v1135 = vld [vmem:[%s1124 + $0x28] sm:$0xf]
      %v1136 = vld [vmem:[%s1124 + $0x2c] sm:$0xf]
      %v1137 = vld [vmem:[%s1124 + $0x30] sm:$0xf]
      %v1138 = vld [vmem:[%s1124 + $0x34] sm:$0xf]
      %v1139 = vld [vmem:[%s1124 + $0x38] sm:$0xf]
      %v1140 = vld [vmem:[%s1124 + $0x3c] sm:$0xf]
      %v1157 = vunpack.c.l.b16 %v1125
      %v1158 = vunpack.c.l.b16 %v1126
      %v1159 = vunpack.c.l.b16 %v1127
      %v1160 = vunpack.c.l.b16 %v1128
      %v1161 = vunpack.c.l.b16 %v1129
      %v1162 = vunpack.c.l.b16 %v1130
      %v1163 = vunpack.c.l.b16 %v1131
      %v1164 = vunpack.c.l.b16 %v1132
      %v1165 = vunpack.c.l.b16 %v1133
      %v1166 = vunpack.c.l.b16 %v1134
      %v1167 = vunpack.c.l.b16 %v1135
      %v1168 = vunpack.c.l.b16 %v1136
      %v1169 = vunpack.c.l.b16 %v1137
      %v1170 = vunpack.c.l.b16 %v1138
      %v1171 = vunpack.c.l.b16 %v1139
      %v1172 = vunpack.c.l.b16 %v1140
      %v1173 = vpack.c.b16 %v1158, %v1157
      %v1174 = vpack.c.b16 %v1160, %v1159
      %v1175 = vpack.c.b16 %v1162, %v1161
      %v1176 = vpack.c.b16 %v1164, %v1163
      %v1177 = vpack.c.b16 %v1166, %v1165
      %v1178 = vpack.c.b16 %v1168, %v1167
      %v1179 = vpack.c.b16 %v1170, %v1169
      %v1180 = vpack.c.b16 %v1172, %v1171
      %1189 = vmatpush.bf16.msra.mxu0 %v1180
      %1190 = vmatpush.bf16.msra.mxu0 %v1179
      %1191 = vmatpush.bf16.msra.mxu0 %v1178
      %1192 = vmatpush.bf16.msra.mxu0 %v1177
      %1193 = vmatpush.bf16.msra.mxu0 %v1176
      %1194 = vmatpush.bf16.msra.mxu0 %v1175
      %1195 = vmatpush.bf16.msra.mxu0 %v1174
      %1196 = vmatpush.bf16.msra.mxu0 %v1173
      %1197 = vmatmul.bf16.gmra.mxu0 %v1120
      %v1198 = vpop.f32.mrf.mxu0
      %v1199 = vadd.f32 0.0, %v1198
      %v1200 = vpop.f32.mrf.mxu0
      %v1201 = vadd.f32 0.0, %v1200
      %1202 = vmatmul.bf16.gmra.mxu0 %v1121
      %v1203 = vpop.f32.mrf.mxu0
      %v1204 = vadd.f32 0.0, %v1203
      %v1205 = vpop.f32.mrf.mxu0
      %v1206 = vadd.f32 0.0, %v1205
      %1207 = vmatmul.bf16.gmra.mxu0 %v1122
      %v1208 = vpop.f32.mrf.mxu0
      %v1209 = vadd.f32 0.0, %v1208
      %v1210 = vpop.f32.mrf.mxu0
      %v1211 = vadd.f32 0.0, %v1210
      %1212 = vmatmul.bf16.gmra.mxu0 %v1123
      %v1213 = vpop.f32.mrf.mxu0
      %v1214 = vadd.f32 0.0, %v1213
      %v1215 = vpop.f32.mrf.mxu0
      %v1216 = vadd.f32 0.0, %v1215
      %1217 = vdwg.mxu0
      %v1218 = vadd.f32 %v1104, %v1199
      %v1219 = vadd.f32 %v1105, %v1201
      %v1220 = vadd.f32 %v1106, %v1204
      %v1221 = vadd.f32 %v1107, %v1206
      %v1222 = vadd.f32 %v1108, %v1209
      %v1223 = vadd.f32 %v1109, %v1211
      %v1224 = vadd.f32 %v1110, %v1214
      %v1225 = vadd.f32 %v1111, %v1216
      %1226 = vst [vmem:[%s208] sm:$0xff] %v1218
      %1227 = vst [vmem:[%s208 + $0x8] sm:$0xff] %v1219
      %1228 = vst [vmem:[%s208 + $0x10] sm:$0xff] %v1220
      %1229 = vst [vmem:[%s208 + $0x18] sm:$0xff] %v1221
      %1230 = vst [vmem:[%s208 + $0x20] sm:$0xff] %v1222
      %1231 = vst [vmem:[%s208 + $0x28] sm:$0xff] %v1223
      %1232 = vst [vmem:[%s208 + $0x30] sm:$0xff] %v1224
      %1233 = vst [vmem:[%s208 + $0x38] sm:$0xff] %v1225
      %v1234 = vadd.f32 %v1218, %v1219
      %v1235 = vadd.f32 %v1234, %v1220
      %v1236 = vadd.f32 %v1235, %v1221
      %v1237 = vadd.f32 %v1236, %v1222
      %v1238 = vadd.f32 %v1237, %v1223
      %v1239 = vadd.f32 %v1238, %v1224
      %v1240 = vadd.f32 %v1239, %v1225
      %v1241 = vrot.slane %v1240, 4
      %v1242 = vadd.f32 %v1240, %v1241
      %v1243 = vrot.slane %v1242, 2
      %v1244 = vadd.f32 %v1242, %v1243
      %v1245 = vrot.slane %v1244, 1
      %v1246 = vadd.f32 %v1244, %v1245
      %1247 = vst [vmem:[%s211] sm:$0x1] %v1246
      %v1248 = vmul.f32 %v1218, %v1218
      %v1249 = vmul.f32 %v1219, %v1219
      %v1250 = vmul.f32 %v1220, %v1220
      %v1251 = vmul.f32 %v1221, %v1221
      %v1252 = vmul.f32 %v1222, %v1222
      %v1253 = vmul.f32 %v1223, %v1223
      %v1254 = vmul.f32 %v1224, %v1224
      %v1255 = vmul.f32 %v1225, %v1225
      %v1256 = vadd.f32 %v1248, %v1249
      %v1257 = vadd.f32 %v1256, %v1250
      %v1258 = vadd.f32 %v1257, %v1251
      %v1259 = vadd.f32 %v1258, %v1252
      %v1260 = vadd.f32 %v1259, %v1253
      %v1261 = vadd.f32 %v1260, %v1254
      %v1262 = vadd.f32 %v1261, %v1255
      %v1263 = vrot.slane %v1262, 4
      %v1264 = vadd.f32 %v1262, %v1263
      %v1265 = vrot.slane %v1264, 2
      %v1266 = vadd.f32 %v1264, %v1265
      %v1267 = vrot.slane %v1266, 1
      %v1268 = vadd.f32 %v1266, %v1267
      %1269 = vst [vmem:[%s214] sm:$0x1] %v1268
      %p1270 = scmp.lt.s32.totalorder %s16, 1
      %s1271 = scalar_select %p1270, %s16, 1
      %s1272 = smul.addr %s1271, 8
      %s1273 = smul.addr %s1272, 8
      %s1274 = scalar_lea.vmem %s2, %s1273
      %p1275 = scmp.lt.s32.totalorder %s16, 1
      %s1276 = scalar_select %p1275, %s16, 1
      %s1277 = scalar_lea.vmem %s3, %s1276
      %p1278 = scmp.lt.s32.totalorder %s16, 1
      %s1279 = scalar_select %p1278, %s16, 1
      %s1280 = scalar_lea.vmem %s4, %s1279
      // Predicated region
      $region29: #{_lambda_.21} parent=27 // pred_check
        %p1281 = pneg %p81
      $region30: #{_lambda_.21} parent=27 // pred_check_branch
        %1283 = sbr.rel (%p1281) target = $region32
      $region31: #{_lambda_.21} parent=27 // pred_region
        _
      $region32: #{_lambda_.21} parent=27 // pred_fallthru
        _
      // Predicated region
      $region33: #{_lambda_.21} parent=27 // pred_check
        %p1284 = pneg %p107
      $region34: #{_lambda_.21} parent=27 // pred_check_branch
        %1286 = sbr.rel (%p1284) target = $region36
      $region35: #{_lambda_.21} parent=27 // pred_region
        _
      $region36: #{_lambda_.21} parent=27 // pred_fallthru
        _
      // Predicated region
      $region37: #{_lambda_.21} parent=27 // pred_check
        %p1287 = pneg %p133
      $region38: #{_lambda_.21} parent=27 // pred_check_branch
        %1289 = sbr.rel (%p1287) target = $region40
      $region39: #{_lambda_.21} parent=27 // pred_region
        _
      $region40: #{_lambda_.21} parent=27 // pred_fallthru
        _
    $region28: #{_lambda_.21} parent=5 // pred_fallthru
      _
    %p1290 = scmp.le.s32.totalorder 2, %s11
    // Predicated region
    $region41: #{_lambda_.21} parent=5 // pred_check
      %p1291 = pneg %p1290
    $region42: #{_lambda_.21} parent=5 // pred_check_branch
      %1293 = sbr.rel (%p1291) target = $region44
    $region43: #{_lambda_.21} parent=5 // pred_region
      %s1294 = ssub.s32 %s11, 2
      // Predicated region
      $region45: #{_lambda_.21} parent=43 // pred_check
        %p1295 = pneg %p87
      $region46: #{_lambda_.21} parent=43 // pred_check_branch
        %1297 = sbr.rel (%p1295) target = $region48
      $region47: #{_lambda_.21} parent=43 // pred_region
        %p1298 = scmp.lt.s32.totalorder %s17, 1
        %s1299 = scalar_select %p1298, %s17, 1
        %s1300 = smul.addr %s1299, 8
        %s1301 = smul.addr %s1300, 8
        %s1302 = scalar_lea.vmem %s2, %s1301
      $region48: #{_lambda_.21} parent=43 // pred_fallthru
        _
      // Predicated region
      $region49: #{_lambda_.21} parent=43 // pred_check
        %p1303 = pneg %p113
      $region50: #{_lambda_.21} parent=43 // pred_check_branch
        %1305 = sbr.rel (%p1303) target = $region52
      $region51: #{_lambda_.21} parent=43 // pred_region
        %p1306 = scmp.lt.s32.totalorder %s17, 1
        %s1307 = scalar_select %p1306, %s17, 1
        %s1308 = scalar_lea.vmem %s3, %s1307
      $region52: #{_lambda_.21} parent=43 // pred_fallthru
        _
      // Predicated region
      $region53: #{_lambda_.21} parent=43 // pred_check
        %p1309 = pneg %p139
      $region54: #{_lambda_.21} parent=43 // pred_check_branch
        %1311 = sbr.rel (%p1309) target = $region56
      $region55: #{_lambda_.21} parent=43 // pred_region
        %p1312 = scmp.lt.s32.totalorder %s17, 1
        %s1313 = scalar_select %p1312, %s17, 1
        %s1314 = scalar_lea.vmem %s4, %s1313
      $region56: #{_lambda_.21} parent=43 // pred_fallthru
        _
    $region44: #{_lambda_.21} parent=5 // pred_fallthru
      _
  $region6: #{_lambda_.21} parent=0 // loop_footer
    %s15 = sadd.s32 1, %s11
  $region7: #{_lambda_.21} parent=0 // loop_footer_branch
    %10 = sbr.rel target = $region3
  $region8: #{_lambda_.21} parent=0 // loop_exit
    _

// kernel: _lambda_.25
$region0: #{_lambda_.25}
  #allocation0 [shape = 'u32[]', space=smem, size = 0x4, offset = 0x4, fixed_abs, tag = 'smem constant byte address 0x4 - core index']
  #allocation1 [shape = 'u32[72,128]{1,0:T(1,128)}', space=vmem, size = 0x9000, scoped, tag = 'internal scratch']
  %s0 = inlined_call_operand.vmem [shape: f32[2,128], index: 0, kind: input, shape index: {}]
  %s1 = inlined_call_operand.vmem [shape: f32[128,128], index: 1, kind: input, shape index: {}]
  %s2 = inlined_call_operand.vmem [shape: f32[1,128], index: 2, kind: input, shape index: {}]
  %s3 = inlined_call_operand.vmem [shape: f32[2,128], index: 3, kind: output, shape index: {}]
  %s4 = sld [smem:[#allocation0]]
  $region22: #{_lambda_.25} parent=0
    _
  %s6 = ssub.s32 1, %s4
  %s7 = scalar_select 0, %s6, %s4
  // Predicated region
  $region2: #{_lambda_.25} parent=0 // pred_check
    _
  $region3: #{_lambda_.25} parent=0 // pred_check_branch
    %9 = sbr.rel (0) target = $region5
  $region4: #{_lambda_.25} parent=0 // pred_region
    _
  $region5: #{_lambda_.25} parent=0 // pred_fallthru
    _
  // Predicated region
  $region6: #{_lambda_.25} parent=0 // pred_check
    _
  $region7: #{_lambda_.25} parent=0 // pred_check_branch
    %11 = sbr.rel (0) target = $region9
  $region8: #{_lambda_.25} parent=0 // pred_region
    _
  $region9: #{_lambda_.25} parent=0 // pred_fallthru
    _
  // Predicated region
  $region10: #{_lambda_.25} parent=0 // pred_check
    _
  $region11: #{_lambda_.25} parent=0 // pred_check_branch
    %13 = sbr.rel (0) target = $region13
  $region12: #{_lambda_.25} parent=0 // pred_region
    _
  $region13: #{_lambda_.25} parent=0 // pred_fallthru
    _
  %v14 = vld [vmem:[%s0] sm:$0x3]
  %v15 = vld [vmem:[%s1] sm:$0xff]
  %v16 = vld [vmem:[%s1 + $0x8] sm:$0xff]
  %v17 = vld [vmem:[%s1 + $0x10] sm:$0xff]
  %v18 = vld [vmem:[%s1 + $0x18] sm:$0xff]
  %v19 = vld [vmem:[%s1 + $0x20] sm:$0xff]
  %v20 = vld [vmem:[%s1 + $0x28] sm:$0xff]
  %v21 = vld [vmem:[%s1 + $0x30] sm:$0xff]
  %v22 = vld [vmem:[%s1 + $0x38] sm:$0xff]
  %v23 = vld [vmem:[%s1 + $0x40] sm:$0xff]
  %v24 = vld [vmem:[%s1 + $0x48] sm:$0xff]
  %v25 = vld [vmem:[%s1 + $0x50] sm:$0xff]
  %v26 = vld [vmem:[%s1 + $0x58] sm:$0xff]
  %v27 = vld [vmem:[%s1 + $0x60] sm:$0xff]
  %v28 = vld [vmem:[%s1 + $0x68] sm:$0xff]
  %v29 = vld [vmem:[%s1 + $0x70] sm:$0xff]
  %v30 = vld [vmem:[%s1 + $0x78] sm:$0xff]
  %v31 = vld [vmem:[%s2] sm:$0x1]
  %v33 = vperm.slane %v31, 0
  %35 = vmatpush.msra.mxu0 %v30
  %36 = vmatpush.msra.mxu0 %v29
  %37 = vmatpush.msra.mxu0 %v28
  %38 = vmatpush.msra.mxu0 %v27
  %39 = vmatpush.msra.mxu0 %v26
  %40 = vmatpush.msra.mxu0 %v25
  %41 = vmatpush.msra.mxu0 %v24
  %42 = vmatpush.msra.mxu0 %v23
  %43 = vmatpush.msra.mxu0 %v22
  %44 = vmatpush.msra.mxu0 %v21
  %45 = vmatpush.msra.mxu0 %v20
  %46 = vmatpush.msra.mxu0 %v19
  %47 = vmatpush.msra.mxu0 %v18
  %48 = vmatpush.msra.mxu0 %v17
  %49 = vmatpush.msra.mxu0 %v16
  %50 = vmatpush.msra.mxu0 %v15
  %51 = vmatmul.f32.gmra.mxu0 %v14
  %v52 = vpop.f32.mrf.mxu0
  %v53 = vadd.f32 %v33, %v52
  %54 = vdwg.mxu0
  %55 = vst [vmem:[%s3] sm:$0x3] %v53
  // Predicated region
  $region14: #{_lambda_.25} parent=0 // pred_check
    _
  $region15: #{_lambda_.25} parent=0 // pred_check_branch
    %57 = sbr.rel (0) target = $region17
  $region16: #{_lambda_.25} parent=0 // pred_region
    _
  $region17: #{_lambda_.25} parent=0 // pred_fallthru
    _
  // Predicated region
  $region18: #{_lambda_.25} parent=0 // pred_check
    _
  $region19: #{_lambda_.25} parent=0 // pred_check_branch
    %59 = sbr.rel (0) target = $region21
  $region20: #{_lambda_.25} parent=0 // pred_region
    _
  $region21: #{_lambda_.25} parent=0 // pred_fallthru
    _

// kernel: _lambda_.19
$region0: #{_lambda_.19}
  #allocation0 [shape = 'u32[]', space=smem, size = 0x4, offset = 0x4, fixed_abs, tag = 'smem constant byte address 0x4 - core index']
  #allocation1 [shape = 'u32[72,128]{1,0:T(1,128)}', space=vmem, size = 0x9000, scoped, tag = 'internal scratch']
  %s0 = inlined_call_operand.vmem [shape: f32[2,9,9,512], index: 0, kind: input, shape index: {}]
  %s1 = inlined_call_operand.vmem [shape: bf16[4,512,128], index: 1, kind: input, shape index: {}]
  %s2 = inlined_call_operand.vmem [shape: f32[2,64,128], index: 2, kind: output, shape index: {0}]
  %s3 = inlined_call_operand.vmem [shape: f32[2,1,128], index: 3, kind: output, shape index: {1}]
  %s4 = inlined_call_operand.vmem [shape: f32[2,1,128], index: 4, kind: output, shape index: {2}]
  %5 = xla_tuple %s2, %s3, %s4
  %s6 = sld [smem:[#allocation0]]
  $region57: #{_lambda_.19} parent=0
    _
  %s8 = ssub.s32 1, %s6
  %s9 = scalar_select 0, %s8, %s6
  loop: start=0, step=1, limit=4
  $region2: #{_lambda_.19} parent=0 // loop_pre_header
    _
  $region3: #{_lambda_.19} parent=0 // loop_header
    %s11 = sphi 0, %s15
    %p12 = scmp.ge.s32.totalorder %s11, 4
    %s21 = sphi 0, %s23
    %s24 = sphi 0, %s21
    %s25 = sphi 0, %s24
    %s41 = sphi 0, %s25
    %s45 = sphi 0, %s45
    %s47 = sphi 0, %s45
    %s48 = sphi 0, %s47
    %s62 = sphi 0, %s48
    %s68 = sphi 0, %s70
    %s71 = sphi 0, %s68
    %s72 = sphi 0, %s71
    %s88 = sphi 0, %s72
    %s94 = sphi 0, %s96
    %s97 = sphi 0, %s94
    %s98 = sphi 0, %s97
    %s114 = sphi 0, %s98
    %s120 = sphi 0, %s122
    %s123 = sphi 0, %s120
    %s124 = sphi 0, %s123
    %s140 = sphi 0, %s124
  $region4: #{_lambda_.19} parent=0 // loop_header_branch
    %14 = sbr.rel (%p12) target = $region8
  $region5: #{_lambda_.19} parent=0 // loop_body
    %s16 = ssub.s32 %s11, 1
    %s17 = ssub.s32 %s11, 2
    %s18 = sadd.s32 %s11, 1
    %s19 = ssub.s32 %s11, %s18
    %p20 = scmp.eq.s32.totalorder %s19, 0
    %s22 = sadd.s32 %s21, 1
    %s23 = scalar_select %p20, %s21, %s22
    %p26 = pneg %p20
    %p27 = scmp.eq.s32.totalorder %s11, 1
    %p28 = por %p26, %p27
    %p29 = scmp.ne.s32.totalorder %s21, %s24
    %p30 = scmp.eq.s32.totalorder %s11, 0
    %p31 = por %p29, %p30
    %p32 = scmp.ne.s32.totalorder %s21, %s24
    %p33 = scmp.eq.s32.totalorder %s16, 1
    %p34 = por %p32, %p33
    %p35 = scmp.ne.s32.totalorder %s24, %s25
    %p36 = scmp.eq.s32.totalorder %s16, 0
    %p37 = por %p35, %p36
    %p38 = scmp.ne.s32.totalorder %s24, %s25
    %p39 = scmp.eq.s32.totalorder %s17, 1
    %p40 = por %p38, %p39
    %p42 = scmp.ne.s32.totalorder %s25, %s41
    %p43 = scmp.eq.s32.totalorder %s17, 0
    %p44 = por %p42, %p43
    %s46 = sadd.s32 %s45, 1
    %p49 = scmp.eq.s32.totalorder %s11, 1
    %p50 = scmp.ne.s32.totalorder %s45, %s47
    %p51 = scmp.eq.s32.totalorder %s11, 0
    %p52 = por %p50, %p51
    %p53 = scmp.ne.s32.totalorder %s45, %s47
    %p54 = scmp.eq.s32.totalorder %s16, 1
    %p55 = por %p53, %p54
    %p56 = scmp.ne.s32.totalorder %s47, %s48
    %p57 = scmp.eq.s32.totalorder %s16, 0
    %p58 = por %p56, %p57
    %p59 = scmp.ne.s32.totalorder %s47, %s48
    %p60 = scmp.eq.s32.totalorder %s17, 1
    %p61 = por %p59, %p60
    %p63 = scmp.ne.s32.totalorder %s48, %s62
    %p64 = scmp.eq.s32.totalorder %s17, 0
    %p65 = por %p63, %p64
    %s66 = ssub.s32 %s11, %s18
    %p67 = scmp.eq.s32.totalorder %s66, 0
    %s69 = sadd.s32 %s68, 1
    %s70 = scalar_select %p67, %s68, %s69
    %p73 = pneg %p67
    %p74 = scmp.eq.s32.totalorder %s11, 1
    %p75 = por %p73, %p74
    %p76 = scmp.ne.s32.totalorder %s68, %s71
    %p77 = scmp.eq.s32.totalorder %s11, 0
    %p78 = por %p76, %p77
    %p79 = scmp.ne.s32.totalorder %s68, %s71
    %p80 = scmp.eq.s32.totalorder %s16, 1
    %p81 = por %p79, %p80
    %p82 = scmp.ne.s32.totalorder %s71, %s72
    %p83 = scmp.eq.s32.totalorder %s16, 0
    %p84 = por %p82, %p83
    %p85 = scmp.ne.s32.totalorder %s71, %s72
    %p86 = scmp.eq.s32.totalorder %s17, 1
    %p87 = por %p85, %p86
    %p89 = scmp.ne.s32.totalorder %s72, %s88
    %p90 = scmp.eq.s32.totalorder %s17, 0
    %p91 = por %p89, %p90
    %s92 = ssub.s32 %s11, %s18
    %p93 = scmp.eq.s32.totalorder %s92, 0
    %s95 = sadd.s32 %s94, 1
    %s96 = scalar_select %p93, %s94, %s95
    %p99 = pneg %p93
    %p100 = scmp.eq.s32.totalorder %s11, 1
    %p101 = por %p99, %p100
    %p102 = scmp.ne.s32.totalorder %s94, %s97
    %p103 = scmp.eq.s32.totalorder %s11, 0
    %p104 = por %p102, %p103
    %p105 = scmp.ne.s32.totalorder %s94, %s97
    %p106 = scmp.eq.s32.totalorder %s16, 1
    %p107 = por %p105, %p106
    %p108 = scmp.ne.s32.totalorder %s97, %s98
    %p109 = scmp.eq.s32.totalorder %s16, 0
    %p110 = por %p108, %p109
    %p111 = scmp.ne.s32.totalorder %s97, %s98
    %p112 = scmp.eq.s32.totalorder %s17, 1
    %p113 = por %p111, %p112
    %p115 = scmp.ne.s32.totalorder %s98, %s114
    %p116 = scmp.eq.s32.totalorder %s17, 0
    %p117 = por %p115, %p116
    %s118 = ssub.s32 %s11, %s18
    %p119 = scmp.eq.s32.totalorder %s118, 0
    %s121 = sadd.s32 %s120, 1
    %s122 = scalar_select %p119, %s120, %s121
    %p125 = pneg %p119
    %p126 = scmp.eq.s32.totalorder %s11, 1
    %p127 = por %p125, %p126
    %p128 = scmp.ne.s32.totalorder %s120, %s123
    %p129 = scmp.eq.s32.totalorder %s11, 0
    %p130 = por %p128, %p129
    %p131 = scmp.ne.s32.totalorder %s120, %s123
    %p132 = scmp.eq.s32.totalorder %s16, 1
    %p133 = por %p131, %p132
    %p134 = scmp.ne.s32.totalorder %s123, %s124
    %p135 = scmp.eq.s32.totalorder %s16, 0
    %p136 = por %p134, %p135
    %p137 = scmp.ne.s32.totalorder %s123, %s124
    %p138 = scmp.eq.s32.totalorder %s17, 1
    %p139 = por %p137, %p138
    %p141 = scmp.ne.s32.totalorder %s124, %s140
    %p142 = scmp.eq.s32.totalorder %s17, 0
    %p143 = por %p141, %p142
    %p144 = scmp.le.s32.totalorder 1, %s11
    %p145 = scmp.lt.s32.totalorder %s11, 3
    %p146 = pnand %p144, %p145
    %p147 = pneg %p146
    // Predicated region
    $region9: #{_lambda_.19} parent=5 // pred_check
      _
    $region10: #{_lambda_.19} parent=5 // pred_check_branch
      %149 = sbr.rel (%p146) target = $region12
    $region11: #{_lambda_.19} parent=5 // pred_region
      %s150 = ssub.s32 %s11, 1
      // Predicated region
      $region13: #{_lambda_.19} parent=11 // pred_check
        %p151 = pneg %p58
      $region14: #{_lambda_.19} parent=11 // pred_check_branch
        %153 = sbr.rel (%p151) target = $region16
      $region15: #{_lambda_.19} parent=11 // pred_region
        _
      $region16: #{_lambda_.19} parent=11 // pred_fallthru
        _
    $region12: #{_lambda_.19} parent=5 // pred_fallthru
      _
    %p154 = scmp.lt.s32.totalorder %s11, 2
    // Predicated region
    $region17: #{_lambda_.19} parent=5 // pred_check
      %p155 = pneg %p154
    $region18: #{_lambda_.19} parent=5 // pred_check_branch
      %157 = sbr.rel (%p155) target = $region20
    $region19: #{_lambda_.19} parent=5 // pred_region
      // Predicated region
      $region21: #{_lambda_.19} parent=19 // pred_check
        %p158 = pneg %p31
      $region22: #{_lambda_.19} parent=19 // pred_check_branch
        %160 = sbr.rel (%p158) target = $region24
      $region23: #{_lambda_.19} parent=19 // pred_region
        %p161 = scmp.lt.s32.totalorder %s11, 1
        %s162 = scalar_select %p161, %s11, 1
        %s163 = smul.addr %s162, 72
        %s164 = smul.addr %s163, 8
        %s165 = scalar_lea.vmem %s0, %s164
      $region24: #{_lambda_.19} parent=19 // pred_fallthru
        _
    $region20: #{_lambda_.19} parent=5 // pred_fallthru
      _
    %p166 = scmp.le.s32.totalorder 1, %s11
    %p167 = scmp.lt.s32.totalorder %s11, 3
    %p168 = pnand %p166, %p167
    %p169 = pneg %p168
    // Predicated region
    $region25: #{_lambda_.19} parent=5 // pred_check
      _
    $region26: #{_lambda_.19} parent=5 // pred_check_branch
      %171 = sbr.rel (%p168) target = $region28
    $region27: #{_lambda_.19} parent=5 // pred_region
      %s172 = ssub.s32 %s11, 1
      %p173 = scmp.lt.s32.totalorder %s16, 1
      %s174 = scalar_select %p173, %s16, 1
      %s175 = smul.addr %s174, 72
      %s176 = smul.addr %s175, 8
      %s177 = scalar_lea.vmem %s0, %s176
      %p178 = pneg %p37
      %p179 = pneg %p34
      %p180 = pneg %p58
      %p181 = pneg %p55
      %p182 = pneg %p84
      %p183 = pneg %p81
      %p184 = scmp.lt.s32.totalorder %s16, 1
      %s185 = scalar_select %p184, %s16, 1
      %s186 = smul.addr %s185, 8
      %s187 = smul.addr %s186, 8
      %s188 = scalar_lea.vmem %s2, %s187
      %p189 = pneg %p110
      %p190 = pneg %p107
      %p191 = scmp.lt.s32.totalorder %s16, 1
      %s192 = scalar_select %p191, %s16, 1
      %s193 = scalar_lea.vmem %s3, %s192
      %p194 = pneg %p136
      %p195 = pneg %p133
      %p196 = scmp.lt.s32.totalorder %s16, 1
      %s197 = scalar_select %p196, %s16, 1
      %s198 = scalar_lea.vmem %s4, %s197
      %p199 = scmp.lt.s32.totalorder %s16, 1
      %s200 = scalar_select %p199, %s16, 1
      %s201 = smul.addr %s200, 72
      %s202 = smul.addr %s201, 8
      %s203 = scalar_lea.vmem %s0, %s202
      %p204 = scmp.lt.s32.totalorder %s16, 1
      %s205 = scalar_select %p204, %s16, 1
      %s206 = smul.addr %s205, 8
      %s207 = smul.addr %s206, 8
      %s208 = scalar_lea.vmem %s2, %s207
      %p209 = scmp.lt.s32.totalorder %s16, 1
      %s210 = scalar_select %p209, %s16, 1
      %s211 = scalar_lea.vmem %s3, %s210
      %p212 = scmp.lt.s32.totalorder %s16, 1
      %s213 = scalar_select %p212, %s16, 1
      %s214 = scalar_lea.vmem %s4, %s213
      %v215 = vld [vmem:[%s203] sm:$0xff]
      %v216 = vld [vmem:[%s203 + $0x8] sm:$0xff]
      %v217 = vld [vmem:[%s203 + $0x10] sm:$0xff]
      %v218 = vld [vmem:[%s203 + $0x18] sm:$0xff]
      %v219 = vld [vmem:[%s203 + $0x40] sm:$0xff]
      %v220 = vld [vmem:[%s203 + $0x48] sm:$0xff]
      %v221 = vld [vmem:[%s203 + $0x50] sm:$0xff]
      %v222 = vld [vmem:[%s203 + $0x58] sm:$0xff]
      %v223 = vld [vmem:[%s203 + $0x80] sm:$0xff]
      %v224 = vld [vmem:[%s203 + $0x88] sm:$0xff]
      %v225 = vld [vmem:[%s203 + $0x90] sm:$0xff]
      %v226 = vld [vmem:[%s203 + $0x98] sm:$0xff]
      %v227 = vld [vmem:[%s203 + $0xc0] sm:$0xff]
      %v228 = vld [vmem:[%s203 + $0xc8] sm:$0xff]
      %v229 = vld [vmem:[%s203 + $0xd0] sm:$0xff]
      %v230 = vld [vmem:[%s203 + $0xd8] sm:$0xff]
      %v231 = vld [vmem:[%s203 + $0x100] sm:$0xff]
      %v232 = vld [vmem:[%s203 + $0x108] sm:$0xff]
      %v233 = vld [vmem:[%s203 + $0x110] sm:$0xff]
      %v234 = vld [vmem:[%s203 + $0x118] sm:$0xff]
      %v235 = vld [vmem:[%s203 + $0x140] sm:$0xff]
      %v236 = vld [vmem:[%s203 + $0x148] sm:$0xff]
      %v237 = vld [vmem:[%s203 + $0x150] sm:$0xff]
      %v238 = vld [vmem:[%s203 + $0x158] sm:$0xff]
      %v239 = vld [vmem:[%s203 + $0x180] sm:$0xff]
      %v240 = vld [vmem:[%s203 + $0x188] sm:$0xff]
      %v241 = vld [vmem:[%s203 + $0x190] sm:$0xff]
      %v242 = vld [vmem:[%s203 + $0x198] sm:$0xff]
      %v243 = vld [vmem:[%s203 + $0x1c0] sm:$0xff]
      %v244 = vld [vmem:[%s203 + $0x1c8] sm:$0xff]
      %v245 = vld [vmem:[%s203 + $0x1d0] sm:$0xff]
      %v246 = vld [vmem:[%s203 + $0x1d8] sm:$0xff]
      %v247 = vpack.c.bf16 %v219, %v215
      %v248 = vpack.c.bf16 %v220, %v216
      %v249 = vpack.c.bf16 %v221, %v217
      %v250 = vpack.c.bf16 %v222, %v218
      %v251 = vpack.c.bf16 %v227, %v223
      %v252 = vpack.c.bf16 %v228, %v224
      %v253 = vpack.c.bf16 %v229, %v225
      %v254 = vpack.c.bf16 %v230, %v226
      %v255 = vpack.c.bf16 %v235, %v231
      %v256 = vpack.c.bf16 %v236, %v232
      %v257 = vpack.c.bf16 %v237, %v233
      %v258 = vpack.c.bf16 %v238, %v234
      %v259 = vpack.c.bf16 %v243, %v239
      %v260 = vpack.c.bf16 %v244, %v240
      %v261 = vpack.c.bf16 %v245, %v241
      %v262 = vpack.c.bf16 %v246, %v242
      %v263 = vld [vmem:[%s1] sm:$0xf]
      %v264 = vld [vmem:[%s1 + $0x4] sm:$0xf]
      %v265 = vld [vmem:[%s1 + $0x8] sm:$0xf]
      %v266 = vld [vmem:[%s1 + $0xc] sm:$0xf]
      %v267 = vld [vmem:[%s1 + $0x10] sm:$0xf]
      %v268 = vld [vmem:[%s1 + $0x14] sm:$0xf]
      %v269 = vld [vmem:[%s1 + $0x18] sm:$0xf]
      %v270 = vld [vmem:[%s1 + $0x1c] sm:$0xf]
      %v271 = vld [vmem:[%s1 + $0x20] sm:$0xf]
      %v272 = vld [vmem:[%s1 + $0x24] sm:$0xf]
      %v273 = vld [vmem:[%s1 + $0x28] sm:$0xf]
      %v274 = vld [vmem:[%s1 + $0x2c] sm:$0xf]
      %v275 = vld [vmem:[%s1 + $0x30] sm:$0xf]
      %v276 = vld [vmem:[%s1 + $0x34] sm:$0xf]
      %v277 = vld [vmem:[%s1 + $0x38] sm:$0xf]
      %v278 = vld [vmem:[%s1 + $0x3c] sm:$0xf]
      %v279 = vld [vmem:[%s1 + $0x40] sm:$0xf]
      %v280 = vld [vmem:[%s1 + $0x44] sm:$0xf]
      %v281 = vld [vmem:[%s1 + $0x48] sm:$0xf]
      %v282 = vld [vmem:[%s1 + $0x4c] sm:$0xf]
      %v283 = vld [vmem:[%s1 + $0x50] sm:$0xf]
      %v284 = vld [vmem:[%s1 + $0x54] sm:$0xf]
      %v285 = vld [vmem:[%s1 + $0x58] sm:$0xf]
      %v286 = vld [vmem:[%s1 + $0x5c] sm:$0xf]
      %v287 = vld [vmem:[%s1 + $0x60] sm:$0xf]
      %v288 = vld [vmem:[%s1 + $0x64] sm:$0xf]
      %v289 = vld [vmem:[%s1 + $0x68] sm:$0xf]
      %v290 = vld [vmem:[%s1 + $0x6c] sm:$0xf]
      %v291 = vld [vmem:[%s1 + $0x70] sm:$0xf]
      %v292 = vld [vmem:[%s1 + $0x74] sm:$0xf]
      %v293 = vld [vmem:[%s1 + $0x78] sm:$0xf]
      %v294 = vld [vmem:[%s1 + $0x7c] sm:$0xf]
      %v295 = vld [vmem:[%s1 + $0x80] sm:$0xf]
      %v296 = vld [vmem:[%s1 + $0x84] sm:$0xf]
      %v297 = vld [vmem:[%s1 + $0x88] sm:$0xf]
      %v298 = vld [vmem:[%s1 + $0x8c] sm:$0xf]
      %v299 = vld [vmem:[%s1 + $0x90] sm:$0xf]
      %v300 = vld [vmem:[%s1 + $0x94] sm:$0xf]
      %v301 = vld [vmem:[%s1 + $0x98] sm:$0xf]
      %v302 = vld [vmem:[%s1 + $0x9c] sm:$0xf]
      %v303 = vld [vmem:[%s1 + $0xa0] sm:$0xf]
      %v304 = vld [vmem:[%s1 + $0xa4] sm:$0xf]
      %v305 = vld [vmem:[%s1 + $0xa8] sm:$0xf]
      %v306 = vld [vmem:[%s1 + $0xac] sm:$0xf]
      %v307 = vld [vmem:[%s1 + $0xb0] sm:$0xf]
      %v308 = vld [vmem:[%s1 + $0xb4] sm:$0xf]
      %v309 = vld [vmem:[%s1 + $0xb8] sm:$0xf]
      %v310 = vld [vmem:[%s1 + $0xbc] sm:$0xf]
      %v311 = vld [vmem:[%s1 + $0xc0] sm:$0xf]
      %v312 = vld [vmem:[%s1 + $0xc4] sm:$0xf]
      %v313 = vld [vmem:[%s1 + $0xc8] sm:$0xf]
      %v314 = vld [vmem:[%s1 + $0xcc] sm:$0xf]
      %v315 = vld [vmem:[%s1 + $0xd0] sm:$0xf]
      %v316 = vld [vmem:[%s1 + $0xd4] sm:$0xf]
      %v317 = vld [vmem:[%s1 + $0xd8] sm:$0xf]
      %v318 = vld [vmem:[%s1 + $0xdc] sm:$0xf]
      %v319 = vld [vmem:[%s1 + $0xe0] sm:$0xf]
      %v320 = vld [vmem:[%s1 + $0xe4] sm:$0xf]
      %v321 = vld [vmem:[%s1 + $0xe8] sm:$0xf]
      %v322 = vld [vmem:[%s1 + $0xec] sm:$0xf]
      %v323 = vld [vmem:[%s1 + $0xf0] sm:$0xf]
      %v324 = vld [vmem:[%s1 + $0xf4] sm:$0xf]
      %v325 = vld [vmem:[%s1 + $0xf8] sm:$0xf]
      %v326 = vld [vmem:[%s1 + $0xfc] sm:$0xf]
      %v327 = vld [vmem:[%s203] sm:$0xfe]
      %v328 = vld [vmem:[%s203 + $0x8] sm:$0xfe]
      %v329 = vld [vmem:[%s203 + $0x10] sm:$0xfe]
      %v330 = vld [vmem:[%s203 + $0x18] sm:$0xfe]
      %v331 = vld [vmem:[%s203 + $0x20] sm:$0x1]
      %v332 = vld [vmem:[%s203 + $0x28] sm:$0x1]
      %v333 = vld [vmem:[%s203 + $0x30] sm:$0x1]
      %v334 = vld [vmem:[%s203 + $0x38] sm:$0x1]
      %v335 = vld [vmem:[%s203 + $0x40] sm:$0xfe]
      %v336 = vld [vmem:[%s203 + $0x48] sm:$0xfe]
      %v337 = vld [vmem:[%s203 + $0x50] sm:$0xfe]
      %v338 = vld [vmem:[%s203 + $0x58] sm:$0xfe]
      %v339 = vld [vmem:[%s203 + $0x60] sm:$0x1]
      %v340 = vld [vmem:[%s203 + $0x68] sm:$0x1]
      %v341 = vld [vmem:[%s203 + $0x70] sm:$0x1]
      %v342 = vld [vmem:[%s203 + $0x78] sm:$0x1]
      %v343 = vld [vmem:[%s203 + $0x80] sm:$0xfe]
      %v344 = vld [vmem:[%s203 + $0x88] sm:$0xfe]
      %v345 = vld [vmem:[%s203 + $0x90] sm:$0xfe]
      %v346 = vld [vmem:[%s203 + $0x98] sm:$0xfe]
      %v347 = vld [vmem:[%s203 + $0xa0] sm:$0x1]
      %v348 = vld [vmem:[%s203 + $0xa8] sm:$0x1]
      %v349 = vld [vmem:[%s203 + $0xb0] sm:$0x1]
      %v350 = vld [vmem:[%s203 + $0xb8] sm:$0x1]
      %v351 = vld [vmem:[%s203 + $0xc0] sm:$0xfe]
      %v352 = vld [vmem:[%s203 + $0xc8] sm:$0xfe]
      %v353 = vld [vmem:[%s203 + $0xd0] sm:$0xfe]
      %v354 = vld [vmem:[%s203 + $0xd8] sm:$0xfe]
      %v355 = vld [vmem:[%s203 + $0xe0] sm:$0x1]
      %v356 = vld [vmem:[%s203 + $0xe8] sm:$0x1]
      %v357 = vld [vmem:[%s203 + $0xf0] sm:$0x1]
      %v358 = vld [vmem:[%s203 + $0xf8] sm:$0x1]
      %v359 = vld [vmem:[%s203 + $0x100] sm:$0xfe]
      %v360 = vld [vmem:[%s203 + $0x108] sm:$0xfe]
      %v361 = vld [vmem:[%s203 + $0x110] sm:$0xfe]
      %v362 = vld [vmem:[%s203 + $0x118] sm:$0xfe]
      %v363 = vld [vmem:[%s203 + $0x120] sm:$0x1]
      %v364 = vld [vmem:[%s203 + $0x128] sm:$0x1]
      %v365 = vld [vmem:[%s203 + $0x130] sm:$0x1]
      %v366 = vld [vmem:[%s203 + $0x138] sm:$0x1]
      %v367 = vld [vmem:[%s203 + $0x140] sm:$0xfe]
      %v368 = vld [vmem:[%s203 + $0x148] sm:$0xfe]
      %v369 = vld [vmem:[%s203 + $0x150] sm:$0xfe]
      %v370 = vld [vmem:[%s203 + $0x158] sm:$0xfe]
      %v371 = vld [vmem:[%s203 + $0x160] sm:$0x1]
      %v372 = vld [vmem:[%s203 + $0x168] sm:$0x1]
      %v373 = vld [vmem:[%s203 + $0x170] sm:$0x1]
      %v374 = vld [vmem:[%s203 + $0x178] sm:$0x1]
      %v375 = vld [vmem:[%s203 + $0x180] sm:$0xfe]
      %v376 = vld [vmem:[%s203 + $0x188] sm:$0xfe]
      %v377 = vld [vmem:[%s203 + $0x190] sm:$0xfe]
      %v378 = vld [vmem:[%s203 + $0x198] sm:$0xfe]
      %v379 = vld [vmem:[%s203 + $0x1a0] sm:$0x1]
      %v380 = vld [vmem:[%s203 + $0x1a8] sm:$0x1]
      %v381 = vld [vmem:[%s203 + $0x1b0] sm:$0x1]
      %v382 = vld [vmem:[%s203 + $0x1b8] sm:$0x1]
      %v383 = vld [vmem:[%s203 + $0x1c0] sm:$0xfe]
      %v384 = vld [vmem:[%s203 + $0x1c8] sm:$0xfe]
      %v385 = vld [vmem:[%s203 + $0x1d0] sm:$0xfe]
      %v386 = vld [vmem:[%s203 + $0x1d8] sm:$0xfe]
      %v387 = vld [vmem:[%s203 + $0x1e0] sm:$0x1]
      %v388 = vld [vmem:[%s203 + $0x1e8] sm:$0x1]
      %v389 = vld [vmem:[%s203 + $0x1f0] sm:$0x1]
      %v390 = vld [vmem:[%s203 + $0x1f8] sm:$0x1]
      %vm455 = vcmask 1046528
      %v456 = vrot.slane %v327, 1
      %v457 = vrot.slane %v331, 1
      %v458 = vsel %vm455, %v456, %v457
      %v459 = vrot.slane %v328, 1
      %v460 = vrot.slane %v332, 1
      %v461 = vsel %vm455, %v459, %v460
      %v462 = vrot.slane %v329, 1
      %v463 = vrot.slane %v333, 1
      %v464 = vsel %vm455, %v462, %v463
      %v465 = vrot.slane %v330, 1
      %v466 = vrot.slane %v334, 1
      %v467 = vsel %vm455, %v465, %v466
      %v468 = vrot.slane %v335, 1
      %v469 = vrot.slane %v339, 1
      %v470 = vsel %vm455, %v468, %v469
      %v471 = vrot.slane %v336, 1
      %v472 = vrot.slane %v340, 1
      %v473 = vsel %vm455, %v471, %v472
      %v474 = vrot.slane %v337, 1
      %v475 = vrot.slane %v341, 1
      %v476 = vsel %vm455, %v474, %v475
      %v477 = vrot.slane %v338, 1
      %v478 = vrot.slane %v342, 1
      %v479 = vsel %vm455, %v477, %v478
      %v480 = vrot.slane %v343, 1
      %v481 = vrot.slane %v347, 1
      %v482 = vsel %vm455, %v480, %v481
      %v483 = vrot.slane %v344, 1
      %v484 = vrot.slane %v348, 1
      %v485 = vsel %vm455, %v483, %v484
      %v486 = vrot.slane %v345, 1
      %v487 = vrot.slane %v349, 1
      %v488 = vsel %vm455, %v486, %v487
      %v489 = vrot.slane %v346, 1
      %v490 = vrot.slane %v350, 1
      %v491 = vsel %vm455, %v489, %v490
      %v492 = vrot.slane %v351, 1
      %v493 = vrot.slane %v355, 1
      %v494 = vsel %vm455, %v492, %v493
      %v495 = vrot.slane %v352, 1
      %v496 = vrot.slane %v356, 1
      %v497 = vsel %vm455, %v495, %v496
      %v498 = vrot.slane %v353, 1
      %v499 = vrot.slane %v357, 1
      %v500 = vsel %vm455, %v498, %v499
      %v501 = vrot.slane %v354, 1
      %v502 = vrot.slane %v358, 1
      %v503 = vsel %vm455, %v501, %v502
      %v504 = vrot.slane %v359, 1
      %v505 = vrot.slane %v363, 1
      %v506 = vsel %vm455, %v504, %v505
      %v507 = vrot.slane %v360, 1
      %v508 = vrot.slane %v364, 1
      %v509 = vsel %vm455, %v507, %v508
      %v510 = vrot.slane %v361, 1
      %v511 = vrot.slane %v365, 1
      %v512 = vsel %vm455, %v510, %v511
      %v513 = vrot.slane %v362, 1
      %v514 = vrot.slane %v366, 1
      %v515 = vsel %vm455, %v513, %v514
      %v516 = vrot.slane %v367, 1
      %v517 = vrot.slane %v371, 1
      %v518 = vsel %vm455, %v516, %v517
      %v519 = vrot.slane %v368, 1
      %v520 = vrot.slane %v372, 1
      %v521 = vsel %vm455, %v519, %v520
      %v522 = vrot.slane %v369, 1
      %v523 = vrot.slane %v373, 1
      %v524 = vsel %vm455, %v522, %v523
      %v525 = vrot.slane %v370, 1
      %v526 = vrot.slane %v374, 1
      %v527 = vsel %vm455, %v525, %v526
      %v528 = vrot.slane %v375, 1
      %v529 = vrot.slane %v379, 1
      %v530 = vsel %vm455, %v528, %v529
      %v531 = vrot.slane %v376, 1
      %v532 = vrot.slane %v380, 1
      %v533 = vsel %vm455, %v531, %v532
      %v534 = vrot.slane %v377, 1
      %v535 = vrot.slane %v381, 1
      %v536 = vsel %vm455, %v534, %v535
      %v537 = vrot.slane %v378, 1
      %v538 = vrot.slane %v382, 1
      %v539 = vsel %vm455, %v537, %v538
      %v540 = vrot.slane %v383, 1
      %v541 = vrot.slane %v387, 1
      %v542 = vsel %vm455, %v540, %v541
      %v543 = vrot.slane %v384, 1
      %v544 = vrot.slane %v388, 1
      %v545 = vsel %vm455, %v543, %v544
      %v546 = vrot.slane %v385, 1
      %v547 = vrot.slane %v389, 1
      %v548 = vsel %vm455, %v546, %v547
      %v549 = vrot.slane %v386, 1
      %v550 = vrot.slane %v390, 1
      %v551 = vsel %vm455, %v549, %v550
      %v584 = vpack.c.bf16 %v470, %v458
      %v585 = vpack.c.bf16 %v473, %v461
      %v586 = vpack.c.bf16 %v476, %v464
      %v587 = vpack.c.bf16 %v479, %v467
      %v588 = vpack.c.bf16 %v494, %v482
      %v589 = vpack.c.bf16 %v497, %v485
      %v590 = vpack.c.bf16 %v500, %v488
      %v591 = vpack.c.bf16 %v503, %v491
      %v592 = vpack.c.bf16 %v518, %v506
      %v593 = vpack.c.bf16 %v521, %v509
      %v594 = vpack.c.bf16 %v524, %v512
      %v595 = vpack.c.bf16 %v527, %v515
      %v596 = vpack.c.bf16 %v542, %v530
      %v597 = vpack.c.bf16 %v545, %v533
      %v598 = vpack.c.bf16 %v548, %v536
      %v599 = vpack.c.bf16 %v551, %v539
      %s600 = scalar_lea.vmem %s1, 256
      %v601 = vld [vmem:[%s600] sm:$0xf]
      %v602 = vld [vmem:[%s600 + $0x4] sm:$0xf]
      %v603 = vld [vmem:[%s600 + $0x8] sm:$0xf]
      %v604 = vld [vmem:[%s600 + $0xc] sm:$0xf]
      %v605 = vld [vmem:[%s600 + $0x10] sm:$0xf]
      %v606 = vld [vmem:[%s600 + $0x14] sm:$0xf]
      %v607 = vld [vmem:[%s600 + $0x18] sm:$0xf]
      %v608 = vld [vmem:[%s600 + $0x1c] sm:$0xf]
      %v609 = vld [vmem:[%s600 + $0x20] sm:$0xf]
      %v610 = vld [vmem:[%s600 + $0x24] sm:$0xf]
      %v611 = vld [vmem:[%s600 + $0x28] sm:$0xf]
      %v612 = vld [vmem:[%s600 + $0x2c] sm:$0xf]
      %v613 = vld [vmem:[%s600 + $0x30] sm:$0xf]
      %v614 = vld [vmem:[%s600 + $0x34] sm:$0xf]
      %v615 = vld [vmem:[%s600 + $0x38] sm:$0xf]
      %v616 = vld [vmem:[%s600 + $0x3c] sm:$0xf]
      %v617 = vld [vmem:[%s600 + $0x40] sm:$0xf]
      %v618 = vld [vmem:[%s600 + $0x44] sm:$0xf]
      %v619 = vld [vmem:[%s600 + $0x48] sm:$0xf]
      %v620 = vld [vmem:[%s600 + $0x4c] sm:$0xf]
      %v621 = vld [vmem:[%s600 + $0x50] sm:$0xf]
      %v622 = vld [vmem:[%s600 + $0x54] sm:$0xf]
      %v623 = vld [vmem:[%s600 + $0x58] sm:$0xf]
      %v624 = vld [vmem:[%s600 + $0x5c] sm:$0xf]
      %v625 = vld [vmem:[%s600 + $0x60] sm:$0xf]
      %v626 = vld [vmem:[%s600 + $0x64] sm:$0xf]
      %v627 = vld [vmem:[%s600 + $0x68] sm:$0xf]
      %v628 = vld [vmem:[%s600 + $0x6c] sm:$0xf]
      %v629 = vld [vmem:[%s600 + $0x70] sm:$0xf]
      %v630 = vld [vmem:[%s600 + $0x74] sm:$0xf]
      %v631 = vld [vmem:[%s600 + $0x78] sm:$0xf]
      %v632 = vld [vmem:[%s600 + $0x7c] sm:$0xf]
      %v633 = vld [vmem:[%s600 + $0x80] sm:$0xf]
      %v634 = vld [vmem:[%s600 + $0x84] sm:$0xf]
      %v635 = vld [vmem:[%s600 + $0x88] sm:$0xf]
      %v636 = vld [vmem:[%s600 + $0x8c] sm:$0xf]
      %v637 = vld [vmem:[%s600 + $0x90] sm:$0xf]
      %v638 = vld [vmem:[%s600 + $0x94] sm:$0xf]
      %v639 = vld [vmem:[%s600 + $0x98] sm:$0xf]
      %v640 = vld [vmem:[%s600 + $0x9c] sm:$0xf]
      %v641 = vld [vmem:[%s600 + $0xa0] sm:$0xf]
      %v642 = vld [vmem:[%s600 + $0xa4] sm:$0xf]
      %v643 = vld [vmem:[%s600 + $0xa8] sm:$0xf]
      %v644 = vld [vmem:[%s600 + $0xac] sm:$0xf]
      %v645 = vld [vmem:[%s600 + $0xb0] sm:$0xf]
      %v646 = vld [vmem:[%s600 + $0xb4] sm:$0xf]
      %v647 = vld [vmem:[%s600 + $0xb8] sm:$0xf]
      %v648 = vld [vmem:[%s600 + $0xbc] sm:$0xf]
      %v649 = vld [vmem:[%s600 + $0xc0] sm:$0xf]
      %v650 = vld [vmem:[%s600 + $0xc4] sm:$0xf]
      %v651 = vld [vmem:[%s600 + $0xc8] sm:$0xf]
      %v652 = vld [vmem:[%s600 + $0xcc] sm:$0xf]
      %v653 = vld [vmem:[%s600 + $0xd0] sm:$0xf]
      %v654 = vld [vmem:[%s600 + $0xd4] sm:$0xf]
      %v655 = vld [vmem:[%s600 + $0xd8] sm:$0xf]
      %v656 = vld [vmem:[%s600 + $0xdc] sm:$0xf]
      %v657 = vld [vmem:[%s600 + $0xe0] sm:$0xf]
      %v658 = vld [vmem:[%s600 + $0xe4] sm:$0xf]
      %v659 = vld [vmem:[%s600 + $0xe8] sm:$0xf]
      %v660 = vld [vmem:[%s600 + $0xec] sm:$0xf]
      %v661 = vld [vmem:[%s600 + $0xf0] sm:$0xf]
      %v662 = vld [vmem:[%s600 + $0xf4] sm:$0xf]
      %v663 = vld [vmem:[%s600 + $0xf8] sm:$0xf]
      %v664 = vld [vmem:[%s600 + $0xfc] sm:$0xf]
      %v729 = vunpack.c.l.b16 %v601
      %v730 = vunpack.c.l.b16 %v602
      %v731 = vunpack.c.l.b16 %v603
      %v732 = vunpack.c.l.b16 %v604
      %v733 = vunpack.c.l.b16 %v605
      %v734 = vunpack.c.l.b16 %v606
      %v735 = vunpack.c.l.b16 %v607
      %v736 = vunpack.c.l.b16 %v608
      %v737 = vunpack.c.l.b16 %v609
      %v738 = vunpack.c.l.b16 %v610
      %v739 = vunpack.c.l.b16 %v611
      %v740 = vunpack.c.l.b16 %v612
      %v741 = vunpack.c.l.b16 %v613
      %v742 = vunpack.c.l.b16 %v614
      %v743 = vunpack.c.l.b16 %v615
      %v744 = vunpack.c.l.b16 %v616
      %v745 = vunpack.c.l.b16 %v617
      %v746 = vunpack.c.l.b16 %v618
      %v747 = vunpack.c.l.b16 %v619
      %v748 = vunpack.c.l.b16 %v620
      %v749 = vunpack.c.l.b16 %v621
      %v750 = vunpack.c.l.b16 %v622
      %v751 = vunpack.c.l.b16 %v623
      %v752 = vunpack.c.l.b16 %v624
      %v753 = vunpack.c.l.b16 %v625
      %v754 = vunpack.c.l.b16 %v626
      %v755 = vunpack.c.l.b16 %v627
      %v756 = vunpack.c.l.b16 %v628
      %v757 = vunpack.c.l.b16 %v629
      %v758 = vunpack.c.l.b16 %v630
      %v759 = vunpack.c.l.b16 %v631
      %v760 = vunpack.c.l.b16 %v632
      %v761 = vunpack.c.l.b16 %v633
      %v762 = vunpack.c.l.b16 %v634
      %v763 = vunpack.c.l.b16 %v635
      %v764 = vunpack.c.l.b16 %v636
      %v765 = vunpack.c.l.b16 %v637
      %v766 = vunpack.c.l.b16 %v638
      %v767 = vunpack.c.l.b16 %v639
      %v768 = vunpack.c.l.b16 %v640
      %v769 = vunpack.c.l.b16 %v641
      %v770 = vunpack.c.l.b16 %v642
      %v771 = vunpack.c.l.b16 %v643
      %v772 = vunpack.c.l.b16 %v644
      %v773 = vunpack.c.l.b16 %v645
      %v774 = vunpack.c.l.b16 %v646
      %v775 = vunpack.c.l.b16 %v647
      %v776 = vunpack.c.l.b16 %v648
      %v777 = vunpack.c.l.b16 %v649
      %v778 = vunpack.c.l.b16 %v650
      %v779 = vunpack.c.l.b16 %v651
      %v780 = vunpack.c.l.b16 %v652
      %v781 = vunpack.c.l.b16 %v653
      %v782 = vunpack.c.l.b16 %v654
      %v783 = vunpack.c.l.b16 %v655
      %v784 = vunpack.c.l.b16 %v656
      %v785 = vunpack.c.l.b16 %v657
      %v786 = vunpack.c.l.b16 %v658
      %v787 = vunpack.c.l.b16 %v659
      %v788 = vunpack.c.l.b16 %v660
      %v789 = vunpack.c.l.b16 %v661
      %v790 = vunpack.c.l.b16 %v662
      %v791 = vunpack.c.l.b16 %v663
      %v792 = vunpack.c.l.b16 %v664
      %v793 = vpack.c.b16 %v730, %v729
      %v794 = vpack.c.b16 %v732, %v731
      %v795 = vpack.c.b16 %v734, %v733
      %v796 = vpack.c.b16 %v736, %v735
      %v797 = vpack.c.b16 %v738, %v737
      %v798 = vpack.c.b16 %v740, %v739
      %v799 = vpack.c.b16 %v742, %v741
      %v800 = vpack.c.b16 %v744, %v743
      %v801 = vpack.c.b16 %v746, %v745
      %v802 = vpack.c.b16 %v748, %v747
      %v803 = vpack.c.b16 %v750, %v749
      %v804 = vpack.c.b16 %v752, %v751
      %v805 = vpack.c.b16 %v754, %v753
      %v806 = vpack.c.b16 %v756, %v755
      %v807 = vpack.c.b16 %v758, %v757
      %v808 = vpack.c.b16 %v760, %v759
      %v809 = vpack.c.b16 %v762, %v761
      %v810 = vpack.c.b16 %v764, %v763
      %v811 = vpack.c.b16 %v766, %v765
      %v812 = vpack.c.b16 %v768, %v767
      %v813 = vpack.c.b16 %v770, %v769
      %v814 = vpack.c.b16 %v772, %v771
      %v815 = vpack.c.b16 %v774, %v773
      %v816 = vpack.c.b16 %v776, %v775
      %v817 = vpack.c.b16 %v778, %v777
      %v818 = vpack.c.b16 %v780, %v779
      %v819 = vpack.c.b16 %v782, %v781
      %v820 = vpack.c.b16 %v784, %v783
      %v821 = vpack.c.b16 %v786, %v785
      %v822 = vpack.c.b16 %v788, %v787
      %v823 = vpack.c.b16 %v790, %v789
      %v824 = vpack.c.b16 %v792, %v791
      %857 = vmatpush.bf16.msra.mxu0 %v800
      %858 = vmatpush.bf16.msra.mxu0 %v799
      %859 = vmatpush.bf16.msra.mxu0 %v798
      %860 = vmatpush.bf16.msra.mxu0 %v797
      %861 = vmatpush.bf16.msra.mxu0 %v796
      %862 = vmatpush.bf16.msra.mxu0 %v795
      %863 = vmatpush.bf16.msra.mxu0 %v794
      %864 = vmatpush.bf16.msra.mxu0 %v793
      %865 = vmatmul.bf16.gmra.mxu0 %v584
      %v866 = vpop.f32.mrf.mxu0
      %v867 = vadd.f32 0.0, %v866
      %v868 = vpop.f32.mrf.mxu0
      %v869 = vadd.f32 0.0, %v868
      %870 = vmatmul.bf16.gmra.mxu0 %v588
      %v871 = vpop.f32.mrf.mxu0
      %v872 = vadd.f32 0.0, %v871
      %v873 = vpop.f32.mrf.mxu0
      %v874 = vadd.f32 0.0, %v873
      %875 = vmatmul.bf16.gmra.mxu0 %v592
      %v876 = vpop.f32.mrf.mxu0
      %v877 = vadd.f32 0.0, %v876
      %v878 = vpop.f32.mrf.mxu0
      %v879 = vadd.f32 0.0, %v878
      %880 = vmatmul.bf16.gmra.mxu0 %v596
      %v881 = vpop.f32.mrf.mxu0
      %v882 = vadd.f32 0.0, %v881
      %v883 = vpop.f32.mrf.mxu0
      %v884 = vadd.f32 0.0, %v883
      %885 = vdwg.mxu0
      %886 = vmatpush.bf16.msra.mxu0 %v808
      %887 = vmatpush.bf16.msra.mxu0 %v807
      %888 = vmatpush.bf16.msra.mxu0 %v806
      %889 = vmatpush.bf16.msra.mxu0 %v805
      %890 = vmatpush.bf16.msra.mxu0 %v804
      %891 = vmatpush.bf16.msra.mxu0 %v803
      %892 = vmatpush.bf16.msra.mxu0 %v802
      %893 = vmatpush.bf16.msra.mxu0 %v801
      %894 = vmatmul.bf16.gmra.mxu0 %v585
      %v895 = vpop.f32.mrf.mxu0
      %v896 = vadd.f32 %v867, %v895
      %v897 = vpop.f32.mrf.mxu0
      %v898 = vadd.f32 %v869, %v897
      %899 = vmatmul.bf16.gmra.mxu0 %v589
      %v900 = vpop.f32.mrf.mxu0
      %v901 = vadd.f32 %v872, %v900
      %v902 = vpop.f32.mrf.mxu0
      %v903 = vadd.f32 %v874, %v902
      %904 = vmatmul.bf16.gmra.mxu0 %v593
      %v905 = vpop.f32.mrf.mxu0
      %v906 = vadd.f32 %v877, %v905
      %v907 = vpop.f32.mrf.mxu0
      %v908 = vadd.f32 %v879, %v907
      %909 = vmatmul.bf16.gmra.mxu0 %v597
      %v910 = vpop.f32.mrf.mxu0
      %v911 = vadd.f32 %v882, %v910
      %v912 = vpop.f32.mrf.mxu0
      %v913 = vadd.f32 %v884, %v912
      %914 = vdwg.mxu0
      %915 = vmatpush.bf16.msra.mxu0 %v816
      %916 = vmatpush.bf16.msra.mxu0 %v815
      %917 = vmatpush.bf16.msra.mxu0 %v814
      %918 = vmatpush.bf16.msra.mxu0 %v813
      %919 = vmatpush.bf16.msra.mxu0 %v812
      %920 = vmatpush.bf16.msra.mxu0 %v811
      %921 = vmatpush.bf16.msra.mxu0 %v810
      %922 = vmatpush.bf16.msra.mxu0 %v809
      %923 = vmatmul.bf16.gmra.mxu0 %v586
      %v924 = vpop.f32.mrf.mxu0
      %v925 = vadd.f32 %v896, %v924
      %v926 = vpop.f32.mrf.mxu0
      %v927 = vadd.f32 %v898, %v926
      %928 = vmatmul.bf16.gmra.mxu0 %v590
      %v929 = vpop.f32.mrf.mxu0
      %v930 = vadd.f32 %v901, %v929
      %v931 = vpop.f32.mrf.mxu0
      %v932 = vadd.f32 %v903, %v931
      %933 = vmatmul.bf16.gmra.mxu0 %v594
      %v934 = vpop.f32.mrf.mxu0
      %v935 = vadd.f32 %v906, %v934
      %v936 = vpop.f32.mrf.mxu0
      %v937 = vadd.f32 %v908, %v936
      %938 = vmatmul.bf16.gmra.mxu0 %v598
      %v939 = vpop.f32.mrf.mxu0
      %v940 = vadd.f32 %v911, %v939
      %v941 = vpop.f32.mrf.mxu0
      %v942 = vadd.f32 %v913, %v941
      %943 = vdwg.mxu0
      %944 = vmatpush.bf16.msra.mxu0 %v824
      %945 = vmatpush.bf16.msra.mxu0 %v823
      %946 = vmatpush.bf16.msra.mxu0 %v822
      %947 = vmatpush.bf16.msra.mxu0 %v821
      %948 = vmatpush.bf16.msra.mxu0 %v820
      %949 = vmatpush.bf16.msra.mxu0 %v819
      %950 = vmatpush.bf16.msra.mxu0 %v818
      %951 = vmatpush.bf16.msra.mxu0 %v817
      %952 = vmatmul.bf16.gmra.mxu0 %v587
      %v953 = vpop.f32.mrf.mxu0
      %v954 = vadd.f32 %v925, %v953
      %v955 = vpop.f32.mrf.mxu0
      %v956 = vadd.f32 %v927, %v955
      %957 = vmatmul.bf16.gmra.mxu0 %v591
      %v958 = vpop.f32.mrf.mxu0
      %v959 = vadd.f32 %v930, %v958
      %v960 = vpop.f32.mrf.mxu0
      %v961 = vadd.f32 %v932, %v960
      %962 = vmatmul.bf16.gmra.mxu0 %v595
      %v963 = vpop.f32.mrf.mxu0
      %v964 = vadd.f32 %v935, %v963
      %v965 = vpop.f32.mrf.mxu0
      %v966 = vadd.f32 %v937, %v965
      %967 = vmatmul.bf16.gmra.mxu0 %v599
      %v968 = vpop.f32.mrf.mxu0
      %v969 = vadd.f32 %v940, %v968
      %v970 = vpop.f32.mrf.mxu0
      %v971 = vadd.f32 %v942, %v970
      %972 = vdwg.mxu0
      %v1037 = vunpack.c.l.b16 %v263
      %v1038 = vunpack.c.l.b16 %v264
      %v1039 = vunpack.c.l.b16 %v265
      %v1040 = vunpack.c.l.b16 %v266
      %v1041 = vunpack.c.l.b16 %v267
      %v1042 = vunpack.c.l.b16 %v268
      %v1043 = vunpack.c.l.b16 %v269
      %v1044 = vunpack.c.l.b16 %v270
      %v1045 = vunpack.c.l.b16 %v271
      %v1046 = vunpack.c.l.b16 %v272
      %v1047 = vunpack.c.l.b16 %v273
      %v1048 = vunpack.c.l.b16 %v274
      %v1049 = vunpack.c.l.b16 %v275
      %v1050 = vunpack.c.l.b16 %v276
      %v1051 = vunpack.c.l.b16 %v277
      %v1052 = vunpack.c.l.b16 %v278
      %v1053 = vunpack.c.l.b16 %v279
      %v1054 = vunpack.c.l.b16 %v280
      %v1055 = vunpack.c.l.b16 %v281
      %v1056 = vunpack.c.l.b16 %v282
      %v1057 = vunpack.c.l.b16 %v283
      %v1058 = vunpack.c.l.b16 %v284
      %v1059 = vunpack.c.l.b16 %v285
      %v1060 = vunpack.c.l.b16 %v286
      %v1061 = vunpack.c.l.b16 %v287
      %v1062 = vunpack.c.l.b16 %v288
      %v1063 = vunpack.c.l.b16 %v289
      %v1064 = vunpack.c.l.b16 %v290
      %v1065 = vunpack.c.l.b16 %v291
      %v1066 = vunpack.c.l.b16 %v292
      %v1067 = vunpack.c.l.b16 %v293
      %v1068 = vunpack.c.l.b16 %v294
      %v1069 = vunpack.c.l.b16 %v295
      %v1070 = vunpack.c.l.b16 %v296
      %v1071 = vunpack.c.l.b16 %v297
      %v1072 = vunpack.c.l.b16 %v298
      %v1073 = vunpack.c.l.b16 %v299
      %v1074 = vunpack.c.l.b16 %v300
      %v1075 = vunpack.c.l.b16 %v301
      %v1076 = vunpack.c.l.b16 %v302
      %v1077 = vunpack.c.l.b16 %v303
      %v1078 = vunpack.c.l.b16 %v304
      %v1079 = vunpack.c.l.b16 %v305
      %v1080 = vunpack.c.l.b16 %v306
      %v1081 = vunpack.c.l.b16 %v307
      %v1082 = vunpack.c.l.b16 %v308
      %v1083 = vunpack.c.l.b16 %v309
      %v1084 = vunpack.c.l.b16 %v310
      %v1085 = vunpack.c.l.b16 %v311
      %v1086 = vunpack.c.l.b16 %v312
      %v1087 = vunpack.c.l.b16 %v313
      %v1088 = vunpack.c.l.b16 %v314
      %v1089 = vunpack.c.l.b16 %v315
      %v1090 = vunpack.c.l.b16 %v316
      %v1091 = vunpack.c.l.b16 %v317
      %v1092 = vunpack.c.l.b16 %v318
      %v1093 = vunpack.c.l.b16 %v319
      %v1094 = vunpack.c.l.b16 %v320
      %v1095 = vunpack.c.l.b16 %v321
      %v1096 = vunpack.c.l.b16 %v322
      %v1097 = vunpack.c.l.b16 %v323
      %v1098 = vunpack.c.l.b16 %v324
      %v1099 = vunpack.c.l.b16 %v325
      %v1100 = vunpack.c.l.b16 %v326
      %v1101 = vpack.c.b16 %v1038, %v1037
      %v1102 = vpack.c.b16 %v1040, %v1039
      %v1103 = vpack.c.b16 %v1042, %v1041
      %v1104 = vpack.c.b16 %v1044, %v1043
      %v1105 = vpack.c.b16 %v1046, %v1045
      %v1106 = vpack.c.b16 %v1048, %v1047
      %v1107 = vpack.c.b16 %v1050, %v1049
      %v1108 = vpack.c.b16 %v1052, %v1051
      %v1109 = vpack.c.b16 %v1054, %v1053
      %v1110 = vpack.c.b16 %v1056, %v1055
      %v1111 = vpack.c.b16 %v1058, %v1057
      %v1112 = vpack.c.b16 %v1060, %v1059
      %v1113 = vpack.c.b16 %v1062, %v1061
      %v1114 = vpack.c.b16 %v1064, %v1063
      %v1115 = vpack.c.b16 %v1066, %v1065
      %v1116 = vpack.c.b16 %v1068, %v1067
      %v1117 = vpack.c.b16 %v1070, %v1069
      %v1118 = vpack.c.b16 %v1072, %v1071
      %v1119 = vpack.c.b16 %v1074, %v1073
      %v1120 = vpack.c.b16 %v1076, %v1075
      %v1121 = vpack.c.b16 %v1078, %v1077
      %v1122 = vpack.c.b16 %v1080, %v1079
      %v1123 = vpack.c.b16 %v1082, %v1081
      %v1124 = vpack.c.b16 %v1084, %v1083
      %v1125 = vpack.c.b16 %v1086, %v1085
      %v1126 = vpack.c.b16 %v1088, %v1087
      %v1127 = vpack.c.b16 %v1090, %v1089
      %v1128 = vpack.c.b16 %v1092, %v1091
      %v1129 = vpack.c.b16 %v1094, %v1093
      %v1130 = vpack.c.b16 %v1096, %v1095
      %v1131 = vpack.c.b16 %v1098, %v1097
      %v1132 = vpack.c.b16 %v1100, %v1099
      %1165 = vmatpush.bf16.msra.mxu0 %v1108
      %1166 = vmatpush.bf16.msra.mxu0 %v1107
      %1167 = vmatpush.bf16.msra.mxu0 %v1106
      %1168 = vmatpush.bf16.msra.mxu0 %v1105
      %1169 = vmatpush.bf16.msra.mxu0 %v1104
      %1170 = vmatpush.bf16.msra.mxu0 %v1103
      %1171 = vmatpush.bf16.msra.mxu0 %v1102
      %1172 = vmatpush.bf16.msra.mxu0 %v1101
      %1173 = vmatmul.bf16.gmra.mxu0 %v247
      %v1174 = vpop.f32.mrf.mxu0
      %v1175 = vadd.f32 %v954, %v1174
      %v1176 = vpop.f32.mrf.mxu0
      %v1177 = vadd.f32 %v956, %v1176
      %1178 = vmatmul.bf16.gmra.mxu0 %v251
      %v1179 = vpop.f32.mrf.mxu0
      %v1180 = vadd.f32 %v959, %v1179
      %v1181 = vpop.f32.mrf.mxu0
      %v1182 = vadd.f32 %v961, %v1181
      %1183 = vmatmul.bf16.gmra.mxu0 %v255
      %v1184 = vpop.f32.mrf.mxu0
      %v1185 = vadd.f32 %v964, %v1184
      %v1186 = vpop.f32.mrf.mxu0
      %v1187 = vadd.f32 %v966, %v1186
      %1188 = vmatmul.bf16.gmra.mxu0 %v259
      %v1189 = vpop.f32.mrf.mxu0
      %v1190 = vadd.f32 %v969, %v1189
      %v1191 = vpop.f32.mrf.mxu0
      %v1192 = vadd.f32 %v971, %v1191
      %1193 = vdwg.mxu0
      %1194 = vmatpush.bf16.msra.mxu0 %v1116
      %1195 = vmatpush.bf16.msra.mxu0 %v1115
      %1196 = vmatpush.bf16.msra.mxu0 %v1114
      %1197 = vmatpush.bf16.msra.mxu0 %v1113
      %1198 = vmatpush.bf16.msra.mxu0 %v1112
      %1199 = vmatpush.bf16.msra.mxu0 %v1111
      %1200 = vmatpush.bf16.msra.mxu0 %v1110
      %1201 = vmatpush.bf16.msra.mxu0 %v1109
      %1202 = vmatmul.bf16.gmra.mxu0 %v248
      %v1203 = vpop.f32.mrf.mxu0
      %v1204 = vadd.f32 %v1175, %v1203
      %v1205 = vpop.f32.mrf.mxu0
      %v1206 = vadd.f32 %v1177, %v1205
      %1207 = vmatmul.bf16.gmra.mxu0 %v252
      %v1208 = vpop.f32.mrf.mxu0
      %v1209 = vadd.f32 %v1180, %v1208
      %v1210 = vpop.f32.mrf.mxu0
      %v1211 = vadd.f32 %v1182, %v1210
      %1212 = vmatmul.bf16.gmra.mxu0 %v256
      %v1213 = vpop.f32.mrf.mxu0
      %v1214 = vadd.f32 %v1185, %v1213
      %v1215 = vpop.f32.mrf.mxu0
      %v1216 = vadd.f32 %v1187, %v1215
      %1217 = vmatmul.bf16.gmra.mxu0 %v260
      %v1218 = vpop.f32.mrf.mxu0
      %v1219 = vadd.f32 %v1190, %v1218
      %v1220 = vpop.f32.mrf.mxu0
      %v1221 = vadd.f32 %v1192, %v1220
      %1222 = vdwg.mxu0
      %1223 = vmatpush.bf16.msra.mxu0 %v1124
      %1224 = vmatpush.bf16.msra.mxu0 %v1123
      %1225 = vmatpush.bf16.msra.mxu0 %v1122
      %1226 = vmatpush.bf16.msra.mxu0 %v1121
      %1227 = vmatpush.bf16.msra.mxu0 %v1120
      %1228 = vmatpush.bf16.msra.mxu0 %v1119
      %1229 = vmatpush.bf16.msra.mxu0 %v1118
      %1230 = vmatpush.bf16.msra.mxu0 %v1117
      %1231 = vmatmul.bf16.gmra.mxu0 %v249
      %v1232 = vpop.f32.mrf.mxu0
      %v1233 = vadd.f32 %v1204, %v1232
      %v1234 = vpop.f32.mrf.mxu0
      %v1235 = vadd.f32 %v1206, %v1234
      %1236 = vmatmul.bf16.gmra.mxu0 %v253
      %v1237 = vpop.f32.mrf.mxu0
      %v1238 = vadd.f32 %v1209, %v1237
      %v1239 = vpop.f32.mrf.mxu0
      %v1240 = vadd.f32 %v1211, %v1239
      %1241 = vmatmul.bf16.gmra.mxu0 %v257
      %v1242 = vpop.f32.mrf.mxu0
      %v1243 = vadd.f32 %v1214, %v1242
      %v1244 = vpop.f32.mrf.mxu0
      %v1245 = vadd.f32 %v1216, %v1244
      %1246 = vmatmul.bf16.gmra.mxu0 %v261
      %v1247 = vpop.f32.mrf.mxu0
      %v1248 = vadd.f32 %v1219, %v1247
      %v1249 = vpop.f32.mrf.mxu0
      %v1250 = vadd.f32 %v1221, %v1249
      %1251 = vdwg.mxu0
      %1252 = vmatpush.bf16.msra.mxu0 %v1132
      %1253 = vmatpush.bf16.msra.mxu0 %v1131
      %1254 = vmatpush.bf16.msra.mxu0 %v1130
      %1255 = vmatpush.bf16.msra.mxu0 %v1129
      %1256 = vmatpush.bf16.msra.mxu0 %v1128
      %1257 = vmatpush.bf16.msra.mxu0 %v1127
      %1258 = vmatpush.bf16.msra.mxu0 %v1126
      %1259 = vmatpush.bf16.msra.mxu0 %v1125
      %1260 = vmatmul.bf16.gmra.mxu0 %v250
      %v1261 = vpop.f32.mrf.mxu0
      %v1262 = vadd.f32 %v1233, %v1261
      %v1263 = vpop.f32.mrf.mxu0
      %v1264 = vadd.f32 %v1235, %v1263
      %1265 = vmatmul.bf16.gmra.mxu0 %v254
      %v1266 = vpop.f32.mrf.mxu0
      %v1267 = vadd.f32 %v1238, %v1266
      %v1268 = vpop.f32.mrf.mxu0
      %v1269 = vadd.f32 %v1240, %v1268
      %1270 = vmatmul.bf16.gmra.mxu0 %v258
      %v1271 = vpop.f32.mrf.mxu0
      %v1272 = vadd.f32 %v1243, %v1271
      %v1273 = vpop.f32.mrf.mxu0
      %v1274 = vadd.f32 %v1245, %v1273
      %1275 = vmatmul.bf16.gmra.mxu0 %v262
      %v1276 = vpop.f32.mrf.mxu0
      %v1277 = vadd.f32 %v1248, %v1276
      %v1278 = vpop.f32.mrf.mxu0
      %v1279 = vadd.f32 %v1250, %v1278
      %1280 = vdwg.mxu0
      %s1281 = scalar_lea.vmem %s203, 64
      %v1282 = vld [vmem:[%s1281] sm:$0xff]
      %v1283 = vld [vmem:[%s1281 + $0x8] sm:$0xff]
      %v1284 = vld [vmem:[%s1281 + $0x10] sm:$0xff]
      %v1285 = vld [vmem:[%s1281 + $0x18] sm:$0xff]
      %v1286 = vld [vmem:[%s1281 + $0x40] sm:$0xff]
      %v1287 = vld [vmem:[%s1281 + $0x48] sm:$0xff]
      %v1288 = vld [vmem:[%s1281 + $0x50] sm:$0xff]
      %v1289 = vld [vmem:[%s1281 + $0x58] sm:$0xff]
      %v1290 = vld [vmem:[%s1281 + $0x80] sm:$0xff]
      %v1291 = vld [vmem:[%s1281 + $0x88] sm:$0xff]
      %v1292 = vld [vmem:[%s1281 + $0x90] sm:$0xff]
      %v1293 = vld [vmem:[%s1281 + $0x98] sm:$0xff]
      %v1294 = vld [vmem:[%s1281 + $0xc0] sm:$0xff]
      %v1295 = vld [vmem:[%s1281 + $0xc8] sm:$0xff]
      %v1296 = vld [vmem:[%s1281 + $0xd0] sm:$0xff]
      %v1297 = vld [vmem:[%s1281 + $0xd8] sm:$0xff]
      %v1298 = vld [vmem:[%s1281 + $0x100] sm:$0xff]
      %v1299 = vld [vmem:[%s1281 + $0x108] sm:$0xff]
      %v1300 = vld [vmem:[%s1281 + $0x110] sm:$0xff]
      %v1301 = vld [vmem:[%s1281 + $0x118] sm:$0xff]
      %v1302 = vld [vmem:[%s1281 + $0x140] sm:$0xff]
      %v1303 = vld [vmem:[%s1281 + $0x148] sm:$0xff]
      %v1304 = vld [vmem:[%s1281 + $0x150] sm:$0xff]
      %v1305 = vld [vmem:[%s1281 + $0x158] sm:$0xff]
      %v1306 = vld [vmem:[%s1281 + $0x180] sm:$0xff]
      %v1307 = vld [vmem:[%s1281 + $0x188] sm:$0xff]
      %v1308 = vld [vmem:[%s1281 + $0x190] sm:$0xff]
      %v1309 = vld [vmem:[%s1281 + $0x198] sm:$0xff]
      %v1310 = vld [vmem:[%s1281 + $0x1c0] sm:$0xff]
      %v1311 = vld [vmem:[%s1281 + $0x1c8] sm:$0xff]
      %v1312 = vld [vmem:[%s1281 + $0x1d0] sm:$0xff]
      %v1313 = vld [vmem:[%s1281 + $0x1d8] sm:$0xff]
      %v1314 = vpack.c.bf16 %v1286, %v1282
      %v1315 = vpack.c.bf16 %v1287, %v1283
      %v1316 = vpack.c.bf16 %v1288, %v1284
      %v1317 = vpack.c.bf16 %v1289, %v1285
      %v1318 = vpack.c.bf16 %v1294, %v1290
      %v1319 = vpack.c.bf16 %v1295, %v1291
      %v1320 = vpack.c.bf16 %v1296, %v1292
      %v1321 = vpack.c.bf16 %v1297, %v1293
      %v1322 = vpack.c.bf16 %v1302, %v1298
      %v1323 = vpack.c.bf16 %v1303, %v1299
      %v1324 = vpack.c.bf16 %v1304, %v1300
      %v1325 = vpack.c.bf16 %v1305, %v1301
      %v1326 = vpack.c.bf16 %v1310, %v1306
      %v1327 = vpack.c.bf16 %v1311, %v1307
      %v1328 = vpack.c.bf16 %v1312, %v1308
      %v1329 = vpack.c.bf16 %v1313, %v1309
      %s1330 = scalar_lea.vmem %s1, 512
      %v1331 = vld [vmem:[%s1330] sm:$0xf]
      %v1332 = vld [vmem:[%s1330 + $0x4] sm:$0xf]
      %v1333 = vld [vmem:[%s1330 + $0x8] sm:$0xf]
      %v1334 = vld [vmem:[%s1330 + $0xc] sm:$0xf]
      %v1335 = vld [vmem:[%s1330 + $0x10] sm:$0xf]
      %v1336 = vld [vmem:[%s1330 + $0x14] sm:$0xf]
      %v1337 = vld [vmem:[%s1330 + $0x18] sm:$0xf]
      %v1338 = vld [vmem:[%s1330 + $0x1c] sm:$0xf]
      %v1339 = vld [vmem:[%s1330 + $0x20] sm:$0xf]
      %v1340 = vld [vmem:[%s1330 + $0x24] sm:$0xf]
      %v1341 = vld [vmem:[%s1330 + $0x28] sm:$0xf]
      %v1342 = vld [vmem:[%s1330 + $0x2c] sm:$0xf]
      %v1343 = vld [vmem:[%s1330 + $0x30] sm:$0xf]
      %v1344 = vld [vmem:[%s1330 + $0x34] sm:$0xf]
      %v1345 = vld [vmem:[%s1330 + $0x38] sm:$0xf]
      %v1346 = vld [vmem:[%s1330 + $0x3c] sm:$0xf]
      %v1347 = vld [vmem:[%s1330 + $0x40] sm:$0xf]
      %v1348 = vld [vmem:[%s1330 + $0x44] sm:$0xf]
      %v1349 = vld [vmem:[%s1330 + $0x48] sm:$0xf]
      %v1350 = vld [vmem:[%s1330 + $0x4c] sm:$0xf]
      %v1351 = vld [vmem:[%s1330 + $0x50] sm:$0xf]
      %v1352 = vld [vmem:[%s1330 + $0x54] sm:$0xf]
      %v1353 = vld [vmem:[%s1330 + $0x58] sm:$0xf]
      %v1354 = vld [vmem:[%s1330 + $0x5c] sm:$0xf]
      %v1355 = vld [vmem:[%s1330 + $0x60] sm:$0xf]
      %v1356 = vld [vmem:[%s1330 + $0x64] sm:$0xf]
      %v1357 = vld [vmem:[%s1330 + $0x68] sm:$0xf]
      %v1358 = vld [vmem:[%s1330 + $0x6c] sm:$0xf]
      %v1359 = vld [vmem:[%s1330 + $0x70] sm:$0xf]
      %v1360 = vld [vmem:[%s1330 + $0x74] sm:$0xf]
      %v1361 = vld [vmem:[%s1330 + $0x78] sm:$0xf]
      %v1362 = vld [vmem:[%s1330 + $0x7c] sm:$0xf]
      %v1363 = vld [vmem:[%s1330 + $0x80] sm:$0xf]
      %v1364 = vld [vmem:[%s1330 + $0x84] sm:$0xf]
      %v1365 = vld [vmem:[%s1330 + $0x88] sm:$0xf]
      %v1366 = vld [vmem:[%s1330 + $0x8c] sm:$0xf]
      %v1367 = vld [vmem:[%s1330 + $0x90] sm:$0xf]
      %v1368 = vld [vmem:[%s1330 + $0x94] sm:$0xf]
      %v1369 = vld [vmem:[%s1330 + $0x98] sm:$0xf]
      %v1370 = vld [vmem:[%s1330 + $0x9c] sm:$0xf]
      %v1371 = vld [vmem:[%s1330 + $0xa0] sm:$0xf]
      %v1372 = vld [vmem:[%s1330 + $0xa4] sm:$0xf]
      %v1373 = vld [vmem:[%s1330 + $0xa8] sm:$0xf]
      %v1374 = vld [vmem:[%s1330 + $0xac] sm:$0xf]
      %v1375 = vld [vmem:[%s1330 + $0xb0] sm:$0xf]
      %v1376 = vld [vmem:[%s1330 + $0xb4] sm:$0xf]
      %v1377 = vld [vmem:[%s1330 + $0xb8] sm:$0xf]
      %v1378 = vld [vmem:[%s1330 + $0xbc] sm:$0xf]
      %v1379 = vld [vmem:[%s1330 + $0xc0] sm:$0xf]
      %v1380 = vld [vmem:[%s1330 + $0xc4] sm:$0xf]
      %v1381 = vld [vmem:[%s1330 + $0xc8] sm:$0xf]
      %v1382 = vld [vmem:[%s1330 + $0xcc] sm:$0xf]
      %v1383 = vld [vmem:[%s1330 + $0xd0] sm:$0xf]
      %v1384 = vld [vmem:[%s1330 + $0xd4] sm:$0xf]
      %v1385 = vld [vmem:[%s1330 + $0xd8] sm:$0xf]
      %v1386 = vld [vmem:[%s1330 + $0xdc] sm:$0xf]
      %v1387 = vld [vmem:[%s1330 + $0xe0] sm:$0xf]
      %v1388 = vld [vmem:[%s1330 + $0xe4] sm:$0xf]
      %v1389 = vld [vmem:[%s1330 + $0xe8] sm:$0xf]
      %v1390 = vld [vmem:[%s1330 + $0xec] sm:$0xf]
      %v1391 = vld [vmem:[%s1330 + $0xf0] sm:$0xf]
      %v1392 = vld [vmem:[%s1330 + $0xf4] sm:$0xf]
      %v1393 = vld [vmem:[%s1330 + $0xf8] sm:$0xf]
      %v1394 = vld [vmem:[%s1330 + $0xfc] sm:$0xf]
      %v1459 = vunpack.c.l.b16 %v1331
      %v1460 = vunpack.c.l.b16 %v1332
      %v1461 = vunpack.c.l.b16 %v1333
      %v1462 = vunpack.c.l.b16 %v1334
      %v1463 = vunpack.c.l.b16 %v1335
      %v1464 = vunpack.c.l.b16 %v1336
      %v1465 = vunpack.c.l.b16 %v1337
      %v1466 = vunpack.c.l.b16 %v1338
      %v1467 = vunpack.c.l.b16 %v1339
      %v1468 = vunpack.c.l.b16 %v1340
      %v1469 = vunpack.c.l.b16 %v1341
      %v1470 = vunpack.c.l.b16 %v1342
      %v1471 = vunpack.c.l.b16 %v1343
      %v1472 = vunpack.c.l.b16 %v1344
      %v1473 = vunpack.c.l.b16 %v1345
      %v1474 = vunpack.c.l.b16 %v1346
      %v1475 = vunpack.c.l.b16 %v1347
      %v1476 = vunpack.c.l.b16 %v1348
      %v1477 = vunpack.c.l.b16 %v1349
      %v1478 = vunpack.c.l.b16 %v1350
      %v1479 = vunpack.c.l.b16 %v1351
      %v1480 = vunpack.c.l.b16 %v1352
      %v1481 = vunpack.c.l.b16 %v1353
      %v1482 = vunpack.c.l.b16 %v1354
      %v1483 = vunpack.c.l.b16 %v1355
      %v1484 = vunpack.c.l.b16 %v1356
      %v1485 = vunpack.c.l.b16 %v1357
      %v1486 = vunpack.c.l.b16 %v1358
      %v1487 = vunpack.c.l.b16 %v1359
      %v1488 = vunpack.c.l.b16 %v1360
      %v1489 = vunpack.c.l.b16 %v1361
      %v1490 = vunpack.c.l.b16 %v1362
      %v1491 = vunpack.c.l.b16 %v1363
      %v1492 = vunpack.c.l.b16 %v1364
      %v1493 = vunpack.c.l.b16 %v1365
      %v1494 = vunpack.c.l.b16 %v1366
      %v1495 = vunpack.c.l.b16 %v1367
      %v1496 = vunpack.c.l.b16 %v1368
      %v1497 = vunpack.c.l.b16 %v1369
      %v1498 = vunpack.c.l.b16 %v1370
      %v1499 = vunpack.c.l.b16 %v1371
      %v1500 = vunpack.c.l.b16 %v1372
      %v1501 = vunpack.c.l.b16 %v1373
      %v1502 = vunpack.c.l.b16 %v1374
      %v1503 = vunpack.c.l.b16 %v1375
      %v1504 = vunpack.c.l.b16 %v1376
      %v1505 = vunpack.c.l.b16 %v1377
      %v1506 = vunpack.c.l.b16 %v1378
      %v1507 = vunpack.c.l.b16 %v1379
      %v1508 = vunpack.c.l.b16 %v1380
      %v1509 = vunpack.c.l.b16 %v1381
      %v1510 = vunpack.c.l.b16 %v1382
      %v1511 = vunpack.c.l.b16 %v1383
      %v1512 = vunpack.c.l.b16 %v1384
      %v1513 = vunpack.c.l.b16 %v1385
      %v1514 = vunpack.c.l.b16 %v1386
      %v1515 = vunpack.c.l.b16 %v1387
      %v1516 = vunpack.c.l.b16 %v1388
      %v1517 = vunpack.c.l.b16 %v1389
      %v1518 = vunpack.c.l.b16 %v1390
      %v1519 = vunpack.c.l.b16 %v1391
      %v1520 = vunpack.c.l.b16 %v1392
      %v1521 = vunpack.c.l.b16 %v1393
      %v1522 = vunpack.c.l.b16 %v1394
      %v1523 = vpack.c.b16 %v1460, %v1459
      %v1524 = vpack.c.b16 %v1462, %v1461
      %v1525 = vpack.c.b16 %v1464, %v1463
      %v1526 = vpack.c.b16 %v1466, %v1465
      %v1527 = vpack.c.b16 %v1468, %v1467
      %v1528 = vpack.c.b16 %v1470, %v1469
      %v1529 = vpack.c.b16 %v1472, %v1471
      %v1530 = vpack.c.b16 %v1474, %v1473
      %v1531 = vpack.c.b16 %v1476, %v1475
      %v1532 = vpack.c.b16 %v1478, %v1477
      %v1533 = vpack.c.b16 %v1480, %v1479
      %v1534 = vpack.c.b16 %v1482, %v1481
      %v1535 = vpack.c.b16 %v1484, %v1483
      %v1536 = vpack.c.b16 %v1486, %v1485
      %v1537 = vpack.c.b16 %v1488, %v1487
      %v1538 = vpack.c.b16 %v1490, %v1489
      %v1539 = vpack.c.b16 %v1492, %v1491
      %v1540 = vpack.c.b16 %v1494, %v1493
      %v1541 = vpack.c.b16 %v1496, %v1495
      %v1542 = vpack.c.b16 %v1498, %v1497
      %v1543 = vpack.c.b16 %v1500, %v1499
      %v1544 = vpack.c.b16 %v1502, %v1501
      %v1545 = vpack.c.b16 %v1504, %v1503
      %v1546 = vpack.c.b16 %v1506, %v1505
      %v1547 = vpack.c.b16 %v1508, %v1507
      %v1548 = vpack.c.b16 %v1510, %v1509
      %v1549 = vpack.c.b16 %v1512, %v1511
      %v1550 = vpack.c.b16 %v1514, %v1513
      %v1551 = vpack.c.b16 %v1516, %v1515
      %v1552 = vpack.c.b16 %v1518, %v1517
      %v1553 = vpack.c.b16 %v1520, %v1519
      %v1554 = vpack.c.b16 %v1522, %v1521
      %1587 = vmatpush.bf16.msra.mxu0 %v1530
      %1588 = vmatpush.bf16.msra.mxu0 %v1529
      %1589 = vmatpush.bf16.msra.mxu0 %v1528
      %1590 = vmatpush.bf16.msra.mxu0 %v1527
      %1591 = vmatpush.bf16.msra.mxu0 %v1526
      %1592 = vmatpush.bf16.msra.mxu0 %v1525
      %1593 = vmatpush.bf16.msra.mxu0 %v1524
      %1594 = vmatpush.bf16.msra.mxu0 %v1523
      %1595 = vmatmul.bf16.gmra.mxu0 %v1314
      %v1596 = vpop.f32.mrf.mxu0
      %v1597 = vadd.f32 0.0, %v1596
      %v1598 = vpop.f32.mrf.mxu0
      %v1599 = vadd.f32 0.0, %v1598
      %1600 = vmatmul.bf16.gmra.mxu0 %v1318
      %v1601 = vpop.f32.mrf.mxu0
      %v1602 = vadd.f32 0.0, %v1601
      %v1603 = vpop.f32.mrf.mxu0
      %v1604 = vadd.f32 0.0, %v1603
      %1605 = vmatmul.bf16.gmra.mxu0 %v1322
      %v1606 = vpop.f32.mrf.mxu0
      %v1607 = vadd.f32 0.0, %v1606
      %v1608 = vpop.f32.mrf.mxu0
      %v1609 = vadd.f32 0.0, %v1608
      %1610 = vmatmul.bf16.gmra.mxu0 %v1326
      %v1611 = vpop.f32.mrf.mxu0
      %v1612 = vadd.f32 0.0, %v1611
      %v1613 = vpop.f32.mrf.mxu0
      %v1614 = vadd.f32 0.0, %v1613
      %1615 = vdwg.mxu0
      %1616 = vmatpush.bf16.msra.mxu0 %v1538
      %1617 = vmatpush.bf16.msra.mxu0 %v1537
      %1618 = vmatpush.bf16.msra.mxu0 %v1536
      %1619 = vmatpush.bf16.msra.mxu0 %v1535
      %1620 = vmatpush.bf16.msra.mxu0 %v1534
      %1621 = vmatpush.bf16.msra.mxu0 %v1533
      %1622 = vmatpush.bf16.msra.mxu0 %v1532
      %1623 = vmatpush.bf16.msra.mxu0 %v1531
      %1624 = vmatmul.bf16.gmra.mxu0 %v1315
      %v1625 = vpop.f32.mrf.mxu0
      %v1626 = vadd.f32 %v1597, %v1625
      %v1627 = vpop.f32.mrf.mxu0
      %v1628 = vadd.f32 %v1599, %v1627
      %1629 = vmatmul.bf16.gmra.mxu0 %v1319
      %v1630 = vpop.f32.mrf.mxu0
      %v1631 = vadd.f32 %v1602, %v1630
      %v1632 = vpop.f32.mrf.mxu0
      %v1633 = vadd.f32 %v1604, %v1632
      %1634 = vmatmul.bf16.gmra.mxu0 %v1323
      %v1635 = vpop.f32.mrf.mxu0
      %v1636 = vadd.f32 %v1607, %v1635
      %v1637 = vpop.f32.mrf.mxu0
      %v1638 = vadd.f32 %v1609, %v1637
      %1639 = vmatmul.bf16.gmra.mxu0 %v1327
      %v1640 = vpop.f32.mrf.mxu0
      %v1641 = vadd.f32 %v1612, %v1640
      %v1642 = vpop.f32.mrf.mxu0
      %v1643 = vadd.f32 %v1614, %v1642
      %1644 = vdwg.mxu0
      %1645 = vmatpush.bf16.msra.mxu0 %v1546
      %1646 = vmatpush.bf16.msra.mxu0 %v1545
      %1647 = vmatpush.bf16.msra.mxu0 %v1544
      %1648 = vmatpush.bf16.msra.mxu0 %v1543
      %1649 = vmatpush.bf16.msra.mxu0 %v1542
      %1650 = vmatpush.bf16.msra.mxu0 %v1541
      %1651 = vmatpush.bf16.msra.mxu0 %v1540
      %1652 = vmatpush.bf16.msra.mxu0 %v1539
      %1653 = vmatmul.bf16.gmra.mxu0 %v1316
      %v1654 = vpop.f32.mrf.mxu0
      %v1655 = vadd.f32 %v1626, %v1654
      %v1656 = vpop.f32.mrf.mxu0
      %v1657 = vadd.f32 %v1628, %v1656
      %1658 = vmatmul.bf16.gmra.mxu0 %v1320
      %v1659 = vpop.f32.mrf.mxu0
      %v1660 = vadd.f32 %v1631, %v1659
      %v1661 = vpop.f32.mrf.mxu0
      %v1662 = vadd.f32 %v1633, %v1661
      %1663 = vmatmul.bf16.gmra.mxu0 %v1324
      %v1664 = vpop.f32.mrf.mxu0
      %v1665 = vadd.f32 %v1636, %v1664
      %v1666 = vpop.f32.mrf.mxu0
      %v1667 = vadd.f32 %v1638, %v1666
      %1668 = vmatmul.bf16.gmra.mxu0 %v1328
      %v1669 = vpop.f32.mrf.mxu0
      %v1670 = vadd.f32 %v1641, %v1669
      %v1671 = vpop.f32.mrf.mxu0
      %v1672 = vadd.f32 %v1643, %v1671
      %1673 = vdwg.mxu0
      %1674 = vmatpush.bf16.msra.mxu0 %v1554
      %1675 = vmatpush.bf16.msra.mxu0 %v1553
      %1676 = vmatpush.bf16.msra.mxu0 %v1552
      %1677 = vmatpush.bf16.msra.mxu0 %v1551
      %1678 = vmatpush.bf16.msra.mxu0 %v1550
      %1679 = vmatpush.bf16.msra.mxu0 %v1549
      %1680 = vmatpush.bf16.msra.mxu0 %v1548
      %1681 = vmatpush.bf16.msra.mxu0 %v1547
      %1682 = vmatmul.bf16.gmra.mxu0 %v1317
      %v1683 = vpop.f32.mrf.mxu0
      %v1684 = vadd.f32 %v1655, %v1683
      %v1685 = vpop.f32.mrf.mxu0
      %v1686 = vadd.f32 %v1657, %v1685
      %1687 = vmatmul.bf16.gmra.mxu0 %v1321
      %v1688 = vpop.f32.mrf.mxu0
      %v1689 = vadd.f32 %v1660, %v1688
      %v1690 = vpop.f32.mrf.mxu0
      %v1691 = vadd.f32 %v1662, %v1690
      %1692 = vmatmul.bf16.gmra.mxu0 %v1325
      %v1693 = vpop.f32.mrf.mxu0
      %v1694 = vadd.f32 %v1665, %v1693
      %v1695 = vpop.f32.mrf.mxu0
      %v1696 = vadd.f32 %v1667, %v1695
      %1697 = vmatmul.bf16.gmra.mxu0 %v1329
      %v1698 = vpop.f32.mrf.mxu0
      %v1699 = vadd.f32 %v1670, %v1698
      %v1700 = vpop.f32.mrf.mxu0
      %v1701 = vadd.f32 %v1672, %v1700
      %1702 = vdwg.mxu0
      %v1703 = vadd.f32 %v1262, %v1684
      %v1704 = vadd.f32 %v1264, %v1686
      %v1705 = vadd.f32 %v1267, %v1689
      %v1706 = vadd.f32 %v1269, %v1691
      %v1707 = vadd.f32 %v1272, %v1694
      %v1708 = vadd.f32 %v1274, %v1696
      %v1709 = vadd.f32 %v1277, %v1699
      %v1710 = vadd.f32 %v1279, %v1701
      %v1711 = vld [vmem:[%s1281] sm:$0xfe]
      %v1712 = vld [vmem:[%s1281 + $0x8] sm:$0xfe]
      %v1713 = vld [vmem:[%s1281 + $0x10] sm:$0xfe]
      %v1714 = vld [vmem:[%s1281 + $0x18] sm:$0xfe]
      %v1715 = vld [vmem:[%s1281 + $0x20] sm:$0x1]
      %v1716 = vld [vmem:[%s1281 + $0x28] sm:$0x1]
      %v1717 = vld [vmem:[%s1281 + $0x30] sm:$0x1]
      %v1718 = vld [vmem:[%s1281 + $0x38] sm:$0x1]
      %v1719 = vld [vmem:[%s1281 + $0x40] sm:$0xfe]
      %v1720 = vld [vmem:[%s1281 + $0x48] sm:$0xfe]
      %v1721 = vld [vmem:[%s1281 + $0x50] sm:$0xfe]
      %v1722 = vld [vmem:[%s1281 + $0x58] sm:$0xfe]
      %v1723 = vld [vmem:[%s1281 + $0x60] sm:$0x1]
      %v1724 = vld [vmem:[%s1281 + $0x68] sm:$0x1]
      %v1725 = vld [vmem:[%s1281 + $0x70] sm:$0x1]
      %v1726 = vld [vmem:[%s1281 + $0x78] sm:$0x1]
      %v1727 = vld [vmem:[%s1281 + $0x80] sm:$0xfe]
      %v1728 = vld [vmem:[%s1281 + $0x88] sm:$0xfe]
      %v1729 = vld [vmem:[%s1281 + $0x90] sm:$0xfe]
      %v1730 = vld [vmem:[%s1281 + $0x98] sm:$0xfe]
      %v1731 = vld [vmem:[%s1281 + $0xa0] sm:$0x1]
      %v1732 = vld [vmem:[%s1281 + $0xa8] sm:$0x1]
      %v1733 = vld [vmem:[%s1281 + $0xb0] sm:$0x1]
      %v1734 = vld [vmem:[%s1281 + $0xb8] sm:$0x1]
      %v1735 = vld [vmem:[%s1281 + $0xc0] sm:$0xfe]
      %v1736 = vld [vmem:[%s1281 + $0xc8] sm:$0xfe]
      %v1737 = vld [vmem:[%s1281 + $0xd0] sm:$0xfe]
      %v1738 = vld [vmem:[%s1281 + $0xd8] sm:$0xfe]
      %v1739 = vld [vmem:[%s1281 + $0xe0] sm:$0x1]
      %v1740 = vld [vmem:[%s1281 + $0xe8] sm:$0x1]
      %v1741 = vld [vmem:[%s1281 + $0xf0] sm:$0x1]
      %v1742 = vld [vmem:[%s1281 + $0xf8] sm:$0x1]
      %v1743 = vld [vmem:[%s1281 + $0x100] sm:$0xfe]
      %v1744 = vld [vmem:[%s1281 + $0x108] sm:$0xfe]
      %v1745 = vld [vmem:[%s1281 + $0x110] sm:$0xfe]
      %v1746 = vld [vmem:[%s1281 + $0x118] sm:$0xfe]
      %v1747 = vld [vmem:[%s1281 + $0x120] sm:$0x1]
      %v1748 = vld [vmem:[%s1281 + $0x128] sm:$0x1]
      %v1749 = vld [vmem:[%s1281 + $0x130] sm:$0x1]
      %v1750 = vld [vmem:[%s1281 + $0x138] sm:$0x1]
      %v1751 = vld [vmem:[%s1281 + $0x140] sm:$0xfe]
      %v1752 = vld [vmem:[%s1281 + $0x148] sm:$0xfe]
      %v1753 = vld [vmem:[%s1281 + $0x150] sm:$0xfe]
      %v1754 = vld [vmem:[%s1281 + $0x158] sm:$0xfe]
      %v1755 = vld [vmem:[%s1281 + $0x160] sm:$0x1]
      %v1756 = vld [vmem:[%s1281 + $0x168] sm:$0x1]
      %v1757 = vld [vmem:[%s1281 + $0x170] sm:$0x1]
      %v1758 = vld [vmem:[%s1281 + $0x178] sm:$0x1]
      %v1759 = vld [vmem:[%s1281 + $0x180] sm:$0xfe]
      %v1760 = vld [vmem:[%s1281 + $0x188] sm:$0xfe]
      %v1761 = vld [vmem:[%s1281 + $0x190] sm:$0xfe]
      %v1762 = vld [vmem:[%s1281 + $0x198] sm:$0xfe]
      %v1763 = vld [vmem:[%s1281 + $0x1a0] sm:$0x1]
      %v1764 = vld [vmem:[%s1281 + $0x1a8] sm:$0x1]
      %v1765 = vld [vmem:[%s1281 + $0x1b0] sm:$0x1]
      %v1766 = vld [vmem:[%s1281 + $0x1b8] sm:$0x1]
      %v1767 = vld [vmem:[%s1281 + $0x1c0] sm:$0xfe]
      %v1768 = vld [vmem:[%s1281 + $0x1c8] sm:$0xfe]
      %v1769 = vld [vmem:[%s1281 + $0x1d0] sm:$0xfe]
      %v1770 = vld [vmem:[%s1281 + $0x1d8] sm:$0xfe]
      %v1771 = vld [vmem:[%s1281 + $0x1e0] sm:$0x1]
      %v1772 = vld [vmem:[%s1281 + $0x1e8] sm:$0x1]
      %v1773 = vld [vmem:[%s1281 + $0x1f0] sm:$0x1]
      %v1774 = vld [vmem:[%s1281 + $0x1f8] sm:$0x1]
      %v1839 = vrot.slane %v1711, 1
      %v1840 = vrot.slane %v1715, 1
      %v1841 = vsel %vm455, %v1839, %v1840
      %v1842 = vrot.slane %v1712, 1
      %v1843 = vrot.slane %v1716, 1
      %v1844 = vsel %vm455, %v1842, %v1843
      %v1845 = vrot.slane %v1713, 1
      %v1846 = vrot.slane %v1717, 1
      %v1847 = vsel %vm455, %v1845, %v1846
      %v1848 = vrot.slane %v1714, 1
      %v1849 = vrot.slane %v1718, 1
      %v1850 = vsel %vm455, %v1848, %v1849
      %v1851 = vrot.slane %v1719, 1
      %v1852 = vrot.slane %v1723, 1
      %v1853 = vsel %vm455, %v1851, %v1852
      %v1854 = vrot.slane %v1720, 1
      %v1855 = vrot.slane %v1724, 1
      %v1856 = vsel %vm455, %v1854, %v1855
      %v1857 = vrot.slane %v1721, 1
      %v1858 = vrot.slane %v1725, 1
      %v1859 = vsel %vm455, %v1857, %v1858
      %v1860 = vrot.slane %v1722, 1
      %v1861 = vrot.slane %v1726, 1
      %v1862 = vsel %vm455, %v1860, %v1861
      %v1863 = vrot.slane %v1727, 1
      %v1864 = vrot.slane %v1731, 1
      %v1865 = vsel %vm455, %v1863, %v1864
      %v1866 = vrot.slane %v1728, 1
      %v1867 = vrot.slane %v1732, 1
      %v1868 = vsel %vm455, %v1866, %v1867
      %v1869 = vrot.slane %v1729, 1
      %v1870 = vrot.slane %v1733, 1
      %v1871 = vsel %vm455, %v1869, %v1870
      %v1872 = vrot.slane %v1730, 1
      %v1873 = vrot.slane %v1734, 1
      %v1874 = vsel %vm455, %v1872, %v1873
      %v1875 = vrot.slane %v1735, 1
      %v1876 = vrot.slane %v1739, 1
      %v1877 = vsel %vm455, %v1875, %v1876
      %v1878 = vrot.slane %v1736, 1
      %v1879 = vrot.slane %v1740, 1
      %v1880 = vsel %vm455, %v1878, %v1879
      %v1881 = vrot.slane %v1737, 1
      %v1882 = vrot.slane %v1741, 1
      %v1883 = vsel %vm455, %v1881, %v1882
      %v1884 = vrot.slane %v1738, 1
      %v1885 = vrot.slane %v1742, 1
      %v1886 = vsel %vm455, %v1884, %v1885
      %v1887 = vrot.slane %v1743, 1
      %v1888 = vrot.slane %v1747, 1
      %v1889 = vsel %vm455, %v1887, %v1888
      %v1890 = vrot.slane %v1744, 1
      %v1891 = vrot.slane %v1748, 1
      %v1892 = vsel %vm455, %v1890, %v1891
      %v1893 = vrot.slane %v1745, 1
      %v1894 = vrot.slane %v1749, 1
      %v1895 = vsel %vm455, %v1893, %v1894
      %v1896 = vrot.slane %v1746, 1
      %v1897 = vrot.slane %v1750, 1
      %v1898 = vsel %vm455, %v1896, %v1897
      %v1899 = vrot.slane %v1751, 1
      %v1900 = vrot.slane %v1755, 1
      %v1901 = vsel %vm455, %v1899, %v1900
      %v1902 = vrot.slane %v1752, 1
      %v1903 = vrot.slane %v1756, 1
      %v1904 = vsel %vm455, %v1902, %v1903
      %v1905 = vrot.slane %v1753, 1
      %v1906 = vrot.slane %v1757, 1
      %v1907 = vsel %vm455, %v1905, %v1906
      %v1908 = vrot.slane %v1754, 1
      %v1909 = vrot.slane %v1758, 1
      %v1910 = vsel %vm455, %v1908, %v1909
      %v1911 = vrot.slane %v1759, 1
      %v1912 = vrot.slane %v1763, 1
      %v1913 = vsel %vm455, %v1911, %v1912
      %v1914 = vrot.slane %v1760, 1
      %v1915 = vrot.slane %v1764, 1
      %v1916 = vsel %vm455, %v1914, %v1915
      %v1917 = vrot.slane %v1761, 1
      %v1918 = vrot.slane %v1765, 1
      %v1919 = vsel %vm455, %v1917, %v1918
      %v1920 = vrot.slane %v1762, 1
      %v1921 = vrot.slane %v1766, 1
      %v1922 = vsel %vm455, %v1920, %v1921
      %v1923 = vrot.slane %v1767, 1
      %v1924 = vrot.slane %v1771, 1
      %v1925 = vsel %vm455, %v1923, %v1924
      %v1926 = vrot.slane %v1768, 1
      %v1927 = vrot.slane %v1772, 1
      %v1928 = vsel %vm455, %v1926, %v1927
      %v1929 = vrot.slane %v1769, 1
      %v1930 = vrot.slane %v1773, 1
      %v1931 = vsel %vm455, %v1929, %v1930
      %v1932 = vrot.slane %v1770, 1
      %v1933 = vrot.slane %v1774, 1
      %v1934 = vsel %vm455, %v1932, %v1933
      %v1967 = vpack.c.bf16 %v1853, %v1841
      %v1968 = vpack.c.bf16 %v1856, %v1844
      %v1969 = vpack.c.bf16 %v1859, %v1847
      %v1970 = vpack.c.bf16 %v1862, %v1850
      %v1971 = vpack.c.bf16 %v1877, %v1865
      %v1972 = vpack.c.bf16 %v1880, %v1868
      %v1973 = vpack.c.bf16 %v1883, %v1871
      %v1974 = vpack.c.bf16 %v1886, %v1874
      %v1975 = vpack.c.bf16 %v1901, %v1889
      %v1976 = vpack.c.bf16 %v1904, %v1892
      %v1977 = vpack.c.bf16 %v1907, %v1895
      %v1978 = vpack.c.bf16 %v1910, %v1898
      %v1979 = vpack.c.bf16 %v1925, %v1913
      %v1980 = vpack.c.bf16 %v1928, %v1916
      %v1981 = vpack.c.bf16 %v1931, %v1919
      %v1982 = vpack.c.bf16 %v1934, %v1922
      %s1983 = scalar_lea.vmem %s1, 768
      %v1984 = vld [vmem:[%s1983] sm:$0xf]
      %v1985 = vld [vmem:[%s1983 + $0x4] sm:$0xf]
      %v1986 = vld [vmem:[%s1983 + $0x8] sm:$0xf]
      %v1987 = vld [vmem:[%s1983 + $0xc] sm:$0xf]
      %v1988 = vld [vmem:[%s1983 + $0x10] sm:$0xf]
      %v1989 = vld [vmem:[%s1983 + $0x14] sm:$0xf]
      %v1990 = vld [vmem:[%s1983 + $0x18] sm:$0xf]
      %v1991 = vld [vmem:[%s1983 + $0x1c] sm:$0xf]
      %v1992 = vld [vmem:[%s1983 + $0x20] sm:$0xf]
      %v1993 = vld [vmem:[%s1983 + $0x24] sm:$0xf]
      %v1994 = vld [vmem:[%s1983 + $0x28] sm:$0xf]
      %v1995 = vld [vmem:[%s1983 + $0x2c] sm:$0xf]
      %v1996 = vld [vmem:[%s1983 + $0x30] sm:$0xf]
      %v1997 = vld [vmem:[%s1983 + $0x34] sm:$0xf]
      %v1998 = vld [vmem:[%s1983 + $0x38] sm:$0xf]
      %v1999 = vld [vmem:[%s1983 + $0x3c] sm:$0xf]
      %v2000 = vld [vmem:[%s1983 + $0x40] sm:$0xf]
      %v2001 = vld [vmem:[%s1983 + $0x44] sm:$0xf]
      %v2002 = vld [vmem:[%s1983 + $0x48] sm:$0xf]
      %v2003 = vld [vmem:[%s1983 + $0x4c] sm:$0xf]
      %v2004 = vld [vmem:[%s1983 + $0x50] sm:$0xf]
      %v2005 = vld [vmem:[%s1983 + $0x54] sm:$0xf]
      %v2006 = vld [vmem:[%s1983 + $0x58] sm:$0xf]
      %v2007 = vld [vmem:[%s1983 + $0x5c] sm:$0xf]
      %v2008 = vld [vmem:[%s1983 + $0x60] sm:$0xf]
      %v2009 = vld [vmem:[%s1983 + $0x64] sm:$0xf]
      %v2010 = vld [vmem:[%s1983 + $0x68] sm:$0xf]
      %v2011 = vld [vmem:[%s1983 + $0x6c] sm:$0xf]
      %v2012 = vld [vmem:[%s1983 + $0x70] sm:$0xf]
      %v2013 = vld [vmem:[%s1983 + $0x74] sm:$0xf]
      %v2014 = vld [vmem:[%s1983 + $0x78] sm:$0xf]
      %v2015 = vld [vmem:[%s1983 + $0x7c] sm:$0xf]
      %v2016 = vld [vmem:[%s1983 + $0x80] sm:$0xf]
      %v2017 = vld [vmem:[%s1983 + $0x84] sm:$0xf]
      %v2018 = vld [vmem:[%s1983 + $0x88] sm:$0xf]
      %v2019 = vld [vmem:[%s1983 + $0x8c] sm:$0xf]
      %v2020 = vld [vmem:[%s1983 + $0x90] sm:$0xf]
      %v2021 = vld [vmem:[%s1983 + $0x94] sm:$0xf]
      %v2022 = vld [vmem:[%s1983 + $0x98] sm:$0xf]
      %v2023 = vld [vmem:[%s1983 + $0x9c] sm:$0xf]
      %v2024 = vld [vmem:[%s1983 + $0xa0] sm:$0xf]
      %v2025 = vld [vmem:[%s1983 + $0xa4] sm:$0xf]
      %v2026 = vld [vmem:[%s1983 + $0xa8] sm:$0xf]
      %v2027 = vld [vmem:[%s1983 + $0xac] sm:$0xf]
      %v2028 = vld [vmem:[%s1983 + $0xb0] sm:$0xf]
      %v2029 = vld [vmem:[%s1983 + $0xb4] sm:$0xf]
      %v2030 = vld [vmem:[%s1983 + $0xb8] sm:$0xf]
      %v2031 = vld [vmem:[%s1983 + $0xbc] sm:$0xf]
      %v2032 = vld [vmem:[%s1983 + $0xc0] sm:$0xf]
      %v2033 = vld [vmem:[%s1983 + $0xc4] sm:$0xf]
      %v2034 = vld [vmem:[%s1983 + $0xc8] sm:$0xf]
      %v2035 = vld [vmem:[%s1983 + $0xcc] sm:$0xf]
      %v2036 = vld [vmem:[%s1983 + $0xd0] sm:$0xf]
      %v2037 = vld [vmem:[%s1983 + $0xd4] sm:$0xf]
      %v2038 = vld [vmem:[%s1983 + $0xd8] sm:$0xf]
      %v2039 = vld [vmem:[%s1983 + $0xdc] sm:$0xf]
      %v2040 = vld [vmem:[%s1983 + $0xe0] sm:$0xf]
      %v2041 = vld [vmem:[%s1983 + $0xe4] sm:$0xf]
      %v2042 = vld [vmem:[%s1983 + $0xe8] sm:$0xf]
      %v2043 = vld [vmem:[%s1983 + $0xec] sm:$0xf]
      %v2044 = vld [vmem:[%s1983 + $0xf0] sm:$0xf]
      %v2045 = vld [vmem:[%s1983 + $0xf4] sm:$0xf]
      %v2046 = vld [vmem:[%s1983 + $0xf8] sm:$0xf]
      %v2047 = vld [vmem:[%s1983 + $0xfc] sm:$0xf]
      %v2112 = vunpack.c.l.b16 %v1984
      %v2113 = vunpack.c.l.b16 %v1985
      %v2114 = vunpack.c.l.b16 %v1986
      %v2115 = vunpack.c.l.b16 %v1987
      %v2116 = vunpack.c.l.b16 %v1988
      %v2117 = vunpack.c.l.b16 %v1989
      %v2118 = vunpack.c.l.b16 %v1990
      %v2119 = vunpack.c.l.b16 %v1991
      %v2120 = vunpack.c.l.b16 %v1992
      %v2121 = vunpack.c.l.b16 %v1993
      %v2122 = vunpack.c.l.b16 %v1994
      %v2123 = vunpack.c.l.b16 %v1995
      %v2124 = vunpack.c.l.b16 %v1996
      %v2125 = vunpack.c.l.b16 %v1997
      %v2126 = vunpack.c.l.b16 %v1998
      %v2127 = vunpack.c.l.b16 %v1999
      %v2128 = vunpack.c.l.b16 %v2000
      %v2129 = vunpack.c.l.b16 %v2001
      %v2130 = vunpack.c.l.b16 %v2002
      %v2131 = vunpack.c.l.b16 %v2003
      %v2132 = vunpack.c.l.b16 %v2004
      %v2133 = vunpack.c.l.b16 %v2005
      %v2134 = vunpack.c.l.b16 %v2006
      %v2135 = vunpack.c.l.b16 %v2007
      %v2136 = vunpack.c.l.b16 %v2008
      %v2137 = vunpack.c.l.b16 %v2009
      %v2138 = vunpack.c.l.b16 %v2010
      %v2139 = vunpack.c.l.b16 %v2011
      %v2140 = vunpack.c.l.b16 %v2012
      %v2141 = vunpack.c.l.b16 %v2013
      %v2142 = vunpack.c.l.b16 %v2014
      %v2143 = vunpack.c.l.b16 %v2015
      %v2144 = vunpack.c.l.b16 %v2016
      %v2145 = vunpack.c.l.b16 %v2017
      %v2146 = vunpack.c.l.b16 %v2018
      %v2147 = vunpack.c.l.b16 %v2019
      %v2148 = vunpack.c.l.b16 %v2020
      %v2149 = vunpack.c.l.b16 %v2021
      %v2150 = vunpack.c.l.b16 %v2022
      %v2151 = vunpack.c.l.b16 %v2023
      %v2152 = vunpack.c.l.b16 %v2024
      %v2153 = vunpack.c.l.b16 %v2025
      %v2154 = vunpack.c.l.b16 %v2026
      %v2155 = vunpack.c.l.b16 %v2027
      %v2156 = vunpack.c.l.b16 %v2028
      %v2157 = vunpack.c.l.b16 %v2029
      %v2158 = vunpack.c.l.b16 %v2030
      %v2159 = vunpack.c.l.b16 %v2031
      %v2160 = vunpack.c.l.b16 %v2032
      %v2161 = vunpack.c.l.b16 %v2033
      %v2162 = vunpack.c.l.b16 %v2034
      %v2163 = vunpack.c.l.b16 %v2035
      %v2164 = vunpack.c.l.b16 %v2036
      %v2165 = vunpack.c.l.b16 %v2037
      %v2166 = vunpack.c.l.b16 %v2038
      %v2167 = vunpack.c.l.b16 %v2039
      %v2168 = vunpack.c.l.b16 %v2040
      %v2169 = vunpack.c.l.b16 %v2041
      %v2170 = vunpack.c.l.b16 %v2042
      %v2171 = vunpack.c.l.b16 %v2043
      %v2172 = vunpack.c.l.b16 %v2044
      %v2173 = vunpack.c.l.b16 %v2045
      %v2174 = vunpack.c.l.b16 %v2046
      %v2175 = vunpack.c.l.b16 %v2047
      %v2176 = vpack.c.b16 %v2113, %v2112
      %v2177 = vpack.c.b16 %v2115, %v2114
      %v2178 = vpack.c.b16 %v2117, %v2116
      %v2179 = vpack.c.b16 %v2119, %v2118
      %v2180 = vpack.c.b16 %v2121, %v2120
      %v2181 = vpack.c.b16 %v2123, %v2122
      %v2182 = vpack.c.b16 %v2125, %v2124
      %v2183 = vpack.c.b16 %v2127, %v2126
      %v2184 = vpack.c.b16 %v2129, %v2128
      %v2185 = vpack.c.b16 %v2131, %v2130
      %v2186 = vpack.c.b16 %v2133, %v2132
      %v2187 = vpack.c.b16 %v2135, %v2134
      %v2188 = vpack.c.b16 %v2137, %v2136
      %v2189 = vpack.c.b16 %v2139, %v2138
      %v2190 = vpack.c.b16 %v2141, %v2140
      %v2191 = vpack.c.b16 %v2143, %v2142
      %v2192 = vpack.c.b16 %v2145, %v2144
      %v2193 = vpack.c.b16 %v2147, %v2146
      %v2194 = vpack.c.b16 %v2149, %v2148
      %v2195 = vpack.c.b16 %v2151, %v2150
      %v2196 = vpack.c.b16 %v2153, %v2152
      %v2197 = vpack.c.b16 %v2155, %v2154
      %v2198 = vpack.c.b16 %v2157, %v2156
      %v2199 = vpack.c.b16 %v2159, %v2158
      %v2200 = vpack.c.b16 %v2161, %v2160
      %v2201 = vpack.c.b16 %v2163, %v2162
      %v2202 = vpack.c.b16 %v2165, %v2164
      %v2203 = vpack.c.b16 %v2167, %v2166
      %v2204 = vpack.c.b16 %v2169, %v2168
      %v2205 = vpack.c.b16 %v2171, %v2170
      %v2206 = vpack.c.b16 %v2173, %v2172
      %v2207 = vpack.c.b16 %v2175, %v2174
      %2240 = vmatpush.bf16.msra.mxu0 %v2183
      %2241 = vmatpush.bf16.msra.mxu0 %v2182
      %2242 = vmatpush.bf16.msra.mxu0 %v2181
      %2243 = vmatpush.bf16.msra.mxu0 %v2180
      %2244 = vmatpush.bf16.msra.mxu0 %v2179
      %2245 = vmatpush.bf16.msra.mxu0 %v2178
      %2246 = vmatpush.bf16.msra.mxu0 %v2177
      %2247 = vmatpush.bf16.msra.mxu0 %v2176
      %2248 = vmatmul.bf16.gmra.mxu0 %v1967
      %v2249 = vpop.f32.mrf.mxu0
      %v2250 = vadd.f32 0.0, %v2249
      %v2251 = vpop.f32.mrf.mxu0
      %v2252 = vadd.f32 0.0, %v2251
      %2253 = vmatmul.bf16.gmra.mxu0 %v1971
      %v2254 = vpop.f32.mrf.mxu0
      %v2255 = vadd.f32 0.0, %v2254
      %v2256 = vpop.f32.mrf.mxu0
      %v2257 = vadd.f32 0.0, %v2256
      %2258 = vmatmul.bf16.gmra.mxu0 %v1975
      %v2259 = vpop.f32.mrf.mxu0
      %v2260 = vadd.f32 0.0, %v2259
      %v2261 = vpop.f32.mrf.mxu0
      %v2262 = vadd.f32 0.0, %v2261
      %2263 = vmatmul.bf16.gmra.mxu0 %v1979
      %v2264 = vpop.f32.mrf.mxu0
      %v2265 = vadd.f32 0.0, %v2264
      %v2266 = vpop.f32.mrf.mxu0
      %v2267 = vadd.f32 0.0, %v2266
      %2268 = vdwg.mxu0
      %2269 = vmatpush.bf16.msra.mxu0 %v2191
      %2270 = vmatpush.bf16.msra.mxu0 %v2190
      %2271 = vmatpush.bf16.msra.mxu0 %v2189
      %2272 = vmatpush.bf16.msra.mxu0 %v2188
      %2273 = vmatpush.bf16.msra.mxu0 %v2187
      %2274 = vmatpush.bf16.msra.mxu0 %v2186
      %2275 = vmatpush.bf16.msra.mxu0 %v2185
      %2276 = vmatpush.bf16.msra.mxu0 %v2184
      %2277 = vmatmul.bf16.gmra.mxu0 %v1968
      %v2278 = vpop.f32.mrf.mxu0
      %v2279 = vadd.f32 %v2250, %v2278
      %v2280 = vpop.f32.mrf.mxu0
      %v2281 = vadd.f32 %v2252, %v2280
      %2282 = vmatmul.bf16.gmra.mxu0 %v1972
      %v2283 = vpop.f32.mrf.mxu0
      %v2284 = vadd.f32 %v2255, %v2283
      %v2285 = vpop.f32.mrf.mxu0
      %v2286 = vadd.f32 %v2257, %v2285
      %2287 = vmatmul.bf16.gmra.mxu0 %v1976
      %v2288 = vpop.f32.mrf.mxu0
      %v2289 = vadd.f32 %v2260, %v2288
      %v2290 = vpop.f32.mrf.mxu0
      %v2291 = vadd.f32 %v2262, %v2290
      %2292 = vmatmul.bf16.gmra.mxu0 %v1980
      %v2293 = vpop.f32.mrf.mxu0
      %v2294 = vadd.f32 %v2265, %v2293
      %v2295 = vpop.f32.mrf.mxu0
      %v2296 = vadd.f32 %v2267, %v2295
      %2297 = vdwg.mxu0
      %2298 = vmatpush.bf16.msra.mxu0 %v2199
      %2299 = vmatpush.bf16.msra.mxu0 %v2198
      %2300 = vmatpush.bf16.msra.mxu0 %v2197
      %2301 = vmatpush.bf16.msra.mxu0 %v2196
      %2302 = vmatpush.bf16.msra.mxu0 %v2195
      %2303 = vmatpush.bf16.msra.mxu0 %v2194
      %2304 = vmatpush.bf16.msra.mxu0 %v2193
      %2305 = vmatpush.bf16.msra.mxu0 %v2192
      %2306 = vmatmul.bf16.gmra.mxu0 %v1969
      %v2307 = vpop.f32.mrf.mxu0
      %v2308 = vadd.f32 %v2279, %v2307
      %v2309 = vpop.f32.mrf.mxu0
      %v2310 = vadd.f32 %v2281, %v2309
      %2311 = vmatmul.bf16.gmra.mxu0 %v1973
      %v2312 = vpop.f32.mrf.mxu0
      %v2313 = vadd.f32 %v2284, %v2312
      %v2314 = vpop.f32.mrf.mxu0
      %v2315 = vadd.f32 %v2286, %v2314
      %2316 = vmatmul.bf16.gmra.mxu0 %v1977
      %v2317 = vpop.f32.mrf.mxu0
      %v2318 = vadd.f32 %v2289, %v2317
      %v2319 = vpop.f32.mrf.mxu0
      %v2320 = vadd.f32 %v2291, %v2319
      %2321 = vmatmul.bf16.gmra.mxu0 %v1981
      %v2322 = vpop.f32.mrf.mxu0
      %v2323 = vadd.f32 %v2294, %v2322
      %v2324 = vpop.f32.mrf.mxu0
      %v2325 = vadd.f32 %v2296, %v2324
      %2326 = vdwg.mxu0
      %2327 = vmatpush.bf16.msra.mxu0 %v2207
      %2328 = vmatpush.bf16.msra.mxu0 %v2206
      %2329 = vmatpush.bf16.msra.mxu0 %v2205
      %2330 = vmatpush.bf16.msra.mxu0 %v2204
      %2331 = vmatpush.bf16.msra.mxu0 %v2203
      %2332 = vmatpush.bf16.msra.mxu0 %v2202
      %2333 = vmatpush.bf16.msra.mxu0 %v2201
      %2334 = vmatpush.bf16.msra.mxu0 %v2200
      %2335 = vmatmul.bf16.gmra.mxu0 %v1970
      %v2336 = vpop.f32.mrf.mxu0
      %v2337 = vadd.f32 %v2308, %v2336
      %v2338 = vpop.f32.mrf.mxu0
      %v2339 = vadd.f32 %v2310, %v2338
      %2340 = vmatmul.bf16.gmra.mxu0 %v1974
      %v2341 = vpop.f32.mrf.mxu0
      %v2342 = vadd.f32 %v2313, %v2341
      %v2343 = vpop.f32.mrf.mxu0
      %v2344 = vadd.f32 %v2315, %v2343
      %2345 = vmatmul.bf16.gmra.mxu0 %v1978
      %v2346 = vpop.f32.mrf.mxu0
      %v2347 = vadd.f32 %v2318, %v2346
      %v2348 = vpop.f32.mrf.mxu0
      %v2349 = vadd.f32 %v2320, %v2348
      %2350 = vmatmul.bf16.gmra.mxu0 %v1982
      %v2351 = vpop.f32.mrf.mxu0
      %v2352 = vadd.f32 %v2323, %v2351
      %v2353 = vpop.f32.mrf.mxu0
      %v2354 = vadd.f32 %v2325, %v2353
      %2355 = vdwg.mxu0
      %v2356 = vadd.f32 %v1703, %v2337
      %v2357 = vadd.f32 %v1704, %v2339
      %v2358 = vadd.f32 %v1705, %v2342
      %v2359 = vadd.f32 %v1706, %v2344
      %v2360 = vadd.f32 %v1707, %v2347
      %v2361 = vadd.f32 %v1708, %v2349
      %v2362 = vadd.f32 %v1709, %v2352
      %v2363 = vadd.f32 %v1710, %v2354
      %2364 = vst [vmem:[%s208] sm:$0xff] %v2356
      %2365 = vst [vmem:[%s208 + $0x8] sm:$0xff] %v2357
      %2366 = vst [vmem:[%s208 + $0x10] sm:$0xff] %v2358
      %2367 = vst [vmem:[%s208 + $0x18] sm:$0xff] %v2359
      %2368 = vst [vmem:[%s208 + $0x20] sm:$0xff] %v2360
      %2369 = vst [vmem:[%s208 + $0x28] sm:$0xff] %v2361
      %2370 = vst [vmem:[%s208 + $0x30] sm:$0xff] %v2362
      %2371 = vst [vmem:[%s208 + $0x38] sm:$0xff] %v2363
      %v2372 = vadd.f32 %v2356, %v2357
      %v2373 = vadd.f32 %v2372, %v2358
      %v2374 = vadd.f32 %v2373, %v2359
      %v2375 = vadd.f32 %v2374, %v2360
      %v2376 = vadd.f32 %v2375, %v2361
      %v2377 = vadd.f32 %v2376, %v2362
      %v2378 = vadd.f32 %v2377, %v2363
      %v2379 = vrot.slane %v2378, 4
      %v2380 = vadd.f32 %v2378, %v2379
      %v2381 = vrot.slane %v2380, 2
      %v2382 = vadd.f32 %v2380, %v2381
      %v2383 = vrot.slane %v2382, 1
      %v2384 = vadd.f32 %v2382, %v2383
      %2385 = vst [vmem:[%s211] sm:$0x1] %v2384
      %v2386 = vmul.f32 %v2356, %v2356
      %v2387 = vmul.f32 %v2357, %v2357
      %v2388 = vmul.f32 %v2358, %v2358
      %v2389 = vmul.f32 %v2359, %v2359
      %v2390 = vmul.f32 %v2360, %v2360
      %v2391 = vmul.f32 %v2361, %v2361
      %v2392 = vmul.f32 %v2362, %v2362
      %v2393 = vmul.f32 %v2363, %v2363
      %v2394 = vadd.f32 %v2386, %v2387
      %v2395 = vadd.f32 %v2394, %v2388
      %v2396 = vadd.f32 %v2395, %v2389
      %v2397 = vadd.f32 %v2396, %v2390
      %v2398 = vadd.f32 %v2397, %v2391
      %v2399 = vadd.f32 %v2398, %v2392
      %v2400 = vadd.f32 %v2399, %v2393
      %v2401 = vrot.slane %v2400, 4
      %v2402 = vadd.f32 %v2400, %v2401
      %v2403 = vrot.slane %v2402, 2
      %v2404 = vadd.f32 %v2402, %v2403
      %v2405 = vrot.slane %v2404, 1
      %v2406 = vadd.f32 %v2404, %v2405
      %2407 = vst [vmem:[%s214] sm:$0x1] %v2406
      %p2408 = scmp.lt.s32.totalorder %s16, 1
      %s2409 = scalar_select %p2408, %s16, 1
      %s2410 = smul.addr %s2409, 8
      %s2411 = smul.addr %s2410, 8
      %s2412 = scalar_lea.vmem %s2, %s2411
      %p2413 = scmp.lt.s32.totalorder %s16, 1
      %s2414 = scalar_select %p2413, %s16, 1
      %s2415 = scalar_lea.vmem %s3, %s2414
      %p2416 = scmp.lt.s32.totalorder %s16, 1
      %s2417 = scalar_select %p2416, %s16, 1
      %s2418 = scalar_lea.vmem %s4, %s2417
      // Predicated region
      $region29: #{_lambda_.19} parent=27 // pred_check
        %p2419 = pneg %p81
      $region30: #{_lambda_.19} parent=27 // pred_check_branch
        %2421 = sbr.rel (%p2419) target = $region32
      $region31: #{_lambda_.19} parent=27 // pred_region
        _
      $region32: #{_lambda_.19} parent=27 // pred_fallthru
        _
      // Predicated region
      $region33: #{_lambda_.19} parent=27 // pred_check
        %p2422 = pneg %p107
      $region34: #{_lambda_.19} parent=27 // pred_check_branch
        %2424 = sbr.rel (%p2422) target = $region36
      $region35: #{_lambda_.19} parent=27 // pred_region
        _
      $region36: #{_lambda_.19} parent=27 // pred_fallthru
        _
      // Predicated region
      $region37: #{_lambda_.19} parent=27 // pred_check
        %p2425 = pneg %p133
      $region38: #{_lambda_.19} parent=27 // pred_check_branch
        %2427 = sbr.rel (%p2425) target = $region40
      $region39: #{_lambda_.19} parent=27 // pred_region
        _
      $region40: #{_lambda_.19} parent=27 // pred_fallthru
        _
    $region28: #{_lambda_.19} parent=5 // pred_fallthru
      _
    %p2428 = scmp.le.s32.totalorder 2, %s11
    // Predicated region
    $region41: #{_lambda_.19} parent=5 // pred_check
      %p2429 = pneg %p2428
    $region42: #{_lambda_.19} parent=5 // pred_check_branch
      %2431 = sbr.rel (%p2429) target = $region44
    $region43: #{_lambda_.19} parent=5 // pred_region
      %s2432 = ssub.s32 %s11, 2
      // Predicated region
      $region45: #{_lambda_.19} parent=43 // pred_check
        %p2433 = pneg %p87
      $region46: #{_lambda_.19} parent=43 // pred_check_branch
        %2435 = sbr.rel (%p2433) target = $region48
      $region47: #{_lambda_.19} parent=43 // pred_region
        %p2436 = scmp.lt.s32.totalorder %s17, 1
        %s2437 = scalar_select %p2436, %s17, 1
        %s2438 = smul.addr %s2437, 8
        %s2439 = smul.addr %s2438, 8
        %s2440 = scalar_lea.vmem %s2, %s2439
      $region48: #{_lambda_.19} parent=43 // pred_fallthru
        _
      // Predicated region
      $region49: #{_lambda_.19} parent=43 // pred_check
        %p2441 = pneg %p113
      $region50: #{_lambda_.19} parent=43 // pred_check_branch
        %2443 = sbr.rel (%p2441) target = $region52
      $region51: #{_lambda_.19} parent=43 // pred_region
        %p2444 = scmp.lt.s32.totalorder %s17, 1
        %s2445 = scalar_select %p2444, %s17, 1
        %s2446 = scalar_lea.vmem %s3, %s2445
      $region52: #{_lambda_.19} parent=43 // pred_fallthru
        _
      // Predicated region
      $region53: #{_lambda_.19} parent=43 // pred_check
        %p2447 = pneg %p139
      $region54: #{_lambda_.19} parent=43 // pred_check_branch
        %2449 = sbr.rel (%p2447) target = $region56
      $region55: #{_lambda_.19} parent=43 // pred_region
        %p2450 = scmp.lt.s32.totalorder %s17, 1
        %s2451 = scalar_select %p2450, %s17, 1
        %s2452 = scalar_lea.vmem %s4, %s2451
      $region56: #{_lambda_.19} parent=43 // pred_fallthru
        _
    $region44: #{_lambda_.19} parent=5 // pred_fallthru
      _
  $region6: #{_lambda_.19} parent=0 // loop_footer
    %s15 = sadd.s32 1, %s11
  $region7: #{_lambda_.19} parent=0 // loop_footer_branch
    %10 = sbr.rel target = $region3
  $region8: #{_lambda_.19} parent=0 // loop_exit
    _

</llo_original>
